<compile_context>
chip_gen: v5e
topology: v5e:2x2
jax: 0.10.0
libtpu: 0.0.40
codegen_flags: <defaults>
</compile_context>

<pallas_src>
import functools
import math

import jax
import jax.numpy as jnp
from jax import lax
from jax.experimental import pallas as pl
from jax.experimental.pallas import tpu as pltpu

LN_EPS = 1e-12        # XLNetConfig.layer_norm_eps
MASK_VALUE = 1e30     # HF XLNet: attn_score - 1e30 * attn_mask


def _gelu_tanh(x):
    # TODO(synk): HF "gelu" is the exact erf-based GELU; the tanh approximation is
    # used for a guaranteed Mosaic lowering (difference < 1e-3; the pure-JAX
    # reference below uses the same approximation).
    c = 0.7978845608028654  # sqrt(2/pi)
    return 0.5 * x * (1.0 + jnp.tanh(c * (x + 0.044715 * x * x * x)))


def _layernorm(x, g, b, eps):
    mu = jnp.mean(x, axis=-1, keepdims=True)
    var = jnp.mean((x - mu) * (x - mu), axis=-1, keepdims=True)
    return (x - mu) * lax.rsqrt(var + eps) * g + b


# ----------------------------------------------------------------------------- #
# Pallas kernels
# ----------------------------------------------------------------------------- #
def _xlnet_layer_kernel(h_ref, wqkv_ref, wo_ref, rwbx_ref, kr_ref, bkr_ref,
                        pad_ref, ln1g_ref, ln1b_ref, w1_ref, b1_ref, w2_ref,
                        b2_ref, ln2g_ref, ln2b_ref, out_ref, attn_ref, *,
                        n_head, d_head, qlen, klen, eps, use_roll):
    """One full XLNet block (rel-attn + LN + FFN + LN) for one batch row.

    grid = (bsz,).  The 1/sqrt(d_head) scale is folded into the q projection and
    the relative biases on the host; rrb_s·krᵀ is precomputed per layer, so the
    score for head n is
        q·kᵀ + rwb_s·kᵀ  +  rel_shift(q·krᵀ + rrb_s·krᵀ)  -  1e30·mask
    with one fused q @ [k ; kr]ᵀ matmul per head.
    """
    H = n_head * d_head
    h_b = h_ref[0]                                                  # (qlen, d_model) bf16

    # Fused Q/K/V projection for all heads (one wide MXU matmul); single bf16 cast.
    qkv = jnp.dot(h_b, wqkv_ref[...],
                  preferred_element_type=jnp.float32).astype(jnp.bfloat16)

    # Content bias rwb_s·kᵀ for all heads in one matmul (rwbx is block-diagonal).
    rwk_all = lax.dot_general(rwbx_ref[...], qkv[:, H:2 * H],
                              (((1,), (1,)), ((), ())),
                              preferred_element_type=jnp.float32)   # (n_head, klen)

    # Additive non-target mask, shared by all heads: -1e30 where the key is a
    # padding token, except the diagonal (self position is always visible).
    pad_row = pad_ref[0]                                            # (1, klen) f32
    ri = lax.broadcasted_iota(jnp.int32, (qlen, klen), 0)
    ci = lax.broadcasted_iota(jnp.int32, (qlen, klen), 1)
    neg_bias = jnp.where(ri == ci, 0.0, pad_row * MASK_VALUE)       # (qlen, klen)

    kr = kr_ref[...]                                                # (plen, H) bf16

    # TODO(synk): at XLNet-base (n_head=12, d_head=64) process heads in pairs so the
    # qkv column slices / attn_ref write-backs land on 128-lane boundaries.
    for n in range(n_head):                                         # static loop
        q = qkv[:, n * d_head:(n + 1) * d_head]                     # pre-scaled
        k = qkv[:, H + n * d_head:H + (n + 1) * d_head]
        v = qkv[:, 2 * H + n * d_head:2 * H + (n + 1) * d_head]
        kr_n = kr[:, n * d_head:(n + 1) * d_head]                   # (plen, d_head)

        # One fused score matmul: columns [0:klen] = content, [klen:] = position.
        kcat = jnp.concatenate([k, kr_n], axis=0)                   # (klen+plen, d_head)
        s = lax.dot_general(q, kcat, (((1,), (1,)), ((), ())),
                            preferred_element_type=jnp.float32)     # (qlen, klen+plen)

        ac = s[:, :klen] + rwk_all[n:n + 1, :]                      # content
        bd_full = s[:, klen:] + bkr_ref[n:n + 1, :]                 # position (+precomputed bias)

        # XLNet rel_shift: bd[i, j] = bd_full[i, klen - i + j]  (relative distance i-j).
        if use_roll:
            # Single strided lane-rotate on the XLU (roll amount qlen + i for row i).
            bd = pltpu.roll(bd_full, shift=qlen, axis=1,
                            stride=1, stride_axis=0)[:, :klen]
        else:
            # Fallback only (correctness safety net): O(qlen) static slices.
            bd = jnp.concatenate(
                [bd_full[i:i + 1, klen - i:2 * klen - i] for i in range(qlen)],
                axis=0)

        score = ac + bd - neg_bias
        score = score - jnp.max(score, axis=-1, keepdims=True)
        p = jnp.exp(score)
        inv = pl.reciprocal(jnp.sum(p, axis=-1, keepdims=True), approx=True)
        p = (p * inv).astype(jnp.bfloat16)
        # Per-head output goes straight into the VMEM scratch (no list + concat).
        attn_ref[:, n * d_head:(n + 1) * d_head] = jnp.dot(
            p, v, preferred_element_type=jnp.float32).astype(jnp.bfloat16)

    # One wide output projection for all heads + residual + LayerNorm (f32).
    attn_out = jnp.dot(attn_ref[...], wo_ref[...],
                       preferred_element_type=jnp.float32)          # (qlen, d_model)
    y1 = _layernorm(attn_out + h_b.astype(jnp.float32),
                    ln1g_ref[...], ln1b_ref[...], eps)

    # Position-wise FFN fused in the same kernel (no HBM round trip of y1).
    y = jnp.dot(y1.astype(jnp.bfloat16), w1_ref[...],
                preferred_element_type=jnp.float32) + b1_ref[...]
    y = _gelu_tanh(y)
    y = jnp.dot(y.astype(jnp.bfloat16), w2_ref[...],
                preferred_element_type=jnp.float32) + b2_ref[...]
    out_ref[0] = _layernorm(y + y1, ln2g_ref[...], ln2b_ref[...],
                            eps).astype(out_ref.dtype)


def _kr_kernel(pe_ref, wr_ref, rrbx_ref, kr_ref, bkr_ref):
    # Positional-key projection + batch-independent rrb_s·krᵀ bias for one layer.
    kr = jnp.dot(pe_ref[...], wr_ref[0],
                 preferred_element_type=jnp.float32).astype(jnp.bfloat16)
    kr_ref[0] = kr                                                  # (plen, H)
    bkr_ref[0] = lax.dot_general(rrbx_ref[0], kr, (((1,), (1,)), ((), ())),
                                 preferred_element_type=jnp.float32)  # (n_head, plen)


def _head_kernel(x_ref, ws_ref, bs_ref, wl_ref, bl_ref, out_ref):
    s = jnp.tanh(jnp.dot(x_ref[...], ws_ref[...],
                         preferred_element_type=jnp.float32) + bs_ref[...])
    out_ref[...] = jnp.dot(s.astype(jnp.bfloat16), wl_ref[...],
                           preferred_element_type=jnp.float32) + bl_ref[...]


# ----------------------------------------------------------------------------- #
# rel_shift roll self-check (eager, tiny, run once before jit)
# ----------------------------------------------------------------------------- #
def rel_shift_roll_ok(qlen, klen):
    """Verify the strided-roll rel_shift gives bd[i,j] = bd_full[i, klen-i+j]."""
    plen = qlen + klen
    x = jnp.arange(qlen * plen, dtype=jnp.float32).reshape(qlen, plen)

    def kern(x_ref, o_ref):
        o_ref[...] = pltpu.roll(x_ref[...], shift=qlen, axis=1,
                                stride=1, stride_axis=0)[:, :klen]

    try:
        got = pl.pallas_call(
            kern, out_shape=jax.ShapeDtypeStruct((qlen, klen), jnp.float32))(x)
        idx = klen - jnp.arange(qlen)[:, None] + jnp.arange(klen)[None, :]
        want = jnp.take_along_axis(x, idx, axis=1)
        return bool(jnp.array_equal(got, want))
    except Exception:
        return False


# ----------------------------------------------------------------------------- #
# Pallas wrappers
# ----------------------------------------------------------------------------- #
def xlnet_layer(h, lp, kr, bkr, pad, use_roll):
    bsz, qlen, d_model = h.shape
    n_head, H = lp["rwbx"].shape
    d_head = H // n_head
    plen = kr.shape[0]
    klen = qlen                                      # mlen = 0
    assert plen == qlen + klen                       # rel_shift assumes mlen == 0
    d_inner = lp["w1"].shape[1]
    kernel = functools.partial(_xlnet_layer_kernel, n_head=n_head, d_head=d_head,
                               qlen=qlen, klen=klen, eps=LN_EPS, use_roll=use_roll)
    # TODO(synk): at XLNet-base shapes mark the grid-invariant weight specs with
    # pipeline_mode=pl.Buffered(1) (single-buffered) to halve their VMEM footprint,
    # and add a q-tile "parallel" grid axis so both v7x TensorCores stay busy at
    # small batch; optionally merge all layers into one pallas_call (grid=(n_layer,),
    # h resident in VMEM) to hide per-layer weight DMA behind compute.
    return pl.pallas_call(
        kernel,
        out_shape=jax.ShapeDtypeStruct((bsz, qlen, d_model), jnp.bfloat16),
        grid=(bsz,),
        in_specs=[
            pl.BlockSpec((1, qlen, d_model), lambda b: (b, 0, 0)),      # h (bf16)
            pl.BlockSpec((d_model, 3 * H), lambda b: (0, 0)),           # fused wqkv
            pl.BlockSpec((H, d_model), lambda b: (0, 0)),               # fused wo
            pl.BlockSpec((n_head, H), lambda b: (0, 0)),                # rwb_s (block-diag)
            pl.BlockSpec((plen, H), lambda b: (0, 0)),                  # kr (un-shifted)
            pl.BlockSpec((n_head, plen), lambda b: (0, 0)),             # rrb_s . kr^T
            pl.BlockSpec((1, 1, klen), lambda b: (b, 0, 0)),            # padding row
            pl.BlockSpec((1, d_model), lambda b: (0, 0)),               # ln1 gamma
            pl.BlockSpec((1, d_model), lambda b: (0, 0)),               # ln1 beta
            pl.BlockSpec((d_model, d_inner), lambda b: (0, 0)),         # ffn w1
            pl.BlockSpec((1, d_inner), lambda b: (0, 0)),               # ffn b1
            pl.BlockSpec((d_inner, d_model), lambda b: (0, 0)),         # ffn w2
            pl.BlockSpec((1, d_model), lambda b: (0, 0)),               # ffn b2
            pl.BlockSpec((1, d_model), lambda b: (0, 0)),               # ln2 gamma
            pl.BlockSpec((1, d_model), lambda b: (0, 0)),               # ln2 beta
        ],
        out_specs=pl.BlockSpec((1, qlen, d_model), lambda b: (b, 0, 0)),
        scratch_shapes=[pltpu.VMEM((qlen, H), jnp.bfloat16)],           # per-head acc
        compiler_params=pltpu.CompilerParams(
            dimension_semantics=("parallel",),
            vmem_limit_bytes=48 * 1024 * 1024),
    )(h, lp["wqkv"], lp["wo"], lp["rwbx"], kr, bkr, pad,
      lp["ln1_g"], lp["ln1_b"], lp["w1"], lp["b1"], lp["w2"], lp["b2"],
      lp["ln2_g"], lp["ln2_b"])


def project_pos_keys(pos_emb_bf16, wr_all, rrb_exp_all):
    # kr and the batch-independent rrb_s.kr^T bias for all layers in one call.
    n_layer, d_model, H = wr_all.shape
    n_head = rrb_exp_all.shape[1]
    plen = pos_emb_bf16.shape[0]
    return pl.pallas_call(
        _kr_kernel,
        out_shape=(jax.ShapeDtypeStruct((n_layer, plen, H), jnp.bfloat16),
                   jax.ShapeDtypeStruct((n_layer, n_head, plen), jnp.float32)),
        grid=(n_layer,),
        in_specs=[pl.BlockSpec((plen, d_model), lambda l: (0, 0)),
                  pl.BlockSpec((1, d_model, H), lambda l: (l, 0, 0)),
                  pl.BlockSpec((1, n_head, H), lambda l: (l, 0, 0))],
        out_specs=(pl.BlockSpec((1, plen, H), lambda l: (l, 0, 0)),
                   pl.BlockSpec((1, n_head, plen), lambda l: (l, 0, 0))),
        compiler_params=pltpu.CompilerParams(dimension_semantics=("parallel",)),
    )(pos_emb_bf16, wr_all, rrb_exp_all)


def classification_head(x, fp):
    bsz, d_model = x.shape
    n_labels = fp["wl"].shape[1]
    return pl.pallas_call(
        _head_kernel,
        out_shape=jax.ShapeDtypeStruct((bsz, n_labels), jnp.float32),
        grid=(1,),
        in_specs=[pl.BlockSpec((bsz, d_model), lambda i: (0, 0)),
                  pl.BlockSpec((d_model, d_model), lambda i: (0, 0)),
                  pl.BlockSpec((1, d_model), lambda i: (0, 0)),
                  pl.BlockSpec((d_model, n_labels), lambda i: (0, 0)),
                  pl.BlockSpec((1, n_labels), lambda i: (0, 0))],
        out_specs=pl.BlockSpec((bsz, n_labels), lambda i: (0, 0)),
    )(x, fp["ws"], fp["bs"], fp["wl"], fp["bl"])


# ----------------------------------------------------------------------------- #
# Plain-JAX glue (embedding gather, positional encoding, parameter fusion)
# ----------------------------------------------------------------------------- #
def relative_positional_encoding(qlen, klen, d_model):
    freq_seq = jnp.arange(0, d_model, 2.0, dtype=jnp.float32)
    inv_freq = 1.0 / (10000.0 ** (freq_seq / d_model))
    pos_seq = jnp.arange(klen, -qlen, -1.0, dtype=jnp.float32)      # len = klen+qlen
    sinusoid = pos_seq[:, None] * inv_freq[None, :]
    return jnp.concatenate([jnp.sin(sinusoid), jnp.cos(sinusoid)], axis=-1)


def prepare_fused_params(params):
    """Fuse per-head projections, fold the softmax scale into q/rwb/rrb and cast
    weights to bf16 (f32 accumulation in-kernel)."""
    n_head, d_model, d_head = params["layers"][0]["wq"].shape
    H = n_head * d_head
    scale = 1.0 / math.sqrt(d_head)
    fused = {
        "ws": params["ws"].astype(jnp.bfloat16), "bs": params["bs"],
        "wl": params["wl"].astype(jnp.bfloat16), "bl": params["bl"],
        "wr_all": jnp.stack([lp["wr"] for lp in params["layers"]],
                            axis=0).astype(jnp.bfloat16),
        "layers": [],
    }

    def _fuse(w):   # (n_head, d_model, d_head) -> (d_model, n_head*d_head)
        return jnp.transpose(w, (1, 0, 2)).reshape(d_model, H)

    eye = jnp.eye(n_head, dtype=jnp.float32)

    def _block_diag(bias):   # (n_head, d_head) -> (n_head, H) block diagonal
        return (eye[:, :, None] * bias[None, :, :]).reshape(n_head, H)

    rrb_exp = []
    for lp in params["layers"]:
        # Softmax scale folded into the q projection and the relative biases.
        wqkv = jnp.concatenate([_fuse(lp["wq"]) * scale, _fuse(lp["wk"]),
                                _fuse(lp["wv"])], axis=1).astype(jnp.bfloat16)
        rwb_s = lp["r_w_bias"].reshape(n_head, d_head) * scale
        rrb_s = lp["r_r_bias"].reshape(n_head, d_head) * scale
        rrb_exp.append(_block_diag(rrb_s))
        fused["layers"].append({
            "wqkv": wqkv,                                            # (d_model, 3H)
            "wo": lp["wo"].reshape(H, d_model).astype(jnp.bfloat16),
            "rwbx": _block_diag(rwb_s).astype(jnp.bfloat16),         # (n_head, H)
            "ln1_g": lp["ln1_g"], "ln1_b": lp["ln1_b"],
            "w1": lp["w1"].astype(jnp.bfloat16), "b1": lp["b1"],
            "w2": lp["w2"].astype(jnp.bfloat16), "b2": lp["b2"],
            "ln2_g": lp["ln2_g"], "ln2_b": lp["ln2_b"],
        })
    fused["rrb_exp_all"] = jnp.stack(rrb_exp, axis=0).astype(jnp.bfloat16)
    return fused


# ----------------------------------------------------------------------------- #
# Full forward (Pallas path)
# ----------------------------------------------------------------------------- #
def detox_xlnet_forward(params, tox, ntox, attn_mask, *, use_roll=True):
    # The reference module also runs the encoder over the non-toxic ids, but only
    # the toxic stream reaches sequence_summary/logits_proj, so the ntox stream is
    # dropped here (identical output, half the encoder work).
    del ntox
    bsz, qlen = tox.shape
    klen = qlen                                      # mlen = 0
    d_model = params["emb"].shape[1]
    fp = prepare_fused_params(params)

    h = params["emb"][tox].astype(jnp.bfloat16)                       # (bsz, q, d)
    pad = (1.0 - attn_mask).astype(jnp.float32).reshape(bsz, 1, klen)

    pos_emb = relative_positional_encoding(qlen, klen, d_model).astype(jnp.bfloat16)
    kr_all, bkr_all = project_pos_keys(pos_emb, fp["wr_all"], fp["rrb_exp_all"])

    for li, lp in enumerate(fp["layers"]):
        h = xlnet_layer(h, lp, kr_all[li], bkr_all[li], pad, use_roll)

    last = h[:, -1, :]                               # sequence_summary: "last" (toxic)
    return classification_head(last, fp)


# ----------------------------------------------------------------------------- #
# Pure-JAX reference (uses the original, un-fused parameter layout)
# ----------------------------------------------------------------------------- #
def _layernorm_ref(x, g, b):
    mu = x.mean(-1, keepdims=True)
    var = ((x - mu) ** 2).mean(-1, keepdims=True)
    return (x - mu) * lax.rsqrt(var + LN_EPS) * g + b


def build_non_tgt_mask(attn_mask, qlen):
    bsz = attn_mask.shape[0]
    input_mask = 1.0 - attn_mask
    data_mask = jnp.broadcast_to(input_mask[:, None, :], (bsz, qlen, qlen))
    attn_mask_f = (data_mask > 0).astype(jnp.float32)
    eye = jnp.eye(qlen, dtype=jnp.float32)
    return ((attn_mask_f - eye[None]) > 0).astype(jnp.float32)


def shift_rel_keys(kr_flat, qlen, klen, n_head, d_head):
    plen = kr_flat.shape[0]
    kr = kr_flat.reshape(plen, n_head, d_head)
    idx = klen - jnp.arange(qlen)[:, None] + jnp.arange(klen)[None, :]
    krs = kr[idx]
    return jnp.transpose(krs, (2, 0, 1, 3))


def detox_xlnet_forward_ref(params, tox, ntox, attn_mask):
    del ntox
    bsz, qlen = tox.shape
    klen = qlen
    d_model = params["emb"].shape[1]
    n_head, _, d_head = params["layers"][0]["wq"].shape
    scale = 1.0 / math.sqrt(d_head)

    h = params["emb"][tox]
    pos_emb = relative_positional_encoding(qlen, klen, d_model)
    mask = build_non_tgt_mask(attn_mask, qlen)
    for lp in params["layers"]:
        kr = pos_emb @ lp["wr"]
        krs = shift_rel_keys(kr, qlen, klen, n_head, d_head)
        q = jnp.einsum("bqm,nmd->bnqd", h, lp["wq"])
        k = jnp.einsum("bqm,nmd->bnqd", h, lp["wk"])
        v = jnp.einsum("bqm,nmd->bnqd", h, lp["wv"])
        rwb = lp["r_w_bias"][None, :, :, :]
        rrb = lp["r_r_bias"][None, :, :, :]
        ac = jnp.einsum("bnqd,bnkd->bnqk", q + rwb, k)
        bd = jnp.einsum("bnqd,nqkd->bnqk", q + rrb, krs)
        score = (ac + bd) * scale - MASK_VALUE * mask[:, None]
        p = jax.nn.softmax(score, axis=-1)
        av = jnp.einsum("bnqk,bnkd->bnqd", p, v)
        attn_out = jnp.einsum("bnqd,ndm->bqm", av, lp["wo"])
        h = _layernorm_ref(attn_out + h, lp["ln1_g"][0], lp["ln1_b"][0])
        y = _gelu_tanh(h @ lp["w1"] + lp["b1"][0])
        y = y @ lp["w2"] + lp["b2"][0]
        h = _layernorm_ref(y + h, lp["ln2_g"][0], lp["ln2_b"][0])
    last = h[:, -1, :]
    s = jnp.tanh(last @ params["ws"] + params["bs"][0])
    return s @ params["wl"] + params["bl"][0]


# ----------------------------------------------------------------------------- #
# Deterministic parameter initialization (synthetic; no checkpoint loading)
# ----------------------------------------------------------------------------- #
def init_params(key, vocab, d_model, n_head, d_head, d_inner, n_layer, n_labels):
    keys = jax.random.split(key, 4 + n_layer)

    def nrm(k, shape, s=0.02):
        return (s * jax.random.normal(k, shape)).astype(jnp.float32)

    params = {
        "emb": nrm(keys[0], (vocab, d_model)),
        "ws": nrm(keys[1], (d_model, d_model)),        # sequence_summary.summary
        "bs": jnp.zeros((1, d_model), jnp.float32),
        "wl": nrm(keys[2], (d_model, n_labels)),       # logits_proj
        "bl": jnp.zeros((1, n_labels), jnp.float32),
        "layers": [],
    }
    for l in range(n_layer):
        lk = jax.random.split(keys[4 + l], 9)
        params["layers"].append({
            "wq": nrm(lk[0], (n_head, d_model, d_head)),
            "wk": nrm(lk[1], (n_head, d_model, d_head)),
            "wv": nrm(lk[2], (n_head, d_model, d_head)),
            "wo": nrm(lk[3], (n_head, d_head, d_model)),
            "wr": nrm(lk[4], (d_model, n_head * d_head)),
            "r_w_bias": nrm(lk[5], (n_head, 1, d_head)),
            "r_r_bias": nrm(lk[6], (n_head, 1, d_head)),
            "ln1_g": jnp.ones((1, d_model), jnp.float32),
            "ln1_b": jnp.zeros((1, d_model), jnp.float32),
            "w1": nrm(lk[7], (d_model, d_inner)),
            "b1": jnp.zeros((1, d_inner), jnp.float32),
            "w2": nrm(lk[8], (d_inner, d_model)),
            "b2": jnp.zeros((1, d_model), jnp.float32),
            "ln2_g": jnp.ones((1, d_model), jnp.float32),
            "ln2_b": jnp.zeros((1, d_model), jnp.float32),
        })
    return params


if __name__ == "__main__":
    vocab, d_model, n_head, d_head, d_inner, n_layer, n_labels = 96, 128, 4, 32, 256, 2, 2
    bsz, qlen = 2, 64

    key = jax.random.PRNGKey(0)
    pkey, k1, k2 = jax.random.split(key, 3)
    params = init_params(pkey, vocab, d_model, n_head, d_head, d_inner, n_layer, n_labels)

    tox = jax.random.randint(k1, (bsz, qlen), 0, vocab, dtype=jnp.int32)
    ntox = jax.random.randint(k2, (bsz, qlen), 0, vocab, dtype=jnp.int32)
    attn_mask = jnp.ones((bsz, qlen), jnp.float32).at[1, qlen - 5:].set(0.0)

    # One-time eager check of the strided-roll rel_shift convention (falls back to
    # the sliced shift if it ever mismatches on this hardware / JAX version).
    use_roll = rel_shift_roll_ok(qlen, qlen)

    fwd = jax.jit(functools.partial(detox_xlnet_forward, use_roll=use_roll))
    logits = fwd(params, tox, ntox, attn_mask)
    logits = jax.block_until_ready(logits)

    ref = detox_xlnet_forward_ref(params, tox, ntox, attn_mask)
    assert logits.shape == (bsz, n_labels)
    assert bool(jnp.all(jnp.isfinite(logits)))
    assert bool(jnp.allclose(logits, ref, atol=3e-2, rtol=3e-2)), (logits, ref)
    print("KERNEL_OK")
</pallas_src>

<mosaic_0001>
module attributes {stable_mosaic.version = 11 : i64} {
  func.func @kern(%arg0: memref<64x128xf32, #tpu.memory_space<vmem>>, %arg1: memref<64x64xf32, #tpu.memory_space<vmem>>) attributes {dimension_semantics = [], scalar_prefetch = 0 : i64, scratch_operands = 0 : i64, tpu.core_type = #tpu.core_type<tc>} {
    %c0 = arith.constant 0 : index
    %c0_0 = arith.constant 0 : index
    %0 = vector.load %arg0[%c0, %c0_0] : memref<64x128xf32, #tpu.memory_space<vmem>>, vector<64x128xf32>
    %c64_i32 = arith.constant 64 : i32
    %1 = tpu.dynamic_rotate %0 by %c64_i32 dim 1 {stride = 1 : si32, stride_dimension = 0 : si32} : vector<64x128xf32>, i32 -> vector<64x128xf32>
    %2 = vector.extract_strided_slice %1 {offsets = [0, 0], sizes = [64, 64], strides = [1, 1]} : vector<64x128xf32> to vector<64x64xf32>
    %c0_1 = arith.constant 0 : index
    %c0_2 = arith.constant 0 : index
    %3 = vector.load %arg1[%c0_1, %c0_2] : memref<64x64xf32, #tpu.memory_space<vmem>>, vector<64x64xf32>
    tpu.vector_store %arg1[%c0_1, %c0_2], %2 {strides = array<i32>} : memref<64x64xf32, #tpu.memory_space<vmem>>, vector<64x64xf32>,
    return
  }
}

module attributes {stable_mosaic.version = 11 : i64} {
  func.func @_kr_kernel(%arg0: i32, %arg1: memref<128x128xbf16, #tpu.memory_space<vmem>>, %arg2: memref<1x128x128xbf16, #tpu.memory_space<vmem>>, %arg3: memref<1x4x128xbf16, #tpu.memory_space<vmem>>, %arg4: memref<1x128x128xbf16, #tpu.memory_space<vmem>>, %arg5: memref<1x4x128xf32, #tpu.memory_space<vmem>>) attributes {dimension_semantics = [#tpu.dimension_semantics<parallel>], iteration_bounds = array<i64: 2>, scalar_prefetch = 0 : i64, scratch_operands = 0 : i64, tpu.core_type = #tpu.core_type<tc>, window_params = [{pipeline_mode = #tpu.pipeline_mode<synchronous>, transform_indices = @transform_0, window_bounds = array<i64: 128, 128>}, {transform_indices = @transform_1, window_bounds = array<i64: 1, 128, 128>}, {transform_indices = @transform_2, window_bounds = array<i64: 1, 4, 128>}, {transform_indices = @transform_3, window_bounds = array<i64: 1, 128, 128>}, {transform_indices = @transform_4, window_bounds = array<i64: 1, 4, 128>}]} {
    %c0 = arith.constant 0 : index
    %c0_0 = arith.constant 0 : index
    %0 = vector.load %arg1[%c0, %c0_0] : memref<128x128xbf16, #tpu.memory_space<vmem>>, vector<128x128xbf16>
    %c0_1 = arith.constant 0 : index
    %c0_2 = arith.constant 0 : index
    %c0_3 = arith.constant 0 : index
    %1 = vector.load %arg2[%c0_1, %c0_2, %c0_3] : memref<1x128x128xbf16, #tpu.memory_space<vmem>>, vector<1x128x128xbf16>
    %2 = vector.shape_cast %1 : vector<1x128x128xbf16> to vector<128x128xbf16>
    %cst = arith.constant dense<0.000000e+00> : vector<128x128xf32>
    %3 = tpu.matmul %0, %2, %cst {dimension_numbers = #tpu.dot_dimension_numbers<[1], [0], [0], [1], [0, 0, 1, 1], [], []>} : vector<128x128xbf16>, vector<128x128xbf16>, vector<128x128xf32> -> vector<128x128xf32>
    %4 = arith.truncf %3 : vector<128x128xf32> to vector<128x128xbf16>
    %c0_4 = arith.constant 0 : index
    %c0_5 = arith.constant 0 : index
    %c0_6 = arith.constant 0 : index
    %5 = vector.load %arg4[%c0_4, %c0_5, %c0_6] : memref<1x128x128xbf16, #tpu.memory_space<vmem>>, vector<1x128x128xbf16>
    %6 = vector.shape_cast %5 : vector<1x128x128xbf16> to vector<128x128xbf16>
    %7 = vector.shape_cast %4 : vector<128x128xbf16> to vector<1x128x128xbf16>
    tpu.vector_store %arg4[%c0_4, %c0_5, %c0_6], %7 {strides = array<i32>} : memref<1x128x128xbf16, #tpu.memory_space<vmem>>, vector<1x128x128xbf16>,
    %c0_7 = arith.constant 0 : index
    %c0_8 = arith.constant 0 : index
    %c0_9 = arith.constant 0 : index
    %8 = vector.load %arg3[%c0_7, %c0_8, %c0_9] : memref<1x4x128xbf16, #tpu.memory_space<vmem>>, vector<1x4x128xbf16>
    %9 = vector.shape_cast %8 : vector<1x4x128xbf16> to vector<4x128xbf16>
    %cst_10 = arith.constant dense<0.000000e+00> : vector<4x128xf32>
    %10 = tpu.matmul %9, %4, %cst_10 {dimension_numbers = #tpu.dot_dimension_numbers<[1], [1], [0], [0], [0, 0, 1, 0], [], []>} : vector<4x128xbf16>, vector<128x128xbf16>, vector<4x128xf32> -> vector<4x128xf32>
    %c0_11 = arith.constant 0 : index
    %c0_12 = arith.constant 0 : index
    %c0_13 = arith.constant 0 : index
    %11 = vector.load %arg5[%c0_11, %c0_12, %c0_13] : memref<1x4x128xf32, #tpu.memory_space<vmem>>, vector<1x4x128xf32>
    %12 = vector.shape_cast %11 : vector<1x4x128xf32> to vector<4x128xf32>
    %13 = vector.shape_cast %10 : vector<4x128xf32> to vector<1x4x128xf32>
    tpu.vector_store %arg5[%c0_11, %c0_12, %c0_13], %13 {strides = array<i32>} : memref<1x4x128xf32, #tpu.memory_space<vmem>>, vector<1x4x128xf32>,
    return
  }
  func.func @transform_0(%arg0: i32) -> (i32, i32) {
    %c0_i32 = arith.constant 0 : i32
    %c0_i32_0 = arith.constant 0 : i32
    %c0_i32_1 = arith.constant 0 : i32
    return %c0_i32, %c0_i32_0 : i32, i32
  }
  func.func @transform_1(%arg0: i32) -> (i32, i32, i32) {
    %c0_i32 = arith.constant 0 : i32
    %c0_i32_0 = arith.constant 0 : i32
    %c0_i32_1 = arith.constant 0 : i32
    return %arg0, %c0_i32, %c0_i32_0 : i32, i32, i32
  }
  func.func @transform_2(%arg0: i32) -> (i32, i32, i32) {
    %c0_i32 = arith.constant 0 : i32
    %c0_i32_0 = arith.constant 0 : i32
    %c0_i32_1 = arith.constant 0 : i32
    return %arg0, %c0_i32, %c0_i32_0 : i32, i32, i32
  }
  func.func @transform_3(%arg0: i32) -> (i32, i32, i32) {
    %c0_i32 = arith.constant 0 : i32
    %c0_i32_0 = arith.constant 0 : i32
    %c0_i32_1 = arith.constant 0 : i32
    return %arg0, %c0_i32, %c0_i32_0 : i32, i32, i32
  }
  func.func @transform_4(%arg0: i32) -> (i32, i32, i32) {
    %c0_i32 = arith.constant 0 : i32
    %c0_i32_0 = arith.constant 0 : i32
    %c0_i32_1 = arith.constant 0 : i32
    return %arg0, %c0_i32, %c0_i32_0 : i32, i32, i32
  }
}

module attributes {stable_mosaic.version = 11 : i64} {
  func.func @_xlnet_layer_kernel(%arg0: i32, %arg1: memref<1x64x128xbf16, #tpu.memory_space<vmem>>, %arg2: memref<128x384xbf16, #tpu.memory_space<vmem>>, %arg3: memref<128x128xbf16, #tpu.memory_space<vmem>>, %arg4: memref<4x128xbf16, #tpu.memory_space<vmem>>, %arg5: memref<128x128xbf16, #tpu.memory_space<vmem>>, %arg6: memref<4x128xf32, #tpu.memory_space<vmem>>, %arg7: memref<1x1x64xf32, #tpu.memory_space<vmem>>, %arg8: memref<1x128xf32, #tpu.memory_space<vmem>>, %arg9: memref<1x128xf32, #tpu.memory_space<vmem>>, %arg10: memref<128x256xbf16, #tpu.memory_space<vmem>>, %arg11: memref<1x256xf32, #tpu.memory_space<vmem>>, %arg12: memref<256x128xbf16, #tpu.memory_space<vmem>>, %arg13: memref<1x128xf32, #tpu.memory_space<vmem>>, %arg14: memref<1x128xf32, #tpu.memory_space<vmem>>, %arg15: memref<1x128xf32, #tpu.memory_space<vmem>>, %arg16: memref<1x64x128xbf16, #tpu.memory_space<vmem>>, %arg17: memref<64x128xbf16, #tpu.memory_space<vmem>>) attributes {dimension_semantics = [#tpu.dimension_semantics<parallel>], iteration_bounds = array<i64: 2>, scalar_prefetch = 0 : i64, scratch_operands = 1 : i64, tpu.core_type = #tpu.core_type<tc>, window_params = [{transform_indices = @transform_0, window_bounds = array<i64: 1, 64, 128>}, {pipeline_mode = #tpu.pipeline_mode<synchronous>, transform_indices = @transform_1, window_bounds = array<i64: 128, 384>}, {pipeline_mode = #tpu.pipeline_mode<synchronous>, transform_indices = @transform_2, window_bounds = array<i64: 128, 128>}, {pipeline_mode = #tpu.pipeline_mode<synchronous>, transform_indices = @transform_3, window_bounds = array<i64: 4, 128>}, {pipeline_mode = #tpu.pipeline_mode<synchronous>, transform_indices = @transform_4, window_bounds = array<i64: 128, 128>}, {pipeline_mode = #tpu.pipeline_mode<synchronous>, transform_indices = @transform_5, window_bounds = array<i64: 4, 128>}, {transform_indices = @transform_6, window_bounds = array<i64: 1, 1, 64>}, {pipeline_mode = #tpu.pipeline_mode<synchronous>, transform_indices = @transform_7, window_bounds = array<i64: 1, 128>}, {pipeline_mode = #tpu.pipeline_mode<synchronous>, transform_indices = @transform_8, window_bounds = array<i64: 1, 128>}, {pipeline_mode = #tpu.pipeline_mode<synchronous>, transform_indices = @transform_9, window_bounds = array<i64: 128, 256>}, {pipeline_mode = #tpu.pipeline_mode<synchronous>, transform_indices = @transform_10, window_bounds = array<i64: 1, 256>}, {pipeline_mode = #tpu.pipeline_mode<synchronous>, transform_indices = @transform_11, window_bounds = array<i64: 256, 128>}, {pipeline_mode = #tpu.pipeline_mode<synchronous>, transform_indices = @transform_12, window_bounds = array<i64: 1, 128>}, {pipeline_mode = #tpu.pipeline_mode<synchronous>, transform_indices = @transform_13, window_bounds = array<i64: 1, 128>}, {pipeline_mode = #tpu.pipeline_mode<synchronous>, transform_indices = @transform_14, window_bounds = array<i64: 1, 128>}, {transform_indices = @transform_15, window_bounds = array<i64: 1, 64, 128>}]} {
    %c0 = arith.constant 0 : index
    %c0_0 = arith.constant 0 : index
    %c0_1 = arith.constant 0 : index
    %0 = vector.load %arg1[%c0, %c0_0, %c0_1] : memref<1x64x128xbf16, #tpu.memory_space<vmem>>, vector<1x64x128xbf16>
    %1 = vector.shape_cast %0 : vector<1x64x128xbf16> to vector<64x128xbf16>
    %c0_2 = arith.constant 0 : index
    %c0_3 = arith.constant 0 : index
    %2 = vector.load %arg2[%c0_2, %c0_3] : memref<128x384xbf16, #tpu.memory_space<vmem>>, vector<128x384xbf16>
    %cst = arith.constant dense<0.000000e+00> : vector<64x384xf32>
    %3 = tpu.matmul %1, %2, %cst {dimension_numbers = #tpu.dot_dimension_numbers<[1], [0], [0], [1], [0, 0, 1, 1], [], []>} : vector<64x128xbf16>, vector<128x384xbf16>, vector<64x384xf32> -> vector<64x384xf32>
    %4 = arith.truncf %3 : vector<64x384xf32> to vector<64x384xbf16>
    %c0_4 = arith.constant 0 : index
    %c0_5 = arith.constant 0 : index
    %5 = vector.load %arg4[%c0_4, %c0_5] : memref<4x128xbf16, #tpu.memory_space<vmem>>, vector<4x128xbf16>
    %6 = vector.extract_strided_slice %4 {offsets = [0, 128], sizes = [64, 128], strides = [1, 1]} : vector<64x384xbf16> to vector<64x128xbf16>
    %cst_6 = arith.constant dense<0.000000e+00> : vector<4x64xf32>
    %7 = tpu.matmul %5, %6, %cst_6 {dimension_numbers = #tpu.dot_dimension_numbers<[1], [1], [0], [0], [0, 0, 1, 0], [], []>} : vector<4x128xbf16>, vector<64x128xbf16>, vector<4x64xf32> -> vector<4x64xf32>
    %c0_7 = arith.constant 0 : index
    %c0_8 = arith.constant 0 : index
    %c0_9 = arith.constant 0 : index
    %8 = vector.load %arg7[%c0_7, %c0_8, %c0_9] : memref<1x1x64xf32, #tpu.memory_space<vmem>>, vector<1x1x64xf32>
    %9 = vector.shape_cast %8 : vector<1x1x64xf32> to vector<1x64xf32>
    %10 = tpu.iota {dimensions = array<i32: 0>} : vector<64x64xi32>
    %11 = tpu.iota {dimensions = array<i32: 1>} : vector<64x64xi32>
    %12 = arith.cmpi eq, %10, %11 : vector<64x64xi32>
    %cst_10 = arith.constant 1.000000e+30 : f32
    %13 = vector.broadcast %cst_10 : f32 to vector<1x64xf32>
    %14 = arith.mulf %9, %13 : vector<1x64xf32>
    %cst_11 = arith.constant 0.000000e+00 : f32
    %15 = vector.broadcast %cst_11 : f32 to vector<64x64xf32>
    %16 = vector.shape_cast %14 : vector<1x64xf32> to vector<1x64xf32>
    %17 = vector.broadcast %16 : vector<1x64xf32> to vector<64x64xf32>
    %18 = arith.select %12, %15, %17 : vector<64x64xi1>, vector<64x64xf32>
    %c0_12 = arith.constant 0 : index
    %c0_13 = arith.constant 0 : index
    %19 = vector.load %arg5[%c0_12, %c0_13] : memref<128x128xbf16, #tpu.memory_space<vmem>>, vector<128x128xbf16>
    %20 = vector.extract_strided_slice %4 {offsets = [0, 0], sizes = [64, 32], strides = [1, 1]} : vector<64x384xbf16> to vector<64x32xbf16>
    %21 = vector.extract_strided_slice %4 {offsets = [0, 128], sizes = [64, 32], strides = [1, 1]} : vector<64x384xbf16> to vector<64x32xbf16>
    %22 = vector.extract_strided_slice %4 {offsets = [0, 256], sizes = [64, 32], strides = [1, 1]} : vector<64x384xbf16> to vector<64x32xbf16>
    %23 = vector.extract_strided_slice %19 {offsets = [0, 0], sizes = [128, 32], strides = [1, 1]} : vector<128x128xbf16> to vector<128x32xbf16>
    %24 = tpu.concatenate %21, %23 in 0 : vector<64x32xbf16>, vector<128x32xbf16> -> vector<192x32xbf16>
    %cst_14 = arith.constant dense<0.000000e+00> : vector<64x192xf32>
    %25 = tpu.matmul %20, %24, %cst_14 {dimension_numbers = #tpu.dot_dimension_numbers<[1], [1], [0], [0], [0, 0, 1, 0], [], []>} : vector<64x32xbf16>, vector<192x32xbf16>, vector<64x192xf32> -> vector<64x192xf32>
    %26 = vector.extract_strided_slice %25 {offsets = [0, 0], sizes = [64, 64], strides = [1, 1]} : vector<64x192xf32> to vector<64x64xf32>
    %27 = vector.extract_strided_slice %7 {offsets = [0, 0], sizes = [1, 64], strides = [1, 1]} : vector<4x64xf32> to vector<1x64xf32>
    %28 = vector.broadcast %27 : vector<1x64xf32> to vector<64x64xf32>
    %29 = arith.addf %26, %28 : vector<64x64xf32>
    %30 = vector.extract_strided_slice %25 {offsets = [0, 64], sizes = [64, 128], strides = [1, 1]} : vector<64x192xf32> to vector<64x128xf32>
    %c0_15 = arith.constant 0 : index
    %c0_16 = arith.constant 0 : index
    %31 = vector.load %arg6[%c0_15, %c0_16] : memref<4x128xf32, #tpu.memory_space<vmem>>, vector<1x128xf32>
    %32 = vector.broadcast %31 : vector<1x128xf32> to vector<64x128xf32>
    %33 = arith.addf %30, %32 : vector<64x128xf32>
    %34 = vector.extract_strided_slice %33 {offsets = [0, 64], sizes = [1, 64], strides = [1, 1]} : vector<64x128xf32> to vector<1x64xf32>
    %35 = vector.extract_strided_slice %33 {offsets = [1, 63], sizes = [1, 64], strides = [1, 1]} : vector<64x128xf32> to vector<1x64xf32>
    %36 = vector.extract_strided_slice %33 {offsets = [2, 62], sizes = [1, 64], strides = [1, 1]} : vector<64x128xf32> to vector<1x64xf32>
    %37 = vector.extract_strided_slice %33 {offsets = [3, 61], sizes = [1, 64], strides = [1, 1]} : vector<64x128xf32> to vector<1x64xf32>
    %38 = vector.extract_strided_slice %33 {offsets = [4, 60], sizes = [1, 64], strides = [1, 1]} : vector<64x128xf32> to vector<1x64xf32>
    %39 = vector.extract_strided_slice %33 {offsets = [5, 59], sizes = [1, 64], strides = [1, 1]} : vector<64x128xf32> to vector<1x64xf32>
    %40 = vector.extract_strided_slice %33 {offsets = [6, 58], sizes = [1, 64], strides = [1, 1]} : vector<64x128xf32> to vector<1x64xf32>
    %41 = vector.extract_strided_slice %33 {offsets = [7, 57], sizes = [1, 64], strides = [1, 1]} : vector<64x128xf32> to vector<1x64xf32>
    %42 = vector.extract_strided_slice %33 {offsets = [8, 56], sizes = [1, 64], strides = [1, 1]} : vector<64x128xf32> to vector<1x64xf32>
    %43 = vector.extract_strided_slice %33 {offsets = [9, 55], sizes = [1, 64], strides = [1, 1]} : vector<64x128xf32> to vector<1x64xf32>
    %44 = vector.extract_strided_slice %33 {offsets = [10, 54], sizes = [1, 64], strides = [1, 1]} : vector<64x128xf32> to vector<1x64xf32>
    %45 = vector.extract_strided_slice %33 {offsets = [11, 53], sizes = [1, 64], strides = [1, 1]} : vector<64x128xf32> to vector<1x64xf32>
    %46 = vector.extract_strided_slice %33 {offsets = [12, 52], sizes = [1, 64], strides = [1, 1]} : vector<64x128xf32> to vector<1x64xf32>
    %47 = vector.extract_strided_slice %33 {offsets = [13, 51], sizes = [1, 64], strides = [1, 1]} : vector<64x128xf32> to vector<1x64xf32>
    %48 = vector.extract_strided_slice %33 {offsets = [14, 50], sizes = [1, 64], strides = [1, 1]} : vector<64x128xf32> to vector<1x64xf32>
    %49 = vector.extract_strided_slice %33 {offsets = [15, 49], sizes = [1, 64], strides = [1, 1]} : vector<64x128xf32> to vector<1x64xf32>
    %50 = vector.extract_strided_slice %33 {offsets = [16, 48], sizes = [1, 64], strides = [1, 1]} : vector<64x128xf32> to vector<1x64xf32>
    %51 = vector.extract_strided_slice %33 {offsets = [17, 47], sizes = [1, 64], strides = [1, 1]} : vector<64x128xf32> to vector<1x64xf32>
    %52 = vector.extract_strided_slice %33 {offsets = [18, 46], sizes = [1, 64], strides = [1, 1]} : vector<64x128xf32> to vector<1x64xf32>
    %53 = vector.extract_strided_slice %33 {offsets = [19, 45], sizes = [1, 64], strides = [1, 1]} : vector<64x128xf32> to vector<1x64xf32>
    %54 = vector.extract_strided_slice %33 {offsets = [20, 44], sizes = [1, 64], strides = [1, 1]} : vector<64x128xf32> to vector<1x64xf32>
    %55 = vector.extract_strided_slice %33 {offsets = [21, 43], sizes = [1, 64], strides = [1, 1]} : vector<64x128xf32> to vector<1x64xf32>
    %56 = vector.extract_strided_slice %33 {offsets = [22, 42], sizes = [1, 64], strides = [1, 1]} : vector<64x128xf32> to vector<1x64xf32>
    %57 = vector.extract_strided_slice %33 {offsets = [23, 41], sizes = [1, 64], strides = [1, 1]} : vector<64x128xf32> to vector<1x64xf32>
    %58 = vector.extract_strided_slice %33 {offsets = [24, 40], sizes = [1, 64], strides = [1, 1]} : vector<64x128xf32> to vector<1x64xf32>
    %59 = vector.extract_strided_slice %33 {offsets = [25, 39], sizes = [1, 64], strides = [1, 1]} : vector<64x128xf32> to vector<1x64xf32>
    %60 = vector.extract_strided_slice %33 {offsets = [26, 38], sizes = [1, 64], strides = [1, 1]} : vector<64x128xf32> to vector<1x64xf32>
    %61 = vector.extract_strided_slice %33 {offsets = [27, 37], sizes = [1, 64], strides = [1, 1]} : vector<64x128xf32> to vector<1x64xf32>
    %62 = vector.extract_strided_slice %33 {offsets = [28, 36], sizes = [1, 64], strides = [1, 1]} : vector<64x128xf32> to vector<1x64xf32>
    %63 = vector.extract_strided_slice %33 {offsets = [29, 35], sizes = [1, 64], strides = [1, 1]} : vector<64x128xf32> to vector<1x64xf32>
    %64 = vector.extract_strided_slice %33 {offsets = [30, 34], sizes = [1, 64], strides = [1, 1]} : vector<64x128xf32> to vector<1x64xf32>
    %65 = vector.extract_strided_slice %33 {offsets = [31, 33], sizes = [1, 64], strides = [1, 1]} : vector<64x128xf32> to vector<1x64xf32>
    %66 = vector.extract_strided_slice %33 {offsets = [32, 32], sizes = [1, 64], strides = [1, 1]} : vector<64x128xf32> to vector<1x64xf32>
    %67 = vector.extract_strided_slice %33 {offsets = [33, 31], sizes = [1, 64], strides = [1, 1]} : vector<64x128xf32> to vector<1x64xf32>
    %68 = vector.extract_strided_slice %33 {offsets = [34, 30], sizes = [1, 64], strides = [1, 1]} : vector<64x128xf32> to vector<1x64xf32>
    %69 = vector.extract_strided_slice %33 {offsets = [35, 29], sizes = [1, 64], strides = [1, 1]} : vector<64x128xf32> to vector<1x64xf32>
    %70 = vector.extract_strided_slice %33 {offsets = [36, 28], sizes = [1, 64], strides = [1, 1]} : vector<64x128xf32> to vector<1x64xf32>
    %71 = vector.extract_strided_slice %33 {offsets = [37, 27], sizes = [1, 64], strides = [1, 1]} : vector<64x128xf32> to vector<1x64xf32>
    %72 = vector.extract_strided_slice %33 {offsets = [38, 26], sizes = [1, 64], strides = [1, 1]} : vector<64x128xf32> to vector<1x64xf32>
    %73 = vector.extract_strided_slice %33 {offsets = [39, 25], sizes = [1, 64], strides = [1, 1]} : vector<64x128xf32> to vector<1x64xf32>
    %74 = vector.extract_strided_slice %33 {offsets = [40, 24], sizes = [1, 64], strides = [1, 1]} : vector<64x128xf32> to vector<1x64xf32>
    %75 = vector.extract_strided_slice %33 {offsets = [41, 23], sizes = [1, 64], strides = [1, 1]} : vector<64x128xf32> to vector<1x64xf32>
    %76 = vector.extract_strided_slice %33 {offsets = [42, 22], sizes = [1, 64], strides = [1, 1]} : vector<64x128xf32> to vector<1x64xf32>
    %77 = vector.extract_strided_slice %33 {offsets = [43, 21], sizes = [1, 64], strides = [1, 1]} : vector<64x128xf32> to vector<1x64xf32>
    %78 = vector.extract_strided_slice %33 {offsets = [44, 20], sizes = [1, 64], strides = [1, 1]} : vector<64x128xf32> to vector<1x64xf32>
    %79 = vector.extract_strided_slice %33 {offsets = [45, 19], sizes = [1, 64], strides = [1, 1]} : vector<64x128xf32> to vector<1x64xf32>
    %80 = vector.extract_strided_slice %33 {offsets = [46, 18], sizes = [1, 64], strides = [1, 1]} : vector<64x128xf32> to vector<1x64xf32>
    %81 = vector.extract_strided_slice %33 {offsets = [47, 17], sizes = [1, 64], strides = [1, 1]} : vector<64x128xf32> to vector<1x64xf32>
    %82 = vector.extract_strided_slice %33 {offsets = [48, 16], sizes = [1, 64], strides = [1, 1]} : vector<64x128xf32> to vector<1x64xf32>
    %83 = vector.extract_strided_slice %33 {offsets = [49, 15], sizes = [1, 64], strides = [1, 1]} : vector<64x128xf32> to vector<1x64xf32>
    %84 = vector.extract_strided_slice %33 {offsets = [50, 14], sizes = [1, 64], strides = [1, 1]} : vector<64x128xf32> to vector<1x64xf32>
    %85 = vector.extract_strided_slice %33 {offsets = [51, 13], sizes = [1, 64], strides = [1, 1]} : vector<64x128xf32> to vector<1x64xf32>
    %86 = vector.extract_strided_slice %33 {offsets = [52, 12], sizes = [1, 64], strides = [1, 1]} : vector<64x128xf32> to vector<1x64xf32>
    %87 = vector.extract_strided_slice %33 {offsets = [53, 11], sizes = [1, 64], strides = [1, 1]} : vector<64x128xf32> to vector<1x64xf32>
    %88 = vector.extract_strided_slice %33 {offsets = [54, 10], sizes = [1, 64], strides = [1, 1]} : vector<64x128xf32> to vector<1x64xf32>
    %89 = vector.extract_strided_slice %33 {offsets = [55, 9], sizes = [1, 64], strides = [1, 1]} : vector<64x128xf32> to vector<1x64xf32>
    %90 = vector.extract_strided_slice %33 {offsets = [56, 8], sizes = [1, 64], strides = [1, 1]} : vector<64x128xf32> to vector<1x64xf32>
    %91 = vector.extract_strided_slice %33 {offsets = [57, 7], sizes = [1, 64], strides = [1, 1]} : vector<64x128xf32> to vector<1x64xf32>
    %92 = vector.extract_strided_slice %33 {offsets = [58, 6], sizes = [1, 64], strides = [1, 1]} : vector<64x128xf32> to vector<1x64xf32>
    %93 = vector.extract_strided_slice %33 {offsets = [59, 5], sizes = [1, 64], strides = [1, 1]} : vector<64x128xf32> to vector<1x64xf32>
    %94 = vector.extract_strided_slice %33 {offsets = [60, 4], sizes = [1, 64], strides = [1, 1]} : vector<64x128xf32> to vector<1x64xf32>
    %95 = vector.extract_strided_slice %33 {offsets = [61, 3], sizes = [1, 64], strides = [1, 1]} : vector<64x128xf32> to vector<1x64xf32>
    %96 = vector.extract_strided_slice %33 {offsets = [62, 2], sizes = [1, 64], strides = [1, 1]} : vector<64x128xf32> to vector<1x64xf32>
    %97 = vector.extract_strided_slice %33 {offsets = [63, 1], sizes = [1, 64], strides = [1, 1]} : vector<64x128xf32> to vector<1x64xf32>
    %98 = tpu.concatenate %34, %35, %36, %37, %38, %39, %40, %41, %42, %43, %44, %45, %46, %47, %48, %49 in 0 : vector<1x64xf32>, vector<1x64xf32>, vector<1x64xf32>, vector<1x64xf32>, vector<1x64xf32>, vector<1x64xf32>, vector<1x64xf32>, vector<1x64xf32>, vector<1x64xf32>, vector<1x64xf32>, vector<1x64xf32>, vector<1x64xf32>, vector<1x64xf32>, vector<1x64xf32>, vector<1x64xf32>, vector<1x64xf32> -> vector<16x64xf32>
    %99 = tpu.concatenate %50, %51, %52, %53, %54, %55, %56, %57, %58, %59, %60, %61, %62, %63, %64, %65 in 0 : vector<1x64xf32>, vector<1x64xf32>, vector<1x64xf32>, vector<1x64xf32>, vector<1x64xf32>, vector<1x64xf32>, vector<1x64xf32>, vector<1x64xf32>, vector<1x64xf32>, vector<1x64xf32>, vector<1x64xf32>, vector<1x64xf32>, vector<1x64xf32>, vector<1x64xf32>, vector<1x64xf32>, vector<1x64xf32> -> vector<16x64xf32>
    %100 = tpu.concatenate %66, %67, %68, %69, %70, %71, %72, %73, %74, %75, %76, %77, %78, %79, %80, %81 in 0 : vector<1x64xf32>, vector<1x64xf32>, vector<1x64xf32>, vector<1x64xf32>, vector<1x64xf32>, vector<1x64xf32>, vector<1x64xf32>, vector<1x64xf32>, vector<1x64xf32>, vector<1x64xf32>, vector<1x64xf32>, vector<1x64xf32>, vector<1x64xf32>, vector<1x64xf32>, vector<1x64xf32>, vector<1x64xf32> -> vector<16x64xf32>
    %101 = tpu.concatenate %82, %83, %84, %85, %86, %87, %88, %89, %90, %91, %92, %93, %94, %95, %96, %97 in 0 : vector<1x64xf32>, vector<1x64xf32>, vector<1x64xf32>, vector<1x64xf32>, vector<1x64xf32>, vector<1x64xf32>, vector<1x64xf32>, vector<1x64xf32>, vector<1x64xf32>, vector<1x64xf32>, vector<1x64xf32>, vector<1x64xf32>, vector<1x64xf32>, vector<1x64xf32>, vector<1x64xf32>, vector<1x64xf32> -> vector<16x64xf32>
    %102 = tpu.concatenate %98, %99, %100, %101 in 0 : vector<16x64xf32>, vector<16x64xf32>, vector<16x64xf32>, vector<16x64xf32> -> vector<64x64xf32>
    %103 = arith.addf %29, %102 : vector<64x64xf32>
    %104 = arith.subf %103, %18 : vector<64x64xf32>
    %cst_17 = arith.constant dense<0xFF800000> : vector<64xf32>
    %105 = vector.multi_reduction <maximumf>, %104, %cst_17 [1] : vector<64x64xf32> to vector<64xf32>
    %106 = vector.shape_cast %105 : vector<64xf32> to vector<64x1xf32>
    %107 = vector.broadcast %106 : vector<64x1xf32> to vector<64x64xf32>
    %108 = arith.subf %104, %107 : vector<64x64xf32>
    %109 = math.exp %108 : vector<64x64xf32>
    %cst_18 = arith.constant dense<0.000000e+00> : vector<64xf32>
    %110 = vector.multi_reduction <add>, %109, %cst_18 [1] : vector<64x64xf32> to vector<64xf32>
    %111 = vector.shape_cast %110 : vector<64xf32> to vector<64x1xf32>
    %112 = tpu.reciprocal %111 {approx = true} : vector<64x1xf32> -> vector<64x1xf32>
    %113 = vector.broadcast %112 : vector<64x1xf32> to vector<64x64xf32>
    %114 = arith.mulf %109, %113 : vector<64x64xf32>
    %115 = arith.truncf %114 : vector<64x64xf32> to vector<64x64xbf16>
    %cst_19 = arith.constant dense<0.000000e+00> : vector<64x32xf32>
    %116 = tpu.matmul %115, %22, %cst_19 {dimension_numbers = #tpu.dot_dimension_numbers<[1], [0], [0], [1], [0, 0, 1, 1], [], []>} : vector<64x64xbf16>, vector<64x32xbf16>, vector<64x32xf32> -> vector<64x32xf32>
    %117 = arith.truncf %116 : vector<64x32xf32> to vector<64x32xbf16>
    %c0_20 = arith.constant 0 : index
    %c0_21 = arith.constant 0 : index
    %118 = vector.load %arg17[%c0_20, %c0_21] : memref<64x128xbf16, #tpu.memory_space<vmem>>, vector<64x32xbf16>
    tpu.vector_store %arg17[%c0_20, %c0_21], %117 {strides = array<i32>} : memref<64x128xbf16, #tpu.memory_space<vmem>>, vector<64x32xbf16>,
    %119 = vector.extract_strided_slice %4 {offsets = [0, 32], sizes = [64, 32], strides = [1, 1]} : vector<64x384xbf16> to vector<64x32xbf16>
    %120 = vector.extract_strided_slice %4 {offsets = [0, 160], sizes = [64, 32], strides = [1, 1]} : vector<64x384xbf16> to vector<64x32xbf16>
    %121 = vector.extract_strided_slice %4 {offsets = [0, 288], sizes = [64, 32], strides = [1, 1]} : vector<64x384xbf16> to vector<64x32xbf16>
    %122 = vector.extract_strided_slice %19 {offsets = [0, 32], sizes = [128, 32], strides = [1, 1]} : vector<128x128xbf16> to vector<128x32xbf16>
    %123 = tpu.concatenate %120, %122 in 0 : vector<64x32xbf16>, vector<128x32xbf16> -> vector<192x32xbf16>
    %cst_22 = arith.constant dense<0.000000e+00> : vector<64x192xf32>
    %124 = tpu.matmul %119, %123, %cst_22 {dimension_numbers = #tpu.dot_dimension_numbers<[1], [1], [0], [0], [0, 0, 1, 0], [], []>} : vector<64x32xbf16>, vector<192x32xbf16>, vector<64x192xf32> -> vector<64x192xf32>
    %125 = vector.extract_strided_slice %124 {offsets = [0, 0], sizes = [64, 64], strides = [1, 1]} : vector<64x192xf32> to vector<64x64xf32>
    %126 = vector.extract_strided_slice %7 {offsets = [1, 0], sizes = [1, 64], strides = [1, 1]} : vector<4x64xf32> to vector<1x64xf32>
    %127 = vector.broadcast %126 : vector<1x64xf32> to vector<64x64xf32>
    %128 = arith.addf %125, %127 : vector<64x64xf32>
    %129 = vector.extract_strided_slice %124 {offsets = [0, 64], sizes = [64, 128], strides = [1, 1]} : vector<64x192xf32> to vector<64x128xf32>
    %c1 = arith.constant 1 : index
    %c0_23 = arith.constant 0 : index
    %130 = vector.load %arg6[%c1, %c0_23] : memref<4x128xf32, #tpu.memory_space<vmem>>, vector<1x128xf32>
    %131 = vector.broadcast %130 : vector<1x128xf32> to vector<64x128xf32>
    %132 = arith.addf %129, %131 : vector<64x128xf32>
    %133 = vector.extract_strided_slice %132 {offsets = [0, 64], sizes = [1, 64], strides = [1, 1]} : vector<64x128xf32> to vector<1x64xf32>
    %134 = vector.extract_strided_slice %132 {offsets = [1, 63], sizes = [1, 64], strides = [1, 1]} : vector<64x128xf32> to vector<1x64xf32>
    %135 = vector.extract_strided_slice %132 {offsets = [2, 62], sizes = [1, 64], strides = [1, 1]} : vector<64x128xf32> to vector<1x64xf32>
    %136 = vector.extract_strided_slice %132 {offsets = [3, 61], sizes = [1, 64], strides = [1, 1]} : vector<64x128xf32> to vector<1x64xf32>
    %137 = vector.extract_strided_slice %132 {offsets = [4, 60], sizes = [1, 64], strides = [1, 1]} : vector<64x128xf32> to vector<1x64xf32>
    %138 = vector.extract_strided_slice %132 {offsets = [5, 59], sizes = [1, 64], strides = [1, 1]} : vector<64x128xf32> to vector<1x64xf32>
    %139 = vector.extract_strided_slice %132 {offsets = [6, 58], sizes = [1, 64], strides = [1, 1]} : vector<64x128xf32> to vector<1x64xf32>
    %140 = vector.extract_strided_slice %132 {offsets = [7, 57], sizes = [1, 64], strides = [1, 1]} : vector<64x128xf32> to vector<1x64xf32>
    %141 = vector.extract_strided_slice %132 {offsets = [8, 56], sizes = [1, 64], strides = [1, 1]} : vector<64x128xf32> to vector<1x64xf32>
    %142 = vector.extract_strided_slice %132 {offsets = [9, 55], sizes = [1, 64], strides = [1, 1]} : vector<64x128xf32> to vector<1x64xf32>
    %143 = vector.extract_strided_slice %132 {offsets = [10, 54], sizes = [1, 64], strides = [1, 1]} : vector<64x128xf32> to vector<1x64xf32>
    %144 = vector.extract_strided_slice %132 {offsets = [11, 53], sizes = [1, 64], strides = [1, 1]} : vector<64x128xf32> to vector<1x64xf32>
    %145 = vector.extract_strided_slice %132 {offsets = [12, 52], sizes = [1, 64], strides = [1, 1]} : vector<64x128xf32> to vector<1x64xf32>
    %146 = vector.extract_strided_slice %132 {offsets = [13, 51], sizes = [1, 64], strides = [1, 1]} : vector<64x128xf32> to vector<1x64xf32>
    %147 = vector.extract_strided_slice %132 {offsets = [14, 50], sizes = [1, 64], strides = [1, 1]} : vector<64x128xf32> to vector<1x64xf32>
    %148 = vector.extract_strided_slice %132 {offsets = [15, 49], sizes = [1, 64], strides = [1, 1]} : vector<64x128xf32> to vector<1x64xf32>
    %149 = vector.extract_strided_slice %132 {offsets = [16, 48], sizes = [1, 64], strides = [1, 1]} : vector<64x128xf32> to vector<1x64xf32>
    %150 = vector.extract_strided_slice %132 {offsets = [17, 47], sizes = [1, 64], strides = [1, 1]} : vector<64x128xf32> to vector<1x64xf32>
    %151 = vector.extract_strided_slice %132 {offsets = [18, 46], sizes = [1, 64], strides = [1, 1]} : vector<64x128xf32> to vector<1x64xf32>
    %152 = vector.extract_strided_slice %132 {offsets = [19, 45], sizes = [1, 64], strides = [1, 1]} : vector<64x128xf32> to vector<1x64xf32>
    %153 = vector.extract_strided_slice %132 {offsets = [20, 44], sizes = [1, 64], strides = [1, 1]} : vector<64x128xf32> to vector<1x64xf32>
    %154 = vector.extract_strided_slice %132 {offsets = [21, 43], sizes = [1, 64], strides = [1, 1]} : vector<64x128xf32> to vector<1x64xf32>
    %155 = vector.extract_strided_slice %132 {offsets = [22, 42], sizes = [1, 64], strides = [1, 1]} : vector<64x128xf32> to vector<1x64xf32>
    %156 = vector.extract_strided_slice %132 {offsets = [23, 41], sizes = [1, 64], strides = [1, 1]} : vector<64x128xf32> to vector<1x64xf32>
    %157 = vector.extract_strided_slice %132 {offsets = [24, 40], sizes = [1, 64], strides = [1, 1]} : vector<64x128xf32> to vector<1x64xf32>
    %158 = vector.extract_strided_slice %132 {offsets = [25, 39], sizes = [1, 64], strides = [1, 1]} : vector<64x128xf32> to vector<1x64xf32>
    %159 = vector.extract_strided_slice %132 {offsets = [26, 38], sizes = [1, 64], strides = [1, 1]} : vector<64x128xf32> to vector<1x64xf32>
    %160 = vector.extract_strided_slice %132 {offsets = [27, 37], sizes = [1, 64], strides = [1, 1]} : vector<64x128xf32> to vector<1x64xf32>
    %161 = vector.extract_strided_slice %132 {offsets = [28, 36], sizes = [1, 64], strides = [1, 1]} : vector<64x128xf32> to vector<1x64xf32>
    %162 = vector.extract_strided_slice %132 {offsets = [29, 35], sizes = [1, 64], strides = [1, 1]} : vector<64x128xf32> to vector<1x64xf32>
    %163 = vector.extract_strided_slice %132 {offsets = [30, 34], sizes = [1, 64], strides = [1, 1]} : vector<64x128xf32> to vector<1x64xf32>
    %164 = vector.extract_strided_slice %132 {offsets = [31, 33], sizes = [1, 64], strides = [1, 1]} : vector<64x128xf32> to vector<1x64xf32>
    %165 = vector.extract_strided_slice %132 {offsets = [32, 32], sizes = [1, 64], strides = [1, 1]} : vector<64x128xf32> to vector<1x64xf32>
    %166 = vector.extract_strided_slice %132 {offsets = [33, 31], sizes = [1, 64], strides = [1, 1]} : vector<64x128xf32> to vector<1x64xf32>
    %167 = vector.extract_strided_slice %132 {offsets = [34, 30], sizes = [1, 64], strides = [1, 1]} : vector<64x128xf32> to vector<1x64xf32>
    %168 = vector.extract_strided_slice %132 {offsets = [35, 29], sizes = [1, 64], strides = [1, 1]} : vector<64x128xf32> to vector<1x64xf32>
    %169 = vector.extract_strided_slice %132 {offsets = [36, 28], sizes = [1, 64], strides = [1, 1]} : vector<64x128xf32> to vector<1x64xf32>
    %170 = vector.extract_strided_slice %132 {offsets = [37, 27], sizes = [1, 64], strides = [1, 1]} : vector<64x128xf32> to vector<1x64xf32>
    %171 = vector.extract_strided_slice %132 {offsets = [38, 26], sizes = [1, 64], strides = [1, 1]} : vector<64x128xf32> to vector<1x64xf32>
    %172 = vector.extract_strided_slice %132 {offsets = [39, 25], sizes = [1, 64], strides = [1, 1]} : vector<64x128xf32> to vector<1x64xf32>
    %173 = vector.extract_strided_slice %132 {offsets = [40, 24], sizes = [1, 64], strides = [1, 1]} : vector<64x128xf32> to vector<1x64xf32>
    %174 = vector.extract_strided_slice %132 {offsets = [41, 23], sizes = [1, 64], strides = [1, 1]} : vector<64x128xf32> to vector<1x64xf32>
    %175 = vector.extract_strided_slice %132 {offsets = [42, 22], sizes = [1, 64], strides = [1, 1]} : vector<64x128xf32> to vector<1x64xf32>
    %176 = vector.extract_strided_slice %132 {offsets = [43, 21], sizes = [1, 64], strides = [1, 1]} : vector<64x128xf32> to vector<1x64xf32>
    %177 = vector.extract_strided_slice %132 {offsets = [44, 20], sizes = [1, 64], strides = [1, 1]} : vector<64x128xf32> to vector<1x64xf32>
    %178 = vector.extract_strided_slice %132 {offsets = [45, 19], sizes = [1, 64], strides = [1, 1]} : vector<64x128xf32> to vector<1x64xf32>
    %179 = vector.extract_strided_slice %132 {offsets = [46, 18], sizes = [1, 64], strides = [1, 1]} : vector<64x128xf32> to vector<1x64xf32>
    %180 = vector.extract_strided_slice %132 {offsets = [47, 17], sizes = [1, 64], strides = [1, 1]} : vector<64x128xf32> to vector<1x64xf32>
    %181 = vector.extract_strided_slice %132 {offsets = [48, 16], sizes = [1, 64], strides = [1, 1]} : vector<64x128xf32> to vector<1x64xf32>
    %182 = vector.extract_strided_slice %132 {offsets = [49, 15], sizes = [1, 64], strides = [1, 1]} : vector<64x128xf32> to vector<1x64xf32>
    %183 = vector.extract_strided_slice %132 {offsets = [50, 14], sizes = [1, 64], strides = [1, 1]} : vector<64x128xf32> to vector<1x64xf32>
    %184 = vector.extract_strided_slice %132 {offsets = [51, 13], sizes = [1, 64], strides = [1, 1]} : vector<64x128xf32> to vector<1x64xf32>
    %185 = vector.extract_strided_slice %132 {offsets = [52, 12], sizes = [1, 64], strides = [1, 1]} : vector<64x128xf32> to vector<1x64xf32>
    %186 = vector.extract_strided_slice %132 {offsets = [53, 11], sizes = [1, 64], strides = [1, 1]} : vector<64x128xf32> to vector<1x64xf32>
    %187 = vector.extract_strided_slice %132 {offsets = [54, 10], sizes = [1, 64], strides = [1, 1]} : vector<64x128xf32> to vector<1x64xf32>
    %188 = vector.extract_strided_slice %132 {offsets = [55, 9], sizes = [1, 64], strides = [1, 1]} : vector<64x128xf32> to vector<1x64xf32>
    %189 = vector.extract_strided_slice %132 {offsets = [56, 8], sizes = [1, 64], strides = [1, 1]} : vector<64x128xf32> to vector<1x64xf32>
    %190 = vector.extract_strided_slice %132 {offsets = [57, 7], sizes = [1, 64], strides = [1, 1]} : vector<64x128xf32> to vector<1x64xf32>
    %191 = vector.extract_strided_slice %132 {offsets = [58, 6], sizes = [1, 64], strides = [1, 1]} : vector<64x128xf32> to vector<1x64xf32>
    %192 = vector.extract_strided_slice %132 {offsets = [59, 5], sizes = [1, 64], strides = [1, 1]} : vector<64x128xf32> to vector<1x64xf32>
    %193 = vector.extract_strided_slice %132 {offsets = [60, 4], sizes = [1, 64], strides = [1, 1]} : vector<64x128xf32> to vector<1x64xf32>
    %194 = vector.extract_strided_slice %132 {offsets = [61, 3], sizes = [1, 64], strides = [1, 1]} : vector<64x128xf32> to vector<1x64xf32>
    %195 = vector.extract_strided_slice %132 {offsets = [62, 2], sizes = [1, 64], strides = [1, 1]} : vector<64x128xf32> to vector<1x64xf32>
    %196 = vector.extract_strided_slice %132 {offsets = [63, 1], sizes = [1, 64], strides = [1, 1]} : vector<64x128xf32> to vector<1x64xf32>
    %197 = tpu.concatenate %133, %134, %135, %136, %137, %138, %139, %140, %141, %142, %143, %144, %145, %146, %147, %148 in 0 : vector<1x64xf32>, vector<1x64xf32>, vector<1x64xf32>, vector<1x64xf32>, vector<1x64xf32>, vector<1x64xf32>, vector<1x64xf32>, vector<1x64xf32>, vector<1x64xf32>, vector<1x64xf32>, vector<1x64xf32>, vector<1x64xf32>, vector<1x64xf32>, vector<1x64xf32>, vector<1x64xf32>, vector<1x64xf32> -> vector<16x64xf32>
    %198 = tpu.concatenate %149, %150, %151, %152, %153, %154, %155, %156, %157, %158, %159, %160, %161, %162, %163, %164 in 0 : vector<1x64xf32>, vector<1x64xf32>, vector<1x64xf32>, vector<1x64xf32>, vector<1x64xf32>, vector<1x64xf32>, vector<1x64xf32>, vector<1x64xf32>, vector<1x64xf32>, vector<1x64xf32>, vector<1x64xf32>, vector<1x64xf32>, vector<1x64xf32>, vector<1x64xf32>, vector<1x64xf32>, vector<1x64xf32> -> vector<16x64xf32>
    %199 = tpu.concatenate %165, %166, %167, %168, %169, %170, %171, %172, %173, %174, %175, %176, %177, %178, %179, %180 in 0 : vector<1x64xf32>, vector<1x64xf32>, vector<1x64xf32>, vector<1x64xf32>, vector<1x64xf32>, vector<1x64xf32>, vector<1x64xf32>, vector<1x64xf32>, vector<1x64xf32>, vector<1x64xf32>, vector<1x64xf32>, vector<1x64xf32>, vector<1x64xf32>, vector<1x64xf32>, vector<1x64xf32>, vector<1x64xf32> -> vector<16x64xf32>
    %200 = tpu.concatenate %181, %182, %183, %184, %185, %186, %187, %188, %189, %190, %191, %192, %193, %194, %195, %196 in 0 : vector<1x64xf32>, vector<1x64xf32>, vector<1x64xf32>, vector<1x64xf32>, vector<1x64xf32>, vector<1x64xf32>, vector<1x64xf32>, vector<1x64xf32>, vector<1x64xf32>, vector<1x64xf32>, vector<1x64xf32>, vector<1x64xf32>, vector<1x64xf32>, vector<1x64xf32>, vector<1x64xf32>, vector<1x64xf32> -> vector<16x64xf32>
    %201 = tpu.concatenate %197, %198, %199, %200 in 0 : vector<16x64xf32>, vector<16x64xf32>, vector<16x64xf32>, vector<16x64xf32> -> vector<64x64xf32>
    %202 = arith.addf %128, %201 : vector<64x64xf32>
    %203 = arith.subf %202, %18 : vector<64x64xf32>
    %cst_24 = arith.constant dense<0xFF800000> : vector<64xf32>
    %204 = vector.multi_reduction <maximumf>, %203, %cst_24 [1] : vector<64x64xf32> to vector<64xf32>
    %205 = vector.shape_cast %204 : vector<64xf32> to vector<64x1xf32>
    %206 = vector.broadcast %205 : vector<64x1xf32> to vector<64x64xf32>
    %207 = arith.subf %203, %206 : vector<64x64xf32>
    %208 = math.exp %207 : vector<64x64xf32>
    %cst_25 = arith.constant dense<0.000000e+00> : vector<64xf32>
    %209 = vector.multi_reduction <add>, %208, %cst_25 [1] : vector<64x64xf32> to vector<64xf32>
    %210 = vector.shape_cast %209 : vector<64xf32> to vector<64x1xf32>
    %211 = tpu.reciprocal %210 {approx = true} : vector<64x1xf32> -> vector<64x1xf32>
    %212 = vector.broadcast %211 : vector<64x1xf32> to vector<64x64xf32>
    %213 = arith.mulf %208, %212 : vector<64x64xf32>
    %214 = arith.truncf %213 : vector<64x64xf32> to vector<64x64xbf16>
    %cst_26 = arith.constant dense<0.000000e+00> : vector<64x32xf32>
    %215 = tpu.matmul %214, %121, %cst_26 {dimension_numbers = #tpu.dot_dimension_numbers<[1], [0], [0], [1], [0, 0, 1, 1], [], []>} : vector<64x64xbf16>, vector<64x32xbf16>, vector<64x32xf32> -> vector<64x32xf32>
    %216 = arith.truncf %215 : vector<64x32xf32> to vector<64x32xbf16>
    %c0_27 = arith.constant 0 : index
    %c32 = arith.constant 32 : index
    %217 = vector.load %arg17[%c0_27, %c32] : memref<64x128xbf16, #tpu.memory_space<vmem>>, vector<64x32xbf16>
    tpu.vector_store %arg17[%c0_27, %c32], %216 {strides = array<i32>} : memref<64x128xbf16, #tpu.memory_space<vmem>>, vector<64x32xbf16>,
    %218 = vector.extract_strided_slice %4 {offsets = [0, 64], sizes = [64, 32], strides = [1, 1]} : vector<64x384xbf16> to vector<64x32xbf16>
    %219 = vector.extract_strided_slice %4 {offsets = [0, 192], sizes = [64, 32], strides = [1, 1]} : vector<64x384xbf16> to vector<64x32xbf16>
    %220 = vector.extract_strided_slice %4 {offsets = [0, 320], sizes = [64, 32], strides = [1, 1]} : vector<64x384xbf16> to vector<64x32xbf16>
    %221 = vector.extract_strided_slice %19 {offsets = [0, 64], sizes = [128, 32], strides = [1, 1]} : vector<128x128xbf16> to vector<128x32xbf16>
    %222 = tpu.concatenate %219, %221 in 0 : vector<64x32xbf16>, vector<128x32xbf16> -> vector<192x32xbf16>
    %cst_28 = arith.constant dense<0.000000e+00> : vector<64x192xf32>
    %223 = tpu.matmul %218, %222, %cst_28 {dimension_numbers = #tpu.dot_dimension_numbers<[1], [1], [0], [0], [0, 0, 1, 0], [], []>} : vector<64x32xbf16>, vector<192x32xbf16>, vector<64x192xf32> -> vector<64x192xf32>
    %224 = vector.extract_strided_slice %223 {offsets = [0, 0], sizes = [64, 64], strides = [1, 1]} : vector<64x192xf32> to vector<64x64xf32>
    %225 = vector.extract_strided_slice %7 {offsets = [2, 0], sizes = [1, 64], strides = [1, 1]} : vector<4x64xf32> to vector<1x64xf32>
    %226 = vector.broadcast %225 : vector<1x64xf32> to vector<64x64xf32>
    %227 = arith.addf %224, %226 : vector<64x64xf32>
    %228 = vector.extract_strided_slice %223 {offsets = [0, 64], sizes = [64, 128], strides = [1, 1]} : vector<64x192xf32> to vector<64x128xf32>
    %c2 = arith.constant 2 : index
    %c0_29 = arith.constant 0 : index
    %229 = vector.load %arg6[%c2, %c0_29] : memref<4x128xf32, #tpu.memory_space<vmem>>, vector<1x128xf32>
    %230 = vector.broadcast %229 : vector<1x128xf32> to vector<64x128xf32>
    %231 = arith.addf %228, %230 : vector<64x128xf32>
    %232 = vector.extract_strided_slice %231 {offsets = [0, 64], sizes = [1, 64], strides = [1, 1]} : vector<64x128xf32> to vector<1x64xf32>
    %233 = vector.extract_strided_slice %231 {offsets = [1, 63], sizes = [1, 64], strides = [1, 1]} : vector<64x128xf32> to vector<1x64xf32>
    %234 = vector.extract_strided_slice %231 {offsets = [2, 62], sizes = [1, 64], strides = [1, 1]} : vector<64x128xf32> to vector<1x64xf32>
    %235 = vector.extract_strided_slice %231 {offsets = [3, 61], sizes = [1, 64], strides = [1, 1]} : vector<64x128xf32> to vector<1x64xf32>
    %236 = vector.extract_strided_slice %231 {offsets = [4, 60], sizes = [1, 64], strides = [1, 1]} : vector<64x128xf32> to vector<1x64xf32>
    %237 = vector.extract_strided_slice %231 {offsets = [5, 59], sizes = [1, 64], strides = [1, 1]} : vector<64x128xf32> to vector<1x64xf32>
    %238 = vector.extract_strided_slice %231 {offsets = [6, 58], sizes = [1, 64], strides = [1, 1]} : vector<64x128xf32> to vector<1x64xf32>
    %239 = vector.extract_strided_slice %231 {offsets = [7, 57], sizes = [1, 64], strides = [1, 1]} : vector<64x128xf32> to vector<1x64xf32>
    %240 = vector.extract_strided_slice %231 {offsets = [8, 56], sizes = [1, 64], strides = [1, 1]} : vector<64x128xf32> to vector<1x64xf32>
    %241 = vector.extract_strided_slice %231 {offsets = [9, 55], sizes = [1, 64], strides = [1, 1]} : vector<64x128xf32> to vector<1x64xf32>
    %242 = vector.extract_strided_slice %231 {offsets = [10, 54], sizes = [1, 64], strides = [1, 1]} : vector<64x128xf32> to vector<1x64xf32>
    %243 = vector.extract_strided_slice %231 {offsets = [11, 53], sizes = [1, 64], strides = [1, 1]} : vector<64x128xf32> to vector<1x64xf32>
    %244 = vector.extract_strided_slice %231 {offsets = [12, 52], sizes = [1, 64], strides = [1, 1]} : vector<64x128xf32> to vector<1x64xf32>
    %245 = vector.extract_strided_slice %231 {offsets = [13, 51], sizes = [1, 64], strides = [1, 1]} : vector<64x128xf32> to vector<1x64xf32>
    %246 = vector.extract_strided_slice %231 {offsets = [14, 50], sizes = [1, 64], strides = [1, 1]} : vector<64x128xf32> to vector<1x64xf32>
    %247 = vector.extract_strided_slice %231 {offsets = [15, 49], sizes = [1, 64], strides = [1, 1]} : vector<64x128xf32> to vector<1x64xf32>
    %248 = vector.extract_strided_slice %231 {offsets = [16, 48], sizes = [1, 64], strides = [1, 1]} : vector<64x128xf32> to vector<1x64xf32>
    %249 = vector.extract_strided_slice %231 {offsets = [17, 47], sizes = [1, 64], strides = [1, 1]} : vector<64x128xf32> to vector<1x64xf32>
    %250 = vector.extract_strided_slice %231 {offsets = [18, 46], sizes = [1, 64], strides = [1, 1]} : vector<64x128xf32> to vector<1x64xf32>
    %251 = vector.extract_strided_slice %231 {offsets = [19, 45], sizes = [1, 64], strides = [1, 1]} : vector<64x128xf32> to vector<1x64xf32>
    %252 = vector.extract_strided_slice %231 {offsets = [20, 44], sizes = [1, 64], strides = [1, 1]} : vector<64x128xf32> to vector<1x64xf32>
    %253 = vector.extract_strided_slice %231 {offsets = [21, 43], sizes = [1, 64], strides = [1, 1]} : vector<64x128xf32> to vector<1x64xf32>
    %254 = vector.extract_strided_slice %231 {offsets = [22, 42], sizes = [1, 64], strides = [1, 1]} : vector<64x128xf32> to vector<1x64xf32>
    %255 = vector.extract_strided_slice %231 {offsets = [23, 41], sizes = [1, 64], strides = [1, 1]} : vector<64x128xf32> to vector<1x64xf32>
    %256 = vector.extract_strided_slice %231 {offsets = [24, 40], sizes = [1, 64], strides = [1, 1]} : vector<64x128xf32> to vector<1x64xf32>
    %257 = vector.extract_strided_slice %231 {offsets = [25, 39], sizes = [1, 64], strides = [1, 1]} : vector<64x128xf32> to vector<1x64xf32>
    %258 = vector.extract_strided_slice %231 {offsets = [26, 38], sizes = [1, 64], strides = [1, 1]} : vector<64x128xf32> to vector<1x64xf32>
    %259 = vector.extract_strided_slice %231 {offsets = [27, 37], sizes = [1, 64], strides = [1, 1]} : vector<64x128xf32> to vector<1x64xf32>
    %260 = vector.extract_strided_slice %231 {offsets = [28, 36], sizes = [1, 64], strides = [1, 1]} : vector<64x128xf32> to vector<1x64xf32>
    %261 = vector.extract_strided_slice %231 {offsets = [29, 35], sizes = [1, 64], strides = [1, 1]} : vector<64x128xf32> to vector<1x64xf32>
    %262 = vector.extract_strided_slice %231 {offsets = [30, 34], sizes = [1, 64], strides = [1, 1]} : vector<64x128xf32> to vector<1x64xf32>
    %263 = vector.extract_strided_slice %231 {offsets = [31, 33], sizes = [1, 64], strides = [1, 1]} : vector<64x128xf32> to vector<1x64xf32>
    %264 = vector.extract_strided_slice %231 {offsets = [32, 32], sizes = [1, 64], strides = [1, 1]} : vector<64x128xf32> to vector<1x64xf32>
    %265 = vector.extract_strided_slice %231 {offsets = [33, 31], sizes = [1, 64], strides = [1, 1]} : vector<64x128xf32> to vector<1x64xf32>
    %266 = vector.extract_strided_slice %231 {offsets = [34, 30], sizes = [1, 64], strides = [1, 1]} : vector<64x128xf32> to vector<1x64xf32>
    %267 = vector.extract_strided_slice %231 {offsets = [35, 29], sizes = [1, 64], strides = [1, 1]} : vector<64x128xf32> to vector<1x64xf32>
    %268 = vector.extract_strided_slice %231 {offsets = [36, 28], sizes = [1, 64], strides = [1, 1]} : vector<64x128xf32> to vector<1x64xf32>
    %269 = vector.extract_strided_slice %231 {offsets = [37, 27], sizes = [1, 64], strides = [1, 1]} : vector<64x128xf32> to vector<1x64xf32>
    %270 = vector.extract_strided_slice %231 {offsets = [38, 26], sizes = [1, 64], strides = [1, 1]} : vector<64x128xf32> to vector<1x64xf32>
    %271 = vector.extract_strided_slice %231 {offsets = [39, 25], sizes = [1, 64], strides = [1, 1]} : vector<64x128xf32> to vector<1x64xf32>
    %272 = vector.extract_strided_slice %231 {offsets = [40, 24], sizes = [1, 64], strides = [1, 1]} : vector<64x128xf32> to vector<1x64xf32>
    %273 = vector.extract_strided_slice %231 {offsets = [41, 23], sizes = [1, 64], strides = [1, 1]} : vector<64x128xf32> to vector<1x64xf32>
    %274 = vector.extract_strided_slice %231 {offsets = [42, 22], sizes = [1, 64], strides = [1, 1]} : vector<64x128xf32> to vector<1x64xf32>
    %275 = vector.extract_strided_slice %231 {offsets = [43, 21], sizes = [1, 64], strides = [1, 1]} : vector<64x128xf32> to vector<1x64xf32>
    %276 = vector.extract_strided_slice %231 {offsets = [44, 20], sizes = [1, 64], strides = [1, 1]} : vector<64x128xf32> to vector<1x64xf32>
    %277 = vector.extract_strided_slice %231 {offsets = [45, 19], sizes = [1, 64], strides = [1, 1]} : vector<64x128xf32> to vector<1x64xf32>
    %278 = vector.extract_strided_slice %231 {offsets = [46, 18], sizes = [1, 64], strides = [1, 1]} : vector<64x128xf32> to vector<1x64xf32>
    %279 = vector.extract_strided_slice %231 {offsets = [47, 17], sizes = [1, 64], strides = [1, 1]} : vector<64x128xf32> to vector<1x64xf32>
    %280 = vector.extract_strided_slice %231 {offsets = [48, 16], sizes = [1, 64], strides = [1, 1]} : vector<64x128xf32> to vector<1x64xf32>
    %281 = vector.extract_strided_slice %231 {offsets = [49, 15], sizes = [1, 64], strides = [1, 1]} : vector<64x128xf32> to vector<1x64xf32>
    %282 = vector.extract_strided_slice %231 {offsets = [50, 14], sizes = [1, 64], strides = [1, 1]} : vector<64x128xf32> to vector<1x64xf32>
    %283 = vector.extract_strided_slice %231 {offsets = [51, 13], sizes = [1, 64], strides = [1, 1]} : vector<64x128xf32> to vector<1x64xf32>
    %284 = vector.extract_strided_slice %231 {offsets = [52, 12], sizes = [1, 64], strides = [1, 1]} : vector<64x128xf32> to vector<1x64xf32>
    %285 = vector.extract_strided_slice %231 {offsets = [53, 11], sizes = [1, 64], strides = [1, 1]} : vector<64x128xf32> to vector<1x64xf32>
    %286 = vector.extract_strided_slice %231 {offsets = [54, 10], sizes = [1, 64], strides = [1, 1]} : vector<64x128xf32> to vector<1x64xf32>
    %287 = vector.extract_strided_slice %231 {offsets = [55, 9], sizes = [1, 64], strides = [1, 1]} : vector<64x128xf32> to vector<1x64xf32>
    %288 = vector.extract_strided_slice %231 {offsets = [56, 8], sizes = [1, 64], strides = [1, 1]} : vector<64x128xf32> to vector<1x64xf32>
    %289 = vector.extract_strided_slice %231 {offsets = [57, 7], sizes = [1, 64], strides = [1, 1]} : vector<64x128xf32> to vector<1x64xf32>
    %290 = vector.extract_strided_slice %231 {offsets = [58, 6], sizes = [1, 64], strides = [1, 1]} : vector<64x128xf32> to vector<1x64xf32>
    %291 = vector.extract_strided_slice %231 {offsets = [59, 5], sizes = [1, 64], strides = [1, 1]} : vector<64x128xf32> to vector<1x64xf32>
    %292 = vector.extract_strided_slice %231 {offsets = [60, 4], sizes = [1, 64], strides = [1, 1]} : vector<64x128xf32> to vector<1x64xf32>
    %293 = vector.extract_strided_slice %231 {offsets = [61, 3], sizes = [1, 64], strides = [1, 1]} : vector<64x128xf32> to vector<1x64xf32>
    %294 = vector.extract_strided_slice %231 {offsets = [62, 2], sizes = [1, 64], strides = [1, 1]} : vector<64x128xf32> to vector<1x64xf32>
    %295 = vector.extract_strided_slice %231 {offsets = [63, 1], sizes = [1, 64], strides = [1, 1]} : vector<64x128xf32> to vector<1x64xf32>
    %296 = tpu.concatenate %232, %233, %234, %235, %236, %237, %238, %239, %240, %241, %242, %243, %244, %245, %246, %247 in 0 : vector<1x64xf32>, vector<1x64xf32>, vector<1x64xf32>, vector<1x64xf32>, vector<1x64xf32>, vector<1x64xf32>, vector<1x64xf32>, vector<1x64xf32>, vector<1x64xf32>, vector<1x64xf32>, vector<1x64xf32>, vector<1x64xf32>, vector<1x64xf32>, vector<1x64xf32>, vector<1x64xf32>, vector<1x64xf32> -> vector<16x64xf32>
    %297 = tpu.concatenate %248, %249, %250, %251, %252, %253, %254, %255, %256, %257, %258, %259, %260, %261, %262, %263 in 0 : vector<1x64xf32>, vector<1x64xf32>, vector<1x64xf32>, vector<1x64xf32>, vector<1x64xf32>, vector<1x64xf32>, vector<1x64xf32>, vector<1x64xf32>, vector<1x64xf32>, vector<1x64xf32>, vector<1x64xf32>, vector<1x64xf32>, vector<1x64xf32>, vector<1x64xf32>, vector<1x64xf32>, vector<1x64xf32> -> vector<16x64xf32>
    %298 = tpu.concatenate %264, %265, %266, %267, %268, %269, %270, %271, %272, %273, %274, %275, %276, %277, %278, %279 in 0 : vector<1x64xf32>, vector<1x64xf32>, vector<1x64xf32>, vector<1x64xf32>, vector<1x64xf32>, vector<1x64xf32>, vector<1x64xf32>, vector<1x64xf32>, vector<1x64xf32>, vector<1x64xf32>, vector<1x64xf32>, vector<1x64xf32>, vector<1x64xf32>, vector<1x64xf32>, vector<1x64xf32>, vector<1x64xf32> -> vector<16x64xf32>
    %299 = tpu.concatenate %280, %281, %282, %283, %284, %285, %286, %287, %288, %289, %290, %291, %292, %293, %294, %295 in 0 : vector<1x64xf32>, vector<1x64xf32>, vector<1x64xf32>, vector<1x64xf32>, vector<1x64xf32>, vector<1x64xf32>, vector<1x64xf32>, vector<1x64xf32>, vector<1x64xf32>, vector<1x64xf32>, vector<1x64xf32>, vector<1x64xf32>, vector<1x64xf32>, vector<1x64xf32>, vector<1x64xf32>, vector<1x64xf32> -> vector<16x64xf32>
    %300 = tpu.concatenate %296, %297, %298, %299 in 0 : vector<16x64xf32>, vector<16x64xf32>, vector<16x64xf32>, vector<16x64xf32> -> vector<64x64xf32>
    %301 = arith.addf %227, %300 : vector<64x64xf32>
    %302 = arith.subf %301, %18 : vector<64x64xf32>
    %cst_30 = arith.constant dense<0xFF800000> : vector<64xf32>
    %303 = vector.multi_reduction <maximumf>, %302, %cst_30 [1] : vector<64x64xf32> to vector<64xf32>
    %304 = vector.shape_cast %303 : vector<64xf32> to vector<64x1xf32>
    %305 = vector.broadcast %304 : vector<64x1xf32> to vector<64x64xf32>
    %306 = arith.subf %302, %305 : vector<64x64xf32>
    %307 = math.exp %306 : vector<64x64xf32>
    %cst_31 = arith.constant dense<0.000000e+00> : vector<64xf32>
    %308 = vector.multi_reduction <add>, %307, %cst_31 [1] : vector<64x64xf32> to vector<64xf32>
    %309 = vector.shape_cast %308 : vector<64xf32> to vector<64x1xf32>
    %310 = tpu.reciprocal %309 {approx = true} : vector<64x1xf32> -> vector<64x1xf32>
    %311 = vector.broadcast %310 : vector<64x1xf32> to vector<64x64xf32>
    %312 = arith.mulf %307, %311 : vector<64x64xf32>
    %313 = arith.truncf %312 : vector<64x64xf32> to vector<64x64xbf16>
    %cst_32 = arith.constant dense<0.000000e+00> : vector<64x32xf32>
    %314 = tpu.matmul %313, %220, %cst_32 {dimension_numbers = #tpu.dot_dimension_numbers<[1], [0], [0], [1], [0, 0, 1, 1], [], []>} : vector<64x64xbf16>, vector<64x32xbf16>, vector<64x32xf32> -> vector<64x32xf32>
    %315 = arith.truncf %314 : vector<64x32xf32> to vector<64x32xbf16>
    %c0_33 = arith.constant 0 : index
    %c64 = arith.constant 64 : index
    %316 = vector.load %arg17[%c0_33, %c64] : memref<64x128xbf16, #tpu.memory_space<vmem>>, vector<64x32xbf16>
    tpu.vector_store %arg17[%c0_33, %c64], %315 {strides = array<i32>} : memref<64x128xbf16, #tpu.memory_space<vmem>>, vector<64x32xbf16>,
    %317 = vector.extract_strided_slice %4 {offsets = [0, 96], sizes = [64, 32], strides = [1, 1]} : vector<64x384xbf16> to vector<64x32xbf16>
    %318 = vector.extract_strided_slice %4 {offsets = [0, 224], sizes = [64, 32], strides = [1, 1]} : vector<64x384xbf16> to vector<64x32xbf16>
    %319 = vector.extract_strided_slice %4 {offsets = [0, 352], sizes = [64, 32], strides = [1, 1]} : vector<64x384xbf16> to vector<64x32xbf16>
    %320 = vector.extract_strided_slice %19 {offsets = [0, 96], sizes = [128, 32], strides = [1, 1]} : vector<128x128xbf16> to vector<128x32xbf16>
    %321 = tpu.concatenate %318, %320 in 0 : vector<64x32xbf16>, vector<128x32xbf16> -> vector<192x32xbf16>
    %cst_34 = arith.constant dense<0.000000e+00> : vector<64x192xf32>
    %322 = tpu.matmul %317, %321, %cst_34 {dimension_numbers = #tpu.dot_dimension_numbers<[1], [1], [0], [0], [0, 0, 1, 0], [], []>} : vector<64x32xbf16>, vector<192x32xbf16>, vector<64x192xf32> -> vector<64x192xf32>
    %323 = vector.extract_strided_slice %322 {offsets = [0, 0], sizes = [64, 64], strides = [1, 1]} : vector<64x192xf32> to vector<64x64xf32>
    %324 = vector.extract_strided_slice %7 {offsets = [3, 0], sizes = [1, 64], strides = [1, 1]} : vector<4x64xf32> to vector<1x64xf32>
    %325 = vector.broadcast %324 : vector<1x64xf32> to vector<64x64xf32>
    %326 = arith.addf %323, %325 : vector<64x64xf32>
    %327 = vector.extract_strided_slice %322 {offsets = [0, 64], sizes = [64, 128], strides = [1, 1]} : vector<64x192xf32> to vector<64x128xf32>
    %c3 = arith.constant 3 : index
    %c0_35 = arith.constant 0 : index
    %328 = vector.load %arg6[%c3, %c0_35] : memref<4x128xf32, #tpu.memory_space<vmem>>, vector<1x128xf32>
    %329 = vector.broadcast %328 : vector<1x128xf32> to vector<64x128xf32>
    %330 = arith.addf %327, %329 : vector<64x128xf32>
    %331 = vector.extract_strided_slice %330 {offsets = [0, 64], sizes = [1, 64], strides = [1, 1]} : vector<64x128xf32> to vector<1x64xf32>
    %332 = vector.extract_strided_slice %330 {offsets = [1, 63], sizes = [1, 64], strides = [1, 1]} : vector<64x128xf32> to vector<1x64xf32>
    %333 = vector.extract_strided_slice %330 {offsets = [2, 62], sizes = [1, 64], strides = [1, 1]} : vector<64x128xf32> to vector<1x64xf32>
    %334 = vector.extract_strided_slice %330 {offsets = [3, 61], sizes = [1, 64], strides = [1, 1]} : vector<64x128xf32> to vector<1x64xf32>
    %335 = vector.extract_strided_slice %330 {offsets = [4, 60], sizes = [1, 64], strides = [1, 1]} : vector<64x128xf32> to vector<1x64xf32>
    %336 = vector.extract_strided_slice %330 {offsets = [5, 59], sizes = [1, 64], strides = [1, 1]} : vector<64x128xf32> to vector<1x64xf32>
    %337 = vector.extract_strided_slice %330 {offsets = [6, 58], sizes = [1, 64], strides = [1, 1]} : vector<64x128xf32> to vector<1x64xf32>
    %338 = vector.extract_strided_slice %330 {offsets = [7, 57], sizes = [1, 64], strides = [1, 1]} : vector<64x128xf32> to vector<1x64xf32>
    %339 = vector.extract_strided_slice %330 {offsets = [8, 56], sizes = [1, 64], strides = [1, 1]} : vector<64x128xf32> to vector<1x64xf32>
    %340 = vector.extract_strided_slice %330 {offsets = [9, 55], sizes = [1, 64], strides = [1, 1]} : vector<64x128xf32> to vector<1x64xf32>
    %341 = vector.extract_strided_slice %330 {offsets = [10, 54], sizes = [1, 64], strides = [1, 1]} : vector<64x128xf32> to vector<1x64xf32>
    %342 = vector.extract_strided_slice %330 {offsets = [11, 53], sizes = [1, 64], strides = [1, 1]} : vector<64x128xf32> to vector<1x64xf32>
    %343 = vector.extract_strided_slice %330 {offsets = [12, 52], sizes = [1, 64], strides = [1, 1]} : vector<64x128xf32> to vector<1x64xf32>
    %344 = vector.extract_strided_slice %330 {offsets = [13, 51], sizes = [1, 64], strides = [1, 1]} : vector<64x128xf32> to vector<1x64xf32>
    %345 = vector.extract_strided_slice %330 {offsets = [14, 50], sizes = [1, 64], strides = [1, 1]} : vector<64x128xf32> to vector<1x64xf32>
    %346 = vector.extract_strided_slice %330 {offsets = [15, 49], sizes = [1, 64], strides = [1, 1]} : vector<64x128xf32> to vector<1x64xf32>
    %347 = vector.extract_strided_slice %330 {offsets = [16, 48], sizes = [1, 64], strides = [1, 1]} : vector<64x128xf32> to vector<1x64xf32>
    %348 = vector.extract_strided_slice %330 {offsets = [17, 47], sizes = [1, 64], strides = [1, 1]} : vector<64x128xf32> to vector<1x64xf32>
    %349 = vector.extract_strided_slice %330 {offsets = [18, 46], sizes = [1, 64], strides = [1, 1]} : vector<64x128xf32> to vector<1x64xf32>
    %350 = vector.extract_strided_slice %330 {offsets = [19, 45], sizes = [1, 64], strides = [1, 1]} : vector<64x128xf32> to vector<1x64xf32>
    %351 = vector.extract_strided_slice %330 {offsets = [20, 44], sizes = [1, 64], strides = [1, 1]} : vector<64x128xf32> to vector<1x64xf32>
    %352 = vector.extract_strided_slice %330 {offsets = [21, 43], sizes = [1, 64], strides = [1, 1]} : vector<64x128xf32> to vector<1x64xf32>
    %353 = vector.extract_strided_slice %330 {offsets = [22, 42], sizes = [1, 64], strides = [1, 1]} : vector<64x128xf32> to vector<1x64xf32>
    %354 = vector.extract_strided_slice %330 {offsets = [23, 41], sizes = [1, 64], strides = [1, 1]} : vector<64x128xf32> to vector<1x64xf32>
    %355 = vector.extract_strided_slice %330 {offsets = [24, 40], sizes = [1, 64], strides = [1, 1]} : vector<64x128xf32> to vector<1x64xf32>
    %356 = vector.extract_strided_slice %330 {offsets = [25, 39], sizes = [1, 64], strides = [1, 1]} : vector<64x128xf32> to vector<1x64xf32>
    %357 = vector.extract_strided_slice %330 {offsets = [26, 38], sizes = [1, 64], strides = [1, 1]} : vector<64x128xf32> to vector<1x64xf32>
    %358 = vector.extract_strided_slice %330 {offsets = [27, 37], sizes = [1, 64], strides = [1, 1]} : vector<64x128xf32> to vector<1x64xf32>
    %359 = vector.extract_strided_slice %330 {offsets = [28, 36], sizes = [1, 64], strides = [1, 1]} : vector<64x128xf32> to vector<1x64xf32>
    %360 = vector.extract_strided_slice %330 {offsets = [29, 35], sizes = [1, 64], strides = [1, 1]} : vector<64x128xf32> to vector<1x64xf32>
    %361 = vector.extract_strided_slice %330 {offsets = [30, 34], sizes = [1, 64], strides = [1, 1]} : vector<64x128xf32> to vector<1x64xf32>
    %362 = vector.extract_strided_slice %330 {offsets = [31, 33], sizes = [1, 64], strides = [1, 1]} : vector<64x128xf32> to vector<1x64xf32>
    %363 = vector.extract_strided_slice %330 {offsets = [32, 32], sizes = [1, 64], strides = [1, 1]} : vector<64x128xf32> to vector<1x64xf32>
    %364 = vector.extract_strided_slice %330 {offsets = [33, 31], sizes = [1, 64], strides = [1, 1]} : vector<64x128xf32> to vector<1x64xf32>
    %365 = vector.extract_strided_slice %330 {offsets = [34, 30], sizes = [1, 64], strides = [1, 1]} : vector<64x128xf32> to vector<1x64xf32>
    %366 = vector.extract_strided_slice %330 {offsets = [35, 29], sizes = [1, 64], strides = [1, 1]} : vector<64x128xf32> to vector<1x64xf32>
    %367 = vector.extract_strided_slice %330 {offsets = [36, 28], sizes = [1, 64], strides = [1, 1]} : vector<64x128xf32> to vector<1x64xf32>
    %368 = vector.extract_strided_slice %330 {offsets = [37, 27], sizes = [1, 64], strides = [1, 1]} : vector<64x128xf32> to vector<1x64xf32>
    %369 = vector.extract_strided_slice %330 {offsets = [38, 26], sizes = [1, 64], strides = [1, 1]} : vector<64x128xf32> to vector<1x64xf32>
    %370 = vector.extract_strided_slice %330 {offsets = [39, 25], sizes = [1, 64], strides = [1, 1]} : vector<64x128xf32> to vector<1x64xf32>
    %371 = vector.extract_strided_slice %330 {offsets = [40, 24], sizes = [1, 64], strides = [1, 1]} : vector<64x128xf32> to vector<1x64xf32>
    %372 = vector.extract_strided_slice %330 {offsets = [41, 23], sizes = [1, 64], strides = [1, 1]} : vector<64x128xf32> to vector<1x64xf32>
    %373 = vector.extract_strided_slice %330 {offsets = [42, 22], sizes = [1, 64], strides = [1, 1]} : vector<64x128xf32> to vector<1x64xf32>
    %374 = vector.extract_strided_slice %330 {offsets = [43, 21], sizes = [1, 64], strides = [1, 1]} : vector<64x128xf32> to vector<1x64xf32>
    %375 = vector.extract_strided_slice %330 {offsets = [44, 20], sizes = [1, 64], strides = [1, 1]} : vector<64x128xf32> to vector<1x64xf32>
    %376 = vector.extract_strided_slice %330 {offsets = [45, 19], sizes = [1, 64], strides = [1, 1]} : vector<64x128xf32> to vector<1x64xf32>
    %377 = vector.extract_strided_slice %330 {offsets = [46, 18], sizes = [1, 64], strides = [1, 1]} : vector<64x128xf32> to vector<1x64xf32>
    %378 = vector.extract_strided_slice %330 {offsets = [47, 17], sizes = [1, 64], strides = [1, 1]} : vector<64x128xf32> to vector<1x64xf32>
    %379 = vector.extract_strided_slice %330 {offsets = [48, 16], sizes = [1, 64], strides = [1, 1]} : vector<64x128xf32> to vector<1x64xf32>
    %380 = vector.extract_strided_slice %330 {offsets = [49, 15], sizes = [1, 64], strides = [1, 1]} : vector<64x128xf32> to vector<1x64xf32>
    %381 = vector.extract_strided_slice %330 {offsets = [50, 14], sizes = [1, 64], strides = [1, 1]} : vector<64x128xf32> to vector<1x64xf32>
    %382 = vector.extract_strided_slice %330 {offsets = [51, 13], sizes = [1, 64], strides = [1, 1]} : vector<64x128xf32> to vector<1x64xf32>
    %383 = vector.extract_strided_slice %330 {offsets = [52, 12], sizes = [1, 64], strides = [1, 1]} : vector<64x128xf32> to vector<1x64xf32>
    %384 = vector.extract_strided_slice %330 {offsets = [53, 11], sizes = [1, 64], strides = [1, 1]} : vector<64x128xf32> to vector<1x64xf32>
    %385 = vector.extract_strided_slice %330 {offsets = [54, 10], sizes = [1, 64], strides = [1, 1]} : vector<64x128xf32> to vector<1x64xf32>
    %386 = vector.extract_strided_slice %330 {offsets = [55, 9], sizes = [1, 64], strides = [1, 1]} : vector<64x128xf32> to vector<1x64xf32>
    %387 = vector.extract_strided_slice %330 {offsets = [56, 8], sizes = [1, 64], strides = [1, 1]} : vector<64x128xf32> to vector<1x64xf32>
    %388 = vector.extract_strided_slice %330 {offsets = [57, 7], sizes = [1, 64], strides = [1, 1]} : vector<64x128xf32> to vector<1x64xf32>
    %389 = vector.extract_strided_slice %330 {offsets = [58, 6], sizes = [1, 64], strides = [1, 1]} : vector<64x128xf32> to vector<1x64xf32>
    %390 = vector.extract_strided_slice %330 {offsets = [59, 5], sizes = [1, 64], strides = [1, 1]} : vector<64x128xf32> to vector<1x64xf32>
    %391 = vector.extract_strided_slice %330 {offsets = [60, 4], sizes = [1, 64], strides = [1, 1]} : vector<64x128xf32> to vector<1x64xf32>
    %392 = vector.extract_strided_slice %330 {offsets = [61, 3], sizes = [1, 64], strides = [1, 1]} : vector<64x128xf32> to vector<1x64xf32>
    %393 = vector.extract_strided_slice %330 {offsets = [62, 2], sizes = [1, 64], strides = [1, 1]} : vector<64x128xf32> to vector<1x64xf32>
    %394 = vector.extract_strided_slice %330 {offsets = [63, 1], sizes = [1, 64], strides = [1, 1]} : vector<64x128xf32> to vector<1x64xf32>
    %395 = tpu.concatenate %331, %332, %333, %334, %335, %336, %337, %338, %339, %340, %341, %342, %343, %344, %345, %346 in 0 : vector<1x64xf32>, vector<1x64xf32>, vector<1x64xf32>, vector<1x64xf32>, vector<1x64xf32>, vector<1x64xf32>, vector<1x64xf32>, vector<1x64xf32>, vector<1x64xf32>, vector<1x64xf32>, vector<1x64xf32>, vector<1x64xf32>, vector<1x64xf32>, vector<1x64xf32>, vector<1x64xf32>, vector<1x64xf32> -> vector<16x64xf32>
    %396 = tpu.concatenate %347, %348, %349, %350, %351, %352, %353, %354, %355, %356, %357, %358, %359, %360, %361, %362 in 0 : vector<1x64xf32>, vector<1x64xf32>, vector<1x64xf32>, vector<1x64xf32>, vector<1x64xf32>, vector<1x64xf32>, vector<1x64xf32>, vector<1x64xf32>, vector<1x64xf32>, vector<1x64xf32>, vector<1x64xf32>, vector<1x64xf32>, vector<1x64xf32>, vector<1x64xf32>, vector<1x64xf32>, vector<1x64xf32> -> vector<16x64xf32>
    %397 = tpu.concatenate %363, %364, %365, %366, %367, %368, %369, %370, %371, %372, %373, %374, %375, %376, %377, %378 in 0 : vector<1x64xf32>, vector<1x64xf32>, vector<1x64xf32>, vector<1x64xf32>, vector<1x64xf32>, vector<1x64xf32>, vector<1x64xf32>, vector<1x64xf32>, vector<1x64xf32>, vector<1x64xf32>, vector<1x64xf32>, vector<1x64xf32>, vector<1x64xf32>, vector<1x64xf32>, vector<1x64xf32>, vector<1x64xf32> -> vector<16x64xf32>
    %398 = tpu.concatenate %379, %380, %381, %382, %383, %384, %385, %386, %387, %388, %389, %390, %391, %392, %393, %394 in 0 : vector<1x64xf32>, vector<1x64xf32>, vector<1x64xf32>, vector<1x64xf32>, vector<1x64xf32>, vector<1x64xf32>, vector<1x64xf32>, vector<1x64xf32>, vector<1x64xf32>, vector<1x64xf32>, vector<1x64xf32>, vector<1x64xf32>, vector<1x64xf32>, vector<1x64xf32>, vector<1x64xf32>, vector<1x64xf32> -> vector<16x64xf32>
    %399 = tpu.concatenate %395, %396, %397, %398 in 0 : vector<16x64xf32>, vector<16x64xf32>, vector<16x64xf32>, vector<16x64xf32> -> vector<64x64xf32>
    %400 = arith.addf %326, %399 : vector<64x64xf32>
    %401 = arith.subf %400, %18 : vector<64x64xf32>
    %cst_36 = arith.constant dense<0xFF800000> : vector<64xf32>
    %402 = vector.multi_reduction <maximumf>, %401, %cst_36 [1] : vector<64x64xf32> to vector<64xf32>
    %403 = vector.shape_cast %402 : vector<64xf32> to vector<64x1xf32>
    %404 = vector.broadcast %403 : vector<64x1xf32> to vector<64x64xf32>
    %405 = arith.subf %401, %404 : vector<64x64xf32>
    %406 = math.exp %405 : vector<64x64xf32>
    %cst_37 = arith.constant dense<0.000000e+00> : vector<64xf32>
    %407 = vector.multi_reduction <add>, %406, %cst_37 [1] : vector<64x64xf32> to vector<64xf32>
    %408 = vector.shape_cast %407 : vector<64xf32> to vector<64x1xf32>
    %409 = tpu.reciprocal %408 {approx = true} : vector<64x1xf32> -> vector<64x1xf32>
    %410 = vector.broadcast %409 : vector<64x1xf32> to vector<64x64xf32>
    %411 = arith.mulf %406, %410 : vector<64x64xf32>
    %412 = arith.truncf %411 : vector<64x64xf32> to vector<64x64xbf16>
    %cst_38 = arith.constant dense<0.000000e+00> : vector<64x32xf32>
    %413 = tpu.matmul %412, %319, %cst_38 {dimension_numbers = #tpu.dot_dimension_numbers<[1], [0], [0], [1], [0, 0, 1, 1], [], []>} : vector<64x64xbf16>, vector<64x32xbf16>, vector<64x32xf32> -> vector<64x32xf32>
    %414 = arith.truncf %413 : vector<64x32xf32> to vector<64x32xbf16>
    %c0_39 = arith.constant 0 : index
    %c96 = arith.constant 96 : index
    %415 = vector.load %arg17[%c0_39, %c96] : memref<64x128xbf16, #tpu.memory_space<vmem>>, vector<64x32xbf16>
    tpu.vector_store %arg17[%c0_39, %c96], %414 {strides = array<i32>} : memref<64x128xbf16, #tpu.memory_space<vmem>>, vector<64x32xbf16>,
    %c0_40 = arith.constant 0 : index
    %c0_41 = arith.constant 0 : index
    %416 = vector.load %arg17[%c0_40, %c0_41] : memref<64x128xbf16, #tpu.memory_space<vmem>>, vector<64x128xbf16>
    %c0_42 = arith.constant 0 : index
    %c0_43 = arith.constant 0 : index
    %417 = vector.load %arg3[%c0_42, %c0_43] : memref<128x128xbf16, #tpu.memory_space<vmem>>, vector<128x128xbf16>
    %cst_44 = arith.constant dense<0.000000e+00> : vector<64x128xf32>
    %418 = tpu.matmul %416, %417, %cst_44 {dimension_numbers = #tpu.dot_dimension_numbers<[1], [0], [0], [1], [0, 0, 1, 1], [], []>} : vector<64x128xbf16>, vector<128x128xbf16>, vector<64x128xf32> -> vector<64x128xf32>
    %419 = arith.extf %1 : vector<64x128xbf16> to vector<64x128xf32>
    %420 = arith.addf %418, %419 : vector<64x128xf32>
    %c0_45 = arith.constant 0 : index
    %c0_46 = arith.constant 0 : index
    %421 = vector.load %arg8[%c0_45, %c0_46] : memref<1x128xf32, #tpu.memory_space<vmem>>, vector<1x128xf32>
    %c0_47 = arith.constant 0 : index
    %c0_48 = arith.constant 0 : index
    %422 = vector.load %arg9[%c0_47, %c0_48] : memref<1x128xf32, #tpu.memory_space<vmem>>, vector<1x128xf32>
    %cst_49 = arith.constant dense<0.000000e+00> : vector<64xf32>
    %423 = vector.multi_reduction <add>, %420, %cst_49 [1] : vector<64x128xf32> to vector<64xf32>
    %424 = vector.shape_cast %423 : vector<64xf32> to vector<64x1xf32>
    %cst_50 = arith.constant 1.280000e+02 : f32
    %425 = vector.broadcast %cst_50 : f32 to vector<64x1xf32>
    %426 = arith.divf %424, %425 : vector<64x1xf32>
    %427 = vector.broadcast %426 : vector<64x1xf32> to vector<64x128xf32>
    %428 = arith.subf %420, %427 : vector<64x128xf32>
    %429 = vector.broadcast %426 : vector<64x1xf32> to vector<64x128xf32>
    %430 = arith.subf %420, %429 : vector<64x128xf32>
    %431 = arith.mulf %428, %430 : vector<64x128xf32>
    %cst_51 = arith.constant dense<0.000000e+00> : vector<64xf32>
    %432 = vector.multi_reduction <add>, %431, %cst_51 [1] : vector<64x128xf32> to vector<64xf32>
    %433 = vector.shape_cast %432 : vector<64xf32> to vector<64x1xf32>
    %cst_52 = arith.constant 1.280000e+02 : f32
    %434 = vector.broadcast %cst_52 : f32 to vector<64x1xf32>
    %435 = arith.divf %433, %434 : vector<64x1xf32>
    %436 = vector.broadcast %426 : vector<64x1xf32> to vector<64x128xf32>
    %437 = arith.subf %420, %436 : vector<64x128xf32>
    %cst_53 = arith.constant 9.99999996E-13 : f32
    %438 = vector.broadcast %cst_53 : f32 to vector<64x1xf32>
    %439 = arith.addf %435, %438 : vector<64x1xf32>
    %440 = math.rsqrt %439 : vector<64x1xf32>
    %441 = vector.broadcast %440 : vector<64x1xf32> to vector<64x128xf32>
    %442 = arith.mulf %437, %441 : vector<64x128xf32>
    %443 = vector.broadcast %421 : vector<1x128xf32> to vector<64x128xf32>
    %444 = arith.mulf %442, %443 : vector<64x128xf32>
    %445 = vector.broadcast %422 : vector<1x128xf32> to vector<64x128xf32>
    %446 = arith.addf %444, %445 : vector<64x128xf32>
    %447 = arith.truncf %446 : vector<64x128xf32> to vector<64x128xbf16>
    %c0_54 = arith.constant 0 : index
    %c0_55 = arith.constant 0 : index
    %448 = vector.load %arg10[%c0_54, %c0_55] : memref<128x256xbf16, #tpu.memory_space<vmem>>, vector<128x256xbf16>
    %cst_56 = arith.constant dense<0.000000e+00> : vector<64x256xf32>
    %449 = tpu.matmul %447, %448, %cst_56 {dimension_numbers = #tpu.dot_dimension_numbers<[1], [0], [0], [1], [0, 0, 1, 1], [], []>} : vector<64x128xbf16>, vector<128x256xbf16>, vector<64x256xf32> -> vector<64x256xf32>
    %c0_57 = arith.constant 0 : index
    %c0_58 = arith.constant 0 : index
    %450 = vector.load %arg11[%c0_57, %c0_58] : memref<1x256xf32, #tpu.memory_space<vmem>>, vector<1x256xf32>
    %451 = vector.broadcast %450 : vector<1x256xf32> to vector<64x256xf32>
    %452 = arith.addf %449, %451 : vector<64x256xf32>
    %cst_59 = arith.constant 5.000000e-01 : f32
    %453 = vector.broadcast %cst_59 : f32 to vector<64x256xf32>
    %454 = arith.mulf %453, %452 : vector<64x256xf32>
    %cst_60 = arith.constant 4.471500e-02 : f32
    %455 = vector.broadcast %cst_60 : f32 to vector<64x256xf32>
    %456 = arith.mulf %455, %452 : vector<64x256xf32>
    %457 = arith.mulf %456, %452 : vector<64x256xf32>
    %458 = arith.mulf %457, %452 : vector<64x256xf32>
    %459 = arith.addf %452, %458 : vector<64x256xf32>
    %cst_61 = arith.constant 0.797884583 : f32
    %460 = vector.broadcast %cst_61 : f32 to vector<64x256xf32>
    %461 = arith.mulf %460, %459 : vector<64x256xf32>
    %462 = math.tanh %461 : vector<64x256xf32>
    %cst_62 = arith.constant 1.000000e+00 : f32
    %463 = vector.broadcast %cst_62 : f32 to vector<64x256xf32>
    %464 = arith.addf %463, %462 : vector<64x256xf32>
    %465 = arith.mulf %454, %464 : vector<64x256xf32>
    %466 = arith.truncf %465 : vector<64x256xf32> to vector<64x256xbf16>
    %c0_63 = arith.constant 0 : index
    %c0_64 = arith.constant 0 : index
    %467 = vector.load %arg12[%c0_63, %c0_64] : memref<256x128xbf16, #tpu.memory_space<vmem>>, vector<256x128xbf16>
    %cst_65 = arith.constant dense<0.000000e+00> : vector<64x128xf32>
    %468 = tpu.matmul %466, %467, %cst_65 {dimension_numbers = #tpu.dot_dimension_numbers<[1], [0], [0], [1], [0, 0, 1, 1], [], []>} : vector<64x256xbf16>, vector<256x128xbf16>, vector<64x128xf32> -> vector<64x128xf32>
    %c0_66 = arith.constant 0 : index
    %c0_67 = arith.constant 0 : index
    %469 = vector.load %arg13[%c0_66, %c0_67] : memref<1x128xf32, #tpu.memory_space<vmem>>, vector<1x128xf32>
    %470 = vector.broadcast %469 : vector<1x128xf32> to vector<64x128xf32>
    %471 = arith.addf %468, %470 : vector<64x128xf32>
    %472 = arith.addf %471, %446 : vector<64x128xf32>
    %c0_68 = arith.constant 0 : index
    %c0_69 = arith.constant 0 : index
    %473 = vector.load %arg14[%c0_68, %c0_69] : memref<1x128xf32, #tpu.memory_space<vmem>>, vector<1x128xf32>
    %c0_70 = arith.constant 0 : index
    %c0_71 = arith.constant 0 : index
    %474 = vector.load %arg15[%c0_70, %c0_71] : memref<1x128xf32, #tpu.memory_space<vmem>>, vector<1x128xf32>
    %cst_72 = arith.constant dense<0.000000e+00> : vector<64xf32>
    %475 = vector.multi_reduction <add>, %472, %cst_72 [1] : vector<64x128xf32> to vector<64xf32>
    %476 = vector.shape_cast %475 : vector<64xf32> to vector<64x1xf32>
    %cst_73 = arith.constant 1.280000e+02 : f32
    %477 = vector.broadcast %cst_73 : f32 to vector<64x1xf32>
    %478 = arith.divf %476, %477 : vector<64x1xf32>
    %479 = vector.broadcast %478 : vector<64x1xf32> to vector<64x128xf32>
    %480 = arith.subf %472, %479 : vector<64x128xf32>
    %481 = vector.broadcast %478 : vector<64x1xf32> to vector<64x128xf32>
    %482 = arith.subf %472, %481 : vector<64x128xf32>
    %483 = arith.mulf %480, %482 : vector<64x128xf32>
    %cst_74 = arith.constant dense<0.000000e+00> : vector<64xf32>
    %484 = vector.multi_reduction <add>, %483, %cst_74 [1] : vector<64x128xf32> to vector<64xf32>
    %485 = vector.shape_cast %484 : vector<64xf32> to vector<64x1xf32>
    %cst_75 = arith.constant 1.280000e+02 : f32
    %486 = vector.broadcast %cst_75 : f32 to vector<64x1xf32>
    %487 = arith.divf %485, %486 : vector<64x1xf32>
    %488 = vector.broadcast %478 : vector<64x1xf32> to vector<64x128xf32>
    %489 = arith.subf %472, %488 : vector<64x128xf32>
    %cst_76 = arith.constant 9.99999996E-13 : f32
    %490 = vector.broadcast %cst_76 : f32 to vector<64x1xf32>
    %491 = arith.addf %487, %490 : vector<64x1xf32>
    %492 = math.rsqrt %491 : vector<64x1xf32>
    %493 = vector.broadcast %492 : vector<64x1xf32> to vector<64x128xf32>
    %494 = arith.mulf %489, %493 : vector<64x128xf32>
    %495 = vector.broadcast %473 : vector<1x128xf32> to vector<64x128xf32>
    %496 = arith.mulf %494, %495 : vector<64x128xf32>
    %497 = vector.broadcast %474 : vector<1x128xf32> to vector<64x128xf32>
    %498 = arith.addf %496, %497 : vector<64x128xf32>
    %499 = arith.truncf %498 : vector<64x128xf32> to vector<64x128xbf16>
    %c0_77 = arith.constant 0 : index
    %c0_78 = arith.constant 0 : index
    %c0_79 = arith.constant 0 : index
    %500 = vector.load %arg16[%c0_77, %c0_78, %c0_79] : memref<1x64x128xbf16, #tpu.memory_space<vmem>>, vector<1x64x128xbf16>
    %501 = vector.shape_cast %500 : vector<1x64x128xbf16> to vector<64x128xbf16>
    %502 = vector.shape_cast %499 : vector<64x128xbf16> to vector<1x64x128xbf16>
    tpu.vector_store %arg16[%c0_77, %c0_78, %c0_79], %502 {strides = array<i32>} : memref<1x64x128xbf16, #tpu.memory_space<vmem>>, vector<1x64x128xbf16>,
    return
  }
  func.func @transform_0(%arg0: i32) -> (i32, i32, i32) {
    %c0_i32 = arith.constant 0 : i32
    %c0_i32_0 = arith.constant 0 : i32
    %c0_i32_1 = arith.constant 0 : i32
    return %arg0, %c0_i32, %c0_i32_0 : i32, i32, i32
  }
  func.func @transform_1(%arg0: i32) -> (i32, i32) {
    %c0_i32 = arith.constant 0 : i32
    %c0_i32_0 = arith.constant 0 : i32
    %c0_i32_1 = arith.constant 0 : i32
    return %c0_i32, %c0_i32_0 : i32, i32
  }
  func.func @transform_2(%arg0: i32) -> (i32, i32) {
    %c0_i32 = arith.constant 0 : i32
    %c0_i32_0 = arith.constant 0 : i32
    %c0_i32_1 = arith.constant 0 : i32
    return %c0_i32, %c0_i32_0 : i32, i32
  }
  func.func @transform_3(%arg0: i32) -> (i32, i32) {
    %c0_i32 = arith.constant 0 : i32
    %c0_i32_0 = arith.constant 0 : i32
    %c0_i32_1 = arith.constant 0 : i32
    return %c0_i32, %c0_i32_0 : i32, i32
  }
  func.func @transform_4(%arg0: i32) -> (i32, i32) {
    %c0_i32 = arith.constant 0 : i32
    %c0_i32_0 = arith.constant 0 : i32
    %c0_i32_1 = arith.constant 0 : i32
    return %c0_i32, %c0_i32_0 : i32, i32
  }
  func.func @transform_5(%arg0: i32) -> (i32, i32) {
    %c0_i32 = arith.constant 0 : i32
    %c0_i32_0 = arith.constant 0 : i32
    %c0_i32_1 = arith.constant 0 : i32
    return %c0_i32, %c0_i32_0 : i32, i32
  }
  func.func @transform_6(%arg0: i32) -> (i32, i32, i32) {
    %c0_i32 = arith.constant 0 : i32
    %c0_i32_0 = arith.constant 0 : i32
    %c0_i32_1 = arith.constant 0 : i32
    return %arg0, %c0_i32, %c0_i32_0 : i32, i32, i32
  }
  func.func @transform_7(%arg0: i32) -> (i32, i32) {
    %c0_i32 = arith.constant 0 : i32
    %c0_i32_0 = arith.constant 0 : i32
    %c0_i32_1 = arith.constant 0 : i32
    return %c0_i32, %c0_i32_0 : i32, i32
  }
  func.func @transform_8(%arg0: i32) -> (i32, i32) {
    %c0_i32 = arith.constant 0 : i32
    %c0_i32_0 = arith.constant 0 : i32
    %c0_i32_1 = arith.constant 0 : i32
    return %c0_i32, %c0_i32_0 : i32, i32
  }
  func.func @transform_9(%arg0: i32) -> (i32, i32) {
    %c0_i32 = arith.constant 0 : i32
    %c0_i32_0 = arith.constant 0 : i32
    %c0_i32_1 = arith.constant 0 : i32
    return %c0_i32, %c0_i32_0 : i32, i32
  }
  func.func @transform_10(%arg0: i32) -> (i32, i32) {
    %c0_i32 = arith.constant 0 : i32
    %c0_i32_0 = arith.constant 0 : i32
    %c0_i32_1 = arith.constant 0 : i32
    return %c0_i32, %c0_i32_0 : i32, i32
  }
  func.func @transform_11(%arg0: i32) -> (i32, i32) {
    %c0_i32 = arith.constant 0 : i32
    %c0_i32_0 = arith.constant 0 : i32
    %c0_i32_1 = arith.constant 0 : i32
    return %c0_i32, %c0_i32_0 : i32, i32
  }
  func.func @transform_12(%arg0: i32) -> (i32, i32) {
    %c0_i32 = arith.constant 0 : i32
    %c0_i32_0 = arith.constant 0 : i32
    %c0_i32_1 = arith.constant 0 : i32
    return %c0_i32, %c0_i32_0 : i32, i32
  }
  func.func @transform_13(%arg0: i32) -> (i32, i32) {
    %c0_i32 = arith.constant 0 : i32
    %c0_i32_0 = arith.constant 0 : i32
    %c0_i32_1 = arith.constant 0 : i32
    return %c0_i32, %c0_i32_0 : i32, i32
  }
  func.func @transform_14(%arg0: i32) -> (i32, i32) {
    %c0_i32 = arith.constant 0 : i32
    %c0_i32_0 = arith.constant 0 : i32
    %c0_i32_1 = arith.constant 0 : i32
    return %c0_i32, %c0_i32_0 : i32, i32
  }
  func.func @transform_15(%arg0: i32) -> (i32, i32, i32) {
    %c0_i32 = arith.constant 0 : i32
    %c0_i32_0 = arith.constant 0 : i32
    %c0_i32_1 = arith.constant 0 : i32
    return %arg0, %c0_i32, %c0_i32_0 : i32, i32, i32
  }
}

module attributes {stable_mosaic.version = 11 : i64} {
  func.func @_head_kernel(%arg0: i32, %arg1: memref<2x128xbf16, #tpu.memory_space<vmem>>, %arg2: memref<128x128xbf16, #tpu.memory_space<vmem>>, %arg3: memref<1x128xf32, #tpu.memory_space<vmem>>, %arg4: memref<128x2xbf16, #tpu.memory_space<vmem>>, %arg5: memref<1x2xf32, #tpu.memory_space<vmem>>, %arg6: memref<2x2xf32, #tpu.memory_space<vmem>>) attributes {dimension_semantics = [#tpu.dimension_semantics<arbitrary>], iteration_bounds = array<i64: 1>, scalar_prefetch = 0 : i64, scratch_operands = 0 : i64, tpu.core_type = #tpu.core_type<tc>, window_params = [{pipeline_mode = #tpu.pipeline_mode<synchronous>, transform_indices = @transform_0, window_bounds = array<i64: 2, 128>}, {pipeline_mode = #tpu.pipeline_mode<synchronous>, transform_indices = @transform_1, window_bounds = array<i64: 128, 128>}, {pipeline_mode = #tpu.pipeline_mode<synchronous>, transform_indices = @transform_2, window_bounds = array<i64: 1, 128>}, {pipeline_mode = #tpu.pipeline_mode<synchronous>, transform_indices = @transform_3, window_bounds = array<i64: 128, 2>}, {pipeline_mode = #tpu.pipeline_mode<synchronous>, transform_indices = @transform_4, window_bounds = array<i64: 1, 2>}, {pipeline_mode = #tpu.pipeline_mode<synchronous>, transform_indices = @transform_5, window_bounds = array<i64: 2, 2>}]} {
    %c0 = arith.constant 0 : index
    %c0_0 = arith.constant 0 : index
    %0 = vector.load %arg1[%c0, %c0_0] : memref<2x128xbf16, #tpu.memory_space<vmem>>, vector<2x128xbf16>
    %c0_1 = arith.constant 0 : index
    %c0_2 = arith.constant 0 : index
    %1 = vector.load %arg2[%c0_1, %c0_2] : memref<128x128xbf16, #tpu.memory_space<vmem>>, vector<128x128xbf16>
    %cst = arith.constant dense<0.000000e+00> : vector<2x128xf32>
    %2 = tpu.matmul %0, %1, %cst {dimension_numbers = #tpu.dot_dimension_numbers<[1], [0], [0], [1], [0, 0, 1, 1], [], []>} : vector<2x128xbf16>, vector<128x128xbf16>, vector<2x128xf32> -> vector<2x128xf32>
    %c0_3 = arith.constant 0 : index
    %c0_4 = arith.constant 0 : index
    %3 = vector.load %arg3[%c0_3, %c0_4] : memref<1x128xf32, #tpu.memory_space<vmem>>, vector<1x128xf32>
    %4 = vector.broadcast %3 : vector<1x128xf32> to vector<2x128xf32>
    %5 = arith.addf %2, %4 : vector<2x128xf32>
    %6 = math.tanh %5 : vector<2x128xf32>
    %7 = arith.truncf %6 : vector<2x128xf32> to vector<2x128xbf16>
    %c0_5 = arith.constant 0 : index
    %c0_6 = arith.constant 0 : index
    %8 = vector.load %arg4[%c0_5, %c0_6] : memref<128x2xbf16, #tpu.memory_space<vmem>>, vector<128x2xbf16>
    %cst_7 = arith.constant dense<0.000000e+00> : vector<2x2xf32>
    %9 = tpu.matmul %7, %8, %cst_7 {dimension_numbers = #tpu.dot_dimension_numbers<[1], [0], [0], [1], [0, 0, 1, 1], [], []>} : vector<2x128xbf16>, vector<128x2xbf16>, vector<2x2xf32> -> vector<2x2xf32>
    %c0_8 = arith.constant 0 : index
    %c0_9 = arith.constant 0 : index
    %10 = vector.load %arg5[%c0_8, %c0_9] : memref<1x2xf32, #tpu.memory_space<vmem>>, vector<1x2xf32>
    %11 = vector.broadcast %10 : vector<1x2xf32> to vector<2x2xf32>
    %12 = arith.addf %9, %11 : vector<2x2xf32>
    %c0_10 = arith.constant 0 : index
    %c0_11 = arith.constant 0 : index
    %13 = vector.load %arg6[%c0_10, %c0_11] : memref<2x2xf32, #tpu.memory_space<vmem>>, vector<2x2xf32>
    tpu.vector_store %arg6[%c0_10, %c0_11], %12 {strides = array<i32>} : memref<2x2xf32, #tpu.memory_space<vmem>>, vector<2x2xf32>,
    return
  }
  func.func @transform_0(%arg0: i32) -> (i32, i32) {
    %c0_i32 = arith.constant 0 : i32
    %c0_i32_0 = arith.constant 0 : i32
    %c0_i32_1 = arith.constant 0 : i32
    return %c0_i32, %c0_i32_0 : i32, i32
  }
  func.func @transform_1(%arg0: i32) -> (i32, i32) {
    %c0_i32 = arith.constant 0 : i32
    %c0_i32_0 = arith.constant 0 : i32
    %c0_i32_1 = arith.constant 0 : i32
    return %c0_i32, %c0_i32_0 : i32, i32
  }
  func.func @transform_2(%arg0: i32) -> (i32, i32) {
    %c0_i32 = arith.constant 0 : i32
    %c0_i32_0 = arith.constant 0 : i32
    %c0_i32_1 = arith.constant 0 : i32
    return %c0_i32, %c0_i32_0 : i32, i32
  }
  func.func @transform_3(%arg0: i32) -> (i32, i32) {
    %c0_i32 = arith.constant 0 : i32
    %c0_i32_0 = arith.constant 0 : i32
    %c0_i32_1 = arith.constant 0 : i32
    return %c0_i32, %c0_i32_0 : i32, i32
  }
  func.func @transform_4(%arg0: i32) -> (i32, i32) {
    %c0_i32 = arith.constant 0 : i32
    %c0_i32_0 = arith.constant 0 : i32
    %c0_i32_1 = arith.constant 0 : i32
    return %c0_i32, %c0_i32_0 : i32, i32
  }
  func.func @transform_5(%arg0: i32) -> (i32, i32) {
    %c0_i32 = arith.constant 0 : i32
    %c0_i32_0 = arith.constant 0 : i32
    %c0_i32_1 = arith.constant 0 : i32
    return %c0_i32, %c0_i32_0 : i32, i32
  }
}

</mosaic_0001>

<llo_original>
// kernel: tpu_custom_call.1
$region0: #{tpu_custom_call.1}
  #allocation0 [shape = 'u32[]', space=smem, size = 0x4, offset = 0x4, fixed_abs, tag = 'smem constant byte address 0x4 - core index']
  #allocation1 [shape = 'u32[72,128]{1,0:T(1,128)}', space=vmem, size = 0x9000, scoped, tag = 'internal scratch']
  %s0 = inlined_call_operand.hbm [shape: f32[64,128], index: 0, kind: input, shape index: {}]
  %s1 = inlined_call_operand.hbm [shape: f32[64,64], index: 1, kind: output, shape index: {}]
  %s2 = sld [smem:[#allocation0]]
  $region18: #{tpu_custom_call.1} parent=0
    _
  %s4 = ssub.s32 1, %s2
  %s5 = scalar_select 0, %s4, %s2
  $region1: #{tpu_custom_call.1} parent=0
    #allocation2 [shape = 'u8[32768]{0}', space=vmem, size = 0x8000, scoped, tag = 'input window, operand 0, single buffered']
    #allocation3 [shape = 's32[1]{0}', space=sflag, size = 0x4, scoped, tag = 'scoped memory for tpu_custom_call.1']
    #allocation4 [shape = 's32[1]{0}', space=sflag, size = 0x4, scoped, tag = 'scoped memory for tpu_custom_call.1']
    #allocation5 [shape = 'u8[32768]{0}', space=vmem, size = 0x8000, scoped, tag = 'output window, operand 0, single buffered']
    %6 = vsyncpa [#allocation3], 0
    %7 = vsyncpa [#allocation4], 0
    // Predicated region
    $region2: #{tpu_custom_call.1} parent=1 // pred_check
      _
    $region3: #{tpu_custom_call.1} parent=1 // pred_check_branch
      %9 = sbr.rel (0) target = $region5
    $region4: #{tpu_custom_call.1} parent=1 // pred_region
      %11 = vsyncadd [#allocation3], 0
      %s12 = sshll.u32 %s0, 4
      %s13 = int_to_ptr.hbm [resolvable:$true] %s12
      %s14 = sshll.u32 [#allocation2], 4
      %s15 = int_to_ptr.vmem [resolvable:$true] %s14
      %20 = dma.hbm_to_vmem [thread:$0]  %s13, 1024, %s15, [#allocation3], 128, 128, 8
    $region5: #{tpu_custom_call.1} parent=1 // pred_fallthru
      _
    // Predicated region
    $region6: #{tpu_custom_call.1} parent=1 // pred_check
      _
    $region7: #{tpu_custom_call.1} parent=1 // pred_check_branch
      %22 = sbr.rel (0) target = $region9
    $region8: #{tpu_custom_call.1} parent=1 // pred_region
      %24 = dma.done [#allocation3], 1024
    $region9: #{tpu_custom_call.1} parent=1 // pred_fallthru
      _
    %v25 = vld [vmem:[#allocation2] sm:$0xff]
    %v26 = vld [vmem:[#allocation2 + $0x8] sm:$0xff]
    %v27 = vld [vmem:[#allocation2 + $0x10] sm:$0xff]
    %v28 = vld [vmem:[#allocation2 + $0x18] sm:$0xff]
    %v29 = vld [vmem:[#allocation2 + $0x20] sm:$0xff]
    %v30 = vld [vmem:[#allocation2 + $0x28] sm:$0xff]
    %v31 = vld [vmem:[#allocation2 + $0x30] sm:$0xff]
    %v32 = vld [vmem:[#allocation2 + $0x38] sm:$0xff]
    %s34 = sor.u32 256, 64
    %35 = vrot.lane.b32.xlu0 %v25, %s34
    %v36 = vpop.permute.xlu0 %35
    %s38 = sor.u32 256, 72
    %39 = vrot.lane.b32.xlu0 %v26, %s38
    %v40 = vpop.permute.xlu0 %39
    %s42 = sor.u32 256, 80
    %43 = vrot.lane.b32.xlu0 %v27, %s42
    %v44 = vpop.permute.xlu0 %43
    %s46 = sor.u32 256, 88
    %47 = vrot.lane.b32.xlu0 %v28, %s46
    %v48 = vpop.permute.xlu0 %47
    %s50 = sor.u32 256, 96
    %51 = vrot.lane.b32.xlu0 %v29, %s50
    %v52 = vpop.permute.xlu0 %51
    %s54 = sor.u32 256, 104
    %55 = vrot.lane.b32.xlu0 %v30, %s54
    %v56 = vpop.permute.xlu0 %55
    %s58 = sor.u32 256, 112
    %59 = vrot.lane.b32.xlu0 %v31, %s58
    %v60 = vpop.permute.xlu0 %59
    %s62 = sor.u32 256, 120
    %63 = vrot.lane.b32.xlu0 %v32, %s62
    %v64 = vpop.permute.xlu0 %63
    %vm65 = vcmask 523264
    %66 = vst.msk [vmem:[#allocation5] sm:$0xff] %vm65, %v36
    %67 = vst.msk [vmem:[#allocation5 + $0x8] sm:$0xff] %vm65, %v40
    %68 = vst.msk [vmem:[#allocation5 + $0x10] sm:$0xff] %vm65, %v44
    %69 = vst.msk [vmem:[#allocation5 + $0x18] sm:$0xff] %vm65, %v48
    %70 = vst.msk [vmem:[#allocation5 + $0x20] sm:$0xff] %vm65, %v52
    %71 = vst.msk [vmem:[#allocation5 + $0x28] sm:$0xff] %vm65, %v56
    %72 = vst.msk [vmem:[#allocation5 + $0x30] sm:$0xff] %vm65, %v60
    %73 = vst.msk [vmem:[#allocation5 + $0x38] sm:$0xff] %vm65, %v64
    // Predicated region
    $region10: #{tpu_custom_call.1} parent=1 // pred_check
      _
    $region11: #{tpu_custom_call.1} parent=1 // pred_check_branch
      %75 = sbr.rel (0) target = $region13
    $region12: #{tpu_custom_call.1} parent=1 // pred_region
      %77 = vsyncadd [#allocation4], 0
      %s78 = sshll.u32 [#allocation5], 4
      %s79 = int_to_ptr.vmem [resolvable:$true] %s78
      %s80 = sshll.u32 %s1, 4
      %s81 = int_to_ptr.hbm [resolvable:$true] %s80
      %86 = dma.vmem_to_hbm [thread:$0]  %s79, 1024, %s81, [#allocation4], 128, 128, 8
    $region13: #{tpu_custom_call.1} parent=1 // pred_fallthru
      _
    // Predicated region
    $region14: #{tpu_custom_call.1} parent=1 // pred_check
      _
    $region15: #{tpu_custom_call.1} parent=1 // pred_check_branch
      %88 = sbr.rel (0) target = $region17
    $region16: #{tpu_custom_call.1} parent=1 // pred_region
      %90 = dma.done [#allocation4], 1024
    $region17: #{tpu_custom_call.1} parent=1 // pred_fallthru
      _
    %91 = vsyncpa [#allocation3], 1
    %92 = vsyncpa [#allocation4], 1

// kernel: detox_xlnet_forward.4
$region0: #{detox_xlnet_forward.4}
  #allocation0 [shape = 'u32[]', space=smem, size = 0x4, offset = 0x4, fixed_abs, tag = 'smem constant byte address 0x4 - core index']
  #allocation1 [shape = 'u32[72,128]{1,0:T(1,128)}', space=vmem, size = 0x9000, scoped, tag = 'internal scratch']
  %s0 = inlined_call_operand.vmem [shape: bf16[128,128], index: 0, kind: input, shape index: {}]
  %s1 = inlined_call_operand.vmem [shape: bf16[2,128,128], index: 1, kind: input, shape index: {}]
  %s2 = inlined_call_operand.vmem [shape: bf16[2,4,128], index: 2, kind: input, shape index: {}]
  %s3 = inlined_call_operand.vmem [shape: bf16[2,128,128], index: 3, kind: output, shape index: {0}]
  %s4 = inlined_call_operand.vmem [shape: f32[2,4,128], index: 4, kind: output, shape index: {1}]
  %5 = xla_tuple %s3, %s4
  %s6 = sld [smem:[#allocation0]]
  $region53: #{detox_xlnet_forward.4} parent=0
    _
  %s8 = ssub.s32 1, %s6
  %s9 = scalar_select 0, %s8, %s6
  loop: start=0, step=1, limit=4
  $region2: #{detox_xlnet_forward.4} parent=0 // loop_pre_header
    _
  $region3: #{detox_xlnet_forward.4} parent=0 // loop_header
    %s11 = sphi 0, %s15
    %p12 = scmp.ge.s32.totalorder %s11, 4
    %s19 = sphi 0, %s19
    %s21 = sphi 0, %s19
    %s22 = sphi 0, %s21
    %s36 = sphi 0, %s22
    %s42 = sphi 0, %s44
    %s45 = sphi 0, %s42
    %s46 = sphi 0, %s45
    %s62 = sphi 0, %s46
    %s68 = sphi 0, %s70
    %s71 = sphi 0, %s68
    %s72 = sphi 0, %s71
    %s88 = sphi 0, %s72
    %s94 = sphi 0, %s96
    %s97 = sphi 0, %s94
    %s98 = sphi 0, %s97
    %s114 = sphi 0, %s98
    %s120 = sphi 0, %s122
    %s123 = sphi 0, %s120
    %s124 = sphi 0, %s123
    %s140 = sphi 0, %s124
  $region4: #{detox_xlnet_forward.4} parent=0 // loop_header_branch
    %14 = sbr.rel (%p12) target = $region8
  $region5: #{detox_xlnet_forward.4} parent=0 // loop_body
    %s16 = ssub.s32 %s11, 1
    %s17 = ssub.s32 %s11, 2
    %s18 = sadd.s32 %s11, 1
    %s20 = sadd.s32 %s19, 1
    %p23 = scmp.eq.s32.totalorder %s11, 1
    %p24 = scmp.ne.s32.totalorder %s19, %s21
    %p25 = scmp.eq.s32.totalorder %s11, 0
    %p26 = por %p24, %p25
    %p27 = scmp.ne.s32.totalorder %s19, %s21
    %p28 = scmp.eq.s32.totalorder %s16, 1
    %p29 = por %p27, %p28
    %p30 = scmp.ne.s32.totalorder %s21, %s22
    %p31 = scmp.eq.s32.totalorder %s16, 0
    %p32 = por %p30, %p31
    %p33 = scmp.ne.s32.totalorder %s21, %s22
    %p34 = scmp.eq.s32.totalorder %s17, 1
    %p35 = por %p33, %p34
    %p37 = scmp.ne.s32.totalorder %s22, %s36
    %p38 = scmp.eq.s32.totalorder %s17, 0
    %p39 = por %p37, %p38
    %s40 = ssub.s32 %s11, %s18
    %p41 = scmp.eq.s32.totalorder %s40, 0
    %s43 = sadd.s32 %s42, 1
    %s44 = scalar_select %p41, %s42, %s43
    %p47 = pneg %p41
    %p48 = scmp.eq.s32.totalorder %s11, 1
    %p49 = por %p47, %p48
    %p50 = scmp.ne.s32.totalorder %s42, %s45
    %p51 = scmp.eq.s32.totalorder %s11, 0
    %p52 = por %p50, %p51
    %p53 = scmp.ne.s32.totalorder %s42, %s45
    %p54 = scmp.eq.s32.totalorder %s16, 1
    %p55 = por %p53, %p54
    %p56 = scmp.ne.s32.totalorder %s45, %s46
    %p57 = scmp.eq.s32.totalorder %s16, 0
    %p58 = por %p56, %p57
    %p59 = scmp.ne.s32.totalorder %s45, %s46
    %p60 = scmp.eq.s32.totalorder %s17, 1
    %p61 = por %p59, %p60
    %p63 = scmp.ne.s32.totalorder %s46, %s62
    %p64 = scmp.eq.s32.totalorder %s17, 0
    %p65 = por %p63, %p64
    %s66 = ssub.s32 %s11, %s18
    %p67 = scmp.eq.s32.totalorder %s66, 0
    %s69 = sadd.s32 %s68, 1
    %s70 = scalar_select %p67, %s68, %s69
    %p73 = pneg %p67
    %p74 = scmp.eq.s32.totalorder %s11, 1
    %p75 = por %p73, %p74
    %p76 = scmp.ne.s32.totalorder %s68, %s71
    %p77 = scmp.eq.s32.totalorder %s11, 0
    %p78 = por %p76, %p77
    %p79 = scmp.ne.s32.totalorder %s68, %s71
    %p80 = scmp.eq.s32.totalorder %s16, 1
    %p81 = por %p79, %p80
    %p82 = scmp.ne.s32.totalorder %s71, %s72
    %p83 = scmp.eq.s32.totalorder %s16, 0
    %p84 = por %p82, %p83
    %p85 = scmp.ne.s32.totalorder %s71, %s72
    %p86 = scmp.eq.s32.totalorder %s17, 1
    %p87 = por %p85, %p86
    %p89 = scmp.ne.s32.totalorder %s72, %s88
    %p90 = scmp.eq.s32.totalorder %s17, 0
    %p91 = por %p89, %p90
    %s92 = ssub.s32 %s11, %s18
    %p93 = scmp.eq.s32.totalorder %s92, 0
    %s95 = sadd.s32 %s94, 1
    %s96 = scalar_select %p93, %s94, %s95
    %p99 = pneg %p93
    %p100 = scmp.eq.s32.totalorder %s11, 1
    %p101 = por %p99, %p100
    %p102 = scmp.ne.s32.totalorder %s94, %s97
    %p103 = scmp.eq.s32.totalorder %s11, 0
    %p104 = por %p102, %p103
    %p105 = scmp.ne.s32.totalorder %s94, %s97
    %p106 = scmp.eq.s32.totalorder %s16, 1
    %p107 = por %p105, %p106
    %p108 = scmp.ne.s32.totalorder %s97, %s98
    %p109 = scmp.eq.s32.totalorder %s16, 0
    %p110 = por %p108, %p109
    %p111 = scmp.ne.s32.totalorder %s97, %s98
    %p112 = scmp.eq.s32.totalorder %s17, 1
    %p113 = por %p111, %p112
    %p115 = scmp.ne.s32.totalorder %s98, %s114
    %p116 = scmp.eq.s32.totalorder %s17, 0
    %p117 = por %p115, %p116
    %s118 = ssub.s32 %s11, %s18
    %p119 = scmp.eq.s32.totalorder %s118, 0
    %s121 = sadd.s32 %s120, 1
    %s122 = scalar_select %p119, %s120, %s121
    %p125 = pneg %p119
    %p126 = scmp.eq.s32.totalorder %s11, 1
    %p127 = por %p125, %p126
    %p128 = scmp.ne.s32.totalorder %s120, %s123
    %p129 = scmp.eq.s32.totalorder %s11, 0
    %p130 = por %p128, %p129
    %p131 = scmp.ne.s32.totalorder %s120, %s123
    %p132 = scmp.eq.s32.totalorder %s16, 1
    %p133 = por %p131, %p132
    %p134 = scmp.ne.s32.totalorder %s123, %s124
    %p135 = scmp.eq.s32.totalorder %s16, 0
    %p136 = por %p134, %p135
    %p137 = scmp.ne.s32.totalorder %s123, %s124
    %p138 = scmp.eq.s32.totalorder %s17, 1
    %p139 = por %p137, %p138
    %p141 = scmp.ne.s32.totalorder %s124, %s140
    %p142 = scmp.eq.s32.totalorder %s17, 0
    %p143 = por %p141, %p142
    %p144 = scmp.le.s32.totalorder 1, %s11
    %p145 = scmp.lt.s32.totalorder %s11, 3
    %p146 = pnand %p144, %p145
    %p147 = pneg %p146
    // Predicated region
    $region9: #{detox_xlnet_forward.4} parent=5 // pred_check
      _
    $region10: #{detox_xlnet_forward.4} parent=5 // pred_check_branch
      %149 = sbr.rel (%p146) target = $region12
    $region11: #{detox_xlnet_forward.4} parent=5 // pred_region
      %s150 = ssub.s32 %s11, 1
      // Predicated region
      $region13: #{detox_xlnet_forward.4} parent=11 // pred_check
        %p151 = pneg %p32
      $region14: #{detox_xlnet_forward.4} parent=11 // pred_check_branch
        %153 = sbr.rel (%p151) target = $region16
      $region15: #{detox_xlnet_forward.4} parent=11 // pred_region
        _
      $region16: #{detox_xlnet_forward.4} parent=11 // pred_fallthru
        _
    $region12: #{detox_xlnet_forward.4} parent=5 // pred_fallthru
      _
    %p154 = scmp.lt.s32.totalorder %s11, 2
    // Predicated region
    $region17: #{detox_xlnet_forward.4} parent=5 // pred_check
      %p155 = pneg %p154
    $region18: #{detox_xlnet_forward.4} parent=5 // pred_check_branch
      %157 = sbr.rel (%p155) target = $region20
    $region19: #{detox_xlnet_forward.4} parent=5 // pred_region
      // Predicated region
      $region21: #{detox_xlnet_forward.4} parent=19 // pred_check
        %p158 = pneg %p52
      $region22: #{detox_xlnet_forward.4} parent=19 // pred_check_branch
        %160 = sbr.rel (%p158) target = $region24
      $region23: #{detox_xlnet_forward.4} parent=19 // pred_region
        %p161 = scmp.lt.s32.totalorder %s11, 1
        %s162 = scalar_select %p161, %s11, 1
        %s163 = smul.addr %s162, 16
        %s164 = smul.addr %s163, 4
        %s165 = scalar_lea.vmem %s1, %s164
      $region24: #{detox_xlnet_forward.4} parent=19 // pred_fallthru
        _
      // Predicated region
      $region25: #{detox_xlnet_forward.4} parent=19 // pred_check
        %p166 = pneg %p78
      $region26: #{detox_xlnet_forward.4} parent=19 // pred_check_branch
        %168 = sbr.rel (%p166) target = $region28
      $region27: #{detox_xlnet_forward.4} parent=19 // pred_region
        %p169 = scmp.lt.s32.totalorder %s11, 1
        %s170 = scalar_select %p169, %s11, 1
        %s171 = smul.addr %s170, 2
        %s172 = scalar_lea.vmem %s2, %s171
      $region28: #{detox_xlnet_forward.4} parent=19 // pred_fallthru
        _
    $region20: #{detox_xlnet_forward.4} parent=5 // pred_fallthru
      _
    %p173 = scmp.le.s32.totalorder 1, %s11
    %p174 = scmp.lt.s32.totalorder %s11, 3
    %p175 = pnand %p173, %p174
    %p176 = pneg %p175
    // Predicated region
    $region29: #{detox_xlnet_forward.4} parent=5 // pred_check
      _
    $region30: #{detox_xlnet_forward.4} parent=5 // pred_check_branch
      %178 = sbr.rel (%p175) target = $region32
    $region31: #{detox_xlnet_forward.4} parent=5 // pred_region
      %s179 = ssub.s32 %s11, 1
      %p180 = pneg %p32
      %p181 = pneg %p29
      %p182 = scmp.lt.s32.totalorder %s16, 1
      %s183 = scalar_select %p182, %s16, 1
      %s184 = smul.addr %s183, 16
      %s185 = smul.addr %s184, 4
      %s186 = scalar_lea.vmem %s1, %s185
      %p187 = pneg %p58
      %p188 = pneg %p55
      %p189 = scmp.lt.s32.totalorder %s16, 1
      %s190 = scalar_select %p189, %s16, 1
      %s191 = smul.addr %s190, 2
      %s192 = scalar_lea.vmem %s2, %s191
      %p193 = pneg %p84
      %p194 = pneg %p81
      %p195 = pneg %p110
      %p196 = pneg %p107
      %p197 = scmp.lt.s32.totalorder %s16, 1
      %s198 = scalar_select %p197, %s16, 1
      %s199 = smul.addr %s198, 16
      %s200 = smul.addr %s199, 4
      %s201 = scalar_lea.vmem %s3, %s200
      %p202 = pneg %p136
      %p203 = pneg %p133
      %p204 = scmp.lt.s32.totalorder %s16, 1
      %s205 = scalar_select %p204, %s16, 1
      %s206 = smul.addr %s205, 4
      %s207 = scalar_lea.vmem %s4, %s206
      %p208 = scmp.lt.s32.totalorder %s16, 1
      %s209 = scalar_select %p208, %s16, 1
      %s210 = smul.addr %s209, 16
      %s211 = smul.addr %s210, 4
      %s212 = scalar_lea.vmem %s1, %s211
      %p213 = scmp.lt.s32.totalorder %s16, 1
      %s214 = scalar_select %p213, %s16, 1
      %s215 = smul.addr %s214, 2
      %s216 = scalar_lea.vmem %s2, %s215
      %p217 = scmp.lt.s32.totalorder %s16, 1
      %s218 = scalar_select %p217, %s16, 1
      %s219 = smul.addr %s218, 16
      %s220 = smul.addr %s219, 4
      %s221 = scalar_lea.vmem %s3, %s220
      %p222 = scmp.lt.s32.totalorder %s16, 1
      %s223 = scalar_select %p222, %s16, 1
      %s224 = smul.addr %s223, 4
      %s225 = scalar_lea.vmem %s4, %s224
      %v226 = vld [vmem:[%s0] sm:$0xf]
      %v227 = vld [vmem:[%s0 + $0x4] sm:$0xf]
      %v228 = vld [vmem:[%s0 + $0x8] sm:$0xf]
      %v229 = vld [vmem:[%s0 + $0xc] sm:$0xf]
      %v230 = vld [vmem:[%s0 + $0x10] sm:$0xf]
      %v231 = vld [vmem:[%s0 + $0x14] sm:$0xf]
      %v232 = vld [vmem:[%s0 + $0x18] sm:$0xf]
      %v233 = vld [vmem:[%s0 + $0x1c] sm:$0xf]
      %v234 = vld [vmem:[%s0 + $0x20] sm:$0xf]
      %v235 = vld [vmem:[%s0 + $0x24] sm:$0xf]
      %v236 = vld [vmem:[%s0 + $0x28] sm:$0xf]
      %v237 = vld [vmem:[%s0 + $0x2c] sm:$0xf]
      %v238 = vld [vmem:[%s0 + $0x30] sm:$0xf]
      %v239 = vld [vmem:[%s0 + $0x34] sm:$0xf]
      %v240 = vld [vmem:[%s0 + $0x38] sm:$0xf]
      %v241 = vld [vmem:[%s0 + $0x3c] sm:$0xf]
      %v242 = vld [vmem:[%s212] sm:$0xf]
      %v243 = vld [vmem:[%s212 + $0x4] sm:$0xf]
      %v244 = vld [vmem:[%s212 + $0x8] sm:$0xf]
      %v245 = vld [vmem:[%s212 + $0xc] sm:$0xf]
      %v246 = vld [vmem:[%s212 + $0x10] sm:$0xf]
      %v247 = vld [vmem:[%s212 + $0x14] sm:$0xf]
      %v248 = vld [vmem:[%s212 + $0x18] sm:$0xf]
      %v249 = vld [vmem:[%s212 + $0x1c] sm:$0xf]
      %v250 = vld [vmem:[%s212 + $0x20] sm:$0xf]
      %v251 = vld [vmem:[%s212 + $0x24] sm:$0xf]
      %v252 = vld [vmem:[%s212 + $0x28] sm:$0xf]
      %v253 = vld [vmem:[%s212 + $0x2c] sm:$0xf]
      %v254 = vld [vmem:[%s212 + $0x30] sm:$0xf]
      %v255 = vld [vmem:[%s212 + $0x34] sm:$0xf]
      %v256 = vld [vmem:[%s212 + $0x38] sm:$0xf]
      %v257 = vld [vmem:[%s212 + $0x3c] sm:$0xf]
      %v274 = vunpack.c.l.b16 %v226
      %v275 = vunpack.c.l.b16 %v227
      %v276 = vunpack.c.l.b16 %v228
      %v277 = vunpack.c.l.b16 %v229
      %v278 = vunpack.c.l.b16 %v230
      %v279 = vunpack.c.l.b16 %v231
      %v280 = vunpack.c.l.b16 %v232
      %v281 = vunpack.c.l.b16 %v233
      %v282 = vunpack.c.l.b16 %v234
      %v283 = vunpack.c.l.b16 %v235
      %v284 = vunpack.c.l.b16 %v236
      %v285 = vunpack.c.l.b16 %v237
      %v286 = vunpack.c.l.b16 %v238
      %v287 = vunpack.c.l.b16 %v239
      %v288 = vunpack.c.l.b16 %v240
      %v289 = vunpack.c.l.b16 %v241
      %v290 = vpack.c.b16 %v275, %v274
      %v291 = vpack.c.b16 %v277, %v276
      %v292 = vpack.c.b16 %v279, %v278
      %v293 = vpack.c.b16 %v281, %v280
      %v294 = vpack.c.b16 %v283, %v282
      %v295 = vpack.c.b16 %v285, %v284
      %v296 = vpack.c.b16 %v287, %v286
      %v297 = vpack.c.b16 %v289, %v288
      %v322 = vunpack.c.l.b16 %v242
      %v323 = vunpack.c.l.b16 %v243
      %v324 = vunpack.c.l.b16 %v244
      %v325 = vunpack.c.l.b16 %v245
      %v326 = vunpack.c.l.b16 %v246
      %v327 = vunpack.c.l.b16 %v247
      %v328 = vunpack.c.l.b16 %v248
      %v329 = vunpack.c.l.b16 %v249
      %v330 = vunpack.c.l.b16 %v250
      %v331 = vunpack.c.l.b16 %v251
      %v332 = vunpack.c.l.b16 %v252
      %v333 = vunpack.c.l.b16 %v253
      %v334 = vunpack.c.l.b16 %v254
      %v335 = vunpack.c.l.b16 %v255
      %v336 = vunpack.c.l.b16 %v256
      %v337 = vunpack.c.l.b16 %v257
      %v338 = vpack.c.b16 %v323, %v322
      %v339 = vpack.c.b16 %v325, %v324
      %v340 = vpack.c.b16 %v327, %v326
      %v341 = vpack.c.b16 %v329, %v328
      %v342 = vpack.c.b16 %v331, %v330
      %v343 = vpack.c.b16 %v333, %v332
      %v344 = vpack.c.b16 %v335, %v334
      %v345 = vpack.c.b16 %v337, %v336
      %354 = vmatpush.bf16.msra.mxu0 %v345
      %355 = vmatpush.bf16.msra.mxu0 %v344
      %356 = vmatpush.bf16.msra.mxu0 %v343
      %357 = vmatpush.bf16.msra.mxu0 %v342
      %358 = vmatpush.bf16.msra.mxu0 %v341
      %359 = vmatpush.bf16.msra.mxu0 %v340
      %360 = vmatpush.bf16.msra.mxu0 %v339
      %361 = vmatpush.bf16.msra.mxu0 %v338
      %362 = vmatmul.bf16.gmra.mxu0 %v290
      %v363 = vpop.f32.mrf.mxu0
      %v364 = vadd.f32 0.0, %v363
      %v365 = vpop.f32.mrf.mxu0
      %v366 = vadd.f32 0.0, %v365
      %367 = vmatmul.bf16.gmra.mxu0 %v291
      %v368 = vpop.f32.mrf.mxu0
      %v369 = vadd.f32 0.0, %v368
      %v370 = vpop.f32.mrf.mxu0
      %v371 = vadd.f32 0.0, %v370
      %372 = vmatmul.bf16.gmra.mxu0 %v292
      %v373 = vpop.f32.mrf.mxu0
      %v374 = vadd.f32 0.0, %v373
      %v375 = vpop.f32.mrf.mxu0
      %v376 = vadd.f32 0.0, %v375
      %377 = vmatmul.bf16.gmra.mxu0 %v293
      %v378 = vpop.f32.mrf.mxu0
      %v379 = vadd.f32 0.0, %v378
      %v380 = vpop.f32.mrf.mxu0
      %v381 = vadd.f32 0.0, %v380
      %382 = vmatmul.bf16.gmra.mxu0 %v294
      %v383 = vpop.f32.mrf.mxu0
      %v384 = vadd.f32 0.0, %v383
      %v385 = vpop.f32.mrf.mxu0
      %v386 = vadd.f32 0.0, %v385
      %387 = vmatmul.bf16.gmra.mxu0 %v295
      %v388 = vpop.f32.mrf.mxu0
      %v389 = vadd.f32 0.0, %v388
      %v390 = vpop.f32.mrf.mxu0
      %v391 = vadd.f32 0.0, %v390
      %392 = vmatmul.bf16.gmra.mxu0 %v296
      %v393 = vpop.f32.mrf.mxu0
      %v394 = vadd.f32 0.0, %v393
      %v395 = vpop.f32.mrf.mxu0
      %v396 = vadd.f32 0.0, %v395
      %397 = vmatmul.bf16.gmra.mxu0 %v297
      %v398 = vpop.f32.mrf.mxu0
      %v399 = vadd.f32 0.0, %v398
      %v400 = vpop.f32.mrf.mxu0
      %v401 = vadd.f32 0.0, %v400
      %402 = vdwg.mxu0
      %v403 = vpack.c.bf16 %v364, %v364
      %v404 = vpack.c.bf16 %v366, %v366
      %v405 = vpack.c.bf16 %v369, %v369
      %v406 = vpack.c.bf16 %v371, %v371
      %v407 = vpack.c.bf16 %v374, %v374
      %v408 = vpack.c.bf16 %v376, %v376
      %v409 = vpack.c.bf16 %v379, %v379
      %v410 = vpack.c.bf16 %v381, %v381
      %v411 = vpack.c.bf16 %v384, %v384
      %v412 = vpack.c.bf16 %v386, %v386
      %v413 = vpack.c.bf16 %v389, %v389
      %v414 = vpack.c.bf16 %v391, %v391
      %v415 = vpack.c.bf16 %v394, %v394
      %v416 = vpack.c.bf16 %v396, %v396
      %v417 = vpack.c.bf16 %v399, %v399
      %v418 = vpack.c.bf16 %v401, %v401
      %419 = vst [vmem:[%s221] sm:$0xf] %v403
      %420 = vst [vmem:[%s221 + $0x4] sm:$0xf] %v404
      %421 = vst [vmem:[%s221 + $0x8] sm:$0xf] %v405
      %422 = vst [vmem:[%s221 + $0xc] sm:$0xf] %v406
      %423 = vst [vmem:[%s221 + $0x10] sm:$0xf] %v407
      %424 = vst [vmem:[%s221 + $0x14] sm:$0xf] %v408
      %425 = vst [vmem:[%s221 + $0x18] sm:$0xf] %v409
      %426 = vst [vmem:[%s221 + $0x1c] sm:$0xf] %v410
      %427 = vst [vmem:[%s221 + $0x20] sm:$0xf] %v411
      %428 = vst [vmem:[%s221 + $0x24] sm:$0xf] %v412
      %429 = vst [vmem:[%s221 + $0x28] sm:$0xf] %v413
      %430 = vst [vmem:[%s221 + $0x2c] sm:$0xf] %v414
      %431 = vst [vmem:[%s221 + $0x30] sm:$0xf] %v415
      %432 = vst [vmem:[%s221 + $0x34] sm:$0xf] %v416
      %433 = vst [vmem:[%s221 + $0x38] sm:$0xf] %v417
      %434 = vst [vmem:[%s221 + $0x3c] sm:$0xf] %v418
      %v435 = vld [vmem:[%s216] sm:$0x3]
      %v452 = vunpack.c.l.b16 %v403
      %v453 = vunpack.c.l.b16 %v404
      %v454 = vunpack.c.l.b16 %v405
      %v455 = vunpack.c.l.b16 %v406
      %v456 = vunpack.c.l.b16 %v407
      %v457 = vunpack.c.l.b16 %v408
      %v458 = vunpack.c.l.b16 %v409
      %v459 = vunpack.c.l.b16 %v410
      %v460 = vunpack.c.l.b16 %v411
      %v461 = vunpack.c.l.b16 %v412
      %v462 = vunpack.c.l.b16 %v413
      %v463 = vunpack.c.l.b16 %v414
      %v464 = vunpack.c.l.b16 %v415
      %v465 = vunpack.c.l.b16 %v416
      %v466 = vunpack.c.l.b16 %v417
      %v467 = vunpack.c.l.b16 %v418
      %v468 = vpack.c.b16 %v453, %v452
      %v469 = vpack.c.b16 %v455, %v454
      %v470 = vpack.c.b16 %v457, %v456
      %v471 = vpack.c.b16 %v459, %v458
      %v472 = vpack.c.b16 %v461, %v460
      %v473 = vpack.c.b16 %v463, %v462
      %v474 = vpack.c.b16 %v465, %v464
      %v475 = vpack.c.b16 %v467, %v466
      %484 = vmatpush.bf16.xpose.msra.mxu0 %v475
      %485 = vmatpush.bf16.xpose.msra.mxu0 %v474
      %486 = vmatpush.bf16.xpose.msra.mxu0 %v473
      %487 = vmatpush.bf16.xpose.msra.mxu0 %v472
      %488 = vmatpush.bf16.xpose.msra.mxu0 %v471
      %489 = vmatpush.bf16.xpose.msra.mxu0 %v470
      %490 = vmatpush.bf16.xpose.msra.mxu0 %v469
      %491 = vmatpush.bf16.xpose.msra.mxu0 %v468
      %492 = vmatmul.bf16.gmra.mxu0 %v435
      %v493 = vpop.f32.mrf.mxu0
      %v494 = vadd.f32 0.0, %v493
      %v495 = vpop.f32.mrf.mxu0
      %496 = vdwg.mxu0
      %497 = vst [vmem:[%s225] sm:$0xf] %v494
      %p498 = scmp.lt.s32.totalorder %s16, 1
      %s499 = scalar_select %p498, %s16, 1
      %s500 = smul.addr %s499, 16
      %s501 = smul.addr %s500, 4
      %s502 = scalar_lea.vmem %s3, %s501
      %p503 = scmp.lt.s32.totalorder %s16, 1
      %s504 = scalar_select %p503, %s16, 1
      %s505 = smul.addr %s504, 4
      %s506 = scalar_lea.vmem %s4, %s505
      // Predicated region
      $region33: #{detox_xlnet_forward.4} parent=31 // pred_check
        %p507 = pneg %p107
      $region34: #{detox_xlnet_forward.4} parent=31 // pred_check_branch
        %509 = sbr.rel (%p507) target = $region36
      $region35: #{detox_xlnet_forward.4} parent=31 // pred_region
        _
      $region36: #{detox_xlnet_forward.4} parent=31 // pred_fallthru
        _
      // Predicated region
      $region37: #{detox_xlnet_forward.4} parent=31 // pred_check
        %p510 = pneg %p133
      $region38: #{detox_xlnet_forward.4} parent=31 // pred_check_branch
        %512 = sbr.rel (%p510) target = $region40
      $region39: #{detox_xlnet_forward.4} parent=31 // pred_region
        _
      $region40: #{detox_xlnet_forward.4} parent=31 // pred_fallthru
        _
    $region32: #{detox_xlnet_forward.4} parent=5 // pred_fallthru
      _
    %p513 = scmp.le.s32.totalorder 2, %s11
    // Predicated region
    $region41: #{detox_xlnet_forward.4} parent=5 // pred_check
      %p514 = pneg %p513
    $region42: #{detox_xlnet_forward.4} parent=5 // pred_check_branch
      %516 = sbr.rel (%p514) target = $region44
    $region43: #{detox_xlnet_forward.4} parent=5 // pred_region
      %s517 = ssub.s32 %s11, 2
      // Predicated region
      $region45: #{detox_xlnet_forward.4} parent=43 // pred_check
        %p518 = pneg %p113
      $region46: #{detox_xlnet_forward.4} parent=43 // pred_check_branch
        %520 = sbr.rel (%p518) target = $region48
      $region47: #{detox_xlnet_forward.4} parent=43 // pred_region
        %p521 = scmp.lt.s32.totalorder %s17, 1
        %s522 = scalar_select %p521, %s17, 1
        %s523 = smul.addr %s522, 16
        %s524 = smul.addr %s523, 4
        %s525 = scalar_lea.vmem %s3, %s524
      $region48: #{detox_xlnet_forward.4} parent=43 // pred_fallthru
        _
      // Predicated region
      $region49: #{detox_xlnet_forward.4} parent=43 // pred_check
        %p526 = pneg %p139
      $region50: #{detox_xlnet_forward.4} parent=43 // pred_check_branch
        %528 = sbr.rel (%p526) target = $region52
      $region51: #{detox_xlnet_forward.4} parent=43 // pred_region
        %p529 = scmp.lt.s32.totalorder %s17, 1
        %s530 = scalar_select %p529, %s17, 1
        %s531 = smul.addr %s530, 4
        %s532 = scalar_lea.vmem %s4, %s531
      $region52: #{detox_xlnet_forward.4} parent=43 // pred_fallthru
        _
    $region44: #{detox_xlnet_forward.4} parent=5 // pred_fallthru
      _
  $region6: #{detox_xlnet_forward.4} parent=0 // loop_footer
    %s15 = sadd.s32 1, %s11
  $region7: #{detox_xlnet_forward.4} parent=0 // loop_footer_branch
    %10 = sbr.rel target = $region3
  $region8: #{detox_xlnet_forward.4} parent=0 // loop_exit
    _

// kernel: detox_xlnet_forward.7
$region0: #{detox_xlnet_forward.7}
  #allocation0 [shape = 'u32[]', space=smem, size = 0x4, offset = 0x4, fixed_abs, tag = 'smem constant byte address 0x4 - core index']
  #allocation1 [shape = 'u32[72,128]{1,0:T(1,128)}', space=vmem, size = 0x9000, scoped, tag = 'internal scratch']
  %s0 = inlined_call_operand.vmem [shape: bf16[2,128], index: 0, kind: input, shape index: {}]
  %s1 = inlined_call_operand.vmem [shape: bf16[128,128], index: 1, kind: input, shape index: {}]
  %s2 = inlined_call_operand.vmem [shape: f32[1,128], index: 2, kind: input, shape index: {}]
  %s3 = inlined_call_operand.vmem [shape: bf16[128,2], index: 3, kind: input, shape index: {}]
  %s4 = inlined_call_operand.vmem [shape: f32[1,2], index: 4, kind: input, shape index: {}]
  %s5 = inlined_call_operand.hbm [shape: f32[2,2], index: 5, kind: output, shape index: {}]
  %s6 = sld [smem:[#allocation0]]
  $region30: #{detox_xlnet_forward.7} parent=0
    _
  %s8 = ssub.s32 1, %s6
  %s9 = scalar_select 0, %s8, %s6
  $region1: #{detox_xlnet_forward.7} parent=0
    #allocation2 [shape = 'u8[1024]{0}', space=vmem, size = 0x400, scoped, tag = 'output window, operand 0, single buffered']
    #allocation3 [shape = 's32[1]{0}', space=sflag, size = 0x4, scoped, tag = 'scoped memory for detox_xlnet_forward.7']
    %10 = vsyncpa [#allocation3], 0
    // Predicated region
    $region2: #{detox_xlnet_forward.7} parent=1 // pred_check
      _
    $region3: #{detox_xlnet_forward.7} parent=1 // pred_check_branch
      %12 = sbr.rel (0) target = $region5
    $region4: #{detox_xlnet_forward.7} parent=1 // pred_region
      _
    $region5: #{detox_xlnet_forward.7} parent=1 // pred_fallthru
      _
    // Predicated region
    $region6: #{detox_xlnet_forward.7} parent=1 // pred_check
      _
    $region7: #{detox_xlnet_forward.7} parent=1 // pred_check_branch
      %14 = sbr.rel (0) target = $region9
    $region8: #{detox_xlnet_forward.7} parent=1 // pred_region
      _
    $region9: #{detox_xlnet_forward.7} parent=1 // pred_fallthru
      _
    // Predicated region
    $region10: #{detox_xlnet_forward.7} parent=1 // pred_check
      _
    $region11: #{detox_xlnet_forward.7} parent=1 // pred_check_branch
      %16 = sbr.rel (0) target = $region13
    $region12: #{detox_xlnet_forward.7} parent=1 // pred_region
      _
    $region13: #{detox_xlnet_forward.7} parent=1 // pred_fallthru
      _
    // Predicated region
    $region14: #{detox_xlnet_forward.7} parent=1 // pred_check
      _
    $region15: #{detox_xlnet_forward.7} parent=1 // pred_check_branch
      %18 = sbr.rel (0) target = $region17
    $region16: #{detox_xlnet_forward.7} parent=1 // pred_region
      _
    $region17: #{detox_xlnet_forward.7} parent=1 // pred_fallthru
      _
    // Predicated region
    $region18: #{detox_xlnet_forward.7} parent=1 // pred_check
      _
    $region19: #{detox_xlnet_forward.7} parent=1 // pred_check_branch
      %20 = sbr.rel (0) target = $region21
    $region20: #{detox_xlnet_forward.7} parent=1 // pred_region
      _
    $region21: #{detox_xlnet_forward.7} parent=1 // pred_fallthru
      _
    %v21 = vld [vmem:[%s0] sm:$0x1]
    %v22 = vld [vmem:[%s1] sm:$0xf]
    %v23 = vld [vmem:[%s1 + $0x4] sm:$0xf]
    %v24 = vld [vmem:[%s1 + $0x8] sm:$0xf]
    %v25 = vld [vmem:[%s1 + $0xc] sm:$0xf]
    %v26 = vld [vmem:[%s1 + $0x10] sm:$0xf]
    %v27 = vld [vmem:[%s1 + $0x14] sm:$0xf]
    %v28 = vld [vmem:[%s1 + $0x18] sm:$0xf]
    %v29 = vld [vmem:[%s1 + $0x1c] sm:$0xf]
    %v30 = vld [vmem:[%s1 + $0x20] sm:$0xf]
    %v31 = vld [vmem:[%s1 + $0x24] sm:$0xf]
    %v32 = vld [vmem:[%s1 + $0x28] sm:$0xf]
    %v33 = vld [vmem:[%s1 + $0x2c] sm:$0xf]
    %v34 = vld [vmem:[%s1 + $0x30] sm:$0xf]
    %v35 = vld [vmem:[%s1 + $0x34] sm:$0xf]
    %v36 = vld [vmem:[%s1 + $0x38] sm:$0xf]
    %v37 = vld [vmem:[%s1 + $0x3c] sm:$0xf]
    %v38 = vld [vmem:[%s2] sm:$0x1]
    %v40 = vperm.slane %v38, 0
    %v58 = vunpack.c.l.b16 %v22
    %v59 = vunpack.c.l.b16 %v23
    %v60 = vunpack.c.l.b16 %v24
    %v61 = vunpack.c.l.b16 %v25
    %v62 = vunpack.c.l.b16 %v26
    %v63 = vunpack.c.l.b16 %v27
    %v64 = vunpack.c.l.b16 %v28
    %v65 = vunpack.c.l.b16 %v29
    %v66 = vunpack.c.l.b16 %v30
    %v67 = vunpack.c.l.b16 %v31
    %v68 = vunpack.c.l.b16 %v32
    %v69 = vunpack.c.l.b16 %v33
    %v70 = vunpack.c.l.b16 %v34
    %v71 = vunpack.c.l.b16 %v35
    %v72 = vunpack.c.l.b16 %v36
    %v73 = vunpack.c.l.b16 %v37
    %v74 = vpack.c.b16 %v59, %v58
    %v75 = vpack.c.b16 %v61, %v60
    %v76 = vpack.c.b16 %v63, %v62
    %v77 = vpack.c.b16 %v65, %v64
    %v78 = vpack.c.b16 %v67, %v66
    %v79 = vpack.c.b16 %v69, %v68
    %v80 = vpack.c.b16 %v71, %v70
    %v81 = vpack.c.b16 %v73, %v72
    %90 = vmatpush.bf16.msra.mxu0 %v81
    %91 = vmatpush.bf16.msra.mxu0 %v80
    %92 = vmatpush.bf16.msra.mxu0 %v79
    %93 = vmatpush.bf16.msra.mxu0 %v78
    %94 = vmatpush.bf16.msra.mxu0 %v77
    %95 = vmatpush.bf16.msra.mxu0 %v76
    %96 = vmatpush.bf16.msra.mxu0 %v75
    %97 = vmatpush.bf16.msra.mxu0 %v74
    %98 = vmatmul.bf16.gmra.mxu0 %v21
    %v99 = vpop.f32.mrf.mxu0
    %v100 = vadd.f32 %v40, %v99
    %v101 = vpop.f32.mrf.mxu0
    %102 = vdwg.mxu0
    %v103 = vtanh.pop %v100
    %v104 = vpack.c.bf16 %v103, %v103
    %v105 = vld [vmem:[%s3] sm:$0xf]
    %v106 = vld [vmem:[%s3 + $0x4] sm:$0xf]
    %v107 = vld [vmem:[%s3 + $0x8] sm:$0xf]
    %v108 = vld [vmem:[%s3 + $0xc] sm:$0xf]
    %v109 = vld [vmem:[%s3 + $0x10] sm:$0xf]
    %v110 = vld [vmem:[%s3 + $0x14] sm:$0xf]
    %v111 = vld [vmem:[%s3 + $0x18] sm:$0xf]
    %v112 = vld [vmem:[%s3 + $0x1c] sm:$0xf]
    %v113 = vld [vmem:[%s3 + $0x20] sm:$0xf]
    %v114 = vld [vmem:[%s3 + $0x24] sm:$0xf]
    %v115 = vld [vmem:[%s3 + $0x28] sm:$0xf]
    %v116 = vld [vmem:[%s3 + $0x2c] sm:$0xf]
    %v117 = vld [vmem:[%s3 + $0x30] sm:$0xf]
    %v118 = vld [vmem:[%s3 + $0x34] sm:$0xf]
    %v119 = vld [vmem:[%s3 + $0x38] sm:$0xf]
    %v120 = vld [vmem:[%s3 + $0x3c] sm:$0xf]
    %v121 = vld [vmem:[%s4] sm:$0x1]
    %v123 = vperm.slane %v121, 0
    %v141 = vunpack.c.l.b16 %v105
    %v142 = vunpack.c.l.b16 %v106
    %v143 = vunpack.c.l.b16 %v107
    %v144 = vunpack.c.l.b16 %v108
    %v145 = vunpack.c.l.b16 %v109
    %v146 = vunpack.c.l.b16 %v110
    %v147 = vunpack.c.l.b16 %v111
    %v148 = vunpack.c.l.b16 %v112
    %v149 = vunpack.c.l.b16 %v113
    %v150 = vunpack.c.l.b16 %v114
    %v151 = vunpack.c.l.b16 %v115
    %v152 = vunpack.c.l.b16 %v116
    %v153 = vunpack.c.l.b16 %v117
    %v154 = vunpack.c.l.b16 %v118
    %v155 = vunpack.c.l.b16 %v119
    %v156 = vunpack.c.l.b16 %v120
    %v157 = vpack.c.b16 %v142, %v141
    %v158 = vpack.c.b16 %v144, %v143
    %v159 = vpack.c.b16 %v146, %v145
    %v160 = vpack.c.b16 %v148, %v147
    %v161 = vpack.c.b16 %v150, %v149
    %v162 = vpack.c.b16 %v152, %v151
    %v163 = vpack.c.b16 %v154, %v153
    %v164 = vpack.c.b16 %v156, %v155
    %173 = vmatpush.bf16.msra.mxu0 %v164
    %174 = vmatpush.bf16.msra.mxu0 %v163
    %175 = vmatpush.bf16.msra.mxu0 %v162
    %176 = vmatpush.bf16.msra.mxu0 %v161
    %177 = vmatpush.bf16.msra.mxu0 %v160
    %178 = vmatpush.bf16.msra.mxu0 %v159
    %179 = vmatpush.bf16.msra.mxu0 %v158
    %180 = vmatpush.bf16.msra.mxu0 %v157
    %181 = vmatmul.bf16.gmra.mxu0 %v104
    %v182 = vpop.f32.mrf.mxu0
    %v183 = vadd.f32 %v123, %v182
    %v184 = vpop.f32.mrf.mxu0
    %185 = vdwg.mxu0
    %vm186 = vcmask 9216
    %187 = vst.msk [vmem:[#allocation2] sm:$0x3] %vm186, %v183
    // Predicated region
    $region22: #{detox_xlnet_forward.7} parent=1 // pred_check
      _
    $region23: #{detox_xlnet_forward.7} parent=1 // pred_check_branch
      %189 = sbr.rel (0) target = $region25
    $region24: #{detox_xlnet_forward.7} parent=1 // pred_region
      %191 = vsyncadd [#allocation3], 0
      %s193 = sshll.u32 [#allocation2], 4
      %s194 = int_to_ptr.vmem [resolvable:$true] %s193
      %s195 = sshll.u32 %s5, 4
      %s196 = int_to_ptr.hbm [resolvable:$true] %s195
      %198 = dma.vmem_to_hbm [thread:$0]  %s194, 32, %s196, [#allocation3]
    $region25: #{detox_xlnet_forward.7} parent=1 // pred_fallthru
      _
    // Predicated region
    $region26: #{detox_xlnet_forward.7} parent=1 // pred_check
      _
    $region27: #{detox_xlnet_forward.7} parent=1 // pred_check_branch
      %200 = sbr.rel (0) target = $region29
    $region28: #{detox_xlnet_forward.7} parent=1 // pred_region
      %202 = dma.done [#allocation3], 32
    $region29: #{detox_xlnet_forward.7} parent=1 // pred_fallthru
      _
    %203 = vsyncpa [#allocation3], 1

// kernel: detox_xlnet_forward.5
$region0: #{detox_xlnet_forward.5}
  #allocation0 [shape = 'u32[]', space=smem, size = 0x4, offset = 0x4, fixed_abs, tag = 'smem constant byte address 0x4 - core index']
  #allocation1 [shape = 'u32[72,128]{1,0:T(1,128)}', space=vmem, size = 0x9000, scoped, tag = 'internal scratch']
  #allocation2 [shape = 'bf16[64,128]{1,0:T(8,128)(2,1)}', space=vmem, size = 0x4000, scoped, tag = 'scratch operand']
  %s0 = inlined_call_operand.vmem [shape: bf16[2,64,128], index: 0, kind: input, shape index: {}]
  %s1 = inlined_call_operand.vmem [shape: bf16[128,384], index: 1, kind: input, shape index: {}]
  %s2 = inlined_call_operand.vmem [shape: bf16[128,128], index: 2, kind: input, shape index: {}]
  %s3 = inlined_call_operand.vmem [shape: bf16[4,128], index: 3, kind: input, shape index: {}]
  %s4 = inlined_call_operand.vmem [shape: bf16[128,128], index: 4, kind: input, shape index: {}]
  %s5 = inlined_call_operand.vmem [shape: f32[4,128], index: 5, kind: input, shape index: {}]
  %s6 = inlined_call_operand.vmem [shape: f32[2,1,64], index: 6, kind: input, shape index: {}]
  %s7 = inlined_call_operand.vmem [shape: f32[1,128], index: 7, kind: input, shape index: {}]
  %s8 = inlined_call_operand.vmem [shape: f32[1,128], index: 8, kind: input, shape index: {}]
  %s9 = inlined_call_operand.vmem [shape: bf16[128,256], index: 9, kind: input, shape index: {}]
  %s10 = inlined_call_operand.vmem [shape: f32[1,256], index: 10, kind: input, shape index: {}]
  %s11 = inlined_call_operand.vmem [shape: bf16[256,128], index: 11, kind: input, shape index: {}]
  %s12 = inlined_call_operand.vmem [shape: f32[1,128], index: 12, kind: input, shape index: {}]
  %s13 = inlined_call_operand.vmem [shape: f32[1,128], index: 13, kind: input, shape index: {}]
  %s14 = inlined_call_operand.vmem [shape: f32[1,128], index: 14, kind: input, shape index: {}]
  %s15 = inlined_call_operand.vmem [shape: bf16[2,64,128], index: 15, kind: output, shape index: {}]
  %s16 = sld [smem:[#allocation0]]
  $region93: #{detox_xlnet_forward.5} parent=0
    _
  %s18 = ssub.s32 1, %s16
  %s19 = scalar_select 0, %s18, %s16
  loop: start=0, step=1, limit=4
  $region2: #{detox_xlnet_forward.5} parent=0 // loop_pre_header
    _
  $region3: #{detox_xlnet_forward.5} parent=0 // loop_header
    %s21 = sphi 0, %s25
    %p22 = scmp.ge.s32.totalorder %s21, 4
    %s31 = sphi 0, %s33
    %s34 = sphi 0, %s31
    %s35 = sphi 0, %s34
    %s51 = sphi 0, %s35
    %s55 = sphi 0, %s55
    %s57 = sphi 0, %s55
    %s58 = sphi 0, %s57
    %s72 = sphi 0, %s58
    %s76 = sphi 0, %s76
    %s78 = sphi 0, %s76
    %s79 = sphi 0, %s78
    %s93 = sphi 0, %s79
    %s97 = sphi 0, %s97
    %s99 = sphi 0, %s97
    %s100 = sphi 0, %s99
    %s114 = sphi 0, %s100
    %s118 = sphi 0, %s118
    %s120 = sphi 0, %s118
    %s121 = sphi 0, %s120
    %s135 = sphi 0, %s121
    %s139 = sphi 0, %s139
    %s141 = sphi 0, %s139
    %s142 = sphi 0, %s141
    %s156 = sphi 0, %s142
    %s162 = sphi 0, %s164
    %s165 = sphi 0, %s162
    %s166 = sphi 0, %s165
    %s182 = sphi 0, %s166
    %s186 = sphi 0, %s186
    %s188 = sphi 0, %s186
    %s189 = sphi 0, %s188
    %s203 = sphi 0, %s189
    %s207 = sphi 0, %s207
    %s209 = sphi 0, %s207
    %s210 = sphi 0, %s209
    %s224 = sphi 0, %s210
    %s228 = sphi 0, %s228
    %s230 = sphi 0, %s228
    %s231 = sphi 0, %s230
    %s245 = sphi 0, %s231
    %s249 = sphi 0, %s249
    %s251 = sphi 0, %s249
    %s252 = sphi 0, %s251
    %s266 = sphi 0, %s252
    %s270 = sphi 0, %s270
    %s272 = sphi 0, %s270
    %s273 = sphi 0, %s272
    %s287 = sphi 0, %s273
    %s291 = sphi 0, %s291
    %s293 = sphi 0, %s291
    %s294 = sphi 0, %s293
    %s308 = sphi 0, %s294
    %s312 = sphi 0, %s312
    %s314 = sphi 0, %s312
    %s315 = sphi 0, %s314
    %s329 = sphi 0, %s315
    %s333 = sphi 0, %s333
    %s335 = sphi 0, %s333
    %s336 = sphi 0, %s335
    %s350 = sphi 0, %s336
    %s356 = sphi 0, %s358
    %s359 = sphi 0, %s356
    %s360 = sphi 0, %s359
    %s376 = sphi 0, %s360
  $region4: #{detox_xlnet_forward.5} parent=0 // loop_header_branch
    %24 = sbr.rel (%p22) target = $region8
  $region5: #{detox_xlnet_forward.5} parent=0 // loop_body
    %s26 = ssub.s32 %s21, 1
    %s27 = ssub.s32 %s21, 2
    %s28 = sadd.s32 %s21, 1
    %s29 = ssub.s32 %s21, %s28
    %p30 = scmp.eq.s32.totalorder %s29, 0
    %s32 = sadd.s32 %s31, 1
    %s33 = scalar_select %p30, %s31, %s32
    %p36 = pneg %p30
    %p37 = scmp.eq.s32.totalorder %s21, 1
    %p38 = por %p36, %p37
    %p39 = scmp.ne.s32.totalorder %s31, %s34
    %p40 = scmp.eq.s32.totalorder %s21, 0
    %p41 = por %p39, %p40
    %p42 = scmp.ne.s32.totalorder %s31, %s34
    %p43 = scmp.eq.s32.totalorder %s26, 1
    %p44 = por %p42, %p43
    %p45 = scmp.ne.s32.totalorder %s34, %s35
    %p46 = scmp.eq.s32.totalorder %s26, 0
    %p47 = por %p45, %p46
    %p48 = scmp.ne.s32.totalorder %s34, %s35
    %p49 = scmp.eq.s32.totalorder %s27, 1
    %p50 = por %p48, %p49
    %p52 = scmp.ne.s32.totalorder %s35, %s51
    %p53 = scmp.eq.s32.totalorder %s27, 0
    %p54 = por %p52, %p53
    %s56 = sadd.s32 %s55, 1
    %p59 = scmp.eq.s32.totalorder %s21, 1
    %p60 = scmp.ne.s32.totalorder %s55, %s57
    %p61 = scmp.eq.s32.totalorder %s21, 0
    %p62 = por %p60, %p61
    %p63 = scmp.ne.s32.totalorder %s55, %s57
    %p64 = scmp.eq.s32.totalorder %s26, 1
    %p65 = por %p63, %p64
    %p66 = scmp.ne.s32.totalorder %s57, %s58
    %p67 = scmp.eq.s32.totalorder %s26, 0
    %p68 = por %p66, %p67
    %p69 = scmp.ne.s32.totalorder %s57, %s58
    %p70 = scmp.eq.s32.totalorder %s27, 1
    %p71 = por %p69, %p70
    %p73 = scmp.ne.s32.totalorder %s58, %s72
    %p74 = scmp.eq.s32.totalorder %s27, 0
    %p75 = por %p73, %p74
    %s77 = sadd.s32 %s76, 1
    %p80 = scmp.eq.s32.totalorder %s21, 1
    %p81 = scmp.ne.s32.totalorder %s76, %s78
    %p82 = scmp.eq.s32.totalorder %s21, 0
    %p83 = por %p81, %p82
    %p84 = scmp.ne.s32.totalorder %s76, %s78
    %p85 = scmp.eq.s32.totalorder %s26, 1
    %p86 = por %p84, %p85
    %p87 = scmp.ne.s32.totalorder %s78, %s79
    %p88 = scmp.eq.s32.totalorder %s26, 0
    %p89 = por %p87, %p88
    %p90 = scmp.ne.s32.totalorder %s78, %s79
    %p91 = scmp.eq.s32.totalorder %s27, 1
    %p92 = por %p90, %p91
    %p94 = scmp.ne.s32.totalorder %s79, %s93
    %p95 = scmp.eq.s32.totalorder %s27, 0
    %p96 = por %p94, %p95
    %s98 = sadd.s32 %s97, 1
    %p101 = scmp.eq.s32.totalorder %s21, 1
    %p102 = scmp.ne.s32.totalorder %s97, %s99
    %p103 = scmp.eq.s32.totalorder %s21, 0
    %p104 = por %p102, %p103
    %p105 = scmp.ne.s32.totalorder %s97, %s99
    %p106 = scmp.eq.s32.totalorder %s26, 1
    %p107 = por %p105, %p106
    %p108 = scmp.ne.s32.totalorder %s99, %s100
    %p109 = scmp.eq.s32.totalorder %s26, 0
    %p110 = por %p108, %p109
    %p111 = scmp.ne.s32.totalorder %s99, %s100
    %p112 = scmp.eq.s32.totalorder %s27, 1
    %p113 = por %p111, %p112
    %p115 = scmp.ne.s32.totalorder %s100, %s114
    %p116 = scmp.eq.s32.totalorder %s27, 0
    %p117 = por %p115, %p116
    %s119 = sadd.s32 %s118, 1
    %p122 = scmp.eq.s32.totalorder %s21, 1
    %p123 = scmp.ne.s32.totalorder %s118, %s120
    %p124 = scmp.eq.s32.totalorder %s21, 0
    %p125 = por %p123, %p124
    %p126 = scmp.ne.s32.totalorder %s118, %s120
    %p127 = scmp.eq.s32.totalorder %s26, 1
    %p128 = por %p126, %p127
    %p129 = scmp.ne.s32.totalorder %s120, %s121
    %p130 = scmp.eq.s32.totalorder %s26, 0
    %p131 = por %p129, %p130
    %p132 = scmp.ne.s32.totalorder %s120, %s121
    %p133 = scmp.eq.s32.totalorder %s27, 1
    %p134 = por %p132, %p133
    %p136 = scmp.ne.s32.totalorder %s121, %s135
    %p137 = scmp.eq.s32.totalorder %s27, 0
    %p138 = por %p136, %p137
    %s140 = sadd.s32 %s139, 1
    %p143 = scmp.eq.s32.totalorder %s21, 1
    %p144 = scmp.ne.s32.totalorder %s139, %s141
    %p145 = scmp.eq.s32.totalorder %s21, 0
    %p146 = por %p144, %p145
    %p147 = scmp.ne.s32.totalorder %s139, %s141
    %p148 = scmp.eq.s32.totalorder %s26, 1
    %p149 = por %p147, %p148
    %p150 = scmp.ne.s32.totalorder %s141, %s142
    %p151 = scmp.eq.s32.totalorder %s26, 0
    %p152 = por %p150, %p151
    %p153 = scmp.ne.s32.totalorder %s141, %s142
    %p154 = scmp.eq.s32.totalorder %s27, 1
    %p155 = por %p153, %p154
    %p157 = scmp.ne.s32.totalorder %s142, %s156
    %p158 = scmp.eq.s32.totalorder %s27, 0
    %p159 = por %p157, %p158
    %s160 = ssub.s32 %s21, %s28
    %p161 = scmp.eq.s32.totalorder %s160, 0
    %s163 = sadd.s32 %s162, 1
    %s164 = scalar_select %p161, %s162, %s163
    %p167 = pneg %p161
    %p168 = scmp.eq.s32.totalorder %s21, 1
    %p169 = por %p167, %p168
    %p170 = scmp.ne.s32.totalorder %s162, %s165
    %p171 = scmp.eq.s32.totalorder %s21, 0
    %p172 = por %p170, %p171
    %p173 = scmp.ne.s32.totalorder %s162, %s165
    %p174 = scmp.eq.s32.totalorder %s26, 1
    %p175 = por %p173, %p174
    %p176 = scmp.ne.s32.totalorder %s165, %s166
    %p177 = scmp.eq.s32.totalorder %s26, 0
    %p178 = por %p176, %p177
    %p179 = scmp.ne.s32.totalorder %s165, %s166
    %p180 = scmp.eq.s32.totalorder %s27, 1
    %p181 = por %p179, %p180
    %p183 = scmp.ne.s32.totalorder %s166, %s182
    %p184 = scmp.eq.s32.totalorder %s27, 0
    %p185 = por %p183, %p184
    %s187 = sadd.s32 %s186, 1
    %p190 = scmp.eq.s32.totalorder %s21, 1
    %p191 = scmp.ne.s32.totalorder %s186, %s188
    %p192 = scmp.eq.s32.totalorder %s21, 0
    %p193 = por %p191, %p192
    %p194 = scmp.ne.s32.totalorder %s186, %s188
    %p195 = scmp.eq.s32.totalorder %s26, 1
    %p196 = por %p194, %p195
    %p197 = scmp.ne.s32.totalorder %s188, %s189
    %p198 = scmp.eq.s32.totalorder %s26, 0
    %p199 = por %p197, %p198
    %p200 = scmp.ne.s32.totalorder %s188, %s189
    %p201 = scmp.eq.s32.totalorder %s27, 1
    %p202 = por %p200, %p201
    %p204 = scmp.ne.s32.totalorder %s189, %s203
    %p205 = scmp.eq.s32.totalorder %s27, 0
    %p206 = por %p204, %p205
    %s208 = sadd.s32 %s207, 1
    %p211 = scmp.eq.s32.totalorder %s21, 1
    %p212 = scmp.ne.s32.totalorder %s207, %s209
    %p213 = scmp.eq.s32.totalorder %s21, 0
    %p214 = por %p212, %p213
    %p215 = scmp.ne.s32.totalorder %s207, %s209
    %p216 = scmp.eq.s32.totalorder %s26, 1
    %p217 = por %p215, %p216
    %p218 = scmp.ne.s32.totalorder %s209, %s210
    %p219 = scmp.eq.s32.totalorder %s26, 0
    %p220 = por %p218, %p219
    %p221 = scmp.ne.s32.totalorder %s209, %s210
    %p222 = scmp.eq.s32.totalorder %s27, 1
    %p223 = por %p221, %p222
    %p225 = scmp.ne.s32.totalorder %s210, %s224
    %p226 = scmp.eq.s32.totalorder %s27, 0
    %p227 = por %p225, %p226
    %s229 = sadd.s32 %s228, 1
    %p232 = scmp.eq.s32.totalorder %s21, 1
    %p233 = scmp.ne.s32.totalorder %s228, %s230
    %p234 = scmp.eq.s32.totalorder %s21, 0
    %p235 = por %p233, %p234
    %p236 = scmp.ne.s32.totalorder %s228, %s230
    %p237 = scmp.eq.s32.totalorder %s26, 1
    %p238 = por %p236, %p237
    %p239 = scmp.ne.s32.totalorder %s230, %s231
    %p240 = scmp.eq.s32.totalorder %s26, 0
    %p241 = por %p239, %p240
    %p242 = scmp.ne.s32.totalorder %s230, %s231
    %p243 = scmp.eq.s32.totalorder %s27, 1
    %p244 = por %p242, %p243
    %p246 = scmp.ne.s32.totalorder %s231, %s245
    %p247 = scmp.eq.s32.totalorder %s27, 0
    %p248 = por %p246, %p247
    %s250 = sadd.s32 %s249, 1
    %p253 = scmp.eq.s32.totalorder %s21, 1
    %p254 = scmp.ne.s32.totalorder %s249, %s251
    %p255 = scmp.eq.s32.totalorder %s21, 0
    %p256 = por %p254, %p255
    %p257 = scmp.ne.s32.totalorder %s249, %s251
    %p258 = scmp.eq.s32.totalorder %s26, 1
    %p259 = por %p257, %p258
    %p260 = scmp.ne.s32.totalorder %s251, %s252
    %p261 = scmp.eq.s32.totalorder %s26, 0
    %p262 = por %p260, %p261
    %p263 = scmp.ne.s32.totalorder %s251, %s252
    %p264 = scmp.eq.s32.totalorder %s27, 1
    %p265 = por %p263, %p264
    %p267 = scmp.ne.s32.totalorder %s252, %s266
    %p268 = scmp.eq.s32.totalorder %s27, 0
    %p269 = por %p267, %p268
    %s271 = sadd.s32 %s270, 1
    %p274 = scmp.eq.s32.totalorder %s21, 1
    %p275 = scmp.ne.s32.totalorder %s270, %s272
    %p276 = scmp.eq.s32.totalorder %s21, 0
    %p277 = por %p275, %p276
    %p278 = scmp.ne.s32.totalorder %s270, %s272
    %p279 = scmp.eq.s32.totalorder %s26, 1
    %p280 = por %p278, %p279
    %p281 = scmp.ne.s32.totalorder %s272, %s273
    %p282 = scmp.eq.s32.totalorder %s26, 0
    %p283 = por %p281, %p282
    %p284 = scmp.ne.s32.totalorder %s272, %s273
    %p285 = scmp.eq.s32.totalorder %s27, 1
    %p286 = por %p284, %p285
    %p288 = scmp.ne.s32.totalorder %s273, %s287
    %p289 = scmp.eq.s32.totalorder %s27, 0
    %p290 = por %p288, %p289
    %s292 = sadd.s32 %s291, 1
    %p295 = scmp.eq.s32.totalorder %s21, 1
    %p296 = scmp.ne.s32.totalorder %s291, %s293
    %p297 = scmp.eq.s32.totalorder %s21, 0
    %p298 = por %p296, %p297
    %p299 = scmp.ne.s32.totalorder %s291, %s293
    %p300 = scmp.eq.s32.totalorder %s26, 1
    %p301 = por %p299, %p300
    %p302 = scmp.ne.s32.totalorder %s293, %s294
    %p303 = scmp.eq.s32.totalorder %s26, 0
    %p304 = por %p302, %p303
    %p305 = scmp.ne.s32.totalorder %s293, %s294
    %p306 = scmp.eq.s32.totalorder %s27, 1
    %p307 = por %p305, %p306
    %p309 = scmp.ne.s32.totalorder %s294, %s308
    %p310 = scmp.eq.s32.totalorder %s27, 0
    %p311 = por %p309, %p310
    %s313 = sadd.s32 %s312, 1
    %p316 = scmp.eq.s32.totalorder %s21, 1
    %p317 = scmp.ne.s32.totalorder %s312, %s314
    %p318 = scmp.eq.s32.totalorder %s21, 0
    %p319 = por %p317, %p318
    %p320 = scmp.ne.s32.totalorder %s312, %s314
    %p321 = scmp.eq.s32.totalorder %s26, 1
    %p322 = por %p320, %p321
    %p323 = scmp.ne.s32.totalorder %s314, %s315
    %p324 = scmp.eq.s32.totalorder %s26, 0
    %p325 = por %p323, %p324
    %p326 = scmp.ne.s32.totalorder %s314, %s315
    %p327 = scmp.eq.s32.totalorder %s27, 1
    %p328 = por %p326, %p327
    %p330 = scmp.ne.s32.totalorder %s315, %s329
    %p331 = scmp.eq.s32.totalorder %s27, 0
    %p332 = por %p330, %p331
    %s334 = sadd.s32 %s333, 1
    %p337 = scmp.eq.s32.totalorder %s21, 1
    %p338 = scmp.ne.s32.totalorder %s333, %s335
    %p339 = scmp.eq.s32.totalorder %s21, 0
    %p340 = por %p338, %p339
    %p341 = scmp.ne.s32.totalorder %s333, %s335
    %p342 = scmp.eq.s32.totalorder %s26, 1
    %p343 = por %p341, %p342
    %p344 = scmp.ne.s32.totalorder %s335, %s336
    %p345 = scmp.eq.s32.totalorder %s26, 0
    %p346 = por %p344, %p345
    %p347 = scmp.ne.s32.totalorder %s335, %s336
    %p348 = scmp.eq.s32.totalorder %s27, 1
    %p349 = por %p347, %p348
    %p351 = scmp.ne.s32.totalorder %s336, %s350
    %p352 = scmp.eq.s32.totalorder %s27, 0
    %p353 = por %p351, %p352
    %s354 = ssub.s32 %s21, %s28
    %p355 = scmp.eq.s32.totalorder %s354, 0
    %s357 = sadd.s32 %s356, 1
    %s358 = scalar_select %p355, %s356, %s357
    %p361 = pneg %p355
    %p362 = scmp.eq.s32.totalorder %s21, 1
    %p363 = por %p361, %p362
    %p364 = scmp.ne.s32.totalorder %s356, %s359
    %p365 = scmp.eq.s32.totalorder %s21, 0
    %p366 = por %p364, %p365
    %p367 = scmp.ne.s32.totalorder %s356, %s359
    %p368 = scmp.eq.s32.totalorder %s26, 1
    %p369 = por %p367, %p368
    %p370 = scmp.ne.s32.totalorder %s359, %s360
    %p371 = scmp.eq.s32.totalorder %s26, 0
    %p372 = por %p370, %p371
    %p373 = scmp.ne.s32.totalorder %s359, %s360
    %p374 = scmp.eq.s32.totalorder %s27, 1
    %p375 = por %p373, %p374
    %p377 = scmp.ne.s32.totalorder %s360, %s376
    %p378 = scmp.eq.s32.totalorder %s27, 0
    %p379 = por %p377, %p378
    %p380 = scmp.le.s32.totalorder 1, %s21
    %p381 = scmp.lt.s32.totalorder %s21, 3
    %p382 = pnand %p380, %p381
    %p383 = pneg %p382
    // Predicated region
    $region9: #{detox_xlnet_forward.5} parent=5 // pred_check
      _
    $region10: #{detox_xlnet_forward.5} parent=5 // pred_check_branch
      %385 = sbr.rel (%p382) target = $region12
    $region11: #{detox_xlnet_forward.5} parent=5 // pred_region
      %s386 = ssub.s32 %s21, 1
      // Predicated region
      $region13: #{detox_xlnet_forward.5} parent=11 // pred_check
        %p387 = pneg %p68
      $region14: #{detox_xlnet_forward.5} parent=11 // pred_check_branch
        %389 = sbr.rel (%p387) target = $region16
      $region15: #{detox_xlnet_forward.5} parent=11 // pred_region
        _
      $region16: #{detox_xlnet_forward.5} parent=11 // pred_fallthru
        _
      // Predicated region
      $region17: #{detox_xlnet_forward.5} parent=11 // pred_check
        %p390 = pneg %p89
      $region18: #{detox_xlnet_forward.5} parent=11 // pred_check_branch
        %392 = sbr.rel (%p390) target = $region20
      $region19: #{detox_xlnet_forward.5} parent=11 // pred_region
        _
      $region20: #{detox_xlnet_forward.5} parent=11 // pred_fallthru
        _
      // Predicated region
      $region21: #{detox_xlnet_forward.5} parent=11 // pred_check
        %p393 = pneg %p110
      $region22: #{detox_xlnet_forward.5} parent=11 // pred_check_branch
        %395 = sbr.rel (%p393) target = $region24
      $region23: #{detox_xlnet_forward.5} parent=11 // pred_region
        _
      $region24: #{detox_xlnet_forward.5} parent=11 // pred_fallthru
        _
      // Predicated region
      $region25: #{detox_xlnet_forward.5} parent=11 // pred_check
        %p396 = pneg %p131
      $region26: #{detox_xlnet_forward.5} parent=11 // pred_check_branch
        %398 = sbr.rel (%p396) target = $region28
      $region27: #{detox_xlnet_forward.5} parent=11 // pred_region
        _
      $region28: #{detox_xlnet_forward.5} parent=11 // pred_fallthru
        _
      // Predicated region
      $region29: #{detox_xlnet_forward.5} parent=11 // pred_check
        %p399 = pneg %p152
      $region30: #{detox_xlnet_forward.5} parent=11 // pred_check_branch
        %401 = sbr.rel (%p399) target = $region32
      $region31: #{detox_xlnet_forward.5} parent=11 // pred_region
        _
      $region32: #{detox_xlnet_forward.5} parent=11 // pred_fallthru
        _
      // Predicated region
      $region33: #{detox_xlnet_forward.5} parent=11 // pred_check
        %p402 = pneg %p199
      $region34: #{detox_xlnet_forward.5} parent=11 // pred_check_branch
        %404 = sbr.rel (%p402) target = $region36
      $region35: #{detox_xlnet_forward.5} parent=11 // pred_region
        _
      $region36: #{detox_xlnet_forward.5} parent=11 // pred_fallthru
        _
      // Predicated region
      $region37: #{detox_xlnet_forward.5} parent=11 // pred_check
        %p405 = pneg %p220
      $region38: #{detox_xlnet_forward.5} parent=11 // pred_check_branch
        %407 = sbr.rel (%p405) target = $region40
      $region39: #{detox_xlnet_forward.5} parent=11 // pred_region
        _
      $region40: #{detox_xlnet_forward.5} parent=11 // pred_fallthru
        _
      // Predicated region
      $region41: #{detox_xlnet_forward.5} parent=11 // pred_check
        %p408 = pneg %p241
      $region42: #{detox_xlnet_forward.5} parent=11 // pred_check_branch
        %410 = sbr.rel (%p408) target = $region44
      $region43: #{detox_xlnet_forward.5} parent=11 // pred_region
        _
      $region44: #{detox_xlnet_forward.5} parent=11 // pred_fallthru
        _
      // Predicated region
      $region45: #{detox_xlnet_forward.5} parent=11 // pred_check
        %p411 = pneg %p262
      $region46: #{detox_xlnet_forward.5} parent=11 // pred_check_branch
        %413 = sbr.rel (%p411) target = $region48
      $region47: #{detox_xlnet_forward.5} parent=11 // pred_region
        _
      $region48: #{detox_xlnet_forward.5} parent=11 // pred_fallthru
        _
      // Predicated region
      $region49: #{detox_xlnet_forward.5} parent=11 // pred_check
        %p414 = pneg %p283
      $region50: #{detox_xlnet_forward.5} parent=11 // pred_check_branch
        %416 = sbr.rel (%p414) target = $region52
      $region51: #{detox_xlnet_forward.5} parent=11 // pred_region
        _
      $region52: #{detox_xlnet_forward.5} parent=11 // pred_fallthru
        _
      // Predicated region
      $region53: #{detox_xlnet_forward.5} parent=11 // pred_check
        %p417 = pneg %p304
      $region54: #{detox_xlnet_forward.5} parent=11 // pred_check_branch
        %419 = sbr.rel (%p417) target = $region56
      $region55: #{detox_xlnet_forward.5} parent=11 // pred_region
        _
      $region56: #{detox_xlnet_forward.5} parent=11 // pred_fallthru
        _
      // Predicated region
      $region57: #{detox_xlnet_forward.5} parent=11 // pred_check
        %p420 = pneg %p325
      $region58: #{detox_xlnet_forward.5} parent=11 // pred_check_branch
        %422 = sbr.rel (%p420) target = $region60
      $region59: #{detox_xlnet_forward.5} parent=11 // pred_region
        _
      $region60: #{detox_xlnet_forward.5} parent=11 // pred_fallthru
        _
      // Predicated region
      $region61: #{detox_xlnet_forward.5} parent=11 // pred_check
        %p423 = pneg %p346
      $region62: #{detox_xlnet_forward.5} parent=11 // pred_check_branch
        %425 = sbr.rel (%p423) target = $region64
      $region63: #{detox_xlnet_forward.5} parent=11 // pred_region
        _
      $region64: #{detox_xlnet_forward.5} parent=11 // pred_fallthru
        _
    $region12: #{detox_xlnet_forward.5} parent=5 // pred_fallthru
      _
    %p426 = scmp.lt.s32.totalorder %s21, 2
    // Predicated region
    $region65: #{detox_xlnet_forward.5} parent=5 // pred_check
      %p427 = pneg %p426
    $region66: #{detox_xlnet_forward.5} parent=5 // pred_check_branch
      %429 = sbr.rel (%p427) target = $region68
    $region67: #{detox_xlnet_forward.5} parent=5 // pred_region
      // Predicated region
      $region69: #{detox_xlnet_forward.5} parent=67 // pred_check
        %p430 = pneg %p41
      $region70: #{detox_xlnet_forward.5} parent=67 // pred_check_branch
        %432 = sbr.rel (%p430) target = $region72
      $region71: #{detox_xlnet_forward.5} parent=67 // pred_region
        %p433 = scmp.lt.s32.totalorder %s21, 1
        %s434 = scalar_select %p433, %s21, 1
        %s435 = smul.addr %s434, 8
        %s436 = smul.addr %s435, 4
        %s437 = scalar_lea.vmem %s0, %s436
      $region72: #{detox_xlnet_forward.5} parent=67 // pred_fallthru
        _
      // Predicated region
      $region73: #{detox_xlnet_forward.5} parent=67 // pred_check
        %p438 = pneg %p172
      $region74: #{detox_xlnet_forward.5} parent=67 // pred_check_branch
        %440 = sbr.rel (%p438) target = $region76
      $region75: #{detox_xlnet_forward.5} parent=67 // pred_region
        %p441 = scmp.lt.s32.totalorder %s21, 1
        %s442 = scalar_select %p441, %s21, 1
        %s443 = scalar_lea.vmem %s6, %s442
      $region76: #{detox_xlnet_forward.5} parent=67 // pred_fallthru
        _
    $region68: #{detox_xlnet_forward.5} parent=5 // pred_fallthru
      _
    %p444 = scmp.le.s32.totalorder 1, %s21
    %p445 = scmp.lt.s32.totalorder %s21, 3
    %p446 = pnand %p444, %p445
    %p447 = pneg %p446
    // Predicated region
    $region77: #{detox_xlnet_forward.5} parent=5 // pred_check
      _
    $region78: #{detox_xlnet_forward.5} parent=5 // pred_check_branch
      %449 = sbr.rel (%p446) target = $region80
    $region79: #{detox_xlnet_forward.5} parent=5 // pred_region
      %s450 = ssub.s32 %s21, 1
      %p451 = scmp.lt.s32.totalorder %s26, 1
      %s452 = scalar_select %p451, %s26, 1
      %s453 = smul.addr %s452, 8
      %s454 = smul.addr %s453, 4
      %s455 = scalar_lea.vmem %s0, %s454
      %p456 = pneg %p47
      %p457 = pneg %p44
      %p458 = pneg %p68
      %p459 = pneg %p65
      %p460 = pneg %p89
      %p461 = pneg %p86
      %p462 = pneg %p110
      %p463 = pneg %p107
      %p464 = pneg %p131
      %p465 = pneg %p128
      %p466 = pneg %p152
      %p467 = pneg %p149
      %p468 = scmp.lt.s32.totalorder %s26, 1
      %s469 = scalar_select %p468, %s26, 1
      %s470 = scalar_lea.vmem %s6, %s469
      %p471 = pneg %p178
      %p472 = pneg %p175
      %p473 = pneg %p199
      %p474 = pneg %p196
      %p475 = pneg %p220
      %p476 = pneg %p217
      %p477 = pneg %p241
      %p478 = pneg %p238
      %p479 = pneg %p262
      %p480 = pneg %p259
      %p481 = pneg %p283
      %p482 = pneg %p280
      %p483 = pneg %p304
      %p484 = pneg %p301
      %p485 = pneg %p325
      %p486 = pneg %p322
      %p487 = pneg %p346
      %p488 = pneg %p343
      %p489 = pneg %p372
      %p490 = pneg %p369
      %p491 = scmp.lt.s32.totalorder %s26, 1
      %s492 = scalar_select %p491, %s26, 1
      %s493 = smul.addr %s492, 8
      %s494 = smul.addr %s493, 4
      %s495 = scalar_lea.vmem %s15, %s494
      %p496 = scmp.lt.s32.totalorder %s26, 1
      %s497 = scalar_select %p496, %s26, 1
      %s498 = smul.addr %s497, 8
      %s499 = smul.addr %s498, 4
      %s500 = scalar_lea.vmem %s0, %s499
      %p501 = scmp.lt.s32.totalorder %s26, 1
      %s502 = scalar_select %p501, %s26, 1
      %s503 = scalar_lea.vmem %s6, %s502
      %p504 = scmp.lt.s32.totalorder %s26, 1
      %s505 = scalar_select %p504, %s26, 1
      %s506 = smul.addr %s505, 8
      %s507 = smul.addr %s506, 4
      %s508 = scalar_lea.vmem %s15, %s507
      %v510 = vld [vmem:[%s500] sm:$0xf]
      %v511 = vld [vmem:[%s500 + $0x4] sm:$0xf]
      %v512 = vld [vmem:[%s500 + $0x8] sm:$0xf]
      %v513 = vld [vmem:[%s500 + $0xc] sm:$0xf]
      %v514 = vld [vmem:[%s500 + $0x10] sm:$0xf]
      %v515 = vld [vmem:[%s500 + $0x14] sm:$0xf]
      %v516 = vld [vmem:[%s500 + $0x18] sm:$0xf]
      %v517 = vld [vmem:[%s500 + $0x1c] sm:$0xf]
      %v518 = vld [vmem:[%s1] sm:$0xff]
      %v519 = vld [vmem:[%s1 + $0x8] sm:$0xf]
      %v520 = vld [vmem:[%s1 + $0xc] sm:$0xff]
      %v521 = vld [vmem:[%s1 + $0x14] sm:$0xf]
      %v522 = vld [vmem:[%s1 + $0x18] sm:$0xff]
      %v523 = vld [vmem:[%s1 + $0x20] sm:$0xf]
      %v524 = vld [vmem:[%s1 + $0x24] sm:$0xff]
      %v525 = vld [vmem:[%s1 + $0x2c] sm:$0xf]
      %v526 = vld [vmem:[%s1 + $0x30] sm:$0xff]
      %v527 = vld [vmem:[%s1 + $0x38] sm:$0xf]
      %v528 = vld [vmem:[%s1 + $0x3c] sm:$0xff]
      %v529 = vld [vmem:[%s1 + $0x44] sm:$0xf]
      %v530 = vld [vmem:[%s1 + $0x48] sm:$0xff]
      %v531 = vld [vmem:[%s1 + $0x50] sm:$0xf]
      %v532 = vld [vmem:[%s1 + $0x54] sm:$0xff]
      %v533 = vld [vmem:[%s1 + $0x5c] sm:$0xf]
      %v534 = vld [vmem:[%s1 + $0x60] sm:$0xff]
      %v535 = vld [vmem:[%s1 + $0x68] sm:$0xf]
      %v536 = vld [vmem:[%s1 + $0x6c] sm:$0xff]
      %v537 = vld [vmem:[%s1 + $0x74] sm:$0xf]
      %v538 = vld [vmem:[%s1 + $0x78] sm:$0xff]
      %v539 = vld [vmem:[%s1 + $0x80] sm:$0xf]
      %v540 = vld [vmem:[%s1 + $0x84] sm:$0xff]
      %v541 = vld [vmem:[%s1 + $0x8c] sm:$0xf]
      %v542 = vld [vmem:[%s1 + $0x90] sm:$0xff]
      %v543 = vld [vmem:[%s1 + $0x98] sm:$0xf]
      %v544 = vld [vmem:[%s1 + $0x9c] sm:$0xff]
      %v545 = vld [vmem:[%s1 + $0xa4] sm:$0xf]
      %v546 = vld [vmem:[%s1 + $0xa8] sm:$0xff]
      %v547 = vld [vmem:[%s1 + $0xb0] sm:$0xf]
      %v548 = vld [vmem:[%s1 + $0xb4] sm:$0xff]
      %v549 = vld [vmem:[%s1 + $0xbc] sm:$0xf]
      %v558 = vunpack.c.l.b16 %v510
      %v559 = vunpack.c.l.b16 %v511
      %v560 = vunpack.c.l.b16 %v512
      %v561 = vunpack.c.l.b16 %v513
      %v562 = vunpack.c.l.b16 %v514
      %v563 = vunpack.c.l.b16 %v515
      %v564 = vunpack.c.l.b16 %v516
      %v565 = vunpack.c.l.b16 %v517
      %v566 = vpack.c.b16 %v559, %v558
      %v567 = vpack.c.b16 %v561, %v560
      %v568 = vpack.c.b16 %v563, %v562
      %v569 = vpack.c.b16 %v565, %v564
      %v606 = vunpack.c.l.b16 %v518
      %v607 = vunpack.c.h.b16 %v518
      %v608 = vunpack.c.l.b16 %v519
      %v609 = vunpack.c.l.b16 %v520
      %v610 = vunpack.c.h.b16 %v520
      %v611 = vunpack.c.l.b16 %v521
      %v612 = vunpack.c.l.b16 %v522
      %v613 = vunpack.c.h.b16 %v522
      %v614 = vunpack.c.l.b16 %v523
      %v615 = vunpack.c.l.b16 %v524
      %v616 = vunpack.c.h.b16 %v524
      %v617 = vunpack.c.l.b16 %v525
      %v618 = vunpack.c.l.b16 %v526
      %v619 = vunpack.c.h.b16 %v526
      %v620 = vunpack.c.l.b16 %v527
      %v621 = vunpack.c.l.b16 %v528
      %v622 = vunpack.c.h.b16 %v528
      %v623 = vunpack.c.l.b16 %v529
      %v624 = vunpack.c.l.b16 %v530
      %v625 = vunpack.c.h.b16 %v530
      %v626 = vunpack.c.l.b16 %v531
      %v627 = vunpack.c.l.b16 %v532
      %v628 = vunpack.c.h.b16 %v532
      %v629 = vunpack.c.l.b16 %v533
      %v630 = vunpack.c.l.b16 %v534
      %v631 = vunpack.c.h.b16 %v534
      %v632 = vunpack.c.l.b16 %v535
      %v633 = vunpack.c.l.b16 %v536
      %v634 = vunpack.c.h.b16 %v536
      %v635 = vunpack.c.l.b16 %v537
      %v636 = vunpack.c.l.b16 %v538
      %v637 = vunpack.c.h.b16 %v538
      %v638 = vunpack.c.l.b16 %v539
      %v639 = vunpack.c.l.b16 %v540
      %v640 = vunpack.c.h.b16 %v540
      %v641 = vunpack.c.l.b16 %v541
      %v642 = vunpack.c.l.b16 %v542
      %v643 = vunpack.c.h.b16 %v542
      %v644 = vunpack.c.l.b16 %v543
      %v645 = vunpack.c.l.b16 %v544
      %v646 = vunpack.c.h.b16 %v544
      %v647 = vunpack.c.l.b16 %v545
      %v648 = vunpack.c.l.b16 %v546
      %v649 = vunpack.c.h.b16 %v546
      %v650 = vunpack.c.l.b16 %v547
      %v651 = vunpack.c.l.b16 %v548
      %v652 = vunpack.c.h.b16 %v548
      %v653 = vunpack.c.l.b16 %v549
      %v654 = vpack.c.b16 %v609, %v606
      %v655 = vpack.c.b16 %v610, %v607
      %v656 = vpack.c.b16 %v611, %v608
      %v657 = vpack.c.b16 %v615, %v612
      %v658 = vpack.c.b16 %v616, %v613
      %v659 = vpack.c.b16 %v617, %v614
      %v660 = vpack.c.b16 %v621, %v618
      %v661 = vpack.c.b16 %v622, %v619
      %v662 = vpack.c.b16 %v623, %v620
      %v663 = vpack.c.b16 %v627, %v624
      %v664 = vpack.c.b16 %v628, %v625
      %v665 = vpack.c.b16 %v629, %v626
      %v666 = vpack.c.b16 %v633, %v630
      %v667 = vpack.c.b16 %v634, %v631
      %v668 = vpack.c.b16 %v635, %v632
      %v669 = vpack.c.b16 %v639, %v636
      %v670 = vpack.c.b16 %v640, %v637
      %v671 = vpack.c.b16 %v641, %v638
      %v672 = vpack.c.b16 %v645, %v642
      %v673 = vpack.c.b16 %v646, %v643
      %v674 = vpack.c.b16 %v647, %v644
      %v675 = vpack.c.b16 %v651, %v648
      %v676 = vpack.c.b16 %v652, %v649
      %v677 = vpack.c.b16 %v653, %v650
      %702 = vmatpush.bf16.msra.mxu0 %v675
      %703 = vmatpush.bf16.msra.mxu0 %v672
      %704 = vmatpush.bf16.msra.mxu0 %v669
      %705 = vmatpush.bf16.msra.mxu0 %v666
      %706 = vmatpush.bf16.msra.mxu0 %v663
      %707 = vmatpush.bf16.msra.mxu0 %v660
      %708 = vmatpush.bf16.msra.mxu0 %v657
      %709 = vmatpush.bf16.msra.mxu0 %v654
      %710 = vmatmul.bf16.gmra.mxu0 %v566
      %v711 = vpop.f32.mrf.mxu0
      %v712 = vadd.f32 0.0, %v711
      %v713 = vpop.f32.mrf.mxu0
      %v714 = vadd.f32 0.0, %v713
      %715 = vmatmul.bf16.gmra.mxu0 %v567
      %v716 = vpop.f32.mrf.mxu0
      %v717 = vadd.f32 0.0, %v716
      %v718 = vpop.f32.mrf.mxu0
      %v719 = vadd.f32 0.0, %v718
      %720 = vmatmul.bf16.gmra.mxu0 %v568
      %v721 = vpop.f32.mrf.mxu0
      %v722 = vadd.f32 0.0, %v721
      %v723 = vpop.f32.mrf.mxu0
      %v724 = vadd.f32 0.0, %v723
      %725 = vmatmul.bf16.gmra.mxu0 %v569
      %v726 = vpop.f32.mrf.mxu0
      %v727 = vadd.f32 0.0, %v726
      %v728 = vpop.f32.mrf.mxu0
      %v729 = vadd.f32 0.0, %v728
      %730 = vdwg.mxu0
      %731 = vmatpush.bf16.msra.mxu0 %v676
      %732 = vmatpush.bf16.msra.mxu0 %v673
      %733 = vmatpush.bf16.msra.mxu0 %v670
      %734 = vmatpush.bf16.msra.mxu0 %v667
      %735 = vmatpush.bf16.msra.mxu0 %v664
      %736 = vmatpush.bf16.msra.mxu0 %v661
      %737 = vmatpush.bf16.msra.mxu0 %v658
      %738 = vmatpush.bf16.msra.mxu0 %v655
      %739 = vmatmul.bf16.gmra.mxu0 %v566
      %v740 = vpop.f32.mrf.mxu0
      %v741 = vadd.f32 0.0, %v740
      %v742 = vpop.f32.mrf.mxu0
      %v743 = vadd.f32 0.0, %v742
      %744 = vmatmul.bf16.gmra.mxu0 %v567
      %v745 = vpop.f32.mrf.mxu0
      %v746 = vadd.f32 0.0, %v745
      %v747 = vpop.f32.mrf.mxu0
      %v748 = vadd.f32 0.0, %v747
      %749 = vmatmul.bf16.gmra.mxu0 %v568
      %v750 = vpop.f32.mrf.mxu0
      %v751 = vadd.f32 0.0, %v750
      %v752 = vpop.f32.mrf.mxu0
      %v753 = vadd.f32 0.0, %v752
      %754 = vmatmul.bf16.gmra.mxu0 %v569
      %v755 = vpop.f32.mrf.mxu0
      %v756 = vadd.f32 0.0, %v755
      %v757 = vpop.f32.mrf.mxu0
      %v758 = vadd.f32 0.0, %v757
      %759 = vdwg.mxu0
      %760 = vmatpush.bf16.msra.mxu0 %v677
      %761 = vmatpush.bf16.msra.mxu0 %v674
      %762 = vmatpush.bf16.msra.mxu0 %v671
      %763 = vmatpush.bf16.msra.mxu0 %v668
      %764 = vmatpush.bf16.msra.mxu0 %v665
      %765 = vmatpush.bf16.msra.mxu0 %v662
      %766 = vmatpush.bf16.msra.mxu0 %v659
      %767 = vmatpush.bf16.msra.mxu0 %v656
      %768 = vmatmul.bf16.gmra.mxu0 %v566
      %v769 = vpop.f32.mrf.mxu0
      %v770 = vadd.f32 0.0, %v769
      %v771 = vpop.f32.mrf.mxu0
      %v772 = vadd.f32 0.0, %v771
      %773 = vmatmul.bf16.gmra.mxu0 %v567
      %v774 = vpop.f32.mrf.mxu0
      %v775 = vadd.f32 0.0, %v774
      %v776 = vpop.f32.mrf.mxu0
      %v777 = vadd.f32 0.0, %v776
      %778 = vmatmul.bf16.gmra.mxu0 %v568
      %v779 = vpop.f32.mrf.mxu0
      %v780 = vadd.f32 0.0, %v779
      %v781 = vpop.f32.mrf.mxu0
      %v782 = vadd.f32 0.0, %v781
      %783 = vmatmul.bf16.gmra.mxu0 %v569
      %v784 = vpop.f32.mrf.mxu0
      %v785 = vadd.f32 0.0, %v784
      %v786 = vpop.f32.mrf.mxu0
      %v787 = vadd.f32 0.0, %v786
      %788 = vdwg.mxu0
      %v789 = vpack.c.bf16 %v741, %v712
      %v790 = vpack.c.bf16 %v770, %v770
      %v791 = vpack.c.bf16 %v743, %v714
      %v792 = vpack.c.bf16 %v772, %v772
      %v793 = vpack.c.bf16 %v746, %v717
      %v794 = vpack.c.bf16 %v775, %v775
      %v795 = vpack.c.bf16 %v748, %v719
      %v796 = vpack.c.bf16 %v777, %v777
      %v797 = vpack.c.bf16 %v751, %v722
      %v798 = vpack.c.bf16 %v780, %v780
      %v799 = vpack.c.bf16 %v753, %v724
      %v800 = vpack.c.bf16 %v782, %v782
      %v801 = vpack.c.bf16 %v756, %v727
      %v802 = vpack.c.bf16 %v785, %v785
      %v803 = vpack.c.bf16 %v758, %v729
      %v804 = vpack.c.bf16 %v787, %v787
      %v805 = vld [vmem:[%s3] sm:$0x3]
      %v814 = vunpack.c.h.b16 %v789
      %v815 = vunpack.c.h.b16 %v791
      %v816 = vunpack.c.h.b16 %v793
      %v817 = vunpack.c.h.b16 %v795
      %v818 = vunpack.c.h.b16 %v797
      %v819 = vunpack.c.h.b16 %v799
      %v820 = vunpack.c.h.b16 %v801
      %v821 = vunpack.c.h.b16 %v803
      %v822 = vpack.c.b16 %v815, %v814
      %v823 = vpack.c.b16 %v817, %v816
      %v824 = vpack.c.b16 %v819, %v818
      %v825 = vpack.c.b16 %v821, %v820
      %830 = vmatpush.bf16.xpose.msra.mxu0 0
      %831 = vmatpush.bf16.xpose.msra.mxu0 0
      %832 = vmatpush.bf16.xpose.msra.mxu0 0
      %833 = vmatpush.bf16.xpose.msra.mxu0 0
      %834 = vmatpush.bf16.xpose.msra.mxu0 %v825
      %835 = vmatpush.bf16.xpose.msra.mxu0 %v824
      %836 = vmatpush.bf16.xpose.msra.mxu0 %v823
      %837 = vmatpush.bf16.xpose.msra.mxu0 %v822
      %838 = vmatmul.bf16.gmra.mxu0 %v805
      %v839 = vpop.f32.mrf.mxu0
      %v840 = vadd.f32 0.0, %v839
      %v841 = vpop.f32.mrf.mxu0
      %842 = vdwg.mxu0
      %v843 = vld [vmem:[%s503] sm:$0x1]
      %v844 = vlaneseq
      %v845 = vshrl.u32 %v844, 7
      %v846 = vadd.s32 %v845, 8
      %v847 = vadd.s32 %v845, 16
      %v848 = vadd.s32 %v845, 24
      %v849 = vadd.s32 %v845, 32
      %v850 = vadd.s32 %v845, 40
      %v851 = vadd.s32 %v845, 48
      %v852 = vadd.s32 %v845, 56
      %v853 = vlaneseq
      %v854 = vand.u32 %v853, 127
      %vm855 = vcmp.eq.s32.totalorder %v845, %v854
      %vm856 = vcmp.eq.s32.totalorder %v846, %v854
      %vm857 = vcmp.eq.s32.totalorder %v847, %v854
      %vm858 = vcmp.eq.s32.totalorder %v848, %v854
      %vm859 = vcmp.eq.s32.totalorder %v849, %v854
      %vm860 = vcmp.eq.s32.totalorder %v850, %v854
      %vm861 = vcmp.eq.s32.totalorder %v851, %v854
      %vm862 = vcmp.eq.s32.totalorder %v852, %v854
      %v863 = vmul.f32 %v843, 1e+30
      %v865 = vperm.slane %v863, 0
      %v867 = vsel %vm855, 0.0, %v865
      %v868 = vsel %vm856, 0.0, %v865
      %v869 = vsel %vm857, 0.0, %v865
      %v870 = vsel %vm858, 0.0, %v865
      %v871 = vsel %vm859, 0.0, %v865
      %v872 = vsel %vm860, 0.0, %v865
      %v873 = vsel %vm861, 0.0, %v865
      %v874 = vsel %vm862, 0.0, %v865
      %v875 = vld [vmem:[%s4] sm:$0xf]
      %v876 = vld [vmem:[%s4 + $0x4] sm:$0xf]
      %v877 = vld [vmem:[%s4 + $0x8] sm:$0xf]
      %v878 = vld [vmem:[%s4 + $0xc] sm:$0xf]
      %v879 = vld [vmem:[%s4 + $0x10] sm:$0xf]
      %v880 = vld [vmem:[%s4 + $0x14] sm:$0xf]
      %v881 = vld [vmem:[%s4 + $0x18] sm:$0xf]
      %v882 = vld [vmem:[%s4 + $0x1c] sm:$0xf]
      %v883 = vld [vmem:[%s4 + $0x20] sm:$0xf]
      %v884 = vld [vmem:[%s4 + $0x24] sm:$0xf]
      %v885 = vld [vmem:[%s4 + $0x28] sm:$0xf]
      %v886 = vld [vmem:[%s4 + $0x2c] sm:$0xf]
      %v887 = vld [vmem:[%s4 + $0x30] sm:$0xf]
      %v888 = vld [vmem:[%s4 + $0x34] sm:$0xf]
      %v889 = vld [vmem:[%s4 + $0x38] sm:$0xf]
      %v890 = vld [vmem:[%s4 + $0x3c] sm:$0xf]
      %v907 = vunpack.c.l.b16 %v875
      %v908 = vunpack.c.l.b16 %v876
      %v909 = vunpack.c.l.b16 %v877
      %v910 = vunpack.c.l.b16 %v878
      %v911 = vunpack.c.l.b16 %v879
      %v912 = vunpack.c.l.b16 %v880
      %v913 = vunpack.c.l.b16 %v881
      %v914 = vunpack.c.l.b16 %v882
      %v915 = vunpack.c.l.b16 %v883
      %v916 = vunpack.c.l.b16 %v884
      %v917 = vunpack.c.l.b16 %v885
      %v918 = vunpack.c.l.b16 %v886
      %v919 = vunpack.c.l.b16 %v887
      %v920 = vunpack.c.l.b16 %v888
      %v921 = vunpack.c.l.b16 %v889
      %v922 = vunpack.c.l.b16 %v890
      %v923 = vpack.c.b16 %v908, %v907
      %v924 = vpack.c.b16 %v910, %v909
      %v925 = vpack.c.b16 %v912, %v911
      %v926 = vpack.c.b16 %v914, %v913
      %v927 = vpack.c.b16 %v916, %v915
      %v928 = vpack.c.b16 %v918, %v917
      %v929 = vpack.c.b16 %v920, %v919
      %v930 = vpack.c.b16 %v922, %v921
      %v931 = vunpack.c.l.b16 %v789
      %v932 = vunpack.c.l.b16 %v791
      %v933 = vunpack.c.l.b16 %v793
      %v934 = vunpack.c.l.b16 %v795
      %v935 = vunpack.c.l.b16 %v797
      %v936 = vunpack.c.l.b16 %v799
      %v937 = vunpack.c.l.b16 %v801
      %v938 = vunpack.c.l.b16 %v803
      %v939 = vpack.c.b16 %v932, %v931
      %v940 = vpack.c.b16 %v934, %v933
      %v941 = vpack.c.b16 %v936, %v935
      %v942 = vpack.c.b16 %v938, %v937
      %vm943 = vcmask 261120
      %v945 = vsel %vm943, %v939, 0
      %v948 = vsel %vm943, %v940, 0
      %v951 = vsel %vm943, %v941, 0
      %v954 = vsel %vm943, %v942, 0
      %v957 = vsel %vm943, %v822, 0
      %v960 = vsel %vm943, %v823, 0
      %v963 = vsel %vm943, %v824, 0
      %v966 = vsel %vm943, %v825, 0
      %v969 = vsel %vm943, %v923, 0
      %v972 = vsel %vm943, %v924, 0
      %v975 = vsel %vm943, %v925, 0
      %v978 = vsel %vm943, %v926, 0
      %v981 = vsel %vm943, %v927, 0
      %v984 = vsel %vm943, %v928, 0
      %v987 = vsel %vm943, %v929, 0
      %v990 = vsel %vm943, %v930, 0
      %992 = vmatpush.bf16.xpose.msra.mxu0 %v978
      %993 = vmatpush.bf16.xpose.msra.mxu0 %v975
      %994 = vmatpush.bf16.xpose.msra.mxu0 %v972
      %995 = vmatpush.bf16.xpose.msra.mxu0 %v969
      %996 = vmatpush.bf16.xpose.msra.mxu0 %v966
      %997 = vmatpush.bf16.xpose.msra.mxu0 %v963
      %998 = vmatpush.bf16.xpose.msra.mxu0 %v960
      %999 = vmatpush.bf16.xpose.msra.mxu0 %v957
      %1000 = vmatmul.bf16.gmra.mxu0 %v945
      %v1001 = vpop.f32.mrf.mxu0
      %v1002 = vadd.f32 0.0, %v1001
      %v1003 = vpop.f32.mrf.mxu0
      %v1004 = vadd.f32 0.0, %v1003
      %1005 = vmatmul.bf16.gmra.mxu0 %v948
      %v1006 = vpop.f32.mrf.mxu0
      %v1007 = vadd.f32 0.0, %v1006
      %v1008 = vpop.f32.mrf.mxu0
      %v1009 = vadd.f32 0.0, %v1008
      %1010 = vmatmul.bf16.gmra.mxu0 %v951
      %v1011 = vpop.f32.mrf.mxu0
      %v1012 = vadd.f32 0.0, %v1011
      %v1013 = vpop.f32.mrf.mxu0
      %v1014 = vadd.f32 0.0, %v1013
      %1015 = vmatmul.bf16.gmra.mxu0 %v954
      %v1016 = vpop.f32.mrf.mxu0
      %v1017 = vadd.f32 0.0, %v1016
      %v1018 = vpop.f32.mrf.mxu0
      %v1019 = vadd.f32 0.0, %v1018
      %1020 = vdwg.mxu0
      %1021 = vmatpush.bf16.xpose.msra.mxu0 0
      %1022 = vmatpush.bf16.xpose.msra.mxu0 0
      %1023 = vmatpush.bf16.xpose.msra.mxu0 0
      %1024 = vmatpush.bf16.xpose.msra.mxu0 0
      %1025 = vmatpush.bf16.xpose.msra.mxu0 %v990
      %1026 = vmatpush.bf16.xpose.msra.mxu0 %v987
      %1027 = vmatpush.bf16.xpose.msra.mxu0 %v984
      %1028 = vmatpush.bf16.xpose.msra.mxu0 %v981
      %1029 = vmatmul.bf16.gmra.mxu0 %v945
      %v1030 = vpop.f32.mrf.mxu0
      %v1031 = vadd.f32 0.0, %v1030
      %v1032 = vpop.f32.mrf.mxu0
      %v1033 = vadd.f32 0.0, %v1032
      %1034 = vmatmul.bf16.gmra.mxu0 %v948
      %v1035 = vpop.f32.mrf.mxu0
      %v1036 = vadd.f32 0.0, %v1035
      %v1037 = vpop.f32.mrf.mxu0
      %v1038 = vadd.f32 0.0, %v1037
      %1039 = vmatmul.bf16.gmra.mxu0 %v951
      %v1040 = vpop.f32.mrf.mxu0
      %v1041 = vadd.f32 0.0, %v1040
      %v1042 = vpop.f32.mrf.mxu0
      %v1043 = vadd.f32 0.0, %v1042
      %1044 = vmatmul.bf16.gmra.mxu0 %v954
      %v1045 = vpop.f32.mrf.mxu0
      %v1046 = vadd.f32 0.0, %v1045
      %v1047 = vpop.f32.mrf.mxu0
      %v1048 = vadd.f32 0.0, %v1047
      %1049 = vdwg.mxu0
      %v1050 = vperm.slane %v840, 0
      %v1051 = vadd.f32 %v1002, %v1050
      %v1052 = vadd.f32 %v1004, %v1050
      %v1053 = vadd.f32 %v1007, %v1050
      %v1054 = vadd.f32 %v1009, %v1050
      %v1055 = vadd.f32 %v1012, %v1050
      %v1056 = vadd.f32 %v1014, %v1050
      %v1057 = vadd.f32 %v1017, %v1050
      %v1058 = vadd.f32 %v1019, %v1050
      %v1059 = vld [vmem:[%s5] sm:$0x1]
      %v1060 = vperm.slane %v1059, 0
      %1062 = vrot.lane.b32.xlu0 %v1060, 64
      %v1063 = vpop.permute.xlu0 %1062
      %v1065 = vadd.f32 %v1002, %v1063
      %v1066 = vadd.f32 %v1031, %v1063
      %v1067 = vadd.f32 %v1004, %v1063
      %v1068 = vadd.f32 %v1033, %v1063
      %v1069 = vadd.f32 %v1007, %v1063
      %v1070 = vadd.f32 %v1036, %v1063
      %v1071 = vadd.f32 %v1009, %v1063
      %v1072 = vadd.f32 %v1038, %v1063
      %v1073 = vadd.f32 %v1012, %v1063
      %v1074 = vadd.f32 %v1041, %v1063
      %v1075 = vadd.f32 %v1014, %v1063
      %v1076 = vadd.f32 %v1043, %v1063
      %v1077 = vadd.f32 %v1017, %v1063
      %v1078 = vadd.f32 %v1046, %v1063
      %v1079 = vadd.f32 %v1019, %v1063
      %v1080 = vadd.f32 %v1048, %v1063
      %1083 = vrot.lane.b32.xlu0 %v1065, 1
      %v1084 = vpop.permute.xlu0 %1083
      %1085 = vrot.lane.b32.xlu0 %v1066, 1
      %v1086 = vpop.permute.xlu0 %1085
      %vm1087 = vcmask 7168
      %v1088 = vsel %vm1087, %v1084, %v1086
      %1090 = vrot.lane.b32.xlu0 %v1065, 2
      %v1091 = vpop.permute.xlu0 %1090
      %1092 = vrot.lane.b32.xlu0 %v1066, 2
      %v1093 = vpop.permute.xlu0 %1092
      %vm1094 = vcmask 15360
      %v1095 = vsel %vm1094, %v1091, %v1093
      %1097 = vrot.lane.b32.xlu0 %v1065, 3
      %v1098 = vpop.permute.xlu0 %1097
      %1099 = vrot.lane.b32.xlu0 %v1066, 3
      %v1100 = vpop.permute.xlu0 %1099
      %vm1101 = vcmask 23552
      %v1102 = vsel %vm1101, %v1098, %v1100
      %1104 = vrot.lane.b32.xlu0 %v1065, 4
      %v1105 = vpop.permute.xlu0 %1104
      %1106 = vrot.lane.b32.xlu0 %v1066, 4
      %v1107 = vpop.permute.xlu0 %1106
      %vm1108 = vcmask 31744
      %v1109 = vsel %vm1108, %v1105, %v1107
      %1111 = vrot.lane.b32.xlu0 %v1065, 5
      %v1112 = vpop.permute.xlu0 %1111
      %1113 = vrot.lane.b32.xlu0 %v1066, 5
      %v1114 = vpop.permute.xlu0 %1113
      %vm1115 = vcmask 39936
      %v1116 = vsel %vm1115, %v1112, %v1114
      %1118 = vrot.lane.b32.xlu0 %v1065, 6
      %v1119 = vpop.permute.xlu0 %1118
      %1120 = vrot.lane.b32.xlu0 %v1066, 6
      %v1121 = vpop.permute.xlu0 %1120
      %vm1122 = vcmask 48128
      %v1123 = vsel %vm1122, %v1119, %v1121
      %1125 = vrot.lane.b32.xlu0 %v1065, 7
      %v1126 = vpop.permute.xlu0 %1125
      %1127 = vrot.lane.b32.xlu0 %v1066, 7
      %v1128 = vpop.permute.xlu0 %1127
      %vm1129 = vcmask 56320
      %v1130 = vsel %vm1129, %v1126, %v1128
      %1134 = vrot.lane.b32.xlu0 %v1067, 8
      %v1135 = vpop.permute.xlu0 %1134
      %1136 = vrot.lane.b32.xlu0 %v1068, 8
      %v1137 = vpop.permute.xlu0 %1136
      %vm1138 = vcmask 64512
      %v1139 = vsel %vm1138, %v1135, %v1137
      %1141 = vrot.lane.b32.xlu0 %v1067, 9
      %v1142 = vpop.permute.xlu0 %1141
      %1143 = vrot.lane.b32.xlu0 %v1068, 9
      %v1144 = vpop.permute.xlu0 %1143
      %vm1145 = vcmask 72704
      %v1146 = vsel %vm1145, %v1142, %v1144
      %1148 = vrot.lane.b32.xlu0 %v1067, 10
      %v1149 = vpop.permute.xlu0 %1148
      %1150 = vrot.lane.b32.xlu0 %v1068, 10
      %v1151 = vpop.permute.xlu0 %1150
      %vm1152 = vcmask 80896
      %v1153 = vsel %vm1152, %v1149, %v1151
      %1155 = vrot.lane.b32.xlu0 %v1067, 11
      %v1156 = vpop.permute.xlu0 %1155
      %1157 = vrot.lane.b32.xlu0 %v1068, 11
      %v1158 = vpop.permute.xlu0 %1157
      %vm1159 = vcmask 89088
      %v1160 = vsel %vm1159, %v1156, %v1158
      %1162 = vrot.lane.b32.xlu0 %v1067, 12
      %v1163 = vpop.permute.xlu0 %1162
      %1164 = vrot.lane.b32.xlu0 %v1068, 12
      %v1165 = vpop.permute.xlu0 %1164
      %vm1166 = vcmask 97280
      %v1167 = vsel %vm1166, %v1163, %v1165
      %1169 = vrot.lane.b32.xlu0 %v1067, 13
      %v1170 = vpop.permute.xlu0 %1169
      %1171 = vrot.lane.b32.xlu0 %v1068, 13
      %v1172 = vpop.permute.xlu0 %1171
      %vm1173 = vcmask 105472
      %v1174 = vsel %vm1173, %v1170, %v1172
      %1176 = vrot.lane.b32.xlu0 %v1067, 14
      %v1177 = vpop.permute.xlu0 %1176
      %1178 = vrot.lane.b32.xlu0 %v1068, 14
      %v1179 = vpop.permute.xlu0 %1178
      %vm1180 = vcmask 113664
      %v1181 = vsel %vm1180, %v1177, %v1179
      %1183 = vrot.lane.b32.xlu0 %v1067, 15
      %v1184 = vpop.permute.xlu0 %1183
      %1185 = vrot.lane.b32.xlu0 %v1068, 15
      %v1186 = vpop.permute.xlu0 %1185
      %vm1187 = vcmask 121856
      %v1188 = vsel %vm1187, %v1184, %v1186
      %vm1190 = vcmask 1040384
      %v1191 = vsel %vm1190, %v1066, %v1088
      %vm1192 = vcmask 1041408
      %v1193 = vsel %vm1192, %v1191, %v1095
      %vm1194 = vcmask 1042432
      %v1195 = vsel %vm1194, %v1193, %v1102
      %vm1196 = vcmask 1043456
      %v1197 = vsel %vm1196, %v1195, %v1109
      %vm1198 = vcmask 1044480
      %v1199 = vsel %vm1198, %v1197, %v1116
      %vm1200 = vcmask 1045504
      %v1201 = vsel %vm1200, %v1199, %v1123
      %vm1202 = vcmask 1046528
      %v1203 = vsel %vm1202, %v1201, %v1130
      %v1204 = vsel %vm1190, %v1139, %v1146
      %v1205 = vsel %vm1192, %v1204, %v1153
      %v1206 = vsel %vm1194, %v1205, %v1160
      %v1207 = vsel %vm1196, %v1206, %v1167
      %v1208 = vsel %vm1198, %v1207, %v1174
      %v1209 = vsel %vm1200, %v1208, %v1181
      %v1210 = vsel %vm1202, %v1209, %v1188
      %1213 = vrot.lane.b32.xlu0 %v1069, 1
      %v1214 = vpop.permute.xlu0 %1213
      %1215 = vrot.lane.b32.xlu0 %v1070, 1
      %v1216 = vpop.permute.xlu0 %1215
      %v1217 = vsel %vm1087, %v1214, %v1216
      %1220 = vrot.lane.b32.xlu0 %v1069, 2
      %v1221 = vpop.permute.xlu0 %1220
      %1222 = vrot.lane.b32.xlu0 %v1070, 2
      %v1223 = vpop.permute.xlu0 %1222
      %v1224 = vsel %vm1094, %v1221, %v1223
      %1227 = vrot.lane.b32.xlu0 %v1069, 3
      %v1228 = vpop.permute.xlu0 %1227
      %1229 = vrot.lane.b32.xlu0 %v1070, 3
      %v1230 = vpop.permute.xlu0 %1229
      %v1231 = vsel %vm1101, %v1228, %v1230
      %1234 = vrot.lane.b32.xlu0 %v1069, 4
      %v1235 = vpop.permute.xlu0 %1234
      %1236 = vrot.lane.b32.xlu0 %v1070, 4
      %v1237 = vpop.permute.xlu0 %1236
      %v1238 = vsel %vm1108, %v1235, %v1237
      %1241 = vrot.lane.b32.xlu0 %v1069, 5
      %v1242 = vpop.permute.xlu0 %1241
      %1243 = vrot.lane.b32.xlu0 %v1070, 5
      %v1244 = vpop.permute.xlu0 %1243
      %v1245 = vsel %vm1115, %v1242, %v1244
      %1248 = vrot.lane.b32.xlu0 %v1069, 6
      %v1249 = vpop.permute.xlu0 %1248
      %1250 = vrot.lane.b32.xlu0 %v1070, 6
      %v1251 = vpop.permute.xlu0 %1250
      %v1252 = vsel %vm1122, %v1249, %v1251
      %1255 = vrot.lane.b32.xlu0 %v1069, 7
      %v1256 = vpop.permute.xlu0 %1255
      %1257 = vrot.lane.b32.xlu0 %v1070, 7
      %v1258 = vpop.permute.xlu0 %1257
      %v1259 = vsel %vm1129, %v1256, %v1258
      %1264 = vrot.lane.b32.xlu0 %v1071, 8
      %v1265 = vpop.permute.xlu0 %1264
      %1266 = vrot.lane.b32.xlu0 %v1072, 8
      %v1267 = vpop.permute.xlu0 %1266
      %v1268 = vsel %vm1138, %v1265, %v1267
      %1271 = vrot.lane.b32.xlu0 %v1071, 9
      %v1272 = vpop.permute.xlu0 %1271
      %1273 = vrot.lane.b32.xlu0 %v1072, 9
      %v1274 = vpop.permute.xlu0 %1273
      %v1275 = vsel %vm1145, %v1272, %v1274
      %1278 = vrot.lane.b32.xlu0 %v1071, 10
      %v1279 = vpop.permute.xlu0 %1278
      %1280 = vrot.lane.b32.xlu0 %v1072, 10
      %v1281 = vpop.permute.xlu0 %1280
      %v1282 = vsel %vm1152, %v1279, %v1281
      %1285 = vrot.lane.b32.xlu0 %v1071, 11
      %v1286 = vpop.permute.xlu0 %1285
      %1287 = vrot.lane.b32.xlu0 %v1072, 11
      %v1288 = vpop.permute.xlu0 %1287
      %v1289 = vsel %vm1159, %v1286, %v1288
      %1292 = vrot.lane.b32.xlu0 %v1071, 12
      %v1293 = vpop.permute.xlu0 %1292
      %1294 = vrot.lane.b32.xlu0 %v1072, 12
      %v1295 = vpop.permute.xlu0 %1294
      %v1296 = vsel %vm1166, %v1293, %v1295
      %1299 = vrot.lane.b32.xlu0 %v1071, 13
      %v1300 = vpop.permute.xlu0 %1299
      %1301 = vrot.lane.b32.xlu0 %v1072, 13
      %v1302 = vpop.permute.xlu0 %1301
      %v1303 = vsel %vm1173, %v1300, %v1302
      %1306 = vrot.lane.b32.xlu0 %v1071, 14
      %v1307 = vpop.permute.xlu0 %1306
      %1308 = vrot.lane.b32.xlu0 %v1072, 14
      %v1309 = vpop.permute.xlu0 %1308
      %v1310 = vsel %vm1180, %v1307, %v1309
      %1313 = vrot.lane.b32.xlu0 %v1071, 15
      %v1314 = vpop.permute.xlu0 %1313
      %1315 = vrot.lane.b32.xlu0 %v1072, 15
      %v1316 = vpop.permute.xlu0 %1315
      %v1317 = vsel %vm1187, %v1314, %v1316
      %v1320 = vsel %vm1190, %v1069, %v1214
      %v1321 = vsel %vm1190, %v1070, %v1217
      %v1322 = vsel %vm1192, %v1320, %v1221
      %v1323 = vsel %vm1192, %v1321, %v1224
      %v1324 = vsel %vm1194, %v1322, %v1228
      %v1325 = vsel %vm1194, %v1323, %v1231
      %v1326 = vsel %vm1196, %v1324, %v1235
      %v1327 = vsel %vm1196, %v1325, %v1238
      %v1328 = vsel %vm1198, %v1326, %v1242
      %v1329 = vsel %vm1198, %v1327, %v1245
      %v1330 = vsel %vm1200, %v1328, %v1249
      %v1331 = vsel %vm1200, %v1329, %v1252
      %v1332 = vsel %vm1202, %v1330, %v1256
      %v1333 = vsel %vm1202, %v1331, %v1259
      %v1334 = vsel %vm1190, %v1265, %v1272
      %v1335 = vsel %vm1190, %v1268, %v1275
      %v1336 = vsel %vm1192, %v1334, %v1279
      %v1337 = vsel %vm1192, %v1335, %v1282
      %v1338 = vsel %vm1194, %v1336, %v1286
      %v1339 = vsel %vm1194, %v1337, %v1289
      %v1340 = vsel %vm1196, %v1338, %v1293
      %v1341 = vsel %vm1196, %v1339, %v1296
      %v1342 = vsel %vm1198, %v1340, %v1300
      %v1343 = vsel %vm1198, %v1341, %v1303
      %v1344 = vsel %vm1200, %v1342, %v1307
      %v1345 = vsel %vm1200, %v1343, %v1310
      %v1346 = vsel %vm1202, %v1344, %v1314
      %v1347 = vsel %vm1202, %v1345, %v1317
      %1350 = vrot.lane.b32.xlu0 %v1073, 1
      %v1351 = vpop.permute.xlu0 %1350
      %1352 = vrot.lane.b32.xlu0 %v1074, 1
      %v1353 = vpop.permute.xlu0 %1352
      %v1354 = vsel %vm1087, %v1351, %v1353
      %1357 = vrot.lane.b32.xlu0 %v1073, 2
      %v1358 = vpop.permute.xlu0 %1357
      %1359 = vrot.lane.b32.xlu0 %v1074, 2
      %v1360 = vpop.permute.xlu0 %1359
      %v1361 = vsel %vm1094, %v1358, %v1360
      %1364 = vrot.lane.b32.xlu0 %v1073, 3
      %v1365 = vpop.permute.xlu0 %1364
      %1366 = vrot.lane.b32.xlu0 %v1074, 3
      %v1367 = vpop.permute.xlu0 %1366
      %v1368 = vsel %vm1101, %v1365, %v1367
      %1371 = vrot.lane.b32.xlu0 %v1073, 4
      %v1372 = vpop.permute.xlu0 %1371
      %1373 = vrot.lane.b32.xlu0 %v1074, 4
      %v1374 = vpop.permute.xlu0 %1373
      %v1375 = vsel %vm1108, %v1372, %v1374
      %1378 = vrot.lane.b32.xlu0 %v1073, 5
      %v1379 = vpop.permute.xlu0 %1378
      %1380 = vrot.lane.b32.xlu0 %v1074, 5
      %v1381 = vpop.permute.xlu0 %1380
      %v1382 = vsel %vm1115, %v1379, %v1381
      %1385 = vrot.lane.b32.xlu0 %v1073, 6
      %v1386 = vpop.permute.xlu0 %1385
      %1387 = vrot.lane.b32.xlu0 %v1074, 6
      %v1388 = vpop.permute.xlu0 %1387
      %v1389 = vsel %vm1122, %v1386, %v1388
      %1392 = vrot.lane.b32.xlu0 %v1073, 7
      %v1393 = vpop.permute.xlu0 %1392
      %1394 = vrot.lane.b32.xlu0 %v1074, 7
      %v1395 = vpop.permute.xlu0 %1394
      %v1396 = vsel %vm1129, %v1393, %v1395
      %1401 = vrot.lane.b32.xlu0 %v1075, 8
      %v1402 = vpop.permute.xlu0 %1401
      %1403 = vrot.lane.b32.xlu0 %v1076, 8
      %v1404 = vpop.permute.xlu0 %1403
      %v1405 = vsel %vm1138, %v1402, %v1404
      %1408 = vrot.lane.b32.xlu0 %v1075, 9
      %v1409 = vpop.permute.xlu0 %1408
      %1410 = vrot.lane.b32.xlu0 %v1076, 9
      %v1411 = vpop.permute.xlu0 %1410
      %v1412 = vsel %vm1145, %v1409, %v1411
      %1415 = vrot.lane.b32.xlu0 %v1075, 10
      %v1416 = vpop.permute.xlu0 %1415
      %1417 = vrot.lane.b32.xlu0 %v1076, 10
      %v1418 = vpop.permute.xlu0 %1417
      %v1419 = vsel %vm1152, %v1416, %v1418
      %1422 = vrot.lane.b32.xlu0 %v1075, 11
      %v1423 = vpop.permute.xlu0 %1422
      %1424 = vrot.lane.b32.xlu0 %v1076, 11
      %v1425 = vpop.permute.xlu0 %1424
      %v1426 = vsel %vm1159, %v1423, %v1425
      %1429 = vrot.lane.b32.xlu0 %v1075, 12
      %v1430 = vpop.permute.xlu0 %1429
      %1431 = vrot.lane.b32.xlu0 %v1076, 12
      %v1432 = vpop.permute.xlu0 %1431
      %v1433 = vsel %vm1166, %v1430, %v1432
      %1436 = vrot.lane.b32.xlu0 %v1075, 13
      %v1437 = vpop.permute.xlu0 %1436
      %1438 = vrot.lane.b32.xlu0 %v1076, 13
      %v1439 = vpop.permute.xlu0 %1438
      %v1440 = vsel %vm1173, %v1437, %v1439
      %1443 = vrot.lane.b32.xlu0 %v1075, 14
      %v1444 = vpop.permute.xlu0 %1443
      %1445 = vrot.lane.b32.xlu0 %v1076, 14
      %v1446 = vpop.permute.xlu0 %1445
      %v1447 = vsel %vm1180, %v1444, %v1446
      %1450 = vrot.lane.b32.xlu0 %v1075, 15
      %v1451 = vpop.permute.xlu0 %1450
      %1452 = vrot.lane.b32.xlu0 %v1076, 15
      %v1453 = vpop.permute.xlu0 %1452
      %v1454 = vsel %vm1187, %v1451, %v1453
      %v1457 = vsel %vm1190, %v1073, %v1351
      %v1458 = vsel %vm1190, %v1074, %v1354
      %v1459 = vsel %vm1192, %v1457, %v1358
      %v1460 = vsel %vm1192, %v1458, %v1361
      %v1461 = vsel %vm1194, %v1459, %v1365
      %v1462 = vsel %vm1194, %v1460, %v1368
      %v1463 = vsel %vm1196, %v1461, %v1372
      %v1464 = vsel %vm1196, %v1462, %v1375
      %v1465 = vsel %vm1198, %v1463, %v1379
      %v1466 = vsel %vm1198, %v1464, %v1382
      %v1467 = vsel %vm1200, %v1465, %v1386
      %v1468 = vsel %vm1200, %v1466, %v1389
      %v1469 = vsel %vm1202, %v1467, %v1393
      %v1470 = vsel %vm1202, %v1468, %v1396
      %v1471 = vsel %vm1190, %v1402, %v1409
      %v1472 = vsel %vm1190, %v1405, %v1412
      %v1473 = vsel %vm1192, %v1471, %v1416
      %v1474 = vsel %vm1192, %v1472, %v1419
      %v1475 = vsel %vm1194, %v1473, %v1423
      %v1476 = vsel %vm1194, %v1474, %v1426
      %v1477 = vsel %vm1196, %v1475, %v1430
      %v1478 = vsel %vm1196, %v1476, %v1433
      %v1479 = vsel %vm1198, %v1477, %v1437
      %v1480 = vsel %vm1198, %v1478, %v1440
      %v1481 = vsel %vm1200, %v1479, %v1444
      %v1482 = vsel %vm1200, %v1480, %v1447
      %v1483 = vsel %vm1202, %v1481, %v1451
      %v1484 = vsel %vm1202, %v1482, %v1454
      %1487 = vrot.lane.b32.xlu0 %v1077, 1
      %v1488 = vpop.permute.xlu0 %1487
      %1489 = vrot.lane.b32.xlu0 %v1078, 1
      %v1490 = vpop.permute.xlu0 %1489
      %v1491 = vsel %vm1087, %v1488, %v1490
      %1494 = vrot.lane.b32.xlu0 %v1077, 2
      %v1495 = vpop.permute.xlu0 %1494
      %1496 = vrot.lane.b32.xlu0 %v1078, 2
      %v1497 = vpop.permute.xlu0 %1496
      %v1498 = vsel %vm1094, %v1495, %v1497
      %1501 = vrot.lane.b32.xlu0 %v1077, 3
      %v1502 = vpop.permute.xlu0 %1501
      %1503 = vrot.lane.b32.xlu0 %v1078, 3
      %v1504 = vpop.permute.xlu0 %1503
      %v1505 = vsel %vm1101, %v1502, %v1504
      %1508 = vrot.lane.b32.xlu0 %v1077, 4
      %v1509 = vpop.permute.xlu0 %1508
      %1510 = vrot.lane.b32.xlu0 %v1078, 4
      %v1511 = vpop.permute.xlu0 %1510
      %v1512 = vsel %vm1108, %v1509, %v1511
      %1515 = vrot.lane.b32.xlu0 %v1077, 5
      %v1516 = vpop.permute.xlu0 %1515
      %1517 = vrot.lane.b32.xlu0 %v1078, 5
      %v1518 = vpop.permute.xlu0 %1517
      %v1519 = vsel %vm1115, %v1516, %v1518
      %1522 = vrot.lane.b32.xlu0 %v1077, 6
      %v1523 = vpop.permute.xlu0 %1522
      %1524 = vrot.lane.b32.xlu0 %v1078, 6
      %v1525 = vpop.permute.xlu0 %1524
      %v1526 = vsel %vm1122, %v1523, %v1525
      %1529 = vrot.lane.b32.xlu0 %v1077, 7
      %v1530 = vpop.permute.xlu0 %1529
      %1531 = vrot.lane.b32.xlu0 %v1078, 7
      %v1532 = vpop.permute.xlu0 %1531
      %v1533 = vsel %vm1129, %v1530, %v1532
      %1538 = vrot.lane.b32.xlu0 %v1079, 8
      %v1539 = vpop.permute.xlu0 %1538
      %1540 = vrot.lane.b32.xlu0 %v1080, 8
      %v1541 = vpop.permute.xlu0 %1540
      %v1542 = vsel %vm1138, %v1539, %v1541
      %1545 = vrot.lane.b32.xlu0 %v1079, 9
      %v1546 = vpop.permute.xlu0 %1545
      %1547 = vrot.lane.b32.xlu0 %v1080, 9
      %v1548 = vpop.permute.xlu0 %1547
      %v1549 = vsel %vm1145, %v1546, %v1548
      %1552 = vrot.lane.b32.xlu0 %v1079, 10
      %v1553 = vpop.permute.xlu0 %1552
      %1554 = vrot.lane.b32.xlu0 %v1080, 10
      %v1555 = vpop.permute.xlu0 %1554
      %v1556 = vsel %vm1152, %v1553, %v1555
      %1559 = vrot.lane.b32.xlu0 %v1079, 11
      %v1560 = vpop.permute.xlu0 %1559
      %1561 = vrot.lane.b32.xlu0 %v1080, 11
      %v1562 = vpop.permute.xlu0 %1561
      %v1563 = vsel %vm1159, %v1560, %v1562
      %1566 = vrot.lane.b32.xlu0 %v1079, 12
      %v1567 = vpop.permute.xlu0 %1566
      %1568 = vrot.lane.b32.xlu0 %v1080, 12
      %v1569 = vpop.permute.xlu0 %1568
      %v1570 = vsel %vm1166, %v1567, %v1569
      %1573 = vrot.lane.b32.xlu0 %v1079, 13
      %v1574 = vpop.permute.xlu0 %1573
      %1575 = vrot.lane.b32.xlu0 %v1080, 13
      %v1576 = vpop.permute.xlu0 %1575
      %v1577 = vsel %vm1173, %v1574, %v1576
      %1580 = vrot.lane.b32.xlu0 %v1079, 14
      %v1581 = vpop.permute.xlu0 %1580
      %1582 = vrot.lane.b32.xlu0 %v1080, 14
      %v1583 = vpop.permute.xlu0 %1582
      %v1584 = vsel %vm1180, %v1581, %v1583
      %1587 = vrot.lane.b32.xlu0 %v1079, 15
      %v1588 = vpop.permute.xlu0 %1587
      %1589 = vrot.lane.b32.xlu0 %v1080, 15
      %v1590 = vpop.permute.xlu0 %1589
      %v1591 = vsel %vm1187, %v1588, %v1590
      %v1594 = vsel %vm1190, %v1077, %v1488
      %v1595 = vsel %vm1190, %v1078, %v1491
      %v1596 = vsel %vm1192, %v1594, %v1495
      %v1597 = vsel %vm1192, %v1595, %v1498
      %v1598 = vsel %vm1194, %v1596, %v1502
      %v1599 = vsel %vm1194, %v1597, %v1505
      %v1600 = vsel %vm1196, %v1598, %v1509
      %v1601 = vsel %vm1196, %v1599, %v1512
      %v1602 = vsel %vm1198, %v1600, %v1516
      %v1603 = vsel %vm1198, %v1601, %v1519
      %v1604 = vsel %vm1200, %v1602, %v1523
      %v1605 = vsel %vm1200, %v1603, %v1526
      %v1606 = vsel %vm1202, %v1604, %v1530
      %v1607 = vsel %vm1202, %v1605, %v1533
      %v1608 = vsel %vm1190, %v1539, %v1546
      %v1609 = vsel %vm1190, %v1542, %v1549
      %v1610 = vsel %vm1192, %v1608, %v1553
      %v1611 = vsel %vm1192, %v1609, %v1556
      %v1612 = vsel %vm1194, %v1610, %v1560
      %v1613 = vsel %vm1194, %v1611, %v1563
      %v1614 = vsel %vm1196, %v1612, %v1567
      %v1615 = vsel %vm1196, %v1613, %v1570
      %v1616 = vsel %vm1198, %v1614, %v1574
      %v1617 = vsel %vm1198, %v1615, %v1577
      %v1618 = vsel %vm1200, %v1616, %v1581
      %v1619 = vsel %vm1200, %v1617, %v1584
      %v1620 = vsel %vm1202, %v1618, %v1588
      %v1621 = vsel %vm1202, %v1619, %v1591
      %1626 = vrot.lane.b32.xlu0 %v1332, 16
      %v1627 = vpop.permute.xlu0 %1626
      %1628 = vrot.lane.b32.xlu0 %v1333, 16
      %v1629 = vpop.permute.xlu0 %1628
      %1630 = vrot.lane.b32.xlu0 %v1346, 16
      %v1631 = vpop.permute.xlu0 %1630
      %1632 = vrot.lane.b32.xlu0 %v1347, 16
      %v1633 = vpop.permute.xlu0 %1632
      %vm1634 = vcmask 130048
      %v1635 = vsel %vm1634, %v1627, %v1629
      %v1636 = vsel %vm1634, %v1631, %v1633
      %1643 = vrot.lane.b32.xlu0 %v1469, 32
      %v1644 = vpop.permute.xlu0 %1643
      %1645 = vrot.lane.b32.xlu0 %v1470, 32
      %v1646 = vpop.permute.xlu0 %1645
      %1647 = vrot.lane.b32.xlu0 %v1483, 32
      %v1648 = vpop.permute.xlu0 %1647
      %1649 = vrot.lane.b32.xlu0 %v1484, 32
      %v1650 = vpop.permute.xlu0 %1649
      %v1651 = vsel %vm943, %v1644, %v1646
      %v1652 = vsel %vm943, %v1648, %v1650
      %1659 = vrot.lane.b32.xlu0 %v1606, 48
      %v1660 = vpop.permute.xlu0 %1659
      %1661 = vrot.lane.b32.xlu0 %v1607, 48
      %v1662 = vpop.permute.xlu0 %1661
      %1663 = vrot.lane.b32.xlu0 %v1620, 48
      %v1664 = vpop.permute.xlu0 %1663
      %1665 = vrot.lane.b32.xlu0 %v1621, 48
      %v1666 = vpop.permute.xlu0 %1665
      %vm1667 = vcmask 392192
      %v1668 = vsel %vm1667, %v1660, %v1662
      %v1669 = vsel %vm1667, %v1664, %v1666
      %v1672 = vadd.f32 %v1051, %v1203
      %v1673 = vadd.f32 %v1052, %v1210
      %v1674 = vadd.f32 %v1053, %v1635
      %v1675 = vadd.f32 %v1054, %v1636
      %v1676 = vadd.f32 %v1055, %v1651
      %v1677 = vadd.f32 %v1056, %v1652
      %v1678 = vadd.f32 %v1057, %v1668
      %v1679 = vadd.f32 %v1058, %v1669
      %v1680 = vsub.f32 %v1672, %v867
      %v1681 = vsub.f32 %v1673, %v868
      %v1682 = vsub.f32 %v1674, %v869
      %v1683 = vsub.f32 %v1675, %v870
      %v1684 = vsub.f32 %v1676, %v871
      %v1685 = vsub.f32 %v1677, %v872
      %v1686 = vsub.f32 %v1678, %v873
      %v1687 = vsub.f32 %v1679, %v874
      %vm1688 = vcmask 523264
      %v1689 = vsel %vm1688, %v1680, -inf
      %1690 = vmax.xlane.f32.xlu0 %v1689
      %v1691 = vpop.xlane.xlu0 %1690
      %v1692 = vsel %vm1688, %v1681, -inf
      %1693 = vmax.xlane.f32.xlu0 %v1692
      %v1694 = vpop.xlane.xlu0 %1693
      %v1695 = vsel %vm1688, %v1682, -inf
      %1696 = vmax.xlane.f32.xlu0 %v1695
      %v1697 = vpop.xlane.xlu0 %1696
      %v1698 = vsel %vm1688, %v1683, -inf
      %1699 = vmax.xlane.f32.xlu0 %v1698
      %v1700 = vpop.xlane.xlu0 %1699
      %v1701 = vsel %vm1688, %v1684, -inf
      %1702 = vmax.xlane.f32.xlu0 %v1701
      %v1703 = vpop.xlane.xlu0 %1702
      %v1704 = vsel %vm1688, %v1685, -inf
      %1705 = vmax.xlane.f32.xlu0 %v1704
      %v1706 = vpop.xlane.xlu0 %1705
      %v1707 = vsel %vm1688, %v1686, -inf
      %1708 = vmax.xlane.f32.xlu0 %v1707
      %v1709 = vpop.xlane.xlu0 %1708
      %v1710 = vsel %vm1688, %v1687, -inf
      %1711 = vmax.xlane.f32.xlu0 %v1710
      %v1712 = vpop.xlane.xlu0 %1711
      %v1713 = vsub.f32 %v1680, %v1691
      %v1714 = vsub.f32 %v1681, %v1694
      %v1715 = vsub.f32 %v1682, %v1697
      %v1716 = vsub.f32 %v1683, %v1700
      %v1717 = vsub.f32 %v1684, %v1703
      %v1718 = vsub.f32 %v1685, %v1706
      %v1719 = vsub.f32 %v1686, %v1709
      %v1720 = vsub.f32 %v1687, %v1712
      %v1721 = vmul.f32 %v1713, 1.442695
      %v1722 = vpow.pop %v1721
      %v1723 = vmul.f32 %v1714, 1.442695
      %v1724 = vpow.pop %v1723
      %v1725 = vmul.f32 %v1715, 1.442695
      %v1726 = vpow.pop %v1725
      %v1727 = vmul.f32 %v1716, 1.442695
      %v1728 = vpow.pop %v1727
      %v1729 = vmul.f32 %v1717, 1.442695
      %v1730 = vpow.pop %v1729
      %v1731 = vmul.f32 %v1718, 1.442695
      %v1732 = vpow.pop %v1731
      %v1733 = vmul.f32 %v1719, 1.442695
      %v1734 = vpow.pop %v1733
      %v1735 = vmul.f32 %v1720, 1.442695
      %v1736 = vpow.pop %v1735
      %v1737 = vsel %vm1688, %v1722, 0.0
      %1738 = vadd.xlane.f32.xlu0 %v1737
      %v1739 = vpop.xlane.xlu0 %1738
      %v1740 = vsel %vm1688, %v1724, 0.0
      %1741 = vadd.xlane.f32.xlu0 %v1740
      %v1742 = vpop.xlane.xlu0 %1741
      %v1743 = vsel %vm1688, %v1726, 0.0
      %1744 = vadd.xlane.f32.xlu0 %v1743
      %v1745 = vpop.xlane.xlu0 %1744
      %v1746 = vsel %vm1688, %v1728, 0.0
      %1747 = vadd.xlane.f32.xlu0 %v1746
      %v1748 = vpop.xlane.xlu0 %1747
      %v1749 = vsel %vm1688, %v1730, 0.0
      %1750 = vadd.xlane.f32.xlu0 %v1749
      %v1751 = vpop.xlane.xlu0 %1750
      %v1752 = vsel %vm1688, %v1732, 0.0
      %1753 = vadd.xlane.f32.xlu0 %v1752
      %v1754 = vpop.xlane.xlu0 %1753
      %v1755 = vsel %vm1688, %v1734, 0.0
      %1756 = vadd.xlane.f32.xlu0 %v1755
      %v1757 = vpop.xlane.xlu0 %1756
      %v1758 = vsel %vm1688, %v1736, 0.0
      %1759 = vadd.xlane.f32.xlu0 %v1758
      %v1760 = vpop.xlane.xlu0 %1759
      %v1761 = vrcp.pop %v1739
      %v1762 = vrcp.pop %v1742
      %v1763 = vrcp.pop %v1745
      %v1764 = vrcp.pop %v1748
      %v1765 = vrcp.pop %v1751
      %v1766 = vrcp.pop %v1754
      %v1767 = vrcp.pop %v1757
      %v1768 = vrcp.pop %v1760
      %v1769 = vmul.f32 %v1722, %v1761
      %v1770 = vmul.f32 %v1724, %v1762
      %v1771 = vmul.f32 %v1726, %v1763
      %v1772 = vmul.f32 %v1728, %v1764
      %v1773 = vmul.f32 %v1730, %v1765
      %v1774 = vmul.f32 %v1732, %v1766
      %v1775 = vmul.f32 %v1734, %v1767
      %v1776 = vmul.f32 %v1736, %v1768
      %v1777 = vpack.c.bf16 %v1770, %v1769
      %v1778 = vpack.c.bf16 %v1772, %v1771
      %v1779 = vpack.c.bf16 %v1774, %v1773
      %v1780 = vpack.c.bf16 %v1776, %v1775
      %v1789 = vunpack.c.l.b16 %v790
      %v1790 = vunpack.c.l.b16 %v792
      %v1791 = vunpack.c.l.b16 %v794
      %v1792 = vunpack.c.l.b16 %v796
      %v1793 = vunpack.c.l.b16 %v798
      %v1794 = vunpack.c.l.b16 %v800
      %v1795 = vunpack.c.l.b16 %v802
      %v1796 = vunpack.c.l.b16 %v804
      %v1797 = vpack.c.b16 %v1790, %v1789
      %v1798 = vpack.c.b16 %v1792, %v1791
      %v1799 = vpack.c.b16 %v1794, %v1793
      %v1800 = vpack.c.b16 %v1796, %v1795
      %v1806 = vsel %vm1688, %v1777, 0
      %v1809 = vsel %vm1688, %v1778, 0
      %v1812 = vsel %vm1688, %v1779, 0
      %v1815 = vsel %vm1688, %v1780, 0
      %1817 = vmatpush.bf16.msra.mxu0 0
      %1818 = vmatpush.bf16.msra.mxu0 0
      %1819 = vmatpush.bf16.msra.mxu0 0
      %1820 = vmatpush.bf16.msra.mxu0 0
      %1821 = vmatpush.bf16.msra.mxu0 %v1800
      %1822 = vmatpush.bf16.msra.mxu0 %v1799
      %1823 = vmatpush.bf16.msra.mxu0 %v1798
      %1824 = vmatpush.bf16.msra.mxu0 %v1797
      %1825 = vmatmul.bf16.gmra.mxu0 %v1806
      %v1826 = vpop.f32.mrf.mxu0
      %v1827 = vadd.f32 0.0, %v1826
      %v1828 = vpop.f32.mrf.mxu0
      %v1829 = vadd.f32 0.0, %v1828
      %1830 = vmatmul.bf16.gmra.mxu0 %v1809
      %v1831 = vpop.f32.mrf.mxu0
      %v1832 = vadd.f32 0.0, %v1831
      %v1833 = vpop.f32.mrf.mxu0
      %v1834 = vadd.f32 0.0, %v1833
      %1835 = vmatmul.bf16.gmra.mxu0 %v1812
      %v1836 = vpop.f32.mrf.mxu0
      %v1837 = vadd.f32 0.0, %v1836
      %v1838 = vpop.f32.mrf.mxu0
      %v1839 = vadd.f32 0.0, %v1838
      %1840 = vmatmul.bf16.gmra.mxu0 %v1815
      %v1841 = vpop.f32.mrf.mxu0
      %v1842 = vadd.f32 0.0, %v1841
      %v1843 = vpop.f32.mrf.mxu0
      %v1844 = vadd.f32 0.0, %v1843
      %1845 = vdwg.mxu0
      %v1846 = vpack.c.bf16 %v1827, %v1827
      %v1847 = vpack.c.bf16 %v1829, %v1829
      %v1848 = vpack.c.bf16 %v1832, %v1832
      %v1849 = vpack.c.bf16 %v1834, %v1834
      %v1850 = vpack.c.bf16 %v1837, %v1837
      %v1851 = vpack.c.bf16 %v1839, %v1839
      %v1852 = vpack.c.bf16 %v1842, %v1842
      %v1853 = vpack.c.bf16 %v1844, %v1844
      %vm1854 = vcmask 257024
      %1855 = vst.msk [vmem:[#allocation2] sm:$0xf] %vm1854, %v1846
      %1856 = vst.msk [vmem:[#allocation2 + $0x4] sm:$0xf] %vm1854, %v1847
      %1857 = vst.msk [vmem:[#allocation2 + $0x8] sm:$0xf] %vm1854, %v1848
      %1858 = vst.msk [vmem:[#allocation2 + $0xc] sm:$0xf] %vm1854, %v1849
      %1859 = vst.msk [vmem:[#allocation2 + $0x10] sm:$0xf] %vm1854, %v1850
      %1860 = vst.msk [vmem:[#allocation2 + $0x14] sm:$0xf] %vm1854, %v1851
      %1861 = vst.msk [vmem:[#allocation2 + $0x18] sm:$0xf] %vm1854, %v1852
      %1862 = vst.msk [vmem:[#allocation2 + $0x1c] sm:$0xf] %vm1854, %v1853
      %1863 = vrot.lane.b32.xlu0 %v822, 96
      %v1864 = vpop.permute.xlu0 %1863
      %1865 = vrot.lane.b32.xlu0 %v823, 96
      %v1866 = vpop.permute.xlu0 %1865
      %1867 = vrot.lane.b32.xlu0 %v824, 96
      %v1868 = vpop.permute.xlu0 %1867
      %1869 = vrot.lane.b32.xlu0 %v825, 96
      %v1870 = vpop.permute.xlu0 %1869
      %1871 = vrot.lane.b32.xlu0 %v923, 96
      %v1872 = vpop.permute.xlu0 %1871
      %1873 = vrot.lane.b32.xlu0 %v924, 96
      %v1874 = vpop.permute.xlu0 %1873
      %1875 = vrot.lane.b32.xlu0 %v925, 96
      %v1876 = vpop.permute.xlu0 %1875
      %1877 = vrot.lane.b32.xlu0 %v926, 96
      %v1878 = vpop.permute.xlu0 %1877
      %1879 = vrot.lane.b32.xlu0 %v927, 96
      %v1880 = vpop.permute.xlu0 %1879
      %1881 = vrot.lane.b32.xlu0 %v928, 96
      %v1882 = vpop.permute.xlu0 %1881
      %1883 = vrot.lane.b32.xlu0 %v929, 96
      %v1884 = vpop.permute.xlu0 %1883
      %1885 = vrot.lane.b32.xlu0 %v930, 96
      %v1886 = vpop.permute.xlu0 %1885
      %1887 = vrot.lane.b32.xlu0 %v939, 96
      %v1888 = vpop.permute.xlu0 %1887
      %1889 = vrot.lane.b32.xlu0 %v940, 96
      %v1890 = vpop.permute.xlu0 %1889
      %1891 = vrot.lane.b32.xlu0 %v941, 96
      %v1892 = vpop.permute.xlu0 %1891
      %1893 = vrot.lane.b32.xlu0 %v942, 96
      %v1894 = vpop.permute.xlu0 %1893
      %v1896 = vsel %vm943, %v1888, 0
      %v1899 = vsel %vm943, %v1890, 0
      %v1902 = vsel %vm943, %v1892, 0
      %v1905 = vsel %vm943, %v1894, 0
      %v1908 = vsel %vm943, %v1864, 0
      %v1911 = vsel %vm943, %v1866, 0
      %v1914 = vsel %vm943, %v1868, 0
      %v1917 = vsel %vm943, %v1870, 0
      %v1920 = vsel %vm943, %v1872, 0
      %v1923 = vsel %vm943, %v1874, 0
      %v1926 = vsel %vm943, %v1876, 0
      %v1929 = vsel %vm943, %v1878, 0
      %v1932 = vsel %vm943, %v1880, 0
      %v1935 = vsel %vm943, %v1882, 0
      %v1938 = vsel %vm943, %v1884, 0
      %v1941 = vsel %vm943, %v1886, 0
      %1943 = vmatpush.bf16.xpose.msra.mxu0 %v1929
      %1944 = vmatpush.bf16.xpose.msra.mxu0 %v1926
      %1945 = vmatpush.bf16.xpose.msra.mxu0 %v1923
      %1946 = vmatpush.bf16.xpose.msra.mxu0 %v1920
      %1947 = vmatpush.bf16.xpose.msra.mxu0 %v1917
      %1948 = vmatpush.bf16.xpose.msra.mxu0 %v1914
      %1949 = vmatpush.bf16.xpose.msra.mxu0 %v1911
      %1950 = vmatpush.bf16.xpose.msra.mxu0 %v1908
      %1951 = vmatmul.bf16.gmra.mxu0 %v1896
      %v1952 = vpop.f32.mrf.mxu0
      %v1953 = vadd.f32 0.0, %v1952
      %v1954 = vpop.f32.mrf.mxu0
      %v1955 = vadd.f32 0.0, %v1954
      %1956 = vmatmul.bf16.gmra.mxu0 %v1899
      %v1957 = vpop.f32.mrf.mxu0
      %v1958 = vadd.f32 0.0, %v1957
      %v1959 = vpop.f32.mrf.mxu0
      %v1960 = vadd.f32 0.0, %v1959
      %1961 = vmatmul.bf16.gmra.mxu0 %v1902
      %v1962 = vpop.f32.mrf.mxu0
      %v1963 = vadd.f32 0.0, %v1962
      %v1964 = vpop.f32.mrf.mxu0
      %v1965 = vadd.f32 0.0, %v1964
      %1966 = vmatmul.bf16.gmra.mxu0 %v1905
      %v1967 = vpop.f32.mrf.mxu0
      %v1968 = vadd.f32 0.0, %v1967
      %v1969 = vpop.f32.mrf.mxu0
      %v1970 = vadd.f32 0.0, %v1969
      %1971 = vdwg.mxu0
      %1972 = vmatpush.bf16.xpose.msra.mxu0 0
      %1973 = vmatpush.bf16.xpose.msra.mxu0 0
      %1974 = vmatpush.bf16.xpose.msra.mxu0 0
      %1975 = vmatpush.bf16.xpose.msra.mxu0 0
      %1976 = vmatpush.bf16.xpose.msra.mxu0 %v1941
      %1977 = vmatpush.bf16.xpose.msra.mxu0 %v1938
      %1978 = vmatpush.bf16.xpose.msra.mxu0 %v1935
      %1979 = vmatpush.bf16.xpose.msra.mxu0 %v1932
      %1980 = vmatmul.bf16.gmra.mxu0 %v1896
      %v1981 = vpop.f32.mrf.mxu0
      %v1982 = vadd.f32 0.0, %v1981
      %v1983 = vpop.f32.mrf.mxu0
      %v1984 = vadd.f32 0.0, %v1983
      %1985 = vmatmul.bf16.gmra.mxu0 %v1899
      %v1986 = vpop.f32.mrf.mxu0
      %v1987 = vadd.f32 0.0, %v1986
      %v1988 = vpop.f32.mrf.mxu0
      %v1989 = vadd.f32 0.0, %v1988
      %1990 = vmatmul.bf16.gmra.mxu0 %v1902
      %v1991 = vpop.f32.mrf.mxu0
      %v1992 = vadd.f32 0.0, %v1991
      %v1993 = vpop.f32.mrf.mxu0
      %v1994 = vadd.f32 0.0, %v1993
      %1995 = vmatmul.bf16.gmra.mxu0 %v1905
      %v1996 = vpop.f32.mrf.mxu0
      %v1997 = vadd.f32 0.0, %v1996
      %v1998 = vpop.f32.mrf.mxu0
      %v1999 = vadd.f32 0.0, %v1998
      %2000 = vdwg.mxu0
      %v2001 = vperm.slane %v840, 1
      %v2002 = vadd.f32 %v1953, %v2001
      %v2003 = vadd.f32 %v1955, %v2001
      %v2004 = vadd.f32 %v1958, %v2001
      %v2005 = vadd.f32 %v1960, %v2001
      %v2006 = vadd.f32 %v1963, %v2001
      %v2007 = vadd.f32 %v1965, %v2001
      %v2008 = vadd.f32 %v1968, %v2001
      %v2009 = vadd.f32 %v1970, %v2001
      %v2010 = vld [vmem:[%s5 + $0x1] sm:$0x1]
      %v2011 = vperm.slane %v2010, 0
      %2013 = vrot.lane.b32.xlu0 %v2011, 64
      %v2014 = vpop.permute.xlu0 %2013
      %v2016 = vadd.f32 %v1953, %v2014
      %v2017 = vadd.f32 %v1982, %v2014
      %v2018 = vadd.f32 %v1955, %v2014
      %v2019 = vadd.f32 %v1984, %v2014
      %v2020 = vadd.f32 %v1958, %v2014
      %v2021 = vadd.f32 %v1987, %v2014
      %v2022 = vadd.f32 %v1960, %v2014
      %v2023 = vadd.f32 %v1989, %v2014
      %v2024 = vadd.f32 %v1963, %v2014
      %v2025 = vadd.f32 %v1992, %v2014
      %v2026 = vadd.f32 %v1965, %v2014
      %v2027 = vadd.f32 %v1994, %v2014
      %v2028 = vadd.f32 %v1968, %v2014
      %v2029 = vadd.f32 %v1997, %v2014
      %v2030 = vadd.f32 %v1970, %v2014
      %v2031 = vadd.f32 %v1999, %v2014
      %2034 = vrot.lane.b32.xlu0 %v2016, 1
      %v2035 = vpop.permute.xlu0 %2034
      %2036 = vrot.lane.b32.xlu0 %v2017, 1
      %v2037 = vpop.permute.xlu0 %2036
      %v2038 = vsel %vm1087, %v2035, %v2037
      %2040 = vrot.lane.b32.xlu0 %v2016, 2
      %v2041 = vpop.permute.xlu0 %2040
      %2042 = vrot.lane.b32.xlu0 %v2017, 2
      %v2043 = vpop.permute.xlu0 %2042
      %v2044 = vsel %vm1094, %v2041, %v2043
      %2046 = vrot.lane.b32.xlu0 %v2016, 3
      %v2047 = vpop.permute.xlu0 %2046
      %2048 = vrot.lane.b32.xlu0 %v2017, 3
      %v2049 = vpop.permute.xlu0 %2048
      %v2050 = vsel %vm1101, %v2047, %v2049
      %2052 = vrot.lane.b32.xlu0 %v2016, 4
      %v2053 = vpop.permute.xlu0 %2052
      %2054 = vrot.lane.b32.xlu0 %v2017, 4
      %v2055 = vpop.permute.xlu0 %2054
      %v2056 = vsel %vm1108, %v2053, %v2055
      %2058 = vrot.lane.b32.xlu0 %v2016, 5
      %v2059 = vpop.permute.xlu0 %2058
      %2060 = vrot.lane.b32.xlu0 %v2017, 5
      %v2061 = vpop.permute.xlu0 %2060
      %v2062 = vsel %vm1115, %v2059, %v2061
      %2064 = vrot.lane.b32.xlu0 %v2016, 6
      %v2065 = vpop.permute.xlu0 %2064
      %2066 = vrot.lane.b32.xlu0 %v2017, 6
      %v2067 = vpop.permute.xlu0 %2066
      %v2068 = vsel %vm1122, %v2065, %v2067
      %2070 = vrot.lane.b32.xlu0 %v2016, 7
      %v2071 = vpop.permute.xlu0 %2070
      %2072 = vrot.lane.b32.xlu0 %v2017, 7
      %v2073 = vpop.permute.xlu0 %2072
      %v2074 = vsel %vm1129, %v2071, %v2073
      %2078 = vrot.lane.b32.xlu0 %v2018, 8
      %v2079 = vpop.permute.xlu0 %2078
      %2080 = vrot.lane.b32.xlu0 %v2019, 8
      %v2081 = vpop.permute.xlu0 %2080
      %v2082 = vsel %vm1138, %v2079, %v2081
      %2084 = vrot.lane.b32.xlu0 %v2018, 9
      %v2085 = vpop.permute.xlu0 %2084
      %2086 = vrot.lane.b32.xlu0 %v2019, 9
      %v2087 = vpop.permute.xlu0 %2086
      %v2088 = vsel %vm1145, %v2085, %v2087
      %2090 = vrot.lane.b32.xlu0 %v2018, 10
      %v2091 = vpop.permute.xlu0 %2090
      %2092 = vrot.lane.b32.xlu0 %v2019, 10
      %v2093 = vpop.permute.xlu0 %2092
      %v2094 = vsel %vm1152, %v2091, %v2093
      %2096 = vrot.lane.b32.xlu0 %v2018, 11
      %v2097 = vpop.permute.xlu0 %2096
      %2098 = vrot.lane.b32.xlu0 %v2019, 11
      %v2099 = vpop.permute.xlu0 %2098
      %v2100 = vsel %vm1159, %v2097, %v2099
      %2102 = vrot.lane.b32.xlu0 %v2018, 12
      %v2103 = vpop.permute.xlu0 %2102
      %2104 = vrot.lane.b32.xlu0 %v2019, 12
      %v2105 = vpop.permute.xlu0 %2104
      %v2106 = vsel %vm1166, %v2103, %v2105
      %2108 = vrot.lane.b32.xlu0 %v2018, 13
      %v2109 = vpop.permute.xlu0 %2108
      %2110 = vrot.lane.b32.xlu0 %v2019, 13
      %v2111 = vpop.permute.xlu0 %2110
      %v2112 = vsel %vm1173, %v2109, %v2111
      %2114 = vrot.lane.b32.xlu0 %v2018, 14
      %v2115 = vpop.permute.xlu0 %2114
      %2116 = vrot.lane.b32.xlu0 %v2019, 14
      %v2117 = vpop.permute.xlu0 %2116
      %v2118 = vsel %vm1180, %v2115, %v2117
      %2120 = vrot.lane.b32.xlu0 %v2018, 15
      %v2121 = vpop.permute.xlu0 %2120
      %2122 = vrot.lane.b32.xlu0 %v2019, 15
      %v2123 = vpop.permute.xlu0 %2122
      %v2124 = vsel %vm1187, %v2121, %v2123
      %v2126 = vsel %vm1190, %v2017, %v2038
      %v2127 = vsel %vm1192, %v2126, %v2044
      %v2128 = vsel %vm1194, %v2127, %v2050
      %v2129 = vsel %vm1196, %v2128, %v2056
      %v2130 = vsel %vm1198, %v2129, %v2062
      %v2131 = vsel %vm1200, %v2130, %v2068
      %v2132 = vsel %vm1202, %v2131, %v2074
      %v2133 = vsel %vm1190, %v2082, %v2088
      %v2134 = vsel %vm1192, %v2133, %v2094
      %v2135 = vsel %vm1194, %v2134, %v2100
      %v2136 = vsel %vm1196, %v2135, %v2106
      %v2137 = vsel %vm1198, %v2136, %v2112
      %v2138 = vsel %vm1200, %v2137, %v2118
      %v2139 = vsel %vm1202, %v2138, %v2124
      %2142 = vrot.lane.b32.xlu0 %v2020, 1
      %v2143 = vpop.permute.xlu0 %2142
      %2144 = vrot.lane.b32.xlu0 %v2021, 1
      %v2145 = vpop.permute.xlu0 %2144
      %v2146 = vsel %vm1087, %v2143, %v2145
      %2149 = vrot.lane.b32.xlu0 %v2020, 2
      %v2150 = vpop.permute.xlu0 %2149
      %2151 = vrot.lane.b32.xlu0 %v2021, 2
      %v2152 = vpop.permute.xlu0 %2151
      %v2153 = vsel %vm1094, %v2150, %v2152
      %2156 = vrot.lane.b32.xlu0 %v2020, 3
      %v2157 = vpop.permute.xlu0 %2156
      %2158 = vrot.lane.b32.xlu0 %v2021, 3
      %v2159 = vpop.permute.xlu0 %2158
      %v2160 = vsel %vm1101, %v2157, %v2159
      %2163 = vrot.lane.b32.xlu0 %v2020, 4
      %v2164 = vpop.permute.xlu0 %2163
      %2165 = vrot.lane.b32.xlu0 %v2021, 4
      %v2166 = vpop.permute.xlu0 %2165
      %v2167 = vsel %vm1108, %v2164, %v2166
      %2170 = vrot.lane.b32.xlu0 %v2020, 5
      %v2171 = vpop.permute.xlu0 %2170
      %2172 = vrot.lane.b32.xlu0 %v2021, 5
      %v2173 = vpop.permute.xlu0 %2172
      %v2174 = vsel %vm1115, %v2171, %v2173
      %2177 = vrot.lane.b32.xlu0 %v2020, 6
      %v2178 = vpop.permute.xlu0 %2177
      %2179 = vrot.lane.b32.xlu0 %v2021, 6
      %v2180 = vpop.permute.xlu0 %2179
      %v2181 = vsel %vm1122, %v2178, %v2180
      %2184 = vrot.lane.b32.xlu0 %v2020, 7
      %v2185 = vpop.permute.xlu0 %2184
      %2186 = vrot.lane.b32.xlu0 %v2021, 7
      %v2187 = vpop.permute.xlu0 %2186
      %v2188 = vsel %vm1129, %v2185, %v2187
      %2193 = vrot.lane.b32.xlu0 %v2022, 8
      %v2194 = vpop.permute.xlu0 %2193
      %2195 = vrot.lane.b32.xlu0 %v2023, 8
      %v2196 = vpop.permute.xlu0 %2195
      %v2197 = vsel %vm1138, %v2194, %v2196
      %2200 = vrot.lane.b32.xlu0 %v2022, 9
      %v2201 = vpop.permute.xlu0 %2200
      %2202 = vrot.lane.b32.xlu0 %v2023, 9
      %v2203 = vpop.permute.xlu0 %2202
      %v2204 = vsel %vm1145, %v2201, %v2203
      %2207 = vrot.lane.b32.xlu0 %v2022, 10
      %v2208 = vpop.permute.xlu0 %2207
      %2209 = vrot.lane.b32.xlu0 %v2023, 10
      %v2210 = vpop.permute.xlu0 %2209
      %v2211 = vsel %vm1152, %v2208, %v2210
      %2214 = vrot.lane.b32.xlu0 %v2022, 11
      %v2215 = vpop.permute.xlu0 %2214
      %2216 = vrot.lane.b32.xlu0 %v2023, 11
      %v2217 = vpop.permute.xlu0 %2216
      %v2218 = vsel %vm1159, %v2215, %v2217
      %2221 = vrot.lane.b32.xlu0 %v2022, 12
      %v2222 = vpop.permute.xlu0 %2221
      %2223 = vrot.lane.b32.xlu0 %v2023, 12
      %v2224 = vpop.permute.xlu0 %2223
      %v2225 = vsel %vm1166, %v2222, %v2224
      %2228 = vrot.lane.b32.xlu0 %v2022, 13
      %v2229 = vpop.permute.xlu0 %2228
      %2230 = vrot.lane.b32.xlu0 %v2023, 13
      %v2231 = vpop.permute.xlu0 %2230
      %v2232 = vsel %vm1173, %v2229, %v2231
      %2235 = vrot.lane.b32.xlu0 %v2022, 14
      %v2236 = vpop.permute.xlu0 %2235
      %2237 = vrot.lane.b32.xlu0 %v2023, 14
      %v2238 = vpop.permute.xlu0 %2237
      %v2239 = vsel %vm1180, %v2236, %v2238
      %2242 = vrot.lane.b32.xlu0 %v2022, 15
      %v2243 = vpop.permute.xlu0 %2242
      %2244 = vrot.lane.b32.xlu0 %v2023, 15
      %v2245 = vpop.permute.xlu0 %2244
      %v2246 = vsel %vm1187, %v2243, %v2245
      %v2249 = vsel %vm1190, %v2020, %v2143
      %v2250 = vsel %vm1190, %v2021, %v2146
      %v2251 = vsel %vm1192, %v2249, %v2150
      %v2252 = vsel %vm1192, %v2250, %v2153
      %v2253 = vsel %vm1194, %v2251, %v2157
      %v2254 = vsel %vm1194, %v2252, %v2160
      %v2255 = vsel %vm1196, %v2253, %v2164
      %v2256 = vsel %vm1196, %v2254, %v2167
      %v2257 = vsel %vm1198, %v2255, %v2171
      %v2258 = vsel %vm1198, %v2256, %v2174
      %v2259 = vsel %vm1200, %v2257, %v2178
      %v2260 = vsel %vm1200, %v2258, %v2181
      %v2261 = vsel %vm1202, %v2259, %v2185
      %v2262 = vsel %vm1202, %v2260, %v2188
      %v2263 = vsel %vm1190, %v2194, %v2201
      %v2264 = vsel %vm1190, %v2197, %v2204
      %v2265 = vsel %vm1192, %v2263, %v2208
      %v2266 = vsel %vm1192, %v2264, %v2211
      %v2267 = vsel %vm1194, %v2265, %v2215
      %v2268 = vsel %vm1194, %v2266, %v2218
      %v2269 = vsel %vm1196, %v2267, %v2222
      %v2270 = vsel %vm1196, %v2268, %v2225
      %v2271 = vsel %vm1198, %v2269, %v2229
      %v2272 = vsel %vm1198, %v2270, %v2232
      %v2273 = vsel %vm1200, %v2271, %v2236
      %v2274 = vsel %vm1200, %v2272, %v2239
      %v2275 = vsel %vm1202, %v2273, %v2243
      %v2276 = vsel %vm1202, %v2274, %v2246
      %2279 = vrot.lane.b32.xlu0 %v2024, 1
      %v2280 = vpop.permute.xlu0 %2279
      %2281 = vrot.lane.b32.xlu0 %v2025, 1
      %v2282 = vpop.permute.xlu0 %2281
      %v2283 = vsel %vm1087, %v2280, %v2282
      %2286 = vrot.lane.b32.xlu0 %v2024, 2
      %v2287 = vpop.permute.xlu0 %2286
      %2288 = vrot.lane.b32.xlu0 %v2025, 2
      %v2289 = vpop.permute.xlu0 %2288
      %v2290 = vsel %vm1094, %v2287, %v2289
      %2293 = vrot.lane.b32.xlu0 %v2024, 3
      %v2294 = vpop.permute.xlu0 %2293
      %2295 = vrot.lane.b32.xlu0 %v2025, 3
      %v2296 = vpop.permute.xlu0 %2295
      %v2297 = vsel %vm1101, %v2294, %v2296
      %2300 = vrot.lane.b32.xlu0 %v2024, 4
      %v2301 = vpop.permute.xlu0 %2300
      %2302 = vrot.lane.b32.xlu0 %v2025, 4
      %v2303 = vpop.permute.xlu0 %2302
      %v2304 = vsel %vm1108, %v2301, %v2303
      %2307 = vrot.lane.b32.xlu0 %v2024, 5
      %v2308 = vpop.permute.xlu0 %2307
      %2309 = vrot.lane.b32.xlu0 %v2025, 5
      %v2310 = vpop.permute.xlu0 %2309
      %v2311 = vsel %vm1115, %v2308, %v2310
      %2314 = vrot.lane.b32.xlu0 %v2024, 6
      %v2315 = vpop.permute.xlu0 %2314
      %2316 = vrot.lane.b32.xlu0 %v2025, 6
      %v2317 = vpop.permute.xlu0 %2316
      %v2318 = vsel %vm1122, %v2315, %v2317
      %2321 = vrot.lane.b32.xlu0 %v2024, 7
      %v2322 = vpop.permute.xlu0 %2321
      %2323 = vrot.lane.b32.xlu0 %v2025, 7
      %v2324 = vpop.permute.xlu0 %2323
      %v2325 = vsel %vm1129, %v2322, %v2324
      %2330 = vrot.lane.b32.xlu0 %v2026, 8
      %v2331 = vpop.permute.xlu0 %2330
      %2332 = vrot.lane.b32.xlu0 %v2027, 8
      %v2333 = vpop.permute.xlu0 %2332
      %v2334 = vsel %vm1138, %v2331, %v2333
      %2337 = vrot.lane.b32.xlu0 %v2026, 9
      %v2338 = vpop.permute.xlu0 %2337
      %2339 = vrot.lane.b32.xlu0 %v2027, 9
      %v2340 = vpop.permute.xlu0 %2339
      %v2341 = vsel %vm1145, %v2338, %v2340
      %2344 = vrot.lane.b32.xlu0 %v2026, 10
      %v2345 = vpop.permute.xlu0 %2344
      %2346 = vrot.lane.b32.xlu0 %v2027, 10
      %v2347 = vpop.permute.xlu0 %2346
      %v2348 = vsel %vm1152, %v2345, %v2347
      %2351 = vrot.lane.b32.xlu0 %v2026, 11
      %v2352 = vpop.permute.xlu0 %2351
      %2353 = vrot.lane.b32.xlu0 %v2027, 11
      %v2354 = vpop.permute.xlu0 %2353
      %v2355 = vsel %vm1159, %v2352, %v2354
      %2358 = vrot.lane.b32.xlu0 %v2026, 12
      %v2359 = vpop.permute.xlu0 %2358
      %2360 = vrot.lane.b32.xlu0 %v2027, 12
      %v2361 = vpop.permute.xlu0 %2360
      %v2362 = vsel %vm1166, %v2359, %v2361
      %2365 = vrot.lane.b32.xlu0 %v2026, 13
      %v2366 = vpop.permute.xlu0 %2365
      %2367 = vrot.lane.b32.xlu0 %v2027, 13
      %v2368 = vpop.permute.xlu0 %2367
      %v2369 = vsel %vm1173, %v2366, %v2368
      %2372 = vrot.lane.b32.xlu0 %v2026, 14
      %v2373 = vpop.permute.xlu0 %2372
      %2374 = vrot.lane.b32.xlu0 %v2027, 14
      %v2375 = vpop.permute.xlu0 %2374
      %v2376 = vsel %vm1180, %v2373, %v2375
      %2379 = vrot.lane.b32.xlu0 %v2026, 15
      %v2380 = vpop.permute.xlu0 %2379
      %2381 = vrot.lane.b32.xlu0 %v2027, 15
      %v2382 = vpop.permute.xlu0 %2381
      %v2383 = vsel %vm1187, %v2380, %v2382
      %v2386 = vsel %vm1190, %v2024, %v2280
      %v2387 = vsel %vm1190, %v2025, %v2283
      %v2388 = vsel %vm1192, %v2386, %v2287
      %v2389 = vsel %vm1192, %v2387, %v2290
      %v2390 = vsel %vm1194, %v2388, %v2294
      %v2391 = vsel %vm1194, %v2389, %v2297
      %v2392 = vsel %vm1196, %v2390, %v2301
      %v2393 = vsel %vm1196, %v2391, %v2304
      %v2394 = vsel %vm1198, %v2392, %v2308
      %v2395 = vsel %vm1198, %v2393, %v2311
      %v2396 = vsel %vm1200, %v2394, %v2315
      %v2397 = vsel %vm1200, %v2395, %v2318
      %v2398 = vsel %vm1202, %v2396, %v2322
      %v2399 = vsel %vm1202, %v2397, %v2325
      %v2400 = vsel %vm1190, %v2331, %v2338
      %v2401 = vsel %vm1190, %v2334, %v2341
      %v2402 = vsel %vm1192, %v2400, %v2345
      %v2403 = vsel %vm1192, %v2401, %v2348
      %v2404 = vsel %vm1194, %v2402, %v2352
      %v2405 = vsel %vm1194, %v2403, %v2355
      %v2406 = vsel %vm1196, %v2404, %v2359
      %v2407 = vsel %vm1196, %v2405, %v2362
      %v2408 = vsel %vm1198, %v2406, %v2366
      %v2409 = vsel %vm1198, %v2407, %v2369
      %v2410 = vsel %vm1200, %v2408, %v2373
      %v2411 = vsel %vm1200, %v2409, %v2376
      %v2412 = vsel %vm1202, %v2410, %v2380
      %v2413 = vsel %vm1202, %v2411, %v2383
      %2416 = vrot.lane.b32.xlu0 %v2028, 1
      %v2417 = vpop.permute.xlu0 %2416
      %2418 = vrot.lane.b32.xlu0 %v2029, 1
      %v2419 = vpop.permute.xlu0 %2418
      %v2420 = vsel %vm1087, %v2417, %v2419
      %2423 = vrot.lane.b32.xlu0 %v2028, 2
      %v2424 = vpop.permute.xlu0 %2423
      %2425 = vrot.lane.b32.xlu0 %v2029, 2
      %v2426 = vpop.permute.xlu0 %2425
      %v2427 = vsel %vm1094, %v2424, %v2426
      %2430 = vrot.lane.b32.xlu0 %v2028, 3
      %v2431 = vpop.permute.xlu0 %2430
      %2432 = vrot.lane.b32.xlu0 %v2029, 3
      %v2433 = vpop.permute.xlu0 %2432
      %v2434 = vsel %vm1101, %v2431, %v2433
      %2437 = vrot.lane.b32.xlu0 %v2028, 4
      %v2438 = vpop.permute.xlu0 %2437
      %2439 = vrot.lane.b32.xlu0 %v2029, 4
      %v2440 = vpop.permute.xlu0 %2439
      %v2441 = vsel %vm1108, %v2438, %v2440
      %2444 = vrot.lane.b32.xlu0 %v2028, 5
      %v2445 = vpop.permute.xlu0 %2444
      %2446 = vrot.lane.b32.xlu0 %v2029, 5
      %v2447 = vpop.permute.xlu0 %2446
      %v2448 = vsel %vm1115, %v2445, %v2447
      %2451 = vrot.lane.b32.xlu0 %v2028, 6
      %v2452 = vpop.permute.xlu0 %2451
      %2453 = vrot.lane.b32.xlu0 %v2029, 6
      %v2454 = vpop.permute.xlu0 %2453
      %v2455 = vsel %vm1122, %v2452, %v2454
      %2458 = vrot.lane.b32.xlu0 %v2028, 7
      %v2459 = vpop.permute.xlu0 %2458
      %2460 = vrot.lane.b32.xlu0 %v2029, 7
      %v2461 = vpop.permute.xlu0 %2460
      %v2462 = vsel %vm1129, %v2459, %v2461
      %2467 = vrot.lane.b32.xlu0 %v2030, 8
      %v2468 = vpop.permute.xlu0 %2467
      %2469 = vrot.lane.b32.xlu0 %v2031, 8
      %v2470 = vpop.permute.xlu0 %2469
      %v2471 = vsel %vm1138, %v2468, %v2470
      %2474 = vrot.lane.b32.xlu0 %v2030, 9
      %v2475 = vpop.permute.xlu0 %2474
      %2476 = vrot.lane.b32.xlu0 %v2031, 9
      %v2477 = vpop.permute.xlu0 %2476
      %v2478 = vsel %vm1145, %v2475, %v2477
      %2481 = vrot.lane.b32.xlu0 %v2030, 10
      %v2482 = vpop.permute.xlu0 %2481
      %2483 = vrot.lane.b32.xlu0 %v2031, 10
      %v2484 = vpop.permute.xlu0 %2483
      %v2485 = vsel %vm1152, %v2482, %v2484
      %2488 = vrot.lane.b32.xlu0 %v2030, 11
      %v2489 = vpop.permute.xlu0 %2488
      %2490 = vrot.lane.b32.xlu0 %v2031, 11
      %v2491 = vpop.permute.xlu0 %2490
      %v2492 = vsel %vm1159, %v2489, %v2491
      %2495 = vrot.lane.b32.xlu0 %v2030, 12
      %v2496 = vpop.permute.xlu0 %2495
      %2497 = vrot.lane.b32.xlu0 %v2031, 12
      %v2498 = vpop.permute.xlu0 %2497
      %v2499 = vsel %vm1166, %v2496, %v2498
      %2502 = vrot.lane.b32.xlu0 %v2030, 13
      %v2503 = vpop.permute.xlu0 %2502
      %2504 = vrot.lane.b32.xlu0 %v2031, 13
      %v2505 = vpop.permute.xlu0 %2504
      %v2506 = vsel %vm1173, %v2503, %v2505
      %2509 = vrot.lane.b32.xlu0 %v2030, 14
      %v2510 = vpop.permute.xlu0 %2509
      %2511 = vrot.lane.b32.xlu0 %v2031, 14
      %v2512 = vpop.permute.xlu0 %2511
      %v2513 = vsel %vm1180, %v2510, %v2512
      %2516 = vrot.lane.b32.xlu0 %v2030, 15
      %v2517 = vpop.permute.xlu0 %2516
      %2518 = vrot.lane.b32.xlu0 %v2031, 15
      %v2519 = vpop.permute.xlu0 %2518
      %v2520 = vsel %vm1187, %v2517, %v2519
      %v2523 = vsel %vm1190, %v2028, %v2417
      %v2524 = vsel %vm1190, %v2029, %v2420
      %v2525 = vsel %vm1192, %v2523, %v2424
      %v2526 = vsel %vm1192, %v2524, %v2427
      %v2527 = vsel %vm1194, %v2525, %v2431
      %v2528 = vsel %vm1194, %v2526, %v2434
      %v2529 = vsel %vm1196, %v2527, %v2438
      %v2530 = vsel %vm1196, %v2528, %v2441
      %v2531 = vsel %vm1198, %v2529, %v2445
      %v2532 = vsel %vm1198, %v2530, %v2448
      %v2533 = vsel %vm1200, %v2531, %v2452
      %v2534 = vsel %vm1200, %v2532, %v2455
      %v2535 = vsel %vm1202, %v2533, %v2459
      %v2536 = vsel %vm1202, %v2534, %v2462
      %v2537 = vsel %vm1190, %v2468, %v2475
      %v2538 = vsel %vm1190, %v2471, %v2478
      %v2539 = vsel %vm1192, %v2537, %v2482
      %v2540 = vsel %vm1192, %v2538, %v2485
      %v2541 = vsel %vm1194, %v2539, %v2489
      %v2542 = vsel %vm1194, %v2540, %v2492
      %v2543 = vsel %vm1196, %v2541, %v2496
      %v2544 = vsel %vm1196, %v2542, %v2499
      %v2545 = vsel %vm1198, %v2543, %v2503
      %v2546 = vsel %vm1198, %v2544, %v2506
      %v2547 = vsel %vm1200, %v2545, %v2510
      %v2548 = vsel %vm1200, %v2546, %v2513
      %v2549 = vsel %vm1202, %v2547, %v2517
      %v2550 = vsel %vm1202, %v2548, %v2520
      %2555 = vrot.lane.b32.xlu0 %v2261, 16
      %v2556 = vpop.permute.xlu0 %2555
      %2557 = vrot.lane.b32.xlu0 %v2262, 16
      %v2558 = vpop.permute.xlu0 %2557
      %2559 = vrot.lane.b32.xlu0 %v2275, 16
      %v2560 = vpop.permute.xlu0 %2559
      %2561 = vrot.lane.b32.xlu0 %v2276, 16
      %v2562 = vpop.permute.xlu0 %2561
      %v2563 = vsel %vm1634, %v2556, %v2558
      %v2564 = vsel %vm1634, %v2560, %v2562
      %2571 = vrot.lane.b32.xlu0 %v2398, 32
      %v2572 = vpop.permute.xlu0 %2571
      %2573 = vrot.lane.b32.xlu0 %v2399, 32
      %v2574 = vpop.permute.xlu0 %2573
      %2575 = vrot.lane.b32.xlu0 %v2412, 32
      %v2576 = vpop.permute.xlu0 %2575
      %2577 = vrot.lane.b32.xlu0 %v2413, 32
      %v2578 = vpop.permute.xlu0 %2577
      %v2579 = vsel %vm943, %v2572, %v2574
      %v2580 = vsel %vm943, %v2576, %v2578
      %2587 = vrot.lane.b32.xlu0 %v2535, 48
      %v2588 = vpop.permute.xlu0 %2587
      %2589 = vrot.lane.b32.xlu0 %v2536, 48
      %v2590 = vpop.permute.xlu0 %2589
      %2591 = vrot.lane.b32.xlu0 %v2549, 48
      %v2592 = vpop.permute.xlu0 %2591
      %2593 = vrot.lane.b32.xlu0 %v2550, 48
      %v2594 = vpop.permute.xlu0 %2593
      %v2595 = vsel %vm1667, %v2588, %v2590
      %v2596 = vsel %vm1667, %v2592, %v2594
      %v2599 = vadd.f32 %v2002, %v2132
      %v2600 = vadd.f32 %v2003, %v2139
      %v2601 = vadd.f32 %v2004, %v2563
      %v2602 = vadd.f32 %v2005, %v2564
      %v2603 = vadd.f32 %v2006, %v2579
      %v2604 = vadd.f32 %v2007, %v2580
      %v2605 = vadd.f32 %v2008, %v2595
      %v2606 = vadd.f32 %v2009, %v2596
      %v2607 = vsub.f32 %v2599, %v867
      %v2608 = vsub.f32 %v2600, %v868
      %v2609 = vsub.f32 %v2601, %v869
      %v2610 = vsub.f32 %v2602, %v870
      %v2611 = vsub.f32 %v2603, %v871
      %v2612 = vsub.f32 %v2604, %v872
      %v2613 = vsub.f32 %v2605, %v873
      %v2614 = vsub.f32 %v2606, %v874
      %v2615 = vsel %vm1688, %v2607, -inf
      %2616 = vmax.xlane.f32.xlu0 %v2615
      %v2617 = vpop.xlane.xlu0 %2616
      %v2618 = vsel %vm1688, %v2608, -inf
      %2619 = vmax.xlane.f32.xlu0 %v2618
      %v2620 = vpop.xlane.xlu0 %2619
      %v2621 = vsel %vm1688, %v2609, -inf
      %2622 = vmax.xlane.f32.xlu0 %v2621
      %v2623 = vpop.xlane.xlu0 %2622
      %v2624 = vsel %vm1688, %v2610, -inf
      %2625 = vmax.xlane.f32.xlu0 %v2624
      %v2626 = vpop.xlane.xlu0 %2625
      %v2627 = vsel %vm1688, %v2611, -inf
      %2628 = vmax.xlane.f32.xlu0 %v2627
      %v2629 = vpop.xlane.xlu0 %2628
      %v2630 = vsel %vm1688, %v2612, -inf
      %2631 = vmax.xlane.f32.xlu0 %v2630
      %v2632 = vpop.xlane.xlu0 %2631
      %v2633 = vsel %vm1688, %v2613, -inf
      %2634 = vmax.xlane.f32.xlu0 %v2633
      %v2635 = vpop.xlane.xlu0 %2634
      %v2636 = vsel %vm1688, %v2614, -inf
      %2637 = vmax.xlane.f32.xlu0 %v2636
      %v2638 = vpop.xlane.xlu0 %2637
      %v2639 = vsub.f32 %v2607, %v2617
      %v2640 = vsub.f32 %v2608, %v2620
      %v2641 = vsub.f32 %v2609, %v2623
      %v2642 = vsub.f32 %v2610, %v2626
      %v2643 = vsub.f32 %v2611, %v2629
      %v2644 = vsub.f32 %v2612, %v2632
      %v2645 = vsub.f32 %v2613, %v2635
      %v2646 = vsub.f32 %v2614, %v2638
      %v2647 = vmul.f32 %v2639, 1.442695
      %v2648 = vpow.pop %v2647
      %v2649 = vmul.f32 %v2640, 1.442695
      %v2650 = vpow.pop %v2649
      %v2651 = vmul.f32 %v2641, 1.442695
      %v2652 = vpow.pop %v2651
      %v2653 = vmul.f32 %v2642, 1.442695
      %v2654 = vpow.pop %v2653
      %v2655 = vmul.f32 %v2643, 1.442695
      %v2656 = vpow.pop %v2655
      %v2657 = vmul.f32 %v2644, 1.442695
      %v2658 = vpow.pop %v2657
      %v2659 = vmul.f32 %v2645, 1.442695
      %v2660 = vpow.pop %v2659
      %v2661 = vmul.f32 %v2646, 1.442695
      %v2662 = vpow.pop %v2661
      %v2663 = vsel %vm1688, %v2648, 0.0
      %2664 = vadd.xlane.f32.xlu0 %v2663
      %v2665 = vpop.xlane.xlu0 %2664
      %v2666 = vsel %vm1688, %v2650, 0.0
      %2667 = vadd.xlane.f32.xlu0 %v2666
      %v2668 = vpop.xlane.xlu0 %2667
      %v2669 = vsel %vm1688, %v2652, 0.0
      %2670 = vadd.xlane.f32.xlu0 %v2669
      %v2671 = vpop.xlane.xlu0 %2670
      %v2672 = vsel %vm1688, %v2654, 0.0
      %2673 = vadd.xlane.f32.xlu0 %v2672
      %v2674 = vpop.xlane.xlu0 %2673
      %v2675 = vsel %vm1688, %v2656, 0.0
      %2676 = vadd.xlane.f32.xlu0 %v2675
      %v2677 = vpop.xlane.xlu0 %2676
      %v2678 = vsel %vm1688, %v2658, 0.0
      %2679 = vadd.xlane.f32.xlu0 %v2678
      %v2680 = vpop.xlane.xlu0 %2679
      %v2681 = vsel %vm1688, %v2660, 0.0
      %2682 = vadd.xlane.f32.xlu0 %v2681
      %v2683 = vpop.xlane.xlu0 %2682
      %v2684 = vsel %vm1688, %v2662, 0.0
      %2685 = vadd.xlane.f32.xlu0 %v2684
      %v2686 = vpop.xlane.xlu0 %2685
      %v2687 = vrcp.pop %v2665
      %v2688 = vrcp.pop %v2668
      %v2689 = vrcp.pop %v2671
      %v2690 = vrcp.pop %v2674
      %v2691 = vrcp.pop %v2677
      %v2692 = vrcp.pop %v2680
      %v2693 = vrcp.pop %v2683
      %v2694 = vrcp.pop %v2686
      %v2695 = vmul.f32 %v2648, %v2687
      %v2696 = vmul.f32 %v2650, %v2688
      %v2697 = vmul.f32 %v2652, %v2689
      %v2698 = vmul.f32 %v2654, %v2690
      %v2699 = vmul.f32 %v2656, %v2691
      %v2700 = vmul.f32 %v2658, %v2692
      %v2701 = vmul.f32 %v2660, %v2693
      %v2702 = vmul.f32 %v2662, %v2694
      %v2703 = vpack.c.bf16 %v2696, %v2695
      %v2704 = vpack.c.bf16 %v2698, %v2697
      %v2705 = vpack.c.bf16 %v2700, %v2699
      %v2706 = vpack.c.bf16 %v2702, %v2701
      %2707 = vrot.lane.b32.xlu0 %v1797, 96
      %v2708 = vpop.permute.xlu0 %2707
      %2709 = vrot.lane.b32.xlu0 %v1798, 96
      %v2710 = vpop.permute.xlu0 %2709
      %2711 = vrot.lane.b32.xlu0 %v1799, 96
      %v2712 = vpop.permute.xlu0 %2711
      %2713 = vrot.lane.b32.xlu0 %v1800, 96
      %v2714 = vpop.permute.xlu0 %2713
      %v2720 = vsel %vm1688, %v2703, 0
      %v2723 = vsel %vm1688, %v2704, 0
      %v2726 = vsel %vm1688, %v2705, 0
      %v2729 = vsel %vm1688, %v2706, 0
      %2731 = vmatpush.bf16.msra.mxu0 0
      %2732 = vmatpush.bf16.msra.mxu0 0
      %2733 = vmatpush.bf16.msra.mxu0 0
      %2734 = vmatpush.bf16.msra.mxu0 0
      %2735 = vmatpush.bf16.msra.mxu0 %v2714
      %2736 = vmatpush.bf16.msra.mxu0 %v2712
      %2737 = vmatpush.bf16.msra.mxu0 %v2710
      %2738 = vmatpush.bf16.msra.mxu0 %v2708
      %2739 = vmatmul.bf16.gmra.mxu0 %v2720
      %v2740 = vpop.f32.mrf.mxu0
      %v2741 = vadd.f32 0.0, %v2740
      %v2742 = vpop.f32.mrf.mxu0
      %v2743 = vadd.f32 0.0, %v2742
      %2744 = vmatmul.bf16.gmra.mxu0 %v2723
      %v2745 = vpop.f32.mrf.mxu0
      %v2746 = vadd.f32 0.0, %v2745
      %v2747 = vpop.f32.mrf.mxu0
      %v2748 = vadd.f32 0.0, %v2747
      %2749 = vmatmul.bf16.gmra.mxu0 %v2726
      %v2750 = vpop.f32.mrf.mxu0
      %v2751 = vadd.f32 0.0, %v2750
      %v2752 = vpop.f32.mrf.mxu0
      %v2753 = vadd.f32 0.0, %v2752
      %2754 = vmatmul.bf16.gmra.mxu0 %v2729
      %v2755 = vpop.f32.mrf.mxu0
      %v2756 = vadd.f32 0.0, %v2755
      %v2757 = vpop.f32.mrf.mxu0
      %v2758 = vadd.f32 0.0, %v2757
      %2759 = vdwg.mxu0
      %v2760 = vpack.c.bf16 %v2741, %v2741
      %v2761 = vpack.c.bf16 %v2743, %v2743
      %v2762 = vpack.c.bf16 %v2746, %v2746
      %v2763 = vpack.c.bf16 %v2748, %v2748
      %v2764 = vpack.c.bf16 %v2751, %v2751
      %v2765 = vpack.c.bf16 %v2753, %v2753
      %v2766 = vpack.c.bf16 %v2756, %v2756
      %v2767 = vpack.c.bf16 %v2758, %v2758
      %2776 = vrot.lane.b32.xlu0 %v2760, 32
      %v2777 = vpop.permute.xlu0 %2776
      %2778 = vrot.lane.b32.xlu0 %v2761, 32
      %v2779 = vpop.permute.xlu0 %2778
      %2780 = vrot.lane.b32.xlu0 %v2762, 32
      %v2781 = vpop.permute.xlu0 %2780
      %2782 = vrot.lane.b32.xlu0 %v2763, 32
      %v2783 = vpop.permute.xlu0 %2782
      %2784 = vrot.lane.b32.xlu0 %v2764, 32
      %v2785 = vpop.permute.xlu0 %2784
      %2786 = vrot.lane.b32.xlu0 %v2765, 32
      %v2787 = vpop.permute.xlu0 %2786
      %2788 = vrot.lane.b32.xlu0 %v2766, 32
      %v2789 = vpop.permute.xlu0 %2788
      %2790 = vrot.lane.b32.xlu0 %v2767, 32
      %v2791 = vpop.permute.xlu0 %2790
      %vm2800 = vcmask 519424
      %2801 = vst.msk [vmem:[#allocation2] sm:$0xf] %vm2800, %v2777
      %2802 = vst.msk [vmem:[#allocation2 + $0x4] sm:$0xf] %vm2800, %v2779
      %2803 = vst.msk [vmem:[#allocation2 + $0x8] sm:$0xf] %vm2800, %v2781
      %2804 = vst.msk [vmem:[#allocation2 + $0xc] sm:$0xf] %vm2800, %v2783
      %2805 = vst.msk [vmem:[#allocation2 + $0x10] sm:$0xf] %vm2800, %v2785
      %2806 = vst.msk [vmem:[#allocation2 + $0x14] sm:$0xf] %vm2800, %v2787
      %2807 = vst.msk [vmem:[#allocation2 + $0x18] sm:$0xf] %vm2800, %v2789
      %2808 = vst.msk [vmem:[#allocation2 + $0x1c] sm:$0xf] %vm2800, %v2791
      %2809 = vrot.lane.b32.xlu0 %v822, 64
      %v2810 = vpop.permute.xlu0 %2809
      %2811 = vrot.lane.b32.xlu0 %v823, 64
      %v2812 = vpop.permute.xlu0 %2811
      %2813 = vrot.lane.b32.xlu0 %v824, 64
      %v2814 = vpop.permute.xlu0 %2813
      %2815 = vrot.lane.b32.xlu0 %v825, 64
      %v2816 = vpop.permute.xlu0 %2815
      %2817 = vrot.lane.b32.xlu0 %v923, 64
      %v2818 = vpop.permute.xlu0 %2817
      %2819 = vrot.lane.b32.xlu0 %v924, 64
      %v2820 = vpop.permute.xlu0 %2819
      %2821 = vrot.lane.b32.xlu0 %v925, 64
      %v2822 = vpop.permute.xlu0 %2821
      %2823 = vrot.lane.b32.xlu0 %v926, 64
      %v2824 = vpop.permute.xlu0 %2823
      %2825 = vrot.lane.b32.xlu0 %v927, 64
      %v2826 = vpop.permute.xlu0 %2825
      %2827 = vrot.lane.b32.xlu0 %v928, 64
      %v2828 = vpop.permute.xlu0 %2827
      %2829 = vrot.lane.b32.xlu0 %v929, 64
      %v2830 = vpop.permute.xlu0 %2829
      %2831 = vrot.lane.b32.xlu0 %v930, 64
      %v2832 = vpop.permute.xlu0 %2831
      %2833 = vrot.lane.b32.xlu0 %v939, 64
      %v2834 = vpop.permute.xlu0 %2833
      %2835 = vrot.lane.b32.xlu0 %v940, 64
      %v2836 = vpop.permute.xlu0 %2835
      %2837 = vrot.lane.b32.xlu0 %v941, 64
      %v2838 = vpop.permute.xlu0 %2837
      %2839 = vrot.lane.b32.xlu0 %v942, 64
      %v2840 = vpop.permute.xlu0 %2839
      %v2842 = vsel %vm943, %v2834, 0
      %v2845 = vsel %vm943, %v2836, 0
      %v2848 = vsel %vm943, %v2838, 0
      %v2851 = vsel %vm943, %v2840, 0
      %v2854 = vsel %vm943, %v2810, 0
      %v2857 = vsel %vm943, %v2812, 0
      %v2860 = vsel %vm943, %v2814, 0
      %v2863 = vsel %vm943, %v2816, 0
      %v2866 = vsel %vm943, %v2818, 0
      %v2869 = vsel %vm943, %v2820, 0
      %v2872 = vsel %vm943, %v2822, 0
      %v2875 = vsel %vm943, %v2824, 0
      %v2878 = vsel %vm943, %v2826, 0
      %v2881 = vsel %vm943, %v2828, 0
      %v2884 = vsel %vm943, %v2830, 0
      %v2887 = vsel %vm943, %v2832, 0
      %2889 = vmatpush.bf16.xpose.msra.mxu0 %v2875
      %2890 = vmatpush.bf16.xpose.msra.mxu0 %v2872
      %2891 = vmatpush.bf16.xpose.msra.mxu0 %v2869
      %2892 = vmatpush.bf16.xpose.msra.mxu0 %v2866
      %2893 = vmatpush.bf16.xpose.msra.mxu0 %v2863
      %2894 = vmatpush.bf16.xpose.msra.mxu0 %v2860
      %2895 = vmatpush.bf16.xpose.msra.mxu0 %v2857
      %2896 = vmatpush.bf16.xpose.msra.mxu0 %v2854
      %2897 = vmatmul.bf16.gmra.mxu0 %v2842
      %v2898 = vpop.f32.mrf.mxu0
      %v2899 = vadd.f32 0.0, %v2898
      %v2900 = vpop.f32.mrf.mxu0
      %v2901 = vadd.f32 0.0, %v2900
      %2902 = vmatmul.bf16.gmra.mxu0 %v2845
      %v2903 = vpop.f32.mrf.mxu0
      %v2904 = vadd.f32 0.0, %v2903
      %v2905 = vpop.f32.mrf.mxu0
      %v2906 = vadd.f32 0.0, %v2905
      %2907 = vmatmul.bf16.gmra.mxu0 %v2848
      %v2908 = vpop.f32.mrf.mxu0
      %v2909 = vadd.f32 0.0, %v2908
      %v2910 = vpop.f32.mrf.mxu0
      %v2911 = vadd.f32 0.0, %v2910
      %2912 = vmatmul.bf16.gmra.mxu0 %v2851
      %v2913 = vpop.f32.mrf.mxu0
      %v2914 = vadd.f32 0.0, %v2913
      %v2915 = vpop.f32.mrf.mxu0
      %v2916 = vadd.f32 0.0, %v2915
      %2917 = vdwg.mxu0
      %2918 = vmatpush.bf16.xpose.msra.mxu0 0
      %2919 = vmatpush.bf16.xpose.msra.mxu0 0
      %2920 = vmatpush.bf16.xpose.msra.mxu0 0
      %2921 = vmatpush.bf16.xpose.msra.mxu0 0
      %2922 = vmatpush.bf16.xpose.msra.mxu0 %v2887
      %2923 = vmatpush.bf16.xpose.msra.mxu0 %v2884
      %2924 = vmatpush.bf16.xpose.msra.mxu0 %v2881
      %2925 = vmatpush.bf16.xpose.msra.mxu0 %v2878
      %2926 = vmatmul.bf16.gmra.mxu0 %v2842
      %v2927 = vpop.f32.mrf.mxu0
      %v2928 = vadd.f32 0.0, %v2927
      %v2929 = vpop.f32.mrf.mxu0
      %v2930 = vadd.f32 0.0, %v2929
      %2931 = vmatmul.bf16.gmra.mxu0 %v2845
      %v2932 = vpop.f32.mrf.mxu0
      %v2933 = vadd.f32 0.0, %v2932
      %v2934 = vpop.f32.mrf.mxu0
      %v2935 = vadd.f32 0.0, %v2934
      %2936 = vmatmul.bf16.gmra.mxu0 %v2848
      %v2937 = vpop.f32.mrf.mxu0
      %v2938 = vadd.f32 0.0, %v2937
      %v2939 = vpop.f32.mrf.mxu0
      %v2940 = vadd.f32 0.0, %v2939
      %2941 = vmatmul.bf16.gmra.mxu0 %v2851
      %v2942 = vpop.f32.mrf.mxu0
      %v2943 = vadd.f32 0.0, %v2942
      %v2944 = vpop.f32.mrf.mxu0
      %v2945 = vadd.f32 0.0, %v2944
      %2946 = vdwg.mxu0
      %v2947 = vperm.slane %v840, 2
      %v2948 = vadd.f32 %v2899, %v2947
      %v2949 = vadd.f32 %v2901, %v2947
      %v2950 = vadd.f32 %v2904, %v2947
      %v2951 = vadd.f32 %v2906, %v2947
      %v2952 = vadd.f32 %v2909, %v2947
      %v2953 = vadd.f32 %v2911, %v2947
      %v2954 = vadd.f32 %v2914, %v2947
      %v2955 = vadd.f32 %v2916, %v2947
      %v2956 = vld [vmem:[%s5 + $0x2] sm:$0x1]
      %v2957 = vperm.slane %v2956, 0
      %2959 = vrot.lane.b32.xlu0 %v2957, 64
      %v2960 = vpop.permute.xlu0 %2959
      %v2962 = vadd.f32 %v2899, %v2960
      %v2963 = vadd.f32 %v2928, %v2960
      %v2964 = vadd.f32 %v2901, %v2960
      %v2965 = vadd.f32 %v2930, %v2960
      %v2966 = vadd.f32 %v2904, %v2960
      %v2967 = vadd.f32 %v2933, %v2960
      %v2968 = vadd.f32 %v2906, %v2960
      %v2969 = vadd.f32 %v2935, %v2960
      %v2970 = vadd.f32 %v2909, %v2960
      %v2971 = vadd.f32 %v2938, %v2960
      %v2972 = vadd.f32 %v2911, %v2960
      %v2973 = vadd.f32 %v2940, %v2960
      %v2974 = vadd.f32 %v2914, %v2960
      %v2975 = vadd.f32 %v2943, %v2960
      %v2976 = vadd.f32 %v2916, %v2960
      %v2977 = vadd.f32 %v2945, %v2960
      %2980 = vrot.lane.b32.xlu0 %v2962, 1
      %v2981 = vpop.permute.xlu0 %2980
      %2982 = vrot.lane.b32.xlu0 %v2963, 1
      %v2983 = vpop.permute.xlu0 %2982
      %v2984 = vsel %vm1087, %v2981, %v2983
      %2986 = vrot.lane.b32.xlu0 %v2962, 2
      %v2987 = vpop.permute.xlu0 %2986
      %2988 = vrot.lane.b32.xlu0 %v2963, 2
      %v2989 = vpop.permute.xlu0 %2988
      %v2990 = vsel %vm1094, %v2987, %v2989
      %2992 = vrot.lane.b32.xlu0 %v2962, 3
      %v2993 = vpop.permute.xlu0 %2992
      %2994 = vrot.lane.b32.xlu0 %v2963, 3
      %v2995 = vpop.permute.xlu0 %2994
      %v2996 = vsel %vm1101, %v2993, %v2995
      %2998 = vrot.lane.b32.xlu0 %v2962, 4
      %v2999 = vpop.permute.xlu0 %2998
      %3000 = vrot.lane.b32.xlu0 %v2963, 4
      %v3001 = vpop.permute.xlu0 %3000
      %v3002 = vsel %vm1108, %v2999, %v3001
      %3004 = vrot.lane.b32.xlu0 %v2962, 5
      %v3005 = vpop.permute.xlu0 %3004
      %3006 = vrot.lane.b32.xlu0 %v2963, 5
      %v3007 = vpop.permute.xlu0 %3006
      %v3008 = vsel %vm1115, %v3005, %v3007
      %3010 = vrot.lane.b32.xlu0 %v2962, 6
      %v3011 = vpop.permute.xlu0 %3010
      %3012 = vrot.lane.b32.xlu0 %v2963, 6
      %v3013 = vpop.permute.xlu0 %3012
      %v3014 = vsel %vm1122, %v3011, %v3013
      %3016 = vrot.lane.b32.xlu0 %v2962, 7
      %v3017 = vpop.permute.xlu0 %3016
      %3018 = vrot.lane.b32.xlu0 %v2963, 7
      %v3019 = vpop.permute.xlu0 %3018
      %v3020 = vsel %vm1129, %v3017, %v3019
      %3024 = vrot.lane.b32.xlu0 %v2964, 8
      %v3025 = vpop.permute.xlu0 %3024
      %3026 = vrot.lane.b32.xlu0 %v2965, 8
      %v3027 = vpop.permute.xlu0 %3026
      %v3028 = vsel %vm1138, %v3025, %v3027
      %3030 = vrot.lane.b32.xlu0 %v2964, 9
      %v3031 = vpop.permute.xlu0 %3030
      %3032 = vrot.lane.b32.xlu0 %v2965, 9
      %v3033 = vpop.permute.xlu0 %3032
      %v3034 = vsel %vm1145, %v3031, %v3033
      %3036 = vrot.lane.b32.xlu0 %v2964, 10
      %v3037 = vpop.permute.xlu0 %3036
      %3038 = vrot.lane.b32.xlu0 %v2965, 10
      %v3039 = vpop.permute.xlu0 %3038
      %v3040 = vsel %vm1152, %v3037, %v3039
      %3042 = vrot.lane.b32.xlu0 %v2964, 11
      %v3043 = vpop.permute.xlu0 %3042
      %3044 = vrot.lane.b32.xlu0 %v2965, 11
      %v3045 = vpop.permute.xlu0 %3044
      %v3046 = vsel %vm1159, %v3043, %v3045
      %3048 = vrot.lane.b32.xlu0 %v2964, 12
      %v3049 = vpop.permute.xlu0 %3048
      %3050 = vrot.lane.b32.xlu0 %v2965, 12
      %v3051 = vpop.permute.xlu0 %3050
      %v3052 = vsel %vm1166, %v3049, %v3051
      %3054 = vrot.lane.b32.xlu0 %v2964, 13
      %v3055 = vpop.permute.xlu0 %3054
      %3056 = vrot.lane.b32.xlu0 %v2965, 13
      %v3057 = vpop.permute.xlu0 %3056
      %v3058 = vsel %vm1173, %v3055, %v3057
      %3060 = vrot.lane.b32.xlu0 %v2964, 14
      %v3061 = vpop.permute.xlu0 %3060
      %3062 = vrot.lane.b32.xlu0 %v2965, 14
      %v3063 = vpop.permute.xlu0 %3062
      %v3064 = vsel %vm1180, %v3061, %v3063
      %3066 = vrot.lane.b32.xlu0 %v2964, 15
      %v3067 = vpop.permute.xlu0 %3066
      %3068 = vrot.lane.b32.xlu0 %v2965, 15
      %v3069 = vpop.permute.xlu0 %3068
      %v3070 = vsel %vm1187, %v3067, %v3069
      %v3072 = vsel %vm1190, %v2963, %v2984
      %v3073 = vsel %vm1192, %v3072, %v2990
      %v3074 = vsel %vm1194, %v3073, %v2996
      %v3075 = vsel %vm1196, %v3074, %v3002
      %v3076 = vsel %vm1198, %v3075, %v3008
      %v3077 = vsel %vm1200, %v3076, %v3014
      %v3078 = vsel %vm1202, %v3077, %v3020
      %v3079 = vsel %vm1190, %v3028, %v3034
      %v3080 = vsel %vm1192, %v3079, %v3040
      %v3081 = vsel %vm1194, %v3080, %v3046
      %v3082 = vsel %vm1196, %v3081, %v3052
      %v3083 = vsel %vm1198, %v3082, %v3058
      %v3084 = vsel %vm1200, %v3083, %v3064
      %v3085 = vsel %vm1202, %v3084, %v3070
      %3088 = vrot.lane.b32.xlu0 %v2966, 1
      %v3089 = vpop.permute.xlu0 %3088
      %3090 = vrot.lane.b32.xlu0 %v2967, 1
      %v3091 = vpop.permute.xlu0 %3090
      %v3092 = vsel %vm1087, %v3089, %v3091
      %3095 = vrot.lane.b32.xlu0 %v2966, 2
      %v3096 = vpop.permute.xlu0 %3095
      %3097 = vrot.lane.b32.xlu0 %v2967, 2
      %v3098 = vpop.permute.xlu0 %3097
      %v3099 = vsel %vm1094, %v3096, %v3098
      %3102 = vrot.lane.b32.xlu0 %v2966, 3
      %v3103 = vpop.permute.xlu0 %3102
      %3104 = vrot.lane.b32.xlu0 %v2967, 3
      %v3105 = vpop.permute.xlu0 %3104
      %v3106 = vsel %vm1101, %v3103, %v3105
      %3109 = vrot.lane.b32.xlu0 %v2966, 4
      %v3110 = vpop.permute.xlu0 %3109
      %3111 = vrot.lane.b32.xlu0 %v2967, 4
      %v3112 = vpop.permute.xlu0 %3111
      %v3113 = vsel %vm1108, %v3110, %v3112
      %3116 = vrot.lane.b32.xlu0 %v2966, 5
      %v3117 = vpop.permute.xlu0 %3116
      %3118 = vrot.lane.b32.xlu0 %v2967, 5
      %v3119 = vpop.permute.xlu0 %3118
      %v3120 = vsel %vm1115, %v3117, %v3119
      %3123 = vrot.lane.b32.xlu0 %v2966, 6
      %v3124 = vpop.permute.xlu0 %3123
      %3125 = vrot.lane.b32.xlu0 %v2967, 6
      %v3126 = vpop.permute.xlu0 %3125
      %v3127 = vsel %vm1122, %v3124, %v3126
      %3130 = vrot.lane.b32.xlu0 %v2966, 7
      %v3131 = vpop.permute.xlu0 %3130
      %3132 = vrot.lane.b32.xlu0 %v2967, 7
      %v3133 = vpop.permute.xlu0 %3132
      %v3134 = vsel %vm1129, %v3131, %v3133
      %3139 = vrot.lane.b32.xlu0 %v2968, 8
      %v3140 = vpop.permute.xlu0 %3139
      %3141 = vrot.lane.b32.xlu0 %v2969, 8
      %v3142 = vpop.permute.xlu0 %3141
      %v3143 = vsel %vm1138, %v3140, %v3142
      %3146 = vrot.lane.b32.xlu0 %v2968, 9
      %v3147 = vpop.permute.xlu0 %3146
      %3148 = vrot.lane.b32.xlu0 %v2969, 9
      %v3149 = vpop.permute.xlu0 %3148
      %v3150 = vsel %vm1145, %v3147, %v3149
      %3153 = vrot.lane.b32.xlu0 %v2968, 10
      %v3154 = vpop.permute.xlu0 %3153
      %3155 = vrot.lane.b32.xlu0 %v2969, 10
      %v3156 = vpop.permute.xlu0 %3155
      %v3157 = vsel %vm1152, %v3154, %v3156
      %3160 = vrot.lane.b32.xlu0 %v2968, 11
      %v3161 = vpop.permute.xlu0 %3160
      %3162 = vrot.lane.b32.xlu0 %v2969, 11
      %v3163 = vpop.permute.xlu0 %3162
      %v3164 = vsel %vm1159, %v3161, %v3163
      %3167 = vrot.lane.b32.xlu0 %v2968, 12
      %v3168 = vpop.permute.xlu0 %3167
      %3169 = vrot.lane.b32.xlu0 %v2969, 12
      %v3170 = vpop.permute.xlu0 %3169
      %v3171 = vsel %vm1166, %v3168, %v3170
      %3174 = vrot.lane.b32.xlu0 %v2968, 13
      %v3175 = vpop.permute.xlu0 %3174
      %3176 = vrot.lane.b32.xlu0 %v2969, 13
      %v3177 = vpop.permute.xlu0 %3176
      %v3178 = vsel %vm1173, %v3175, %v3177
      %3181 = vrot.lane.b32.xlu0 %v2968, 14
      %v3182 = vpop.permute.xlu0 %3181
      %3183 = vrot.lane.b32.xlu0 %v2969, 14
      %v3184 = vpop.permute.xlu0 %3183
      %v3185 = vsel %vm1180, %v3182, %v3184
      %3188 = vrot.lane.b32.xlu0 %v2968, 15
      %v3189 = vpop.permute.xlu0 %3188
      %3190 = vrot.lane.b32.xlu0 %v2969, 15
      %v3191 = vpop.permute.xlu0 %3190
      %v3192 = vsel %vm1187, %v3189, %v3191
      %v3195 = vsel %vm1190, %v2966, %v3089
      %v3196 = vsel %vm1190, %v2967, %v3092
      %v3197 = vsel %vm1192, %v3195, %v3096
      %v3198 = vsel %vm1192, %v3196, %v3099
      %v3199 = vsel %vm1194, %v3197, %v3103
      %v3200 = vsel %vm1194, %v3198, %v3106
      %v3201 = vsel %vm1196, %v3199, %v3110
      %v3202 = vsel %vm1196, %v3200, %v3113
      %v3203 = vsel %vm1198, %v3201, %v3117
      %v3204 = vsel %vm1198, %v3202, %v3120
      %v3205 = vsel %vm1200, %v3203, %v3124
      %v3206 = vsel %vm1200, %v3204, %v3127
      %v3207 = vsel %vm1202, %v3205, %v3131
      %v3208 = vsel %vm1202, %v3206, %v3134
      %v3209 = vsel %vm1190, %v3140, %v3147
      %v3210 = vsel %vm1190, %v3143, %v3150
      %v3211 = vsel %vm1192, %v3209, %v3154
      %v3212 = vsel %vm1192, %v3210, %v3157
      %v3213 = vsel %vm1194, %v3211, %v3161
      %v3214 = vsel %vm1194, %v3212, %v3164
      %v3215 = vsel %vm1196, %v3213, %v3168
      %v3216 = vsel %vm1196, %v3214, %v3171
      %v3217 = vsel %vm1198, %v3215, %v3175
      %v3218 = vsel %vm1198, %v3216, %v3178
      %v3219 = vsel %vm1200, %v3217, %v3182
      %v3220 = vsel %vm1200, %v3218, %v3185
      %v3221 = vsel %vm1202, %v3219, %v3189
      %v3222 = vsel %vm1202, %v3220, %v3192
      %3225 = vrot.lane.b32.xlu0 %v2970, 1
      %v3226 = vpop.permute.xlu0 %3225
      %3227 = vrot.lane.b32.xlu0 %v2971, 1
      %v3228 = vpop.permute.xlu0 %3227
      %v3229 = vsel %vm1087, %v3226, %v3228
      %3232 = vrot.lane.b32.xlu0 %v2970, 2
      %v3233 = vpop.permute.xlu0 %3232
      %3234 = vrot.lane.b32.xlu0 %v2971, 2
      %v3235 = vpop.permute.xlu0 %3234
      %v3236 = vsel %vm1094, %v3233, %v3235
      %3239 = vrot.lane.b32.xlu0 %v2970, 3
      %v3240 = vpop.permute.xlu0 %3239
      %3241 = vrot.lane.b32.xlu0 %v2971, 3
      %v3242 = vpop.permute.xlu0 %3241
      %v3243 = vsel %vm1101, %v3240, %v3242
      %3246 = vrot.lane.b32.xlu0 %v2970, 4
      %v3247 = vpop.permute.xlu0 %3246
      %3248 = vrot.lane.b32.xlu0 %v2971, 4
      %v3249 = vpop.permute.xlu0 %3248
      %v3250 = vsel %vm1108, %v3247, %v3249
      %3253 = vrot.lane.b32.xlu0 %v2970, 5
      %v3254 = vpop.permute.xlu0 %3253
      %3255 = vrot.lane.b32.xlu0 %v2971, 5
      %v3256 = vpop.permute.xlu0 %3255
      %v3257 = vsel %vm1115, %v3254, %v3256
      %3260 = vrot.lane.b32.xlu0 %v2970, 6
      %v3261 = vpop.permute.xlu0 %3260
      %3262 = vrot.lane.b32.xlu0 %v2971, 6
      %v3263 = vpop.permute.xlu0 %3262
      %v3264 = vsel %vm1122, %v3261, %v3263
      %3267 = vrot.lane.b32.xlu0 %v2970, 7
      %v3268 = vpop.permute.xlu0 %3267
      %3269 = vrot.lane.b32.xlu0 %v2971, 7
      %v3270 = vpop.permute.xlu0 %3269
      %v3271 = vsel %vm1129, %v3268, %v3270
      %3276 = vrot.lane.b32.xlu0 %v2972, 8
      %v3277 = vpop.permute.xlu0 %3276
      %3278 = vrot.lane.b32.xlu0 %v2973, 8
      %v3279 = vpop.permute.xlu0 %3278
      %v3280 = vsel %vm1138, %v3277, %v3279
      %3283 = vrot.lane.b32.xlu0 %v2972, 9
      %v3284 = vpop.permute.xlu0 %3283
      %3285 = vrot.lane.b32.xlu0 %v2973, 9
      %v3286 = vpop.permute.xlu0 %3285
      %v3287 = vsel %vm1145, %v3284, %v3286
      %3290 = vrot.lane.b32.xlu0 %v2972, 10
      %v3291 = vpop.permute.xlu0 %3290
      %3292 = vrot.lane.b32.xlu0 %v2973, 10
      %v3293 = vpop.permute.xlu0 %3292
      %v3294 = vsel %vm1152, %v3291, %v3293
      %3297 = vrot.lane.b32.xlu0 %v2972, 11
      %v3298 = vpop.permute.xlu0 %3297
      %3299 = vrot.lane.b32.xlu0 %v2973, 11
      %v3300 = vpop.permute.xlu0 %3299
      %v3301 = vsel %vm1159, %v3298, %v3300
      %3304 = vrot.lane.b32.xlu0 %v2972, 12
      %v3305 = vpop.permute.xlu0 %3304
      %3306 = vrot.lane.b32.xlu0 %v2973, 12
      %v3307 = vpop.permute.xlu0 %3306
      %v3308 = vsel %vm1166, %v3305, %v3307
      %3311 = vrot.lane.b32.xlu0 %v2972, 13
      %v3312 = vpop.permute.xlu0 %3311
      %3313 = vrot.lane.b32.xlu0 %v2973, 13
      %v3314 = vpop.permute.xlu0 %3313
      %v3315 = vsel %vm1173, %v3312, %v3314
      %3318 = vrot.lane.b32.xlu0 %v2972, 14
      %v3319 = vpop.permute.xlu0 %3318
      %3320 = vrot.lane.b32.xlu0 %v2973, 14
      %v3321 = vpop.permute.xlu0 %3320
      %v3322 = vsel %vm1180, %v3319, %v3321
      %3325 = vrot.lane.b32.xlu0 %v2972, 15
      %v3326 = vpop.permute.xlu0 %3325
      %3327 = vrot.lane.b32.xlu0 %v2973, 15
      %v3328 = vpop.permute.xlu0 %3327
      %v3329 = vsel %vm1187, %v3326, %v3328
      %v3332 = vsel %vm1190, %v2970, %v3226
      %v3333 = vsel %vm1190, %v2971, %v3229
      %v3334 = vsel %vm1192, %v3332, %v3233
      %v3335 = vsel %vm1192, %v3333, %v3236
      %v3336 = vsel %vm1194, %v3334, %v3240
      %v3337 = vsel %vm1194, %v3335, %v3243
      %v3338 = vsel %vm1196, %v3336, %v3247
      %v3339 = vsel %vm1196, %v3337, %v3250
      %v3340 = vsel %vm1198, %v3338, %v3254
      %v3341 = vsel %vm1198, %v3339, %v3257
      %v3342 = vsel %vm1200, %v3340, %v3261
      %v3343 = vsel %vm1200, %v3341, %v3264
      %v3344 = vsel %vm1202, %v3342, %v3268
      %v3345 = vsel %vm1202, %v3343, %v3271
      %v3346 = vsel %vm1190, %v3277, %v3284
      %v3347 = vsel %vm1190, %v3280, %v3287
      %v3348 = vsel %vm1192, %v3346, %v3291
      %v3349 = vsel %vm1192, %v3347, %v3294
      %v3350 = vsel %vm1194, %v3348, %v3298
      %v3351 = vsel %vm1194, %v3349, %v3301
      %v3352 = vsel %vm1196, %v3350, %v3305
      %v3353 = vsel %vm1196, %v3351, %v3308
      %v3354 = vsel %vm1198, %v3352, %v3312
      %v3355 = vsel %vm1198, %v3353, %v3315
      %v3356 = vsel %vm1200, %v3354, %v3319
      %v3357 = vsel %vm1200, %v3355, %v3322
      %v3358 = vsel %vm1202, %v3356, %v3326
      %v3359 = vsel %vm1202, %v3357, %v3329
      %3362 = vrot.lane.b32.xlu0 %v2974, 1
      %v3363 = vpop.permute.xlu0 %3362
      %3364 = vrot.lane.b32.xlu0 %v2975, 1
      %v3365 = vpop.permute.xlu0 %3364
      %v3366 = vsel %vm1087, %v3363, %v3365
      %3369 = vrot.lane.b32.xlu0 %v2974, 2
      %v3370 = vpop.permute.xlu0 %3369
      %3371 = vrot.lane.b32.xlu0 %v2975, 2
      %v3372 = vpop.permute.xlu0 %3371
      %v3373 = vsel %vm1094, %v3370, %v3372
      %3376 = vrot.lane.b32.xlu0 %v2974, 3
      %v3377 = vpop.permute.xlu0 %3376
      %3378 = vrot.lane.b32.xlu0 %v2975, 3
      %v3379 = vpop.permute.xlu0 %3378
      %v3380 = vsel %vm1101, %v3377, %v3379
      %3383 = vrot.lane.b32.xlu0 %v2974, 4
      %v3384 = vpop.permute.xlu0 %3383
      %3385 = vrot.lane.b32.xlu0 %v2975, 4
      %v3386 = vpop.permute.xlu0 %3385
      %v3387 = vsel %vm1108, %v3384, %v3386
      %3390 = vrot.lane.b32.xlu0 %v2974, 5
      %v3391 = vpop.permute.xlu0 %3390
      %3392 = vrot.lane.b32.xlu0 %v2975, 5
      %v3393 = vpop.permute.xlu0 %3392
      %v3394 = vsel %vm1115, %v3391, %v3393
      %3397 = vrot.lane.b32.xlu0 %v2974, 6
      %v3398 = vpop.permute.xlu0 %3397
      %3399 = vrot.lane.b32.xlu0 %v2975, 6
      %v3400 = vpop.permute.xlu0 %3399
      %v3401 = vsel %vm1122, %v3398, %v3400
      %3404 = vrot.lane.b32.xlu0 %v2974, 7
      %v3405 = vpop.permute.xlu0 %3404
      %3406 = vrot.lane.b32.xlu0 %v2975, 7
      %v3407 = vpop.permute.xlu0 %3406
      %v3408 = vsel %vm1129, %v3405, %v3407
      %3413 = vrot.lane.b32.xlu0 %v2976, 8
      %v3414 = vpop.permute.xlu0 %3413
      %3415 = vrot.lane.b32.xlu0 %v2977, 8
      %v3416 = vpop.permute.xlu0 %3415
      %v3417 = vsel %vm1138, %v3414, %v3416
      %3420 = vrot.lane.b32.xlu0 %v2976, 9
      %v3421 = vpop.permute.xlu0 %3420
      %3422 = vrot.lane.b32.xlu0 %v2977, 9
      %v3423 = vpop.permute.xlu0 %3422
      %v3424 = vsel %vm1145, %v3421, %v3423
      %3427 = vrot.lane.b32.xlu0 %v2976, 10
      %v3428 = vpop.permute.xlu0 %3427
      %3429 = vrot.lane.b32.xlu0 %v2977, 10
      %v3430 = vpop.permute.xlu0 %3429
      %v3431 = vsel %vm1152, %v3428, %v3430
      %3434 = vrot.lane.b32.xlu0 %v2976, 11
      %v3435 = vpop.permute.xlu0 %3434
      %3436 = vrot.lane.b32.xlu0 %v2977, 11
      %v3437 = vpop.permute.xlu0 %3436
      %v3438 = vsel %vm1159, %v3435, %v3437
      %3441 = vrot.lane.b32.xlu0 %v2976, 12
      %v3442 = vpop.permute.xlu0 %3441
      %3443 = vrot.lane.b32.xlu0 %v2977, 12
      %v3444 = vpop.permute.xlu0 %3443
      %v3445 = vsel %vm1166, %v3442, %v3444
      %3448 = vrot.lane.b32.xlu0 %v2976, 13
      %v3449 = vpop.permute.xlu0 %3448
      %3450 = vrot.lane.b32.xlu0 %v2977, 13
      %v3451 = vpop.permute.xlu0 %3450
      %v3452 = vsel %vm1173, %v3449, %v3451
      %3455 = vrot.lane.b32.xlu0 %v2976, 14
      %v3456 = vpop.permute.xlu0 %3455
      %3457 = vrot.lane.b32.xlu0 %v2977, 14
      %v3458 = vpop.permute.xlu0 %3457
      %v3459 = vsel %vm1180, %v3456, %v3458
      %3462 = vrot.lane.b32.xlu0 %v2976, 15
      %v3463 = vpop.permute.xlu0 %3462
      %3464 = vrot.lane.b32.xlu0 %v2977, 15
      %v3465 = vpop.permute.xlu0 %3464
      %v3466 = vsel %vm1187, %v3463, %v3465
      %v3469 = vsel %vm1190, %v2974, %v3363
      %v3470 = vsel %vm1190, %v2975, %v3366
      %v3471 = vsel %vm1192, %v3469, %v3370
      %v3472 = vsel %vm1192, %v3470, %v3373
      %v3473 = vsel %vm1194, %v3471, %v3377
      %v3474 = vsel %vm1194, %v3472, %v3380
      %v3475 = vsel %vm1196, %v3473, %v3384
      %v3476 = vsel %vm1196, %v3474, %v3387
      %v3477 = vsel %vm1198, %v3475, %v3391
      %v3478 = vsel %vm1198, %v3476, %v3394
      %v3479 = vsel %vm1200, %v3477, %v3398
      %v3480 = vsel %vm1200, %v3478, %v3401
      %v3481 = vsel %vm1202, %v3479, %v3405
      %v3482 = vsel %vm1202, %v3480, %v3408
      %v3483 = vsel %vm1190, %v3414, %v3421
      %v3484 = vsel %vm1190, %v3417, %v3424
      %v3485 = vsel %vm1192, %v3483, %v3428
      %v3486 = vsel %vm1192, %v3484, %v3431
      %v3487 = vsel %vm1194, %v3485, %v3435
      %v3488 = vsel %vm1194, %v3486, %v3438
      %v3489 = vsel %vm1196, %v3487, %v3442
      %v3490 = vsel %vm1196, %v3488, %v3445
      %v3491 = vsel %vm1198, %v3489, %v3449
      %v3492 = vsel %vm1198, %v3490, %v3452
      %v3493 = vsel %vm1200, %v3491, %v3456
      %v3494 = vsel %vm1200, %v3492, %v3459
      %v3495 = vsel %vm1202, %v3493, %v3463
      %v3496 = vsel %vm1202, %v3494, %v3466
      %3501 = vrot.lane.b32.xlu0 %v3207, 16
      %v3502 = vpop.permute.xlu0 %3501
      %3503 = vrot.lane.b32.xlu0 %v3208, 16
      %v3504 = vpop.permute.xlu0 %3503
      %3505 = vrot.lane.b32.xlu0 %v3221, 16
      %v3506 = vpop.permute.xlu0 %3505
      %3507 = vrot.lane.b32.xlu0 %v3222, 16
      %v3508 = vpop.permute.xlu0 %3507
      %v3509 = vsel %vm1634, %v3502, %v3504
      %v3510 = vsel %vm1634, %v3506, %v3508
      %3517 = vrot.lane.b32.xlu0 %v3344, 32
      %v3518 = vpop.permute.xlu0 %3517
      %3519 = vrot.lane.b32.xlu0 %v3345, 32
      %v3520 = vpop.permute.xlu0 %3519
      %3521 = vrot.lane.b32.xlu0 %v3358, 32
      %v3522 = vpop.permute.xlu0 %3521
      %3523 = vrot.lane.b32.xlu0 %v3359, 32
      %v3524 = vpop.permute.xlu0 %3523
      %v3525 = vsel %vm943, %v3518, %v3520
      %v3526 = vsel %vm943, %v3522, %v3524
      %3533 = vrot.lane.b32.xlu0 %v3481, 48
      %v3534 = vpop.permute.xlu0 %3533
      %3535 = vrot.lane.b32.xlu0 %v3482, 48
      %v3536 = vpop.permute.xlu0 %3535
      %3537 = vrot.lane.b32.xlu0 %v3495, 48
      %v3538 = vpop.permute.xlu0 %3537
      %3539 = vrot.lane.b32.xlu0 %v3496, 48
      %v3540 = vpop.permute.xlu0 %3539
      %v3541 = vsel %vm1667, %v3534, %v3536
      %v3542 = vsel %vm1667, %v3538, %v3540
      %v3545 = vadd.f32 %v2948, %v3078
      %v3546 = vadd.f32 %v2949, %v3085
      %v3547 = vadd.f32 %v2950, %v3509
      %v3548 = vadd.f32 %v2951, %v3510
      %v3549 = vadd.f32 %v2952, %v3525
      %v3550 = vadd.f32 %v2953, %v3526
      %v3551 = vadd.f32 %v2954, %v3541
      %v3552 = vadd.f32 %v2955, %v3542
      %v3553 = vsub.f32 %v3545, %v867
      %v3554 = vsub.f32 %v3546, %v868
      %v3555 = vsub.f32 %v3547, %v869
      %v3556 = vsub.f32 %v3548, %v870
      %v3557 = vsub.f32 %v3549, %v871
      %v3558 = vsub.f32 %v3550, %v872
      %v3559 = vsub.f32 %v3551, %v873
      %v3560 = vsub.f32 %v3552, %v874
      %v3561 = vsel %vm1688, %v3553, -inf
      %3562 = vmax.xlane.f32.xlu0 %v3561
      %v3563 = vpop.xlane.xlu0 %3562
      %v3564 = vsel %vm1688, %v3554, -inf
      %3565 = vmax.xlane.f32.xlu0 %v3564
      %v3566 = vpop.xlane.xlu0 %3565
      %v3567 = vsel %vm1688, %v3555, -inf
      %3568 = vmax.xlane.f32.xlu0 %v3567
      %v3569 = vpop.xlane.xlu0 %3568
      %v3570 = vsel %vm1688, %v3556, -inf
      %3571 = vmax.xlane.f32.xlu0 %v3570
      %v3572 = vpop.xlane.xlu0 %3571
      %v3573 = vsel %vm1688, %v3557, -inf
      %3574 = vmax.xlane.f32.xlu0 %v3573
      %v3575 = vpop.xlane.xlu0 %3574
      %v3576 = vsel %vm1688, %v3558, -inf
      %3577 = vmax.xlane.f32.xlu0 %v3576
      %v3578 = vpop.xlane.xlu0 %3577
      %v3579 = vsel %vm1688, %v3559, -inf
      %3580 = vmax.xlane.f32.xlu0 %v3579
      %v3581 = vpop.xlane.xlu0 %3580
      %v3582 = vsel %vm1688, %v3560, -inf
      %3583 = vmax.xlane.f32.xlu0 %v3582
      %v3584 = vpop.xlane.xlu0 %3583
      %v3585 = vsub.f32 %v3553, %v3563
      %v3586 = vsub.f32 %v3554, %v3566
      %v3587 = vsub.f32 %v3555, %v3569
      %v3588 = vsub.f32 %v3556, %v3572
      %v3589 = vsub.f32 %v3557, %v3575
      %v3590 = vsub.f32 %v3558, %v3578
      %v3591 = vsub.f32 %v3559, %v3581
      %v3592 = vsub.f32 %v3560, %v3584
      %v3593 = vmul.f32 %v3585, 1.442695
      %v3594 = vpow.pop %v3593
      %v3595 = vmul.f32 %v3586, 1.442695
      %v3596 = vpow.pop %v3595
      %v3597 = vmul.f32 %v3587, 1.442695
      %v3598 = vpow.pop %v3597
      %v3599 = vmul.f32 %v3588, 1.442695
      %v3600 = vpow.pop %v3599
      %v3601 = vmul.f32 %v3589, 1.442695
      %v3602 = vpow.pop %v3601
      %v3603 = vmul.f32 %v3590, 1.442695
      %v3604 = vpow.pop %v3603
      %v3605 = vmul.f32 %v3591, 1.442695
      %v3606 = vpow.pop %v3605
      %v3607 = vmul.f32 %v3592, 1.442695
      %v3608 = vpow.pop %v3607
      %v3609 = vsel %vm1688, %v3594, 0.0
      %3610 = vadd.xlane.f32.xlu0 %v3609
      %v3611 = vpop.xlane.xlu0 %3610
      %v3612 = vsel %vm1688, %v3596, 0.0
      %3613 = vadd.xlane.f32.xlu0 %v3612
      %v3614 = vpop.xlane.xlu0 %3613
      %v3615 = vsel %vm1688, %v3598, 0.0
      %3616 = vadd.xlane.f32.xlu0 %v3615
      %v3617 = vpop.xlane.xlu0 %3616
      %v3618 = vsel %vm1688, %v3600, 0.0
      %3619 = vadd.xlane.f32.xlu0 %v3618
      %v3620 = vpop.xlane.xlu0 %3619
      %v3621 = vsel %vm1688, %v3602, 0.0
      %3622 = vadd.xlane.f32.xlu0 %v3621
      %v3623 = vpop.xlane.xlu0 %3622
      %v3624 = vsel %vm1688, %v3604, 0.0
      %3625 = vadd.xlane.f32.xlu0 %v3624
      %v3626 = vpop.xlane.xlu0 %3625
      %v3627 = vsel %vm1688, %v3606, 0.0
      %3628 = vadd.xlane.f32.xlu0 %v3627
      %v3629 = vpop.xlane.xlu0 %3628
      %v3630 = vsel %vm1688, %v3608, 0.0
      %3631 = vadd.xlane.f32.xlu0 %v3630
      %v3632 = vpop.xlane.xlu0 %3631
      %v3633 = vrcp.pop %v3611
      %v3634 = vrcp.pop %v3614
      %v3635 = vrcp.pop %v3617
      %v3636 = vrcp.pop %v3620
      %v3637 = vrcp.pop %v3623
      %v3638 = vrcp.pop %v3626
      %v3639 = vrcp.pop %v3629
      %v3640 = vrcp.pop %v3632
      %v3641 = vmul.f32 %v3594, %v3633
      %v3642 = vmul.f32 %v3596, %v3634
      %v3643 = vmul.f32 %v3598, %v3635
      %v3644 = vmul.f32 %v3600, %v3636
      %v3645 = vmul.f32 %v3602, %v3637
      %v3646 = vmul.f32 %v3604, %v3638
      %v3647 = vmul.f32 %v3606, %v3639
      %v3648 = vmul.f32 %v3608, %v3640
      %v3649 = vpack.c.bf16 %v3642, %v3641
      %v3650 = vpack.c.bf16 %v3644, %v3643
      %v3651 = vpack.c.bf16 %v3646, %v3645
      %v3652 = vpack.c.bf16 %v3648, %v3647
      %3653 = vrot.lane.b32.xlu0 %v1797, 64
      %v3654 = vpop.permute.xlu0 %3653
      %3655 = vrot.lane.b32.xlu0 %v1798, 64
      %v3656 = vpop.permute.xlu0 %3655
      %3657 = vrot.lane.b32.xlu0 %v1799, 64
      %v3658 = vpop.permute.xlu0 %3657
      %3659 = vrot.lane.b32.xlu0 %v1800, 64
      %v3660 = vpop.permute.xlu0 %3659
      %v3666 = vsel %vm1688, %v3649, 0
      %v3669 = vsel %vm1688, %v3650, 0
      %v3672 = vsel %vm1688, %v3651, 0
      %v3675 = vsel %vm1688, %v3652, 0
      %3677 = vmatpush.bf16.msra.mxu0 0
      %3678 = vmatpush.bf16.msra.mxu0 0
      %3679 = vmatpush.bf16.msra.mxu0 0
      %3680 = vmatpush.bf16.msra.mxu0 0
      %3681 = vmatpush.bf16.msra.mxu0 %v3660
      %3682 = vmatpush.bf16.msra.mxu0 %v3658
      %3683 = vmatpush.bf16.msra.mxu0 %v3656
      %3684 = vmatpush.bf16.msra.mxu0 %v3654
      %3685 = vmatmul.bf16.gmra.mxu0 %v3666
      %v3686 = vpop.f32.mrf.mxu0
      %v3687 = vadd.f32 0.0, %v3686
      %v3688 = vpop.f32.mrf.mxu0
      %v3689 = vadd.f32 0.0, %v3688
      %3690 = vmatmul.bf16.gmra.mxu0 %v3669
      %v3691 = vpop.f32.mrf.mxu0
      %v3692 = vadd.f32 0.0, %v3691
      %v3693 = vpop.f32.mrf.mxu0
      %v3694 = vadd.f32 0.0, %v3693
      %3695 = vmatmul.bf16.gmra.mxu0 %v3672
      %v3696 = vpop.f32.mrf.mxu0
      %v3697 = vadd.f32 0.0, %v3696
      %v3698 = vpop.f32.mrf.mxu0
      %v3699 = vadd.f32 0.0, %v3698
      %3700 = vmatmul.bf16.gmra.mxu0 %v3675
      %v3701 = vpop.f32.mrf.mxu0
      %v3702 = vadd.f32 0.0, %v3701
      %v3703 = vpop.f32.mrf.mxu0
      %v3704 = vadd.f32 0.0, %v3703
      %3705 = vdwg.mxu0
      %v3706 = vpack.c.bf16 %v3687, %v3687
      %v3707 = vpack.c.bf16 %v3689, %v3689
      %v3708 = vpack.c.bf16 %v3692, %v3692
      %v3709 = vpack.c.bf16 %v3694, %v3694
      %v3710 = vpack.c.bf16 %v3697, %v3697
      %v3711 = vpack.c.bf16 %v3699, %v3699
      %v3712 = vpack.c.bf16 %v3702, %v3702
      %v3713 = vpack.c.bf16 %v3704, %v3704
      %3722 = vrot.lane.b32.xlu0 %v3706, 64
      %v3723 = vpop.permute.xlu0 %3722
      %3724 = vrot.lane.b32.xlu0 %v3707, 64
      %v3725 = vpop.permute.xlu0 %3724
      %3726 = vrot.lane.b32.xlu0 %v3708, 64
      %v3727 = vpop.permute.xlu0 %3726
      %3728 = vrot.lane.b32.xlu0 %v3709, 64
      %v3729 = vpop.permute.xlu0 %3728
      %3730 = vrot.lane.b32.xlu0 %v3710, 64
      %v3731 = vpop.permute.xlu0 %3730
      %3732 = vrot.lane.b32.xlu0 %v3711, 64
      %v3733 = vpop.permute.xlu0 %3732
      %3734 = vrot.lane.b32.xlu0 %v3712, 64
      %v3735 = vpop.permute.xlu0 %3734
      %3736 = vrot.lane.b32.xlu0 %v3713, 64
      %v3737 = vpop.permute.xlu0 %3736
      %vm3746 = vcmask 781824
      %3747 = vst.msk [vmem:[#allocation2] sm:$0xf] %vm3746, %v3723
      %3748 = vst.msk [vmem:[#allocation2 + $0x4] sm:$0xf] %vm3746, %v3725
      %3749 = vst.msk [vmem:[#allocation2 + $0x8] sm:$0xf] %vm3746, %v3727
      %3750 = vst.msk [vmem:[#allocation2 + $0xc] sm:$0xf] %vm3746, %v3729
      %3751 = vst.msk [vmem:[#allocation2 + $0x10] sm:$0xf] %vm3746, %v3731
      %3752 = vst.msk [vmem:[#allocation2 + $0x14] sm:$0xf] %vm3746, %v3733
      %3753 = vst.msk [vmem:[#allocation2 + $0x18] sm:$0xf] %vm3746, %v3735
      %3754 = vst.msk [vmem:[#allocation2 + $0x1c] sm:$0xf] %vm3746, %v3737
      %3755 = vrot.lane.b32.xlu0 %v822, 32
      %v3756 = vpop.permute.xlu0 %3755
      %3757 = vrot.lane.b32.xlu0 %v823, 32
      %v3758 = vpop.permute.xlu0 %3757
      %3759 = vrot.lane.b32.xlu0 %v824, 32
      %v3760 = vpop.permute.xlu0 %3759
      %3761 = vrot.lane.b32.xlu0 %v825, 32
      %v3762 = vpop.permute.xlu0 %3761
      %3763 = vrot.lane.b32.xlu0 %v923, 32
      %v3764 = vpop.permute.xlu0 %3763
      %3765 = vrot.lane.b32.xlu0 %v924, 32
      %v3766 = vpop.permute.xlu0 %3765
      %3767 = vrot.lane.b32.xlu0 %v925, 32
      %v3768 = vpop.permute.xlu0 %3767
      %3769 = vrot.lane.b32.xlu0 %v926, 32
      %v3770 = vpop.permute.xlu0 %3769
      %3771 = vrot.lane.b32.xlu0 %v927, 32
      %v3772 = vpop.permute.xlu0 %3771
      %3773 = vrot.lane.b32.xlu0 %v928, 32
      %v3774 = vpop.permute.xlu0 %3773
      %3775 = vrot.lane.b32.xlu0 %v929, 32
      %v3776 = vpop.permute.xlu0 %3775
      %3777 = vrot.lane.b32.xlu0 %v930, 32
      %v3778 = vpop.permute.xlu0 %3777
      %3779 = vrot.lane.b32.xlu0 %v939, 32
      %v3780 = vpop.permute.xlu0 %3779
      %3781 = vrot.lane.b32.xlu0 %v940, 32
      %v3782 = vpop.permute.xlu0 %3781
      %3783 = vrot.lane.b32.xlu0 %v941, 32
      %v3784 = vpop.permute.xlu0 %3783
      %3785 = vrot.lane.b32.xlu0 %v942, 32
      %v3786 = vpop.permute.xlu0 %3785
      %v3788 = vsel %vm943, %v3780, 0
      %v3791 = vsel %vm943, %v3782, 0
      %v3794 = vsel %vm943, %v3784, 0
      %v3797 = vsel %vm943, %v3786, 0
      %v3800 = vsel %vm943, %v3756, 0
      %v3803 = vsel %vm943, %v3758, 0
      %v3806 = vsel %vm943, %v3760, 0
      %v3809 = vsel %vm943, %v3762, 0
      %v3812 = vsel %vm943, %v3764, 0
      %v3815 = vsel %vm943, %v3766, 0
      %v3818 = vsel %vm943, %v3768, 0
      %v3821 = vsel %vm943, %v3770, 0
      %v3824 = vsel %vm943, %v3772, 0
      %v3827 = vsel %vm943, %v3774, 0
      %v3830 = vsel %vm943, %v3776, 0
      %v3833 = vsel %vm943, %v3778, 0
      %3835 = vmatpush.bf16.xpose.msra.mxu0 %v3821
      %3836 = vmatpush.bf16.xpose.msra.mxu0 %v3818
      %3837 = vmatpush.bf16.xpose.msra.mxu0 %v3815
      %3838 = vmatpush.bf16.xpose.msra.mxu0 %v3812
      %3839 = vmatpush.bf16.xpose.msra.mxu0 %v3809
      %3840 = vmatpush.bf16.xpose.msra.mxu0 %v3806
      %3841 = vmatpush.bf16.xpose.msra.mxu0 %v3803
      %3842 = vmatpush.bf16.xpose.msra.mxu0 %v3800
      %3843 = vmatmul.bf16.gmra.mxu0 %v3788
      %v3844 = vpop.f32.mrf.mxu0
      %v3845 = vadd.f32 0.0, %v3844
      %v3846 = vpop.f32.mrf.mxu0
      %v3847 = vadd.f32 0.0, %v3846
      %3848 = vmatmul.bf16.gmra.mxu0 %v3791
      %v3849 = vpop.f32.mrf.mxu0
      %v3850 = vadd.f32 0.0, %v3849
      %v3851 = vpop.f32.mrf.mxu0
      %v3852 = vadd.f32 0.0, %v3851
      %3853 = vmatmul.bf16.gmra.mxu0 %v3794
      %v3854 = vpop.f32.mrf.mxu0
      %v3855 = vadd.f32 0.0, %v3854
      %v3856 = vpop.f32.mrf.mxu0
      %v3857 = vadd.f32 0.0, %v3856
      %3858 = vmatmul.bf16.gmra.mxu0 %v3797
      %v3859 = vpop.f32.mrf.mxu0
      %v3860 = vadd.f32 0.0, %v3859
      %v3861 = vpop.f32.mrf.mxu0
      %v3862 = vadd.f32 0.0, %v3861
      %3863 = vdwg.mxu0
      %3864 = vmatpush.bf16.xpose.msra.mxu0 0
      %3865 = vmatpush.bf16.xpose.msra.mxu0 0
      %3866 = vmatpush.bf16.xpose.msra.mxu0 0
      %3867 = vmatpush.bf16.xpose.msra.mxu0 0
      %3868 = vmatpush.bf16.xpose.msra.mxu0 %v3833
      %3869 = vmatpush.bf16.xpose.msra.mxu0 %v3830
      %3870 = vmatpush.bf16.xpose.msra.mxu0 %v3827
      %3871 = vmatpush.bf16.xpose.msra.mxu0 %v3824
      %3872 = vmatmul.bf16.gmra.mxu0 %v3788
      %v3873 = vpop.f32.mrf.mxu0
      %v3874 = vadd.f32 0.0, %v3873
      %v3875 = vpop.f32.mrf.mxu0
      %v3876 = vadd.f32 0.0, %v3875
      %3877 = vmatmul.bf16.gmra.mxu0 %v3791
      %v3878 = vpop.f32.mrf.mxu0
      %v3879 = vadd.f32 0.0, %v3878
      %v3880 = vpop.f32.mrf.mxu0
      %v3881 = vadd.f32 0.0, %v3880
      %3882 = vmatmul.bf16.gmra.mxu0 %v3794
      %v3883 = vpop.f32.mrf.mxu0
      %v3884 = vadd.f32 0.0, %v3883
      %v3885 = vpop.f32.mrf.mxu0
      %v3886 = vadd.f32 0.0, %v3885
      %3887 = vmatmul.bf16.gmra.mxu0 %v3797
      %v3888 = vpop.f32.mrf.mxu0
      %v3889 = vadd.f32 0.0, %v3888
      %v3890 = vpop.f32.mrf.mxu0
      %v3891 = vadd.f32 0.0, %v3890
      %3892 = vdwg.mxu0
      %v3893 = vperm.slane %v840, 3
      %v3894 = vadd.f32 %v3845, %v3893
      %v3895 = vadd.f32 %v3847, %v3893
      %v3896 = vadd.f32 %v3850, %v3893
      %v3897 = vadd.f32 %v3852, %v3893
      %v3898 = vadd.f32 %v3855, %v3893
      %v3899 = vadd.f32 %v3857, %v3893
      %v3900 = vadd.f32 %v3860, %v3893
      %v3901 = vadd.f32 %v3862, %v3893
      %v3902 = vld [vmem:[%s5 + $0x3] sm:$0x1]
      %v3903 = vperm.slane %v3902, 0
      %3905 = vrot.lane.b32.xlu0 %v3903, 64
      %v3906 = vpop.permute.xlu0 %3905
      %v3908 = vadd.f32 %v3845, %v3906
      %v3909 = vadd.f32 %v3874, %v3906
      %v3910 = vadd.f32 %v3847, %v3906
      %v3911 = vadd.f32 %v3876, %v3906
      %v3912 = vadd.f32 %v3850, %v3906
      %v3913 = vadd.f32 %v3879, %v3906
      %v3914 = vadd.f32 %v3852, %v3906
      %v3915 = vadd.f32 %v3881, %v3906
      %v3916 = vadd.f32 %v3855, %v3906
      %v3917 = vadd.f32 %v3884, %v3906
      %v3918 = vadd.f32 %v3857, %v3906
      %v3919 = vadd.f32 %v3886, %v3906
      %v3920 = vadd.f32 %v3860, %v3906
      %v3921 = vadd.f32 %v3889, %v3906
      %v3922 = vadd.f32 %v3862, %v3906
      %v3923 = vadd.f32 %v3891, %v3906
      %3926 = vrot.lane.b32.xlu0 %v3908, 1
      %v3927 = vpop.permute.xlu0 %3926
      %3928 = vrot.lane.b32.xlu0 %v3909, 1
      %v3929 = vpop.permute.xlu0 %3928
      %v3930 = vsel %vm1087, %v3927, %v3929
      %3932 = vrot.lane.b32.xlu0 %v3908, 2
      %v3933 = vpop.permute.xlu0 %3932
      %3934 = vrot.lane.b32.xlu0 %v3909, 2
      %v3935 = vpop.permute.xlu0 %3934
      %v3936 = vsel %vm1094, %v3933, %v3935
      %3938 = vrot.lane.b32.xlu0 %v3908, 3
      %v3939 = vpop.permute.xlu0 %3938
      %3940 = vrot.lane.b32.xlu0 %v3909, 3
      %v3941 = vpop.permute.xlu0 %3940
      %v3942 = vsel %vm1101, %v3939, %v3941
      %3944 = vrot.lane.b32.xlu0 %v3908, 4
      %v3945 = vpop.permute.xlu0 %3944
      %3946 = vrot.lane.b32.xlu0 %v3909, 4
      %v3947 = vpop.permute.xlu0 %3946
      %v3948 = vsel %vm1108, %v3945, %v3947
      %3950 = vrot.lane.b32.xlu0 %v3908, 5
      %v3951 = vpop.permute.xlu0 %3950
      %3952 = vrot.lane.b32.xlu0 %v3909, 5
      %v3953 = vpop.permute.xlu0 %3952
      %v3954 = vsel %vm1115, %v3951, %v3953
      %3956 = vrot.lane.b32.xlu0 %v3908, 6
      %v3957 = vpop.permute.xlu0 %3956
      %3958 = vrot.lane.b32.xlu0 %v3909, 6
      %v3959 = vpop.permute.xlu0 %3958
      %v3960 = vsel %vm1122, %v3957, %v3959
      %3962 = vrot.lane.b32.xlu0 %v3908, 7
      %v3963 = vpop.permute.xlu0 %3962
      %3964 = vrot.lane.b32.xlu0 %v3909, 7
      %v3965 = vpop.permute.xlu0 %3964
      %v3966 = vsel %vm1129, %v3963, %v3965
      %3970 = vrot.lane.b32.xlu0 %v3910, 8
      %v3971 = vpop.permute.xlu0 %3970
      %3972 = vrot.lane.b32.xlu0 %v3911, 8
      %v3973 = vpop.permute.xlu0 %3972
      %v3974 = vsel %vm1138, %v3971, %v3973
      %3976 = vrot.lane.b32.xlu0 %v3910, 9
      %v3977 = vpop.permute.xlu0 %3976
      %3978 = vrot.lane.b32.xlu0 %v3911, 9
      %v3979 = vpop.permute.xlu0 %3978
      %v3980 = vsel %vm1145, %v3977, %v3979
      %3982 = vrot.lane.b32.xlu0 %v3910, 10
      %v3983 = vpop.permute.xlu0 %3982
      %3984 = vrot.lane.b32.xlu0 %v3911, 10
      %v3985 = vpop.permute.xlu0 %3984
      %v3986 = vsel %vm1152, %v3983, %v3985
      %3988 = vrot.lane.b32.xlu0 %v3910, 11
      %v3989 = vpop.permute.xlu0 %3988
      %3990 = vrot.lane.b32.xlu0 %v3911, 11
      %v3991 = vpop.permute.xlu0 %3990
      %v3992 = vsel %vm1159, %v3989, %v3991
      %3994 = vrot.lane.b32.xlu0 %v3910, 12
      %v3995 = vpop.permute.xlu0 %3994
      %3996 = vrot.lane.b32.xlu0 %v3911, 12
      %v3997 = vpop.permute.xlu0 %3996
      %v3998 = vsel %vm1166, %v3995, %v3997
      %4000 = vrot.lane.b32.xlu0 %v3910, 13
      %v4001 = vpop.permute.xlu0 %4000
      %4002 = vrot.lane.b32.xlu0 %v3911, 13
      %v4003 = vpop.permute.xlu0 %4002
      %v4004 = vsel %vm1173, %v4001, %v4003
      %4006 = vrot.lane.b32.xlu0 %v3910, 14
      %v4007 = vpop.permute.xlu0 %4006
      %4008 = vrot.lane.b32.xlu0 %v3911, 14
      %v4009 = vpop.permute.xlu0 %4008
      %v4010 = vsel %vm1180, %v4007, %v4009
      %4012 = vrot.lane.b32.xlu0 %v3910, 15
      %v4013 = vpop.permute.xlu0 %4012
      %4014 = vrot.lane.b32.xlu0 %v3911, 15
      %v4015 = vpop.permute.xlu0 %4014
      %v4016 = vsel %vm1187, %v4013, %v4015
      %v4018 = vsel %vm1190, %v3909, %v3930
      %v4019 = vsel %vm1192, %v4018, %v3936
      %v4020 = vsel %vm1194, %v4019, %v3942
      %v4021 = vsel %vm1196, %v4020, %v3948
      %v4022 = vsel %vm1198, %v4021, %v3954
      %v4023 = vsel %vm1200, %v4022, %v3960
      %v4024 = vsel %vm1202, %v4023, %v3966
      %v4025 = vsel %vm1190, %v3974, %v3980
      %v4026 = vsel %vm1192, %v4025, %v3986
      %v4027 = vsel %vm1194, %v4026, %v3992
      %v4028 = vsel %vm1196, %v4027, %v3998
      %v4029 = vsel %vm1198, %v4028, %v4004
      %v4030 = vsel %vm1200, %v4029, %v4010
      %v4031 = vsel %vm1202, %v4030, %v4016
      %4034 = vrot.lane.b32.xlu0 %v3912, 1
      %v4035 = vpop.permute.xlu0 %4034
      %4036 = vrot.lane.b32.xlu0 %v3913, 1
      %v4037 = vpop.permute.xlu0 %4036
      %v4038 = vsel %vm1087, %v4035, %v4037
      %4041 = vrot.lane.b32.xlu0 %v3912, 2
      %v4042 = vpop.permute.xlu0 %4041
      %4043 = vrot.lane.b32.xlu0 %v3913, 2
      %v4044 = vpop.permute.xlu0 %4043
      %v4045 = vsel %vm1094, %v4042, %v4044
      %4048 = vrot.lane.b32.xlu0 %v3912, 3
      %v4049 = vpop.permute.xlu0 %4048
      %4050 = vrot.lane.b32.xlu0 %v3913, 3
      %v4051 = vpop.permute.xlu0 %4050
      %v4052 = vsel %vm1101, %v4049, %v4051
      %4055 = vrot.lane.b32.xlu0 %v3912, 4
      %v4056 = vpop.permute.xlu0 %4055
      %4057 = vrot.lane.b32.xlu0 %v3913, 4
      %v4058 = vpop.permute.xlu0 %4057
      %v4059 = vsel %vm1108, %v4056, %v4058
      %4062 = vrot.lane.b32.xlu0 %v3912, 5
      %v4063 = vpop.permute.xlu0 %4062
      %4064 = vrot.lane.b32.xlu0 %v3913, 5
      %v4065 = vpop.permute.xlu0 %4064
      %v4066 = vsel %vm1115, %v4063, %v4065
      %4069 = vrot.lane.b32.xlu0 %v3912, 6
      %v4070 = vpop.permute.xlu0 %4069
      %4071 = vrot.lane.b32.xlu0 %v3913, 6
      %v4072 = vpop.permute.xlu0 %4071
      %v4073 = vsel %vm1122, %v4070, %v4072
      %4076 = vrot.lane.b32.xlu0 %v3912, 7
      %v4077 = vpop.permute.xlu0 %4076
      %4078 = vrot.lane.b32.xlu0 %v3913, 7
      %v4079 = vpop.permute.xlu0 %4078
      %v4080 = vsel %vm1129, %v4077, %v4079
      %4085 = vrot.lane.b32.xlu0 %v3914, 8
      %v4086 = vpop.permute.xlu0 %4085
      %4087 = vrot.lane.b32.xlu0 %v3915, 8
      %v4088 = vpop.permute.xlu0 %4087
      %v4089 = vsel %vm1138, %v4086, %v4088
      %4092 = vrot.lane.b32.xlu0 %v3914, 9
      %v4093 = vpop.permute.xlu0 %4092
      %4094 = vrot.lane.b32.xlu0 %v3915, 9
      %v4095 = vpop.permute.xlu0 %4094
      %v4096 = vsel %vm1145, %v4093, %v4095
      %4099 = vrot.lane.b32.xlu0 %v3914, 10
      %v4100 = vpop.permute.xlu0 %4099
      %4101 = vrot.lane.b32.xlu0 %v3915, 10
      %v4102 = vpop.permute.xlu0 %4101
      %v4103 = vsel %vm1152, %v4100, %v4102
      %4106 = vrot.lane.b32.xlu0 %v3914, 11
      %v4107 = vpop.permute.xlu0 %4106
      %4108 = vrot.lane.b32.xlu0 %v3915, 11
      %v4109 = vpop.permute.xlu0 %4108
      %v4110 = vsel %vm1159, %v4107, %v4109
      %4113 = vrot.lane.b32.xlu0 %v3914, 12
      %v4114 = vpop.permute.xlu0 %4113
      %4115 = vrot.lane.b32.xlu0 %v3915, 12
      %v4116 = vpop.permute.xlu0 %4115
      %v4117 = vsel %vm1166, %v4114, %v4116
      %4120 = vrot.lane.b32.xlu0 %v3914, 13
      %v4121 = vpop.permute.xlu0 %4120
      %4122 = vrot.lane.b32.xlu0 %v3915, 13
      %v4123 = vpop.permute.xlu0 %4122
      %v4124 = vsel %vm1173, %v4121, %v4123
      %4127 = vrot.lane.b32.xlu0 %v3914, 14
      %v4128 = vpop.permute.xlu0 %4127
      %4129 = vrot.lane.b32.xlu0 %v3915, 14
      %v4130 = vpop.permute.xlu0 %4129
      %v4131 = vsel %vm1180, %v4128, %v4130
      %4134 = vrot.lane.b32.xlu0 %v3914, 15
      %v4135 = vpop.permute.xlu0 %4134
      %4136 = vrot.lane.b32.xlu0 %v3915, 15
      %v4137 = vpop.permute.xlu0 %4136
      %v4138 = vsel %vm1187, %v4135, %v4137
      %v4141 = vsel %vm1190, %v3912, %v4035
      %v4142 = vsel %vm1190, %v3913, %v4038
      %v4143 = vsel %vm1192, %v4141, %v4042
      %v4144 = vsel %vm1192, %v4142, %v4045
      %v4145 = vsel %vm1194, %v4143, %v4049
      %v4146 = vsel %vm1194, %v4144, %v4052
      %v4147 = vsel %vm1196, %v4145, %v4056
      %v4148 = vsel %vm1196, %v4146, %v4059
      %v4149 = vsel %vm1198, %v4147, %v4063
      %v4150 = vsel %vm1198, %v4148, %v4066
      %v4151 = vsel %vm1200, %v4149, %v4070
      %v4152 = vsel %vm1200, %v4150, %v4073
      %v4153 = vsel %vm1202, %v4151, %v4077
      %v4154 = vsel %vm1202, %v4152, %v4080
      %v4155 = vsel %vm1190, %v4086, %v4093
      %v4156 = vsel %vm1190, %v4089, %v4096
      %v4157 = vsel %vm1192, %v4155, %v4100
      %v4158 = vsel %vm1192, %v4156, %v4103
      %v4159 = vsel %vm1194, %v4157, %v4107
      %v4160 = vsel %vm1194, %v4158, %v4110
      %v4161 = vsel %vm1196, %v4159, %v4114
      %v4162 = vsel %vm1196, %v4160, %v4117
      %v4163 = vsel %vm1198, %v4161, %v4121
      %v4164 = vsel %vm1198, %v4162, %v4124
      %v4165 = vsel %vm1200, %v4163, %v4128
      %v4166 = vsel %vm1200, %v4164, %v4131
      %v4167 = vsel %vm1202, %v4165, %v4135
      %v4168 = vsel %vm1202, %v4166, %v4138
      %4171 = vrot.lane.b32.xlu0 %v3916, 1
      %v4172 = vpop.permute.xlu0 %4171
      %4173 = vrot.lane.b32.xlu0 %v3917, 1
      %v4174 = vpop.permute.xlu0 %4173
      %v4175 = vsel %vm1087, %v4172, %v4174
      %4178 = vrot.lane.b32.xlu0 %v3916, 2
      %v4179 = vpop.permute.xlu0 %4178
      %4180 = vrot.lane.b32.xlu0 %v3917, 2
      %v4181 = vpop.permute.xlu0 %4180
      %v4182 = vsel %vm1094, %v4179, %v4181
      %4185 = vrot.lane.b32.xlu0 %v3916, 3
      %v4186 = vpop.permute.xlu0 %4185
      %4187 = vrot.lane.b32.xlu0 %v3917, 3
      %v4188 = vpop.permute.xlu0 %4187
      %v4189 = vsel %vm1101, %v4186, %v4188
      %4192 = vrot.lane.b32.xlu0 %v3916, 4
      %v4193 = vpop.permute.xlu0 %4192
      %4194 = vrot.lane.b32.xlu0 %v3917, 4
      %v4195 = vpop.permute.xlu0 %4194
      %v4196 = vsel %vm1108, %v4193, %v4195
      %4199 = vrot.lane.b32.xlu0 %v3916, 5
      %v4200 = vpop.permute.xlu0 %4199
      %4201 = vrot.lane.b32.xlu0 %v3917, 5
      %v4202 = vpop.permute.xlu0 %4201
      %v4203 = vsel %vm1115, %v4200, %v4202
      %4206 = vrot.lane.b32.xlu0 %v3916, 6
      %v4207 = vpop.permute.xlu0 %4206
      %4208 = vrot.lane.b32.xlu0 %v3917, 6
      %v4209 = vpop.permute.xlu0 %4208
      %v4210 = vsel %vm1122, %v4207, %v4209
      %4213 = vrot.lane.b32.xlu0 %v3916, 7
      %v4214 = vpop.permute.xlu0 %4213
      %4215 = vrot.lane.b32.xlu0 %v3917, 7
      %v4216 = vpop.permute.xlu0 %4215
      %v4217 = vsel %vm1129, %v4214, %v4216
      %4222 = vrot.lane.b32.xlu0 %v3918, 8
      %v4223 = vpop.permute.xlu0 %4222
      %4224 = vrot.lane.b32.xlu0 %v3919, 8
      %v4225 = vpop.permute.xlu0 %4224
      %v4226 = vsel %vm1138, %v4223, %v4225
      %4229 = vrot.lane.b32.xlu0 %v3918, 9
      %v4230 = vpop.permute.xlu0 %4229
      %4231 = vrot.lane.b32.xlu0 %v3919, 9
      %v4232 = vpop.permute.xlu0 %4231
      %v4233 = vsel %vm1145, %v4230, %v4232
      %4236 = vrot.lane.b32.xlu0 %v3918, 10
      %v4237 = vpop.permute.xlu0 %4236
      %4238 = vrot.lane.b32.xlu0 %v3919, 10
      %v4239 = vpop.permute.xlu0 %4238
      %v4240 = vsel %vm1152, %v4237, %v4239
      %4243 = vrot.lane.b32.xlu0 %v3918, 11
      %v4244 = vpop.permute.xlu0 %4243
      %4245 = vrot.lane.b32.xlu0 %v3919, 11
      %v4246 = vpop.permute.xlu0 %4245
      %v4247 = vsel %vm1159, %v4244, %v4246
      %4250 = vrot.lane.b32.xlu0 %v3918, 12
      %v4251 = vpop.permute.xlu0 %4250
      %4252 = vrot.lane.b32.xlu0 %v3919, 12
      %v4253 = vpop.permute.xlu0 %4252
      %v4254 = vsel %vm1166, %v4251, %v4253
      %4257 = vrot.lane.b32.xlu0 %v3918, 13
      %v4258 = vpop.permute.xlu0 %4257
      %4259 = vrot.lane.b32.xlu0 %v3919, 13
      %v4260 = vpop.permute.xlu0 %4259
      %v4261 = vsel %vm1173, %v4258, %v4260
      %4264 = vrot.lane.b32.xlu0 %v3918, 14
      %v4265 = vpop.permute.xlu0 %4264
      %4266 = vrot.lane.b32.xlu0 %v3919, 14
      %v4267 = vpop.permute.xlu0 %4266
      %v4268 = vsel %vm1180, %v4265, %v4267
      %4271 = vrot.lane.b32.xlu0 %v3918, 15
      %v4272 = vpop.permute.xlu0 %4271
      %4273 = vrot.lane.b32.xlu0 %v3919, 15
      %v4274 = vpop.permute.xlu0 %4273
      %v4275 = vsel %vm1187, %v4272, %v4274
      %v4278 = vsel %vm1190, %v3916, %v4172
      %v4279 = vsel %vm1190, %v3917, %v4175
      %v4280 = vsel %vm1192, %v4278, %v4179
      %v4281 = vsel %vm1192, %v4279, %v4182
      %v4282 = vsel %vm1194, %v4280, %v4186
      %v4283 = vsel %vm1194, %v4281, %v4189
      %v4284 = vsel %vm1196, %v4282, %v4193
      %v4285 = vsel %vm1196, %v4283, %v4196
      %v4286 = vsel %vm1198, %v4284, %v4200
      %v4287 = vsel %vm1198, %v4285, %v4203
      %v4288 = vsel %vm1200, %v4286, %v4207
      %v4289 = vsel %vm1200, %v4287, %v4210
      %v4290 = vsel %vm1202, %v4288, %v4214
      %v4291 = vsel %vm1202, %v4289, %v4217
      %v4292 = vsel %vm1190, %v4223, %v4230
      %v4293 = vsel %vm1190, %v4226, %v4233
      %v4294 = vsel %vm1192, %v4292, %v4237
      %v4295 = vsel %vm1192, %v4293, %v4240
      %v4296 = vsel %vm1194, %v4294, %v4244
      %v4297 = vsel %vm1194, %v4295, %v4247
      %v4298 = vsel %vm1196, %v4296, %v4251
      %v4299 = vsel %vm1196, %v4297, %v4254
      %v4300 = vsel %vm1198, %v4298, %v4258
      %v4301 = vsel %vm1198, %v4299, %v4261
      %v4302 = vsel %vm1200, %v4300, %v4265
      %v4303 = vsel %vm1200, %v4301, %v4268
      %v4304 = vsel %vm1202, %v4302, %v4272
      %v4305 = vsel %vm1202, %v4303, %v4275
      %4308 = vrot.lane.b32.xlu0 %v3920, 1
      %v4309 = vpop.permute.xlu0 %4308
      %4310 = vrot.lane.b32.xlu0 %v3921, 1
      %v4311 = vpop.permute.xlu0 %4310
      %v4312 = vsel %vm1087, %v4309, %v4311
      %4315 = vrot.lane.b32.xlu0 %v3920, 2
      %v4316 = vpop.permute.xlu0 %4315
      %4317 = vrot.lane.b32.xlu0 %v3921, 2
      %v4318 = vpop.permute.xlu0 %4317
      %v4319 = vsel %vm1094, %v4316, %v4318
      %4322 = vrot.lane.b32.xlu0 %v3920, 3
      %v4323 = vpop.permute.xlu0 %4322
      %4324 = vrot.lane.b32.xlu0 %v3921, 3
      %v4325 = vpop.permute.xlu0 %4324
      %v4326 = vsel %vm1101, %v4323, %v4325
      %4329 = vrot.lane.b32.xlu0 %v3920, 4
      %v4330 = vpop.permute.xlu0 %4329
      %4331 = vrot.lane.b32.xlu0 %v3921, 4
      %v4332 = vpop.permute.xlu0 %4331
      %v4333 = vsel %vm1108, %v4330, %v4332
      %4336 = vrot.lane.b32.xlu0 %v3920, 5
      %v4337 = vpop.permute.xlu0 %4336
      %4338 = vrot.lane.b32.xlu0 %v3921, 5
      %v4339 = vpop.permute.xlu0 %4338
      %v4340 = vsel %vm1115, %v4337, %v4339
      %4343 = vrot.lane.b32.xlu0 %v3920, 6
      %v4344 = vpop.permute.xlu0 %4343
      %4345 = vrot.lane.b32.xlu0 %v3921, 6
      %v4346 = vpop.permute.xlu0 %4345
      %v4347 = vsel %vm1122, %v4344, %v4346
      %4350 = vrot.lane.b32.xlu0 %v3920, 7
      %v4351 = vpop.permute.xlu0 %4350
      %4352 = vrot.lane.b32.xlu0 %v3921, 7
      %v4353 = vpop.permute.xlu0 %4352
      %v4354 = vsel %vm1129, %v4351, %v4353
      %4359 = vrot.lane.b32.xlu0 %v3922, 8
      %v4360 = vpop.permute.xlu0 %4359
      %4361 = vrot.lane.b32.xlu0 %v3923, 8
      %v4362 = vpop.permute.xlu0 %4361
      %v4363 = vsel %vm1138, %v4360, %v4362
      %4366 = vrot.lane.b32.xlu0 %v3922, 9
      %v4367 = vpop.permute.xlu0 %4366
      %4368 = vrot.lane.b32.xlu0 %v3923, 9
      %v4369 = vpop.permute.xlu0 %4368
      %v4370 = vsel %vm1145, %v4367, %v4369
      %4373 = vrot.lane.b32.xlu0 %v3922, 10
      %v4374 = vpop.permute.xlu0 %4373
      %4375 = vrot.lane.b32.xlu0 %v3923, 10
      %v4376 = vpop.permute.xlu0 %4375
      %v4377 = vsel %vm1152, %v4374, %v4376
      %4380 = vrot.lane.b32.xlu0 %v3922, 11
      %v4381 = vpop.permute.xlu0 %4380
      %4382 = vrot.lane.b32.xlu0 %v3923, 11
      %v4383 = vpop.permute.xlu0 %4382
      %v4384 = vsel %vm1159, %v4381, %v4383
      %4387 = vrot.lane.b32.xlu0 %v3922, 12
      %v4388 = vpop.permute.xlu0 %4387
      %4389 = vrot.lane.b32.xlu0 %v3923, 12
      %v4390 = vpop.permute.xlu0 %4389
      %v4391 = vsel %vm1166, %v4388, %v4390
      %4394 = vrot.lane.b32.xlu0 %v3922, 13
      %v4395 = vpop.permute.xlu0 %4394
      %4396 = vrot.lane.b32.xlu0 %v3923, 13
      %v4397 = vpop.permute.xlu0 %4396
      %v4398 = vsel %vm1173, %v4395, %v4397
      %4401 = vrot.lane.b32.xlu0 %v3922, 14
      %v4402 = vpop.permute.xlu0 %4401
      %4403 = vrot.lane.b32.xlu0 %v3923, 14
      %v4404 = vpop.permute.xlu0 %4403
      %v4405 = vsel %vm1180, %v4402, %v4404
      %4408 = vrot.lane.b32.xlu0 %v3922, 15
      %v4409 = vpop.permute.xlu0 %4408
      %4410 = vrot.lane.b32.xlu0 %v3923, 15
      %v4411 = vpop.permute.xlu0 %4410
      %v4412 = vsel %vm1187, %v4409, %v4411
      %v4415 = vsel %vm1190, %v3920, %v4309
      %v4416 = vsel %vm1190, %v3921, %v4312
      %v4417 = vsel %vm1192, %v4415, %v4316
      %v4418 = vsel %vm1192, %v4416, %v4319
      %v4419 = vsel %vm1194, %v4417, %v4323
      %v4420 = vsel %vm1194, %v4418, %v4326
      %v4421 = vsel %vm1196, %v4419, %v4330
      %v4422 = vsel %vm1196, %v4420, %v4333
      %v4423 = vsel %vm1198, %v4421, %v4337
      %v4424 = vsel %vm1198, %v4422, %v4340
      %v4425 = vsel %vm1200, %v4423, %v4344
      %v4426 = vsel %vm1200, %v4424, %v4347
      %v4427 = vsel %vm1202, %v4425, %v4351
      %v4428 = vsel %vm1202, %v4426, %v4354
      %v4429 = vsel %vm1190, %v4360, %v4367
      %v4430 = vsel %vm1190, %v4363, %v4370
      %v4431 = vsel %vm1192, %v4429, %v4374
      %v4432 = vsel %vm1192, %v4430, %v4377
      %v4433 = vsel %vm1194, %v4431, %v4381
      %v4434 = vsel %vm1194, %v4432, %v4384
      %v4435 = vsel %vm1196, %v4433, %v4388
      %v4436 = vsel %vm1196, %v4434, %v4391
      %v4437 = vsel %vm1198, %v4435, %v4395
      %v4438 = vsel %vm1198, %v4436, %v4398
      %v4439 = vsel %vm1200, %v4437, %v4402
      %v4440 = vsel %vm1200, %v4438, %v4405
      %v4441 = vsel %vm1202, %v4439, %v4409
      %v4442 = vsel %vm1202, %v4440, %v4412
      %4447 = vrot.lane.b32.xlu0 %v4153, 16
      %v4448 = vpop.permute.xlu0 %4447
      %4449 = vrot.lane.b32.xlu0 %v4154, 16
      %v4450 = vpop.permute.xlu0 %4449
      %4451 = vrot.lane.b32.xlu0 %v4167, 16
      %v4452 = vpop.permute.xlu0 %4451
      %4453 = vrot.lane.b32.xlu0 %v4168, 16
      %v4454 = vpop.permute.xlu0 %4453
      %v4455 = vsel %vm1634, %v4448, %v4450
      %v4456 = vsel %vm1634, %v4452, %v4454
      %4463 = vrot.lane.b32.xlu0 %v4290, 32
      %v4464 = vpop.permute.xlu0 %4463
      %4465 = vrot.lane.b32.xlu0 %v4291, 32
      %v4466 = vpop.permute.xlu0 %4465
      %4467 = vrot.lane.b32.xlu0 %v4304, 32
      %v4468 = vpop.permute.xlu0 %4467
      %4469 = vrot.lane.b32.xlu0 %v4305, 32
      %v4470 = vpop.permute.xlu0 %4469
      %v4471 = vsel %vm943, %v4464, %v4466
      %v4472 = vsel %vm943, %v4468, %v4470
      %4479 = vrot.lane.b32.xlu0 %v4427, 48
      %v4480 = vpop.permute.xlu0 %4479
      %4481 = vrot.lane.b32.xlu0 %v4428, 48
      %v4482 = vpop.permute.xlu0 %4481
      %4483 = vrot.lane.b32.xlu0 %v4441, 48
      %v4484 = vpop.permute.xlu0 %4483
      %4485 = vrot.lane.b32.xlu0 %v4442, 48
      %v4486 = vpop.permute.xlu0 %4485
      %v4487 = vsel %vm1667, %v4480, %v4482
      %v4488 = vsel %vm1667, %v4484, %v4486
      %v4491 = vadd.f32 %v3894, %v4024
      %v4492 = vadd.f32 %v3895, %v4031
      %v4493 = vadd.f32 %v3896, %v4455
      %v4494 = vadd.f32 %v3897, %v4456
      %v4495 = vadd.f32 %v3898, %v4471
      %v4496 = vadd.f32 %v3899, %v4472
      %v4497 = vadd.f32 %v3900, %v4487
      %v4498 = vadd.f32 %v3901, %v4488
      %v4499 = vsub.f32 %v4491, %v867
      %v4500 = vsub.f32 %v4492, %v868
      %v4501 = vsub.f32 %v4493, %v869
      %v4502 = vsub.f32 %v4494, %v870
      %v4503 = vsub.f32 %v4495, %v871
      %v4504 = vsub.f32 %v4496, %v872
      %v4505 = vsub.f32 %v4497, %v873
      %v4506 = vsub.f32 %v4498, %v874
      %v4507 = vsel %vm1688, %v4499, -inf
      %4508 = vmax.xlane.f32.xlu0 %v4507
      %v4509 = vpop.xlane.xlu0 %4508
      %v4510 = vsel %vm1688, %v4500, -inf
      %4511 = vmax.xlane.f32.xlu0 %v4510
      %v4512 = vpop.xlane.xlu0 %4511
      %v4513 = vsel %vm1688, %v4501, -inf
      %4514 = vmax.xlane.f32.xlu0 %v4513
      %v4515 = vpop.xlane.xlu0 %4514
      %v4516 = vsel %vm1688, %v4502, -inf
      %4517 = vmax.xlane.f32.xlu0 %v4516
      %v4518 = vpop.xlane.xlu0 %4517
      %v4519 = vsel %vm1688, %v4503, -inf
      %4520 = vmax.xlane.f32.xlu0 %v4519
      %v4521 = vpop.xlane.xlu0 %4520
      %v4522 = vsel %vm1688, %v4504, -inf
      %4523 = vmax.xlane.f32.xlu0 %v4522
      %v4524 = vpop.xlane.xlu0 %4523
      %v4525 = vsel %vm1688, %v4505, -inf
      %4526 = vmax.xlane.f32.xlu0 %v4525
      %v4527 = vpop.xlane.xlu0 %4526
      %v4528 = vsel %vm1688, %v4506, -inf
      %4529 = vmax.xlane.f32.xlu0 %v4528
      %v4530 = vpop.xlane.xlu0 %4529
      %v4531 = vsub.f32 %v4499, %v4509
      %v4532 = vsub.f32 %v4500, %v4512
      %v4533 = vsub.f32 %v4501, %v4515
      %v4534 = vsub.f32 %v4502, %v4518
      %v4535 = vsub.f32 %v4503, %v4521
      %v4536 = vsub.f32 %v4504, %v4524
      %v4537 = vsub.f32 %v4505, %v4527
      %v4538 = vsub.f32 %v4506, %v4530
      %v4539 = vmul.f32 %v4531, 1.442695
      %v4540 = vpow.pop %v4539
      %v4541 = vmul.f32 %v4532, 1.442695
      %v4542 = vpow.pop %v4541
      %v4543 = vmul.f32 %v4533, 1.442695
      %v4544 = vpow.pop %v4543
      %v4545 = vmul.f32 %v4534, 1.442695
      %v4546 = vpow.pop %v4545
      %v4547 = vmul.f32 %v4535, 1.442695
      %v4548 = vpow.pop %v4547
      %v4549 = vmul.f32 %v4536, 1.442695
      %v4550 = vpow.pop %v4549
      %v4551 = vmul.f32 %v4537, 1.442695
      %v4552 = vpow.pop %v4551
      %v4553 = vmul.f32 %v4538, 1.442695
      %v4554 = vpow.pop %v4553
      %v4555 = vsel %vm1688, %v4540, 0.0
      %4556 = vadd.xlane.f32.xlu0 %v4555
      %v4557 = vpop.xlane.xlu0 %4556
      %v4558 = vsel %vm1688, %v4542, 0.0
      %4559 = vadd.xlane.f32.xlu0 %v4558
      %v4560 = vpop.xlane.xlu0 %4559
      %v4561 = vsel %vm1688, %v4544, 0.0
      %4562 = vadd.xlane.f32.xlu0 %v4561
      %v4563 = vpop.xlane.xlu0 %4562
      %v4564 = vsel %vm1688, %v4546, 0.0
      %4565 = vadd.xlane.f32.xlu0 %v4564
      %v4566 = vpop.xlane.xlu0 %4565
      %v4567 = vsel %vm1688, %v4548, 0.0
      %4568 = vadd.xlane.f32.xlu0 %v4567
      %v4569 = vpop.xlane.xlu0 %4568
      %v4570 = vsel %vm1688, %v4550, 0.0
      %4571 = vadd.xlane.f32.xlu0 %v4570
      %v4572 = vpop.xlane.xlu0 %4571
      %v4573 = vsel %vm1688, %v4552, 0.0
      %4574 = vadd.xlane.f32.xlu0 %v4573
      %v4575 = vpop.xlane.xlu0 %4574
      %v4576 = vsel %vm1688, %v4554, 0.0
      %4577 = vadd.xlane.f32.xlu0 %v4576
      %v4578 = vpop.xlane.xlu0 %4577
      %v4579 = vrcp.pop %v4557
      %v4580 = vrcp.pop %v4560
      %v4581 = vrcp.pop %v4563
      %v4582 = vrcp.pop %v4566
      %v4583 = vrcp.pop %v4569
      %v4584 = vrcp.pop %v4572
      %v4585 = vrcp.pop %v4575
      %v4586 = vrcp.pop %v4578
      %v4587 = vmul.f32 %v4540, %v4579
      %v4588 = vmul.f32 %v4542, %v4580
      %v4589 = vmul.f32 %v4544, %v4581
      %v4590 = vmul.f32 %v4546, %v4582
      %v4591 = vmul.f32 %v4548, %v4583
      %v4592 = vmul.f32 %v4550, %v4584
      %v4593 = vmul.f32 %v4552, %v4585
      %v4594 = vmul.f32 %v4554, %v4586
      %v4595 = vpack.c.bf16 %v4588, %v4587
      %v4596 = vpack.c.bf16 %v4590, %v4589
      %v4597 = vpack.c.bf16 %v4592, %v4591
      %v4598 = vpack.c.bf16 %v4594, %v4593
      %4599 = vrot.lane.b32.xlu0 %v1797, 32
      %v4600 = vpop.permute.xlu0 %4599
      %4601 = vrot.lane.b32.xlu0 %v1798, 32
      %v4602 = vpop.permute.xlu0 %4601
      %4603 = vrot.lane.b32.xlu0 %v1799, 32
      %v4604 = vpop.permute.xlu0 %4603
      %4605 = vrot.lane.b32.xlu0 %v1800, 32
      %v4606 = vpop.permute.xlu0 %4605
      %v4612 = vsel %vm1688, %v4595, 0
      %v4615 = vsel %vm1688, %v4596, 0
      %v4618 = vsel %vm1688, %v4597, 0
      %v4621 = vsel %vm1688, %v4598, 0
      %4623 = vmatpush.bf16.msra.mxu0 0
      %4624 = vmatpush.bf16.msra.mxu0 0
      %4625 = vmatpush.bf16.msra.mxu0 0
      %4626 = vmatpush.bf16.msra.mxu0 0
      %4627 = vmatpush.bf16.msra.mxu0 %v4606
      %4628 = vmatpush.bf16.msra.mxu0 %v4604
      %4629 = vmatpush.bf16.msra.mxu0 %v4602
      %4630 = vmatpush.bf16.msra.mxu0 %v4600
      %4631 = vmatmul.bf16.gmra.mxu0 %v4612
      %v4632 = vpop.f32.mrf.mxu0
      %v4633 = vadd.f32 0.0, %v4632
      %v4634 = vpop.f32.mrf.mxu0
      %v4635 = vadd.f32 0.0, %v4634
      %4636 = vmatmul.bf16.gmra.mxu0 %v4615
      %v4637 = vpop.f32.mrf.mxu0
      %v4638 = vadd.f32 0.0, %v4637
      %v4639 = vpop.f32.mrf.mxu0
      %v4640 = vadd.f32 0.0, %v4639
      %4641 = vmatmul.bf16.gmra.mxu0 %v4618
      %v4642 = vpop.f32.mrf.mxu0
      %v4643 = vadd.f32 0.0, %v4642
      %v4644 = vpop.f32.mrf.mxu0
      %v4645 = vadd.f32 0.0, %v4644
      %4646 = vmatmul.bf16.gmra.mxu0 %v4621
      %v4647 = vpop.f32.mrf.mxu0
      %v4648 = vadd.f32 0.0, %v4647
      %v4649 = vpop.f32.mrf.mxu0
      %v4650 = vadd.f32 0.0, %v4649
      %4651 = vdwg.mxu0
      %v4652 = vpack.c.bf16 %v4633, %v4633
      %v4653 = vpack.c.bf16 %v4635, %v4635
      %v4654 = vpack.c.bf16 %v4638, %v4638
      %v4655 = vpack.c.bf16 %v4640, %v4640
      %v4656 = vpack.c.bf16 %v4643, %v4643
      %v4657 = vpack.c.bf16 %v4645, %v4645
      %v4658 = vpack.c.bf16 %v4648, %v4648
      %v4659 = vpack.c.bf16 %v4650, %v4650
      %4668 = vrot.lane.b32.xlu0 %v4652, 96
      %v4669 = vpop.permute.xlu0 %4668
      %4670 = vrot.lane.b32.xlu0 %v4653, 96
      %v4671 = vpop.permute.xlu0 %4670
      %4672 = vrot.lane.b32.xlu0 %v4654, 96
      %v4673 = vpop.permute.xlu0 %4672
      %4674 = vrot.lane.b32.xlu0 %v4655, 96
      %v4675 = vpop.permute.xlu0 %4674
      %4676 = vrot.lane.b32.xlu0 %v4656, 96
      %v4677 = vpop.permute.xlu0 %4676
      %4678 = vrot.lane.b32.xlu0 %v4657, 96
      %v4679 = vpop.permute.xlu0 %4678
      %4680 = vrot.lane.b32.xlu0 %v4658, 96
      %v4681 = vpop.permute.xlu0 %4680
      %4682 = vrot.lane.b32.xlu0 %v4659, 96
      %v4683 = vpop.permute.xlu0 %4682
      %vm4692 = vcmask 1044224
      %4693 = vst.msk [vmem:[#allocation2] sm:$0xf] %vm4692, %v4669
      %4694 = vst.msk [vmem:[#allocation2 + $0x4] sm:$0xf] %vm4692, %v4671
      %4695 = vst.msk [vmem:[#allocation2 + $0x8] sm:$0xf] %vm4692, %v4673
      %4696 = vst.msk [vmem:[#allocation2 + $0xc] sm:$0xf] %vm4692, %v4675
      %4697 = vst.msk [vmem:[#allocation2 + $0x10] sm:$0xf] %vm4692, %v4677
      %4698 = vst.msk [vmem:[#allocation2 + $0x14] sm:$0xf] %vm4692, %v4679
      %4699 = vst.msk [vmem:[#allocation2 + $0x18] sm:$0xf] %vm4692, %v4681
      %4700 = vst.msk [vmem:[#allocation2 + $0x1c] sm:$0xf] %vm4692, %v4683
      %v4701 = vld [vmem:[#allocation2] sm:$0xf]
      %v4702 = vld [vmem:[#allocation2 + $0x4] sm:$0xf]
      %v4703 = vld [vmem:[#allocation2 + $0x8] sm:$0xf]
      %v4704 = vld [vmem:[#allocation2 + $0xc] sm:$0xf]
      %v4705 = vld [vmem:[#allocation2 + $0x10] sm:$0xf]
      %v4706 = vld [vmem:[#allocation2 + $0x14] sm:$0xf]
      %v4707 = vld [vmem:[#allocation2 + $0x18] sm:$0xf]
      %v4708 = vld [vmem:[#allocation2 + $0x1c] sm:$0xf]
      %v4709 = vld [vmem:[%s2] sm:$0xf]
      %v4710 = vld [vmem:[%s2 + $0x4] sm:$0xf]
      %v4711 = vld [vmem:[%s2 + $0x8] sm:$0xf]
      %v4712 = vld [vmem:[%s2 + $0xc] sm:$0xf]
      %v4713 = vld [vmem:[%s2 + $0x10] sm:$0xf]
      %v4714 = vld [vmem:[%s2 + $0x14] sm:$0xf]
      %v4715 = vld [vmem:[%s2 + $0x18] sm:$0xf]
      %v4716 = vld [vmem:[%s2 + $0x1c] sm:$0xf]
      %v4717 = vld [vmem:[%s2 + $0x20] sm:$0xf]
      %v4718 = vld [vmem:[%s2 + $0x24] sm:$0xf]
      %v4719 = vld [vmem:[%s2 + $0x28] sm:$0xf]
      %v4720 = vld [vmem:[%s2 + $0x2c] sm:$0xf]
      %v4721 = vld [vmem:[%s2 + $0x30] sm:$0xf]
      %v4722 = vld [vmem:[%s2 + $0x34] sm:$0xf]
      %v4723 = vld [vmem:[%s2 + $0x38] sm:$0xf]
      %v4724 = vld [vmem:[%s2 + $0x3c] sm:$0xf]
      %v4725 = vunpack.c.l.bf16 %v510
      %v4726 = vunpack.c.l.bf16 %v511
      %v4727 = vunpack.c.l.bf16 %v512
      %v4728 = vunpack.c.l.bf16 %v513
      %v4729 = vunpack.c.l.bf16 %v514
      %v4730 = vunpack.c.l.bf16 %v515
      %v4731 = vunpack.c.l.bf16 %v516
      %v4732 = vunpack.c.l.bf16 %v517
      %v4741 = vunpack.c.l.b16 %v4701
      %v4742 = vunpack.c.l.b16 %v4702
      %v4743 = vunpack.c.l.b16 %v4703
      %v4744 = vunpack.c.l.b16 %v4704
      %v4745 = vunpack.c.l.b16 %v4705
      %v4746 = vunpack.c.l.b16 %v4706
      %v4747 = vunpack.c.l.b16 %v4707
      %v4748 = vunpack.c.l.b16 %v4708
      %v4749 = vpack.c.b16 %v4742, %v4741
      %v4750 = vpack.c.b16 %v4744, %v4743
      %v4751 = vpack.c.b16 %v4746, %v4745
      %v4752 = vpack.c.b16 %v4748, %v4747
      %v4773 = vunpack.c.l.b16 %v4709
      %v4774 = vunpack.c.l.b16 %v4710
      %v4775 = vunpack.c.l.b16 %v4711
      %v4776 = vunpack.c.l.b16 %v4712
      %v4777 = vunpack.c.l.b16 %v4713
      %v4778 = vunpack.c.l.b16 %v4714
      %v4779 = vunpack.c.l.b16 %v4715
      %v4780 = vunpack.c.l.b16 %v4716
      %v4781 = vunpack.c.l.b16 %v4717
      %v4782 = vunpack.c.l.b16 %v4718
      %v4783 = vunpack.c.l.b16 %v4719
      %v4784 = vunpack.c.l.b16 %v4720
      %v4785 = vunpack.c.l.b16 %v4721
      %v4786 = vunpack.c.l.b16 %v4722
      %v4787 = vunpack.c.l.b16 %v4723
      %v4788 = vunpack.c.l.b16 %v4724
      %v4789 = vpack.c.b16 %v4774, %v4773
      %v4790 = vpack.c.b16 %v4776, %v4775
      %v4791 = vpack.c.b16 %v4778, %v4777
      %v4792 = vpack.c.b16 %v4780, %v4779
      %v4793 = vpack.c.b16 %v4782, %v4781
      %v4794 = vpack.c.b16 %v4784, %v4783
      %v4795 = vpack.c.b16 %v4786, %v4785
      %v4796 = vpack.c.b16 %v4788, %v4787
      %4805 = vmatpush.bf16.msra.mxu0 %v4796
      %4806 = vmatpush.bf16.msra.mxu0 %v4795
      %4807 = vmatpush.bf16.msra.mxu0 %v4794
      %4808 = vmatpush.bf16.msra.mxu0 %v4793
      %4809 = vmatpush.bf16.msra.mxu0 %v4792
      %4810 = vmatpush.bf16.msra.mxu0 %v4791
      %4811 = vmatpush.bf16.msra.mxu0 %v4790
      %4812 = vmatpush.bf16.msra.mxu0 %v4789
      %4813 = vmatmul.bf16.gmra.mxu0 %v4749
      %v4814 = vpop.f32.mrf.mxu0
      %v4815 = vadd.f32 %v4725, %v4814
      %v4816 = vpop.f32.mrf.mxu0
      %v4817 = vadd.f32 %v4726, %v4816
      %4818 = vmatmul.bf16.gmra.mxu0 %v4750
      %v4819 = vpop.f32.mrf.mxu0
      %v4820 = vadd.f32 %v4727, %v4819
      %v4821 = vpop.f32.mrf.mxu0
      %v4822 = vadd.f32 %v4728, %v4821
      %4823 = vmatmul.bf16.gmra.mxu0 %v4751
      %v4824 = vpop.f32.mrf.mxu0
      %v4825 = vadd.f32 %v4729, %v4824
      %v4826 = vpop.f32.mrf.mxu0
      %v4827 = vadd.f32 %v4730, %v4826
      %4828 = vmatmul.bf16.gmra.mxu0 %v4752
      %v4829 = vpop.f32.mrf.mxu0
      %v4830 = vadd.f32 %v4731, %v4829
      %v4831 = vpop.f32.mrf.mxu0
      %v4832 = vadd.f32 %v4732, %v4831
      %4833 = vdwg.mxu0
      %v4834 = vld [vmem:[%s7] sm:$0x1]
      %v4835 = vld [vmem:[%s8] sm:$0x1]
      %4836 = vadd.xlane.f32.xlu0 %v4815
      %v4837 = vpop.xlane.xlu0 %4836
      %4838 = vadd.xlane.f32.xlu0 %v4817
      %v4839 = vpop.xlane.xlu0 %4838
      %4840 = vadd.xlane.f32.xlu0 %v4820
      %v4841 = vpop.xlane.xlu0 %4840
      %4842 = vadd.xlane.f32.xlu0 %v4822
      %v4843 = vpop.xlane.xlu0 %4842
      %4844 = vadd.xlane.f32.xlu0 %v4825
      %v4845 = vpop.xlane.xlu0 %4844
      %4846 = vadd.xlane.f32.xlu0 %v4827
      %v4847 = vpop.xlane.xlu0 %4846
      %4848 = vadd.xlane.f32.xlu0 %v4830
      %v4849 = vpop.xlane.xlu0 %4848
      %4850 = vadd.xlane.f32.xlu0 %v4832
      %v4851 = vpop.xlane.xlu0 %4850
      %v4852 = vrcp.pop 128.0
      %v4853 = vmul.f32 128.0, %v4852
      %v4854 = vsub.f32 1.0, %v4853
      %v4855 = vmul.f32 %v4852, %v4854
      %v4856 = vadd.f32 %v4852, %v4855
      %vm4857 = vweird.f32 %v4852
      %v4858 = vsel %vm4857, %v4852, %v4856
      %v4859 = vmul.f32 %v4837, %v4858
      %v4860 = vmul.f32 %v4839, %v4858
      %v4861 = vmul.f32 %v4841, %v4858
      %v4862 = vmul.f32 %v4843, %v4858
      %v4863 = vmul.f32 %v4845, %v4858
      %v4864 = vmul.f32 %v4847, %v4858
      %v4865 = vmul.f32 %v4849, %v4858
      %v4866 = vmul.f32 %v4851, %v4858
      %v4867 = vsub.f32 %v4815, %v4859
      %v4868 = vsub.f32 %v4817, %v4860
      %v4869 = vsub.f32 %v4820, %v4861
      %v4870 = vsub.f32 %v4822, %v4862
      %v4871 = vsub.f32 %v4825, %v4863
      %v4872 = vsub.f32 %v4827, %v4864
      %v4873 = vsub.f32 %v4830, %v4865
      %v4874 = vsub.f32 %v4832, %v4866
      %v4875 = vmul.f32 %v4867, %v4867
      %v4876 = vmul.f32 %v4868, %v4868
      %v4877 = vmul.f32 %v4869, %v4869
      %v4878 = vmul.f32 %v4870, %v4870
      %v4879 = vmul.f32 %v4871, %v4871
      %v4880 = vmul.f32 %v4872, %v4872
      %v4881 = vmul.f32 %v4873, %v4873
      %v4882 = vmul.f32 %v4874, %v4874
      %4883 = vadd.xlane.f32.xlu0 %v4875
      %v4884 = vpop.xlane.xlu0 %4883
      %4885 = vadd.xlane.f32.xlu0 %v4876
      %v4886 = vpop.xlane.xlu0 %4885
      %4887 = vadd.xlane.f32.xlu0 %v4877
      %v4888 = vpop.xlane.xlu0 %4887
      %4889 = vadd.xlane.f32.xlu0 %v4878
      %v4890 = vpop.xlane.xlu0 %4889
      %4891 = vadd.xlane.f32.xlu0 %v4879
      %v4892 = vpop.xlane.xlu0 %4891
      %4893 = vadd.xlane.f32.xlu0 %v4880
      %v4894 = vpop.xlane.xlu0 %4893
      %4895 = vadd.xlane.f32.xlu0 %v4881
      %v4896 = vpop.xlane.xlu0 %4895
      %4897 = vadd.xlane.f32.xlu0 %v4882
      %v4898 = vpop.xlane.xlu0 %4897
      %v4899 = vmul.f32 %v4884, %v4858
      %v4900 = vmul.f32 %v4886, %v4858
      %v4901 = vmul.f32 %v4888, %v4858
      %v4902 = vmul.f32 %v4890, %v4858
      %v4903 = vmul.f32 %v4892, %v4858
      %v4904 = vmul.f32 %v4894, %v4858
      %v4905 = vmul.f32 %v4896, %v4858
      %v4906 = vmul.f32 %v4898, %v4858
      %v4907 = vadd.f32 %v4899, 1e-12
      %v4908 = vadd.f32 %v4900, 1e-12
      %v4909 = vadd.f32 %v4901, 1e-12
      %v4910 = vadd.f32 %v4902, 1e-12
      %v4911 = vadd.f32 %v4903, 1e-12
      %v4912 = vadd.f32 %v4904, 1e-12
      %v4913 = vadd.f32 %v4905, 1e-12
      %v4914 = vadd.f32 %v4906, 1e-12
      %v4915 = vrsqrt.pop %v4907
      %v4916 = vmul.f32 %v4915, %v4907
      %v4917 = vmul.f32 %v4916, %v4915
      %v4918 = vmul.f32 0.5, %v4917
      %v4919 = vsub.f32 1.5, %v4918
      %v4920 = vmul.f32 %v4915, %v4919
      %vm4921 = vweird.f32 %v4907
      %vm4922 = vweird.f32 %v4915
      %vm4923 = vmor %vm4921, %vm4922
      %v4924 = vsel %vm4923, %v4915, %v4920
      %v4925 = vrsqrt.pop %v4908
      %v4926 = vmul.f32 %v4925, %v4908
      %v4927 = vmul.f32 %v4926, %v4925
      %v4928 = vmul.f32 0.5, %v4927
      %v4929 = vsub.f32 1.5, %v4928
      %v4930 = vmul.f32 %v4925, %v4929
      %vm4931 = vweird.f32 %v4908
      %vm4932 = vweird.f32 %v4925
      %vm4933 = vmor %vm4931, %vm4932
      %v4934 = vsel %vm4933, %v4925, %v4930
      %v4935 = vrsqrt.pop %v4909
      %v4936 = vmul.f32 %v4935, %v4909
      %v4937 = vmul.f32 %v4936, %v4935
      %v4938 = vmul.f32 0.5, %v4937
      %v4939 = vsub.f32 1.5, %v4938
      %v4940 = vmul.f32 %v4935, %v4939
      %vm4941 = vweird.f32 %v4909
      %vm4942 = vweird.f32 %v4935
      %vm4943 = vmor %vm4941, %vm4942
      %v4944 = vsel %vm4943, %v4935, %v4940
      %v4945 = vrsqrt.pop %v4910
      %v4946 = vmul.f32 %v4945, %v4910
      %v4947 = vmul.f32 %v4946, %v4945
      %v4948 = vmul.f32 0.5, %v4947
      %v4949 = vsub.f32 1.5, %v4948
      %v4950 = vmul.f32 %v4945, %v4949
      %vm4951 = vweird.f32 %v4910
      %vm4952 = vweird.f32 %v4945
      %vm4953 = vmor %vm4951, %vm4952
      %v4954 = vsel %vm4953, %v4945, %v4950
      %v4955 = vrsqrt.pop %v4911
      %v4956 = vmul.f32 %v4955, %v4911
      %v4957 = vmul.f32 %v4956, %v4955
      %v4958 = vmul.f32 0.5, %v4957
      %v4959 = vsub.f32 1.5, %v4958
      %v4960 = vmul.f32 %v4955, %v4959
      %vm4961 = vweird.f32 %v4911
      %vm4962 = vweird.f32 %v4955
      %vm4963 = vmor %vm4961, %vm4962
      %v4964 = vsel %vm4963, %v4955, %v4960
      %v4965 = vrsqrt.pop %v4912
      %v4966 = vmul.f32 %v4965, %v4912
      %v4967 = vmul.f32 %v4966, %v4965
      %v4968 = vmul.f32 0.5, %v4967
      %v4969 = vsub.f32 1.5, %v4968
      %v4970 = vmul.f32 %v4965, %v4969
      %vm4971 = vweird.f32 %v4912
      %vm4972 = vweird.f32 %v4965
      %vm4973 = vmor %vm4971, %vm4972
      %v4974 = vsel %vm4973, %v4965, %v4970
      %v4975 = vrsqrt.pop %v4913
      %v4976 = vmul.f32 %v4975, %v4913
      %v4977 = vmul.f32 %v4976, %v4975
      %v4978 = vmul.f32 0.5, %v4977
      %v4979 = vsub.f32 1.5, %v4978
      %v4980 = vmul.f32 %v4975, %v4979
      %vm4981 = vweird.f32 %v4913
      %vm4982 = vweird.f32 %v4975
      %vm4983 = vmor %vm4981, %vm4982
      %v4984 = vsel %vm4983, %v4975, %v4980
      %v4985 = vrsqrt.pop %v4914
      %v4986 = vmul.f32 %v4985, %v4914
      %v4987 = vmul.f32 %v4986, %v4985
      %v4988 = vmul.f32 0.5, %v4987
      %v4989 = vsub.f32 1.5, %v4988
      %v4990 = vmul.f32 %v4985, %v4989
      %vm4991 = vweird.f32 %v4914
      %vm4992 = vweird.f32 %v4985
      %vm4993 = vmor %vm4991, %vm4992
      %v4994 = vsel %vm4993, %v4985, %v4990
      %v4995 = vmul.f32 %v4867, %v4924
      %v4996 = vmul.f32 %v4868, %v4934
      %v4997 = vmul.f32 %v4869, %v4944
      %v4998 = vmul.f32 %v4870, %v4954
      %v4999 = vmul.f32 %v4871, %v4964
      %v5000 = vmul.f32 %v4872, %v4974
      %v5001 = vmul.f32 %v4873, %v4984
      %v5002 = vmul.f32 %v4874, %v4994
      %v5004 = vperm.slane %v4834, 0
      %v5006 = vmul.f32 %v4995, %v5004
      %v5007 = vmul.f32 %v4996, %v5004
      %v5008 = vmul.f32 %v4997, %v5004
      %v5009 = vmul.f32 %v4998, %v5004
      %v5010 = vmul.f32 %v4999, %v5004
      %v5011 = vmul.f32 %v5000, %v5004
      %v5012 = vmul.f32 %v5001, %v5004
      %v5013 = vmul.f32 %v5002, %v5004
      %v5015 = vperm.slane %v4835, 0
      %v5017 = vadd.f32 %v5006, %v5015
      %v5018 = vadd.f32 %v5007, %v5015
      %v5019 = vadd.f32 %v5008, %v5015
      %v5020 = vadd.f32 %v5009, %v5015
      %v5021 = vadd.f32 %v5010, %v5015
      %v5022 = vadd.f32 %v5011, %v5015
      %v5023 = vadd.f32 %v5012, %v5015
      %v5024 = vadd.f32 %v5013, %v5015
      %v5025 = vpack.c.bf16 %v5018, %v5017
      %v5026 = vpack.c.bf16 %v5020, %v5019
      %v5027 = vpack.c.bf16 %v5022, %v5021
      %v5028 = vpack.c.bf16 %v5024, %v5023
      %v5029 = vld [vmem:[%s9] sm:$0xff]
      %v5030 = vld [vmem:[%s9 + $0x8] sm:$0xff]
      %v5031 = vld [vmem:[%s9 + $0x10] sm:$0xff]
      %v5032 = vld [vmem:[%s9 + $0x18] sm:$0xff]
      %v5033 = vld [vmem:[%s9 + $0x20] sm:$0xff]
      %v5034 = vld [vmem:[%s9 + $0x28] sm:$0xff]
      %v5035 = vld [vmem:[%s9 + $0x30] sm:$0xff]
      %v5036 = vld [vmem:[%s9 + $0x38] sm:$0xff]
      %v5037 = vld [vmem:[%s9 + $0x40] sm:$0xff]
      %v5038 = vld [vmem:[%s9 + $0x48] sm:$0xff]
      %v5039 = vld [vmem:[%s9 + $0x50] sm:$0xff]
      %v5040 = vld [vmem:[%s9 + $0x58] sm:$0xff]
      %v5041 = vld [vmem:[%s9 + $0x60] sm:$0xff]
      %v5042 = vld [vmem:[%s9 + $0x68] sm:$0xff]
      %v5043 = vld [vmem:[%s9 + $0x70] sm:$0xff]
      %v5044 = vld [vmem:[%s9 + $0x78] sm:$0xff]
      %v5045 = vld [vmem:[%s10] sm:$0x3]
      %v5047 = vperm.slane %v5045, 0
      %v5048 = vperm.slane %v5045, 1
      %v5067 = vunpack.c.l.b16 %v5029
      %v5068 = vunpack.c.h.b16 %v5029
      %v5069 = vunpack.c.l.b16 %v5030
      %v5070 = vunpack.c.h.b16 %v5030
      %v5071 = vunpack.c.l.b16 %v5031
      %v5072 = vunpack.c.h.b16 %v5031
      %v5073 = vunpack.c.l.b16 %v5032
      %v5074 = vunpack.c.h.b16 %v5032
      %v5075 = vunpack.c.l.b16 %v5033
      %v5076 = vunpack.c.h.b16 %v5033
      %v5077 = vunpack.c.l.b16 %v5034
      %v5078 = vunpack.c.h.b16 %v5034
      %v5079 = vunpack.c.l.b16 %v5035
      %v5080 = vunpack.c.h.b16 %v5035
      %v5081 = vunpack.c.l.b16 %v5036
      %v5082 = vunpack.c.h.b16 %v5036
      %v5083 = vunpack.c.l.b16 %v5037
      %v5084 = vunpack.c.h.b16 %v5037
      %v5085 = vunpack.c.l.b16 %v5038
      %v5086 = vunpack.c.h.b16 %v5038
      %v5087 = vunpack.c.l.b16 %v5039
      %v5088 = vunpack.c.h.b16 %v5039
      %v5089 = vunpack.c.l.b16 %v5040
      %v5090 = vunpack.c.h.b16 %v5040
      %v5091 = vunpack.c.l.b16 %v5041
      %v5092 = vunpack.c.h.b16 %v5041
      %v5093 = vunpack.c.l.b16 %v5042
      %v5094 = vunpack.c.h.b16 %v5042
      %v5095 = vunpack.c.l.b16 %v5043
      %v5096 = vunpack.c.h.b16 %v5043
      %v5097 = vunpack.c.l.b16 %v5044
      %v5098 = vunpack.c.h.b16 %v5044
      %v5099 = vpack.c.b16 %v5069, %v5067
      %v5100 = vpack.c.b16 %v5070, %v5068
      %v5101 = vpack.c.b16 %v5073, %v5071
      %v5102 = vpack.c.b16 %v5074, %v5072
      %v5103 = vpack.c.b16 %v5077, %v5075
      %v5104 = vpack.c.b16 %v5078, %v5076
      %v5105 = vpack.c.b16 %v5081, %v5079
      %v5106 = vpack.c.b16 %v5082, %v5080
      %v5107 = vpack.c.b16 %v5085, %v5083
      %v5108 = vpack.c.b16 %v5086, %v5084
      %v5109 = vpack.c.b16 %v5089, %v5087
      %v5110 = vpack.c.b16 %v5090, %v5088
      %v5111 = vpack.c.b16 %v5093, %v5091
      %v5112 = vpack.c.b16 %v5094, %v5092
      %v5113 = vpack.c.b16 %v5097, %v5095
      %v5114 = vpack.c.b16 %v5098, %v5096
      %5131 = vmatpush.bf16.msra.mxu0 %v5113
      %5132 = vmatpush.bf16.msra.mxu0 %v5111
      %5133 = vmatpush.bf16.msra.mxu0 %v5109
      %5134 = vmatpush.bf16.msra.mxu0 %v5107
      %5135 = vmatpush.bf16.msra.mxu0 %v5105
      %5136 = vmatpush.bf16.msra.mxu0 %v5103
      %5137 = vmatpush.bf16.msra.mxu0 %v5101
      %5138 = vmatpush.bf16.msra.mxu0 %v5099
      %5139 = vmatmul.bf16.gmra.mxu0 %v5025
      %v5140 = vpop.f32.mrf.mxu0
      %v5141 = vadd.f32 %v5047, %v5140
      %v5142 = vpop.f32.mrf.mxu0
      %v5143 = vadd.f32 %v5047, %v5142
      %5144 = vmatmul.bf16.gmra.mxu0 %v5026
      %v5145 = vpop.f32.mrf.mxu0
      %v5146 = vadd.f32 %v5047, %v5145
      %v5147 = vpop.f32.mrf.mxu0
      %v5148 = vadd.f32 %v5047, %v5147
      %5149 = vmatmul.bf16.gmra.mxu0 %v5027
      %v5150 = vpop.f32.mrf.mxu0
      %v5151 = vadd.f32 %v5047, %v5150
      %v5152 = vpop.f32.mrf.mxu0
      %v5153 = vadd.f32 %v5047, %v5152
      %5154 = vmatmul.bf16.gmra.mxu0 %v5028
      %v5155 = vpop.f32.mrf.mxu0
      %v5156 = vadd.f32 %v5047, %v5155
      %v5157 = vpop.f32.mrf.mxu0
      %v5158 = vadd.f32 %v5047, %v5157
      %5159 = vdwg.mxu0
      %5160 = vmatpush.bf16.msra.mxu0 %v5114
      %5161 = vmatpush.bf16.msra.mxu0 %v5112
      %5162 = vmatpush.bf16.msra.mxu0 %v5110
      %5163 = vmatpush.bf16.msra.mxu0 %v5108
      %5164 = vmatpush.bf16.msra.mxu0 %v5106
      %5165 = vmatpush.bf16.msra.mxu0 %v5104
      %5166 = vmatpush.bf16.msra.mxu0 %v5102
      %5167 = vmatpush.bf16.msra.mxu0 %v5100
      %5168 = vmatmul.bf16.gmra.mxu0 %v5025
      %v5169 = vpop.f32.mrf.mxu0
      %v5170 = vadd.f32 %v5048, %v5169
      %v5171 = vpop.f32.mrf.mxu0
      %v5172 = vadd.f32 %v5048, %v5171
      %5173 = vmatmul.bf16.gmra.mxu0 %v5026
      %v5174 = vpop.f32.mrf.mxu0
      %v5175 = vadd.f32 %v5048, %v5174
      %v5176 = vpop.f32.mrf.mxu0
      %v5177 = vadd.f32 %v5048, %v5176
      %5178 = vmatmul.bf16.gmra.mxu0 %v5027
      %v5179 = vpop.f32.mrf.mxu0
      %v5180 = vadd.f32 %v5048, %v5179
      %v5181 = vpop.f32.mrf.mxu0
      %v5182 = vadd.f32 %v5048, %v5181
      %5183 = vmatmul.bf16.gmra.mxu0 %v5028
      %v5184 = vpop.f32.mrf.mxu0
      %v5185 = vadd.f32 %v5048, %v5184
      %v5186 = vpop.f32.mrf.mxu0
      %v5187 = vadd.f32 %v5048, %v5186
      %5188 = vdwg.mxu0
      %v5189 = vmul.f32 %v5141, 0.5
      %v5190 = vmul.f32 %v5170, 0.5
      %v5191 = vmul.f32 %v5143, 0.5
      %v5192 = vmul.f32 %v5172, 0.5
      %v5193 = vmul.f32 %v5146, 0.5
      %v5194 = vmul.f32 %v5175, 0.5
      %v5195 = vmul.f32 %v5148, 0.5
      %v5196 = vmul.f32 %v5177, 0.5
      %v5197 = vmul.f32 %v5151, 0.5
      %v5198 = vmul.f32 %v5180, 0.5
      %v5199 = vmul.f32 %v5153, 0.5
      %v5200 = vmul.f32 %v5182, 0.5
      %v5201 = vmul.f32 %v5156, 0.5
      %v5202 = vmul.f32 %v5185, 0.5
      %v5203 = vmul.f32 %v5158, 0.5
      %v5204 = vmul.f32 %v5187, 0.5
      %v5205 = vmul.f32 %v5141, 0.044715
      %v5206 = vmul.f32 %v5170, 0.044715
      %v5207 = vmul.f32 %v5143, 0.044715
      %v5208 = vmul.f32 %v5172, 0.044715
      %v5209 = vmul.f32 %v5146, 0.044715
      %v5210 = vmul.f32 %v5175, 0.044715
      %v5211 = vmul.f32 %v5148, 0.044715
      %v5212 = vmul.f32 %v5177, 0.044715
      %v5213 = vmul.f32 %v5151, 0.044715
      %v5214 = vmul.f32 %v5180, 0.044715
      %v5215 = vmul.f32 %v5153, 0.044715
      %v5216 = vmul.f32 %v5182, 0.044715
      %v5217 = vmul.f32 %v5156, 0.044715
      %v5218 = vmul.f32 %v5185, 0.044715
      %v5219 = vmul.f32 %v5158, 0.044715
      %v5220 = vmul.f32 %v5187, 0.044715
      %v5221 = vmul.f32 %v5205, %v5141
      %v5222 = vmul.f32 %v5206, %v5170
      %v5223 = vmul.f32 %v5207, %v5143
      %v5224 = vmul.f32 %v5208, %v5172
      %v5225 = vmul.f32 %v5209, %v5146
      %v5226 = vmul.f32 %v5210, %v5175
      %v5227 = vmul.f32 %v5211, %v5148
      %v5228 = vmul.f32 %v5212, %v5177
      %v5229 = vmul.f32 %v5213, %v5151
      %v5230 = vmul.f32 %v5214, %v5180
      %v5231 = vmul.f32 %v5215, %v5153
      %v5232 = vmul.f32 %v5216, %v5182
      %v5233 = vmul.f32 %v5217, %v5156
      %v5234 = vmul.f32 %v5218, %v5185
      %v5235 = vmul.f32 %v5219, %v5158
      %v5236 = vmul.f32 %v5220, %v5187
      %v5237 = vmul.f32 %v5221, %v5141
      %v5238 = vmul.f32 %v5222, %v5170
      %v5239 = vmul.f32 %v5223, %v5143
      %v5240 = vmul.f32 %v5224, %v5172
      %v5241 = vmul.f32 %v5225, %v5146
      %v5242 = vmul.f32 %v5226, %v5175
      %v5243 = vmul.f32 %v5227, %v5148
      %v5244 = vmul.f32 %v5228, %v5177
      %v5245 = vmul.f32 %v5229, %v5151
      %v5246 = vmul.f32 %v5230, %v5180
      %v5247 = vmul.f32 %v5231, %v5153
      %v5248 = vmul.f32 %v5232, %v5182
      %v5249 = vmul.f32 %v5233, %v5156
      %v5250 = vmul.f32 %v5234, %v5185
      %v5251 = vmul.f32 %v5235, %v5158
      %v5252 = vmul.f32 %v5236, %v5187
      %v5253 = vadd.f32 %v5141, %v5237
      %v5254 = vadd.f32 %v5170, %v5238
      %v5255 = vadd.f32 %v5143, %v5239
      %v5256 = vadd.f32 %v5172, %v5240
      %v5257 = vadd.f32 %v5146, %v5241
      %v5258 = vadd.f32 %v5175, %v5242
      %v5259 = vadd.f32 %v5148, %v5243
      %v5260 = vadd.f32 %v5177, %v5244
      %v5261 = vadd.f32 %v5151, %v5245
      %v5262 = vadd.f32 %v5180, %v5246
      %v5263 = vadd.f32 %v5153, %v5247
      %v5264 = vadd.f32 %v5182, %v5248
      %v5265 = vadd.f32 %v5156, %v5249
      %v5266 = vadd.f32 %v5185, %v5250
      %v5267 = vadd.f32 %v5158, %v5251
      %v5268 = vadd.f32 %v5187, %v5252
      %v5269 = vmul.f32 %v5253, 0.7978846
      %v5270 = vmul.f32 %v5254, 0.7978846
      %v5271 = vmul.f32 %v5255, 0.7978846
      %v5272 = vmul.f32 %v5256, 0.7978846
      %v5273 = vmul.f32 %v5257, 0.7978846
      %v5274 = vmul.f32 %v5258, 0.7978846
      %v5275 = vmul.f32 %v5259, 0.7978846
      %v5276 = vmul.f32 %v5260, 0.7978846
      %v5277 = vmul.f32 %v5261, 0.7978846
      %v5278 = vmul.f32 %v5262, 0.7978846
      %v5279 = vmul.f32 %v5263, 0.7978846
      %v5280 = vmul.f32 %v5264, 0.7978846
      %v5281 = vmul.f32 %v5265, 0.7978846
      %v5282 = vmul.f32 %v5266, 0.7978846
      %v5283 = vmul.f32 %v5267, 0.7978846
      %v5284 = vmul.f32 %v5268, 0.7978846
      %v5285 = vtanh.pop %v5269
      %v5286 = vtanh.pop %v5270
      %v5287 = vtanh.pop %v5271
      %v5288 = vtanh.pop %v5272
      %v5289 = vtanh.pop %v5273
      %v5290 = vtanh.pop %v5274
      %v5291 = vtanh.pop %v5275
      %v5292 = vtanh.pop %v5276
      %v5293 = vtanh.pop %v5277
      %v5294 = vtanh.pop %v5278
      %v5295 = vtanh.pop %v5279
      %v5296 = vtanh.pop %v5280
      %v5297 = vtanh.pop %v5281
      %v5298 = vtanh.pop %v5282
      %v5299 = vtanh.pop %v5283
      %v5300 = vtanh.pop %v5284
      %v5301 = vadd.f32 %v5285, 1.0
      %v5302 = vadd.f32 %v5286, 1.0
      %v5303 = vadd.f32 %v5287, 1.0
      %v5304 = vadd.f32 %v5288, 1.0
      %v5305 = vadd.f32 %v5289, 1.0
      %v5306 = vadd.f32 %v5290, 1.0
      %v5307 = vadd.f32 %v5291, 1.0
      %v5308 = vadd.f32 %v5292, 1.0
      %v5309 = vadd.f32 %v5293, 1.0
      %v5310 = vadd.f32 %v5294, 1.0
      %v5311 = vadd.f32 %v5295, 1.0
      %v5312 = vadd.f32 %v5296, 1.0
      %v5313 = vadd.f32 %v5297, 1.0
      %v5314 = vadd.f32 %v5298, 1.0
      %v5315 = vadd.f32 %v5299, 1.0
      %v5316 = vadd.f32 %v5300, 1.0
      %v5317 = vmul.f32 %v5189, %v5301
      %v5318 = vmul.f32 %v5190, %v5302
      %v5319 = vmul.f32 %v5191, %v5303
      %v5320 = vmul.f32 %v5192, %v5304
      %v5321 = vmul.f32 %v5193, %v5305
      %v5322 = vmul.f32 %v5194, %v5306
      %v5323 = vmul.f32 %v5195, %v5307
      %v5324 = vmul.f32 %v5196, %v5308
      %v5325 = vmul.f32 %v5197, %v5309
      %v5326 = vmul.f32 %v5198, %v5310
      %v5327 = vmul.f32 %v5199, %v5311
      %v5328 = vmul.f32 %v5200, %v5312
      %v5329 = vmul.f32 %v5201, %v5313
      %v5330 = vmul.f32 %v5202, %v5314
      %v5331 = vmul.f32 %v5203, %v5315
      %v5332 = vmul.f32 %v5204, %v5316
      %v5333 = vpack.c.bf16 %v5319, %v5317
      %v5334 = vpack.c.bf16 %v5320, %v5318
      %v5335 = vpack.c.bf16 %v5323, %v5321
      %v5336 = vpack.c.bf16 %v5324, %v5322
      %v5337 = vpack.c.bf16 %v5327, %v5325
      %v5338 = vpack.c.bf16 %v5328, %v5326
      %v5339 = vpack.c.bf16 %v5331, %v5329
      %v5340 = vpack.c.bf16 %v5332, %v5330
      %v5341 = vld [vmem:[%s11] sm:$0xf]
      %v5342 = vld [vmem:[%s11 + $0x4] sm:$0xf]
      %v5343 = vld [vmem:[%s11 + $0x8] sm:$0xf]
      %v5344 = vld [vmem:[%s11 + $0xc] sm:$0xf]
      %v5345 = vld [vmem:[%s11 + $0x10] sm:$0xf]
      %v5346 = vld [vmem:[%s11 + $0x14] sm:$0xf]
      %v5347 = vld [vmem:[%s11 + $0x18] sm:$0xf]
      %v5348 = vld [vmem:[%s11 + $0x1c] sm:$0xf]
      %v5349 = vld [vmem:[%s11 + $0x20] sm:$0xf]
      %v5350 = vld [vmem:[%s11 + $0x24] sm:$0xf]
      %v5351 = vld [vmem:[%s11 + $0x28] sm:$0xf]
      %v5352 = vld [vmem:[%s11 + $0x2c] sm:$0xf]
      %v5353 = vld [vmem:[%s11 + $0x30] sm:$0xf]
      %v5354 = vld [vmem:[%s11 + $0x34] sm:$0xf]
      %v5355 = vld [vmem:[%s11 + $0x38] sm:$0xf]
      %v5356 = vld [vmem:[%s11 + $0x3c] sm:$0xf]
      %v5357 = vld [vmem:[%s11 + $0x40] sm:$0xf]
      %v5358 = vld [vmem:[%s11 + $0x44] sm:$0xf]
      %v5359 = vld [vmem:[%s11 + $0x48] sm:$0xf]
      %v5360 = vld [vmem:[%s11 + $0x4c] sm:$0xf]
      %v5361 = vld [vmem:[%s11 + $0x50] sm:$0xf]
      %v5362 = vld [vmem:[%s11 + $0x54] sm:$0xf]
      %v5363 = vld [vmem:[%s11 + $0x58] sm:$0xf]
      %v5364 = vld [vmem:[%s11 + $0x5c] sm:$0xf]
      %v5365 = vld [vmem:[%s11 + $0x60] sm:$0xf]
      %v5366 = vld [vmem:[%s11 + $0x64] sm:$0xf]
      %v5367 = vld [vmem:[%s11 + $0x68] sm:$0xf]
      %v5368 = vld [vmem:[%s11 + $0x6c] sm:$0xf]
      %v5369 = vld [vmem:[%s11 + $0x70] sm:$0xf]
      %v5370 = vld [vmem:[%s11 + $0x74] sm:$0xf]
      %v5371 = vld [vmem:[%s11 + $0x78] sm:$0xf]
      %v5372 = vld [vmem:[%s11 + $0x7c] sm:$0xf]
      %v5373 = vld [vmem:[%s12] sm:$0x1]
      %v5375 = vperm.slane %v5373, 0
      %v5409 = vunpack.c.l.b16 %v5341
      %v5410 = vunpack.c.l.b16 %v5342
      %v5411 = vunpack.c.l.b16 %v5343
      %v5412 = vunpack.c.l.b16 %v5344
      %v5413 = vunpack.c.l.b16 %v5345
      %v5414 = vunpack.c.l.b16 %v5346
      %v5415 = vunpack.c.l.b16 %v5347
      %v5416 = vunpack.c.l.b16 %v5348
      %v5417 = vunpack.c.l.b16 %v5349
      %v5418 = vunpack.c.l.b16 %v5350
      %v5419 = vunpack.c.l.b16 %v5351
      %v5420 = vunpack.c.l.b16 %v5352
      %v5421 = vunpack.c.l.b16 %v5353
      %v5422 = vunpack.c.l.b16 %v5354
      %v5423 = vunpack.c.l.b16 %v5355
      %v5424 = vunpack.c.l.b16 %v5356
      %v5425 = vunpack.c.l.b16 %v5357
      %v5426 = vunpack.c.l.b16 %v5358
      %v5427 = vunpack.c.l.b16 %v5359
      %v5428 = vunpack.c.l.b16 %v5360
      %v5429 = vunpack.c.l.b16 %v5361
      %v5430 = vunpack.c.l.b16 %v5362
      %v5431 = vunpack.c.l.b16 %v5363
      %v5432 = vunpack.c.l.b16 %v5364
      %v5433 = vunpack.c.l.b16 %v5365
      %v5434 = vunpack.c.l.b16 %v5366
      %v5435 = vunpack.c.l.b16 %v5367
      %v5436 = vunpack.c.l.b16 %v5368
      %v5437 = vunpack.c.l.b16 %v5369
      %v5438 = vunpack.c.l.b16 %v5370
      %v5439 = vunpack.c.l.b16 %v5371
      %v5440 = vunpack.c.l.b16 %v5372
      %v5441 = vpack.c.b16 %v5410, %v5409
      %v5442 = vpack.c.b16 %v5412, %v5411
      %v5443 = vpack.c.b16 %v5414, %v5413
      %v5444 = vpack.c.b16 %v5416, %v5415
      %v5445 = vpack.c.b16 %v5418, %v5417
      %v5446 = vpack.c.b16 %v5420, %v5419
      %v5447 = vpack.c.b16 %v5422, %v5421
      %v5448 = vpack.c.b16 %v5424, %v5423
      %v5449 = vpack.c.b16 %v5426, %v5425
      %v5450 = vpack.c.b16 %v5428, %v5427
      %v5451 = vpack.c.b16 %v5430, %v5429
      %v5452 = vpack.c.b16 %v5432, %v5431
      %v5453 = vpack.c.b16 %v5434, %v5433
      %v5454 = vpack.c.b16 %v5436, %v5435
      %v5455 = vpack.c.b16 %v5438, %v5437
      %v5456 = vpack.c.b16 %v5440, %v5439
      %5473 = vmatpush.bf16.msra.mxu0 %v5448
      %5474 = vmatpush.bf16.msra.mxu0 %v5447
      %5475 = vmatpush.bf16.msra.mxu0 %v5446
      %5476 = vmatpush.bf16.msra.mxu0 %v5445
      %5477 = vmatpush.bf16.msra.mxu0 %v5444
      %5478 = vmatpush.bf16.msra.mxu0 %v5443
      %5479 = vmatpush.bf16.msra.mxu0 %v5442
      %5480 = vmatpush.bf16.msra.mxu0 %v5441
      %5481 = vmatmul.bf16.gmra.mxu0 %v5333
      %v5482 = vpop.f32.mrf.mxu0
      %v5483 = vadd.f32 %v5375, %v5482
      %v5484 = vpop.f32.mrf.mxu0
      %v5485 = vadd.f32 %v5375, %v5484
      %5486 = vmatmul.bf16.gmra.mxu0 %v5335
      %v5487 = vpop.f32.mrf.mxu0
      %v5488 = vadd.f32 %v5375, %v5487
      %v5489 = vpop.f32.mrf.mxu0
      %v5490 = vadd.f32 %v5375, %v5489
      %5491 = vmatmul.bf16.gmra.mxu0 %v5337
      %v5492 = vpop.f32.mrf.mxu0
      %v5493 = vadd.f32 %v5375, %v5492
      %v5494 = vpop.f32.mrf.mxu0
      %v5495 = vadd.f32 %v5375, %v5494
      %5496 = vmatmul.bf16.gmra.mxu0 %v5339
      %v5497 = vpop.f32.mrf.mxu0
      %v5498 = vadd.f32 %v5375, %v5497
      %v5499 = vpop.f32.mrf.mxu0
      %v5500 = vadd.f32 %v5375, %v5499
      %5501 = vdwg.mxu0
      %5502 = vmatpush.bf16.msra.mxu0 %v5456
      %5503 = vmatpush.bf16.msra.mxu0 %v5455
      %5504 = vmatpush.bf16.msra.mxu0 %v5454
      %5505 = vmatpush.bf16.msra.mxu0 %v5453
      %5506 = vmatpush.bf16.msra.mxu0 %v5452
      %5507 = vmatpush.bf16.msra.mxu0 %v5451
      %5508 = vmatpush.bf16.msra.mxu0 %v5450
      %5509 = vmatpush.bf16.msra.mxu0 %v5449
      %5510 = vmatmul.bf16.gmra.mxu0 %v5334
      %v5511 = vpop.f32.mrf.mxu0
      %v5512 = vadd.f32 %v5483, %v5511
      %v5513 = vpop.f32.mrf.mxu0
      %v5514 = vadd.f32 %v5485, %v5513
      %5515 = vmatmul.bf16.gmra.mxu0 %v5336
      %v5516 = vpop.f32.mrf.mxu0
      %v5517 = vadd.f32 %v5488, %v5516
      %v5518 = vpop.f32.mrf.mxu0
      %v5519 = vadd.f32 %v5490, %v5518
      %5520 = vmatmul.bf16.gmra.mxu0 %v5338
      %v5521 = vpop.f32.mrf.mxu0
      %v5522 = vadd.f32 %v5493, %v5521
      %v5523 = vpop.f32.mrf.mxu0
      %v5524 = vadd.f32 %v5495, %v5523
      %5525 = vmatmul.bf16.gmra.mxu0 %v5340
      %v5526 = vpop.f32.mrf.mxu0
      %v5527 = vadd.f32 %v5498, %v5526
      %v5528 = vpop.f32.mrf.mxu0
      %v5529 = vadd.f32 %v5500, %v5528
      %5530 = vdwg.mxu0
      %v5531 = vadd.f32 %v5512, %v5017
      %v5532 = vadd.f32 %v5514, %v5018
      %v5533 = vadd.f32 %v5517, %v5019
      %v5534 = vadd.f32 %v5519, %v5020
      %v5535 = vadd.f32 %v5522, %v5021
      %v5536 = vadd.f32 %v5524, %v5022
      %v5537 = vadd.f32 %v5527, %v5023
      %v5538 = vadd.f32 %v5529, %v5024
      %v5539 = vld [vmem:[%s13] sm:$0x1]
      %v5540 = vld [vmem:[%s14] sm:$0x1]
      %5541 = vadd.xlane.f32.xlu0 %v5531
      %v5542 = vpop.xlane.xlu0 %5541
      %5543 = vadd.xlane.f32.xlu0 %v5532
      %v5544 = vpop.xlane.xlu0 %5543
      %5545 = vadd.xlane.f32.xlu0 %v5533
      %v5546 = vpop.xlane.xlu0 %5545
      %5547 = vadd.xlane.f32.xlu0 %v5534
      %v5548 = vpop.xlane.xlu0 %5547
      %5549 = vadd.xlane.f32.xlu0 %v5535
      %v5550 = vpop.xlane.xlu0 %5549
      %5551 = vadd.xlane.f32.xlu0 %v5536
      %v5552 = vpop.xlane.xlu0 %5551
      %5553 = vadd.xlane.f32.xlu0 %v5537
      %v5554 = vpop.xlane.xlu0 %5553
      %5555 = vadd.xlane.f32.xlu0 %v5538
      %v5556 = vpop.xlane.xlu0 %5555
      %v5557 = vmul.f32 %v5542, %v4858
      %v5558 = vmul.f32 %v5544, %v4858
      %v5559 = vmul.f32 %v5546, %v4858
      %v5560 = vmul.f32 %v5548, %v4858
      %v5561 = vmul.f32 %v5550, %v4858
      %v5562 = vmul.f32 %v5552, %v4858
      %v5563 = vmul.f32 %v5554, %v4858
      %v5564 = vmul.f32 %v5556, %v4858
      %v5565 = vsub.f32 %v5531, %v5557
      %v5566 = vsub.f32 %v5532, %v5558
      %v5567 = vsub.f32 %v5533, %v5559
      %v5568 = vsub.f32 %v5534, %v5560
      %v5569 = vsub.f32 %v5535, %v5561
      %v5570 = vsub.f32 %v5536, %v5562
      %v5571 = vsub.f32 %v5537, %v5563
      %v5572 = vsub.f32 %v5538, %v5564
      %v5573 = vmul.f32 %v5565, %v5565
      %v5574 = vmul.f32 %v5566, %v5566
      %v5575 = vmul.f32 %v5567, %v5567
      %v5576 = vmul.f32 %v5568, %v5568
      %v5577 = vmul.f32 %v5569, %v5569
      %v5578 = vmul.f32 %v5570, %v5570
      %v5579 = vmul.f32 %v5571, %v5571
      %v5580 = vmul.f32 %v5572, %v5572
      %5581 = vadd.xlane.f32.xlu0 %v5573
      %v5582 = vpop.xlane.xlu0 %5581
      %5583 = vadd.xlane.f32.xlu0 %v5574
      %v5584 = vpop.xlane.xlu0 %5583
      %5585 = vadd.xlane.f32.xlu0 %v5575
      %v5586 = vpop.xlane.xlu0 %5585
      %5587 = vadd.xlane.f32.xlu0 %v5576
      %v5588 = vpop.xlane.xlu0 %5587
      %5589 = vadd.xlane.f32.xlu0 %v5577
      %v5590 = vpop.xlane.xlu0 %5589
      %5591 = vadd.xlane.f32.xlu0 %v5578
      %v5592 = vpop.xlane.xlu0 %5591
      %5593 = vadd.xlane.f32.xlu0 %v5579
      %v5594 = vpop.xlane.xlu0 %5593
      %5595 = vadd.xlane.f32.xlu0 %v5580
      %v5596 = vpop.xlane.xlu0 %5595
      %v5597 = vmul.f32 %v5582, %v4858
      %v5598 = vmul.f32 %v5584, %v4858
      %v5599 = vmul.f32 %v5586, %v4858
      %v5600 = vmul.f32 %v5588, %v4858
      %v5601 = vmul.f32 %v5590, %v4858
      %v5602 = vmul.f32 %v5592, %v4858
      %v5603 = vmul.f32 %v5594, %v4858
      %v5604 = vmul.f32 %v5596, %v4858
      %v5605 = vadd.f32 %v5597, 1e-12
      %v5606 = vadd.f32 %v5598, 1e-12
      %v5607 = vadd.f32 %v5599, 1e-12
      %v5608 = vadd.f32 %v5600, 1e-12
      %v5609 = vadd.f32 %v5601, 1e-12
      %v5610 = vadd.f32 %v5602, 1e-12
      %v5611 = vadd.f32 %v5603, 1e-12
      %v5612 = vadd.f32 %v5604, 1e-12
      %v5613 = vrsqrt.pop %v5605
      %v5614 = vmul.f32 %v5613, %v5605
      %v5615 = vmul.f32 %v5614, %v5613
      %v5616 = vmul.f32 0.5, %v5615
      %v5617 = vsub.f32 1.5, %v5616
      %v5618 = vmul.f32 %v5613, %v5617
      %vm5619 = vweird.f32 %v5605
      %vm5620 = vweird.f32 %v5613
      %vm5621 = vmor %vm5619, %vm5620
      %v5622 = vsel %vm5621, %v5613, %v5618
      %v5623 = vrsqrt.pop %v5606
      %v5624 = vmul.f32 %v5623, %v5606
      %v5625 = vmul.f32 %v5624, %v5623
      %v5626 = vmul.f32 0.5, %v5625
      %v5627 = vsub.f32 1.5, %v5626
      %v5628 = vmul.f32 %v5623, %v5627
      %vm5629 = vweird.f32 %v5606
      %vm5630 = vweird.f32 %v5623
      %vm5631 = vmor %vm5629, %vm5630
      %v5632 = vsel %vm5631, %v5623, %v5628
      %v5633 = vrsqrt.pop %v5607
      %v5634 = vmul.f32 %v5633, %v5607
      %v5635 = vmul.f32 %v5634, %v5633
      %v5636 = vmul.f32 0.5, %v5635
      %v5637 = vsub.f32 1.5, %v5636
      %v5638 = vmul.f32 %v5633, %v5637
      %vm5639 = vweird.f32 %v5607
      %vm5640 = vweird.f32 %v5633
      %vm5641 = vmor %vm5639, %vm5640
      %v5642 = vsel %vm5641, %v5633, %v5638
      %v5643 = vrsqrt.pop %v5608
      %v5644 = vmul.f32 %v5643, %v5608
      %v5645 = vmul.f32 %v5644, %v5643
      %v5646 = vmul.f32 0.5, %v5645
      %v5647 = vsub.f32 1.5, %v5646
      %v5648 = vmul.f32 %v5643, %v5647
      %vm5649 = vweird.f32 %v5608
      %vm5650 = vweird.f32 %v5643
      %vm5651 = vmor %vm5649, %vm5650
      %v5652 = vsel %vm5651, %v5643, %v5648
      %v5653 = vrsqrt.pop %v5609
      %v5654 = vmul.f32 %v5653, %v5609
      %v5655 = vmul.f32 %v5654, %v5653
      %v5656 = vmul.f32 0.5, %v5655
      %v5657 = vsub.f32 1.5, %v5656
      %v5658 = vmul.f32 %v5653, %v5657
      %vm5659 = vweird.f32 %v5609
      %vm5660 = vweird.f32 %v5653
      %vm5661 = vmor %vm5659, %vm5660
      %v5662 = vsel %vm5661, %v5653, %v5658
      %v5663 = vrsqrt.pop %v5610
      %v5664 = vmul.f32 %v5663, %v5610
      %v5665 = vmul.f32 %v5664, %v5663
      %v5666 = vmul.f32 0.5, %v5665
      %v5667 = vsub.f32 1.5, %v5666
      %v5668 = vmul.f32 %v5663, %v5667
      %vm5669 = vweird.f32 %v5610
      %vm5670 = vweird.f32 %v5663
      %vm5671 = vmor %vm5669, %vm5670
      %v5672 = vsel %vm5671, %v5663, %v5668
      %v5673 = vrsqrt.pop %v5611
      %v5674 = vmul.f32 %v5673, %v5611
      %v5675 = vmul.f32 %v5674, %v5673
      %v5676 = vmul.f32 0.5, %v5675
      %v5677 = vsub.f32 1.5, %v5676
      %v5678 = vmul.f32 %v5673, %v5677
      %vm5679 = vweird.f32 %v5611
      %vm5680 = vweird.f32 %v5673
      %vm5681 = vmor %vm5679, %vm5680
      %v5682 = vsel %vm5681, %v5673, %v5678
      %v5683 = vrsqrt.pop %v5612
      %v5684 = vmul.f32 %v5683, %v5612
      %v5685 = vmul.f32 %v5684, %v5683
      %v5686 = vmul.f32 0.5, %v5685
      %v5687 = vsub.f32 1.5, %v5686
      %v5688 = vmul.f32 %v5683, %v5687
      %vm5689 = vweird.f32 %v5612
      %vm5690 = vweird.f32 %v5683
      %vm5691 = vmor %vm5689, %vm5690
      %v5692 = vsel %vm5691, %v5683, %v5688
      %v5693 = vmul.f32 %v5565, %v5622
      %v5694 = vmul.f32 %v5566, %v5632
      %v5695 = vmul.f32 %v5567, %v5642
      %v5696 = vmul.f32 %v5568, %v5652
      %v5697 = vmul.f32 %v5569, %v5662
      %v5698 = vmul.f32 %v5570, %v5672
      %v5699 = vmul.f32 %v5571, %v5682
      %v5700 = vmul.f32 %v5572, %v5692
      %v5702 = vperm.slane %v5539, 0
      %v5704 = vmul.f32 %v5693, %v5702
      %v5705 = vmul.f32 %v5694, %v5702
      %v5706 = vmul.f32 %v5695, %v5702
      %v5707 = vmul.f32 %v5696, %v5702
      %v5708 = vmul.f32 %v5697, %v5702
      %v5709 = vmul.f32 %v5698, %v5702
      %v5710 = vmul.f32 %v5699, %v5702
      %v5711 = vmul.f32 %v5700, %v5702
      %v5713 = vperm.slane %v5540, 0
      %v5715 = vadd.f32 %v5704, %v5713
      %v5716 = vadd.f32 %v5705, %v5713
      %v5717 = vadd.f32 %v5706, %v5713
      %v5718 = vadd.f32 %v5707, %v5713
      %v5719 = vadd.f32 %v5708, %v5713
      %v5720 = vadd.f32 %v5709, %v5713
      %v5721 = vadd.f32 %v5710, %v5713
      %v5722 = vadd.f32 %v5711, %v5713
      %v5723 = vpack.c.bf16 %v5715, %v5715
      %v5724 = vpack.c.bf16 %v5716, %v5716
      %v5725 = vpack.c.bf16 %v5717, %v5717
      %v5726 = vpack.c.bf16 %v5718, %v5718
      %v5727 = vpack.c.bf16 %v5719, %v5719
      %v5728 = vpack.c.bf16 %v5720, %v5720
      %v5729 = vpack.c.bf16 %v5721, %v5721
      %v5730 = vpack.c.bf16 %v5722, %v5722
      %5731 = vst [vmem:[%s508] sm:$0xf] %v5723
      %5732 = vst [vmem:[%s508 + $0x4] sm:$0xf] %v5724
      %5733 = vst [vmem:[%s508 + $0x8] sm:$0xf] %v5725
      %5734 = vst [vmem:[%s508 + $0xc] sm:$0xf] %v5726
      %5735 = vst [vmem:[%s508 + $0x10] sm:$0xf] %v5727
      %5736 = vst [vmem:[%s508 + $0x14] sm:$0xf] %v5728
      %5737 = vst [vmem:[%s508 + $0x18] sm:$0xf] %v5729
      %5738 = vst [vmem:[%s508 + $0x1c] sm:$0xf] %v5730
      %p5739 = scmp.lt.s32.totalorder %s26, 1
      %s5740 = scalar_select %p5739, %s26, 1
      %s5741 = smul.addr %s5740, 8
      %s5742 = smul.addr %s5741, 4
      %s5743 = scalar_lea.vmem %s15, %s5742
      // Predicated region
      $region81: #{detox_xlnet_forward.5} parent=79 // pred_check
        %p5744 = pneg %p369
      $region82: #{detox_xlnet_forward.5} parent=79 // pred_check_branch
        %5746 = sbr.rel (%p5744) target = $region84
      $region83: #{detox_xlnet_forward.5} parent=79 // pred_region
        _
      $region84: #{detox_xlnet_forward.5} parent=79 // pred_fallthru
        _
    $region80: #{detox_xlnet_forward.5} parent=5 // pred_fallthru
      _
    %p5747 = scmp.le.s32.totalorder 2, %s21
    // Predicated region
    $region85: #{detox_xlnet_forward.5} parent=5 // pred_check
      %p5748 = pneg %p5747
    $region86: #{detox_xlnet_forward.5} parent=5 // pred_check_branch
      %5750 = sbr.rel (%p5748) target = $region88
    $region87: #{detox_xlnet_forward.5} parent=5 // pred_region
      %s5751 = ssub.s32 %s21, 2
      // Predicated region
      $region89: #{detox_xlnet_forward.5} parent=87 // pred_check
        %p5752 = pneg %p375
      $region90: #{detox_xlnet_forward.5} parent=87 // pred_check_branch
        %5754 = sbr.rel (%p5752) target = $region92
      $region91: #{detox_xlnet_forward.5} parent=87 // pred_region
        %p5755 = scmp.lt.s32.totalorder %s27, 1
        %s5756 = scalar_select %p5755, %s27, 1
        %s5757 = smul.addr %s5756, 8
        %s5758 = smul.addr %s5757, 4
        %s5759 = scalar_lea.vmem %s15, %s5758
      $region92: #{detox_xlnet_forward.5} parent=87 // pred_fallthru
        _
    $region88: #{detox_xlnet_forward.5} parent=5 // pred_fallthru
      _
  $region6: #{detox_xlnet_forward.5} parent=0 // loop_footer
    %s25 = sadd.s32 1, %s21
  $region7: #{detox_xlnet_forward.5} parent=0 // loop_footer_branch
    %20 = sbr.rel target = $region3
  $region8: #{detox_xlnet_forward.5} parent=0 // loop_exit
    _

</llo_original>
